<compile_context>
chip_gen: v7x
topology: tpu7x:2x2x1
jax: 0.10.0
libtpu: 0.0.40
codegen_flags: <defaults>
</compile_context>

<pallas_src>
import functools

import jax
import jax.numpy as jnp
from jax import lax
from jax.experimental import pallas as pl
from jax.experimental.pallas import tpu as pltpu

BN_EPS = 1e-5


def _compiler_params(block_bytes, semantics):
    """Per-call Mosaic params with an explicit, footprint-derived VMEM limit."""
    limit = int(min(max(2 * block_bytes + (8 << 20), 32 << 20), 64 << 20))
    return pltpu.CompilerParams(dimension_semantics=semantics,
                                vmem_limit_bytes=limit)


# ----------------------------------------------------------------------------
# Kernel 1: fused (rows @ W_scaled) + bias + ReLU  (downsampling convs / 1x1 head)
# ----------------------------------------------------------------------------
def _mm_bn_relu_kernel(p_ref, w_ref, b_ref, o_ref):
    acc = jnp.dot(p_ref[...], w_ref[...], preferred_element_type=jnp.float32)
    o_ref[...] = jnp.maximum(acc + b_ref[...], 0.0).astype(o_ref.dtype)


def _row_tile(m, k):
    """Row tile: one full block for small M (per-step overhead dominates),
    otherwise a multiple of 16 aiming at >=8 grid steps (>=4 per v7x TensorCore)
    while keeping the double-buffered bf16 patch stream under ~6 MiB (v5e-safe)."""
    if m <= 256:
        return m                                    # full-dim block is always legal
    tm = max(128, min(512, ((m // 8 + 15) // 16) * 16))
    cap = max(16, (((6 << 20) // max(4 * k, 1)) // 16) * 16)
    return min(tm, cap)


def fused_matmul_bn_relu(x2d, w_kc, bias_p, out_dtype):
    """relu(x2d @ w_kc + bias).  bf16 MXU operands, f32 accumulate/epilogue.
    No padding copies: cdiv grid; the masked last block only produces rows that
    are row-independent garbage and never stored past M."""
    m, k = x2d.shape
    c = w_kc.shape[1]
    tm = _row_tile(m, k)
    out_bytes = 2 if out_dtype == jnp.bfloat16 else 4
    blk = 2 * tm * k * 2 + k * c * 2 + 2 * tm * c * out_bytes
    return pl.pallas_call(
        _mm_bn_relu_kernel,
        out_shape=jax.ShapeDtypeStruct((m, c), out_dtype),
        grid=(pl.cdiv(m, tm),),
        in_specs=[pl.BlockSpec((tm, k), lambda i: (i, 0)),
                  pl.BlockSpec((k, c), lambda i: (0, 0)),
                  pl.BlockSpec((1, c), lambda i: (0, 0))],
        out_specs=pl.BlockSpec((tm, c), lambda i: (i, 0)),
        compiler_params=_compiler_params(blk, ("parallel",)),
    )(x2d, w_kc, bias_p)


# ----------------------------------------------------------------------------
# Kernel 2: fully fused ResidualBlock [+ to_doa head]
#   input  x : (F+2, T+2, C) bf16, zero halo, freq-major
#   conv1  h = relu(BN(conv3x3(x)))      -> lives only in VMEM scratch
#   conv2  z = BN(conv3x3(h)) ; out = relu(z + x)
#   head   y = relu(BN(conv1x1(out)))    (last block only)
# ----------------------------------------------------------------------------
def _make_rblk_kernel(F, T, C, has_head):
    def kernel(x_ref, w1_ref, b1_ref, w2_ref, b2_ref, *rest):
        if has_head:
            w3_ref, b3_ref, o_ref, h_ref = rest
        else:
            o_ref, h_ref = rest

        # zero halo of h (scratch persists across grid steps -> re-zero each step)
        h_ref[...] = jnp.zeros(h_ref.shape, h_ref.dtype)

        # ---- conv1: 9 taps x F freq columns, M = T time rows per matmul --------
        for f in range(F):
            acc = jnp.zeros((T, C), jnp.float32)
            for dt in range(3):
                for df in range(3):
                    acc += jnp.dot(x_ref[f + df, dt:dt + T, :],
                                   w1_ref[dt * 3 + df],
                                   preferred_element_type=jnp.float32)
            h_ref[f + 1, 1:T + 1, :] = jnp.maximum(
                acc + b1_ref[...], 0.0).astype(h_ref.dtype)

        if not has_head:
            # output is the next block's zero-halo input: write the halo zeros
            o_ref[...] = jnp.zeros(o_ref.shape, o_ref.dtype)

        # ---- conv2 + skip add + ReLU [+ fused to_doa 1x1 head] -----------------
        for f in range(F):
            acc = jnp.zeros((T, C), jnp.float32)
            for dt in range(3):
                for df in range(3):
                    acc += jnp.dot(h_ref[f + df, dt:dt + T, :],
                                   w2_ref[dt * 3 + df],
                                   preferred_element_type=jnp.float32)
            skip = x_ref[f + 1, 1:T + 1, :].astype(jnp.float32)
            out = jnp.maximum(acc + b2_ref[...] + skip, 0.0)
            if has_head:
                y = jnp.dot(out.astype(jnp.bfloat16), w3_ref[...],
                            preferred_element_type=jnp.float32)
                o_ref[f, :, :] = jnp.maximum(y + b3_ref[...],
                                             0.0).astype(o_ref.dtype)
            else:
                o_ref[f + 1, 1:T + 1, :] = out.astype(o_ref.dtype)

    return kernel


def fused_residual_block(xpad, blk, head=None):
    """xpad: (N, F+2, T+2, C) bf16 with zero halo.  Returns the next block's
    padded bf16 input, or -- if `head` is given -- the to_doa output
    (N, F, T, n_doa_total) in f32."""
    N, Fp, Tp, C = xpad.shape
    F, T = Fp - 2, Tp - 2
    w1, b1 = blk[0]["w_taps"], blk[0]["bias_p"]
    w2, b2 = blk[1]["w_taps"], blk[1]["bias_p"]
    assert w1.shape == (9, C, C) and w2.shape == (9, C, C)

    args = [xpad, w1, b1, w2, b2]
    in_specs = [
        pl.BlockSpec((None, Fp, Tp, C), lambda n: (n, 0, 0, 0)),
        pl.BlockSpec((9, C, C), lambda n: (0, 0, 0)),
        pl.BlockSpec((1, C), lambda n: (0, 0)),
        pl.BlockSpec((9, C, C), lambda n: (0, 0, 0)),
        pl.BlockSpec((1, C), lambda n: (0, 0)),
    ]
    blk_bytes = 2 * (2 * Fp * Tp * C * 2 + 2 * 9 * C * C * 2) + Fp * Tp * C * 2
    if head is not None:
        w3, b3 = head["w_kc"], head["bias_p"]
        cd = w3.shape[1]
        args += [w3, b3]
        in_specs += [pl.BlockSpec((C, cd), lambda n: (0, 0)),
                     pl.BlockSpec((1, cd), lambda n: (0, 0))]
        out_shape = jax.ShapeDtypeStruct((N, F, T, cd), jnp.float32)
        out_spec = pl.BlockSpec((None, F, T, cd), lambda n: (n, 0, 0, 0))
        blk_bytes += 2 * (C * cd * 2 + F * T * cd * 4)
    else:
        out_shape = jax.ShapeDtypeStruct((N, Fp, Tp, C), jnp.bfloat16)
        out_spec = pl.BlockSpec((None, Fp, Tp, C), lambda n: (n, 0, 0, 0))

    # TODO(synk): for long sequences add a time-tile grid axis with a 2-row halo
    # (recompute h on the halo) so more than N pipeline steps are exposed.
    return pl.pallas_call(
        _make_rblk_kernel(F, T, C, head is not None),
        out_shape=out_shape,
        grid=(N,),
        in_specs=in_specs,
        out_specs=out_spec,
        scratch_shapes=[pltpu.VMEM((Fp, Tp, C), jnp.bfloat16)],
        compiler_params=_compiler_params(blk_bytes, ("parallel",)),
    )(*args)


# ----------------------------------------------------------------------------
# XLA-side glue: im2col for the (strided, unpadded) downsampling convs
# ----------------------------------------------------------------------------
# TODO(synk): fold the ds chain into the in-kernel tap scheme too (needs strided
# time slices for stride_t > 1); kept in XLA since these layers are tiny.
def _im2col(x_nhwc, kt, kf, st, sf):
    N, T, F, C = x_nhwc.shape
    To = (T - kt) // st + 1
    Fo = (F - kf) // sf + 1
    cols = []
    for dt in range(kt):
        for df in range(kf):
            cols.append(lax.slice(
                x_nhwc, (0, dt, df, 0),
                (N, dt + (To - 1) * st + 1, df + (Fo - 1) * sf + 1, C),
                (1, st, sf, 1)))
    p = jnp.stack(cols, axis=3)                 # (N, To, Fo, kt*kf, C)
    return p.reshape(N * To * Fo, kt * kf * C), (N, To, Fo)


# ----------------------------------------------------------------------------
# Parameter construction (Conv2d + BatchNorm2d, eval mode, BN folded)
# ----------------------------------------------------------------------------
def make_conv_bn_params(key, c_in, c_out, kt, kf):
    k = jax.random.split(key, 6)
    w = jax.random.normal(k[0], (c_out, c_in, kt, kf), jnp.float32) * 0.1
    b = jax.random.normal(k[1], (c_out,), jnp.float32) * 0.05
    gamma = 1.0 + 0.1 * jax.random.normal(k[2], (c_out,), jnp.float32)
    beta = 0.05 * jax.random.normal(k[3], (c_out,), jnp.float32)
    mean = 0.05 * jax.random.normal(k[4], (c_out,), jnp.float32)
    var = 1.0 + 0.1 * jnp.abs(jax.random.normal(k[5], (c_out,), jnp.float32))
    scale = gamma / jnp.sqrt(var + BN_EPS)              # folded BN scale
    bias_eff = beta + (b - mean) * scale                # folded BN bias (+conv bias)
    # (C_out, C_in, kt, kf) -> (kt, kf, C_in, C_out), BN scale folded into W
    w_sp = jnp.transpose(w, (2, 3, 1, 0)) * scale
    return dict(
        w=w, b=b, gamma=gamma, beta=beta, mean=mean, var=var,       # f32 reference
        w_taps=w_sp.reshape(kt * kf, c_in, c_out).astype(jnp.bfloat16),
        w_kc=w_sp.reshape(kt * kf * c_in, c_out).astype(jnp.bfloat16),
        bias_p=bias_eff.reshape(1, c_out).astype(jnp.float32))


def build_params(key, c_in, n_doa_total, ds_convs, n_rblk):
    keys = jax.random.split(key, len(ds_convs) + 2 * n_rblk + 1)
    ki = 0
    params = {"ds": [], "rblk": []}
    n_ch = c_in
    for l in ds_convs:
        assert l["c_in"] == n_ch
        params["ds"].append(make_conv_bn_params(
            keys[ki], l["c_in"], l["c_out"], l["kernel"][0], l["kernel"][1]))
        ki += 1
        n_ch = l["c_out"]
    # TODO(synk): ResidualBlock is not defined in the provided source; assumed
    # conv3x3-BN-ReLU -> conv3x3-BN -> identity skip add -> ReLU.
    for _ in range(n_rblk):
        params["rblk"].append([make_conv_bn_params(keys[ki + j], n_ch, n_ch, 3, 3)
                               for j in range(2)])
        ki += 2
    # to_doa: 1x1 Conv(n_ch_trunk -> n_doa_total) + BN + ReLU
    params["to_doa"] = make_conv_bn_params(keys[ki], n_ch, n_doa_total, 1, 1)
    return params


# ----------------------------------------------------------------------------
# DoaResnetTrunk forward (Pallas)
# ----------------------------------------------------------------------------
def doa_resnet_trunk_forward(params, x_nchw, *, ds_cfg, n_doa_total, feat_size):
    # NCHW -> (N, T, F, C); bf16 activations through the trunk
    x = jnp.transpose(x_nchw, (0, 2, 3, 1)).astype(jnp.bfloat16)

    # shared trunk: downsampling Conv-BN-ReLU layers (strided, no padding)
    for lp, (kt, kf, st, sf) in zip(params["ds"], ds_cfg):
        patches, (N, To, Fo) = _im2col(x, kt, kf, st, sf)
        c_out = lp["w_kc"].shape[1]
        x = fused_matmul_bn_relu(patches, lp["w_kc"], lp["bias_p"],
                                 jnp.bfloat16).reshape(N, To, Fo, c_out)

    if params["rblk"]:
        # freq-major zero-halo layout consumed/produced by the fused block kernels
        xp = jnp.pad(jnp.transpose(x, (0, 2, 1, 3)),
                     ((0, 0), (1, 1), (1, 1), (0, 0)))
        n_blk = len(params["rblk"])
        for bi, blk in enumerate(params["rblk"]):
            xp = fused_residual_block(
                xp, blk, head=params["to_doa"] if bi == n_blk - 1 else None)
        y = xp                                   # (N, F, T, n_doa_total), f32
    else:
        # no residual blocks: standalone to_doa 1x1 Conv-BN-ReLU
        N, To, Fo, C = x.shape
        xt = jnp.transpose(x, (0, 2, 1, 3)).reshape(N * Fo * To, C)
        y = fused_matmul_bn_relu(xt, params["to_doa"]["w_kc"],
                                 params["to_doa"]["bias_p"], jnp.float32)
        y = y.reshape(N, Fo, To, params["to_doa"]["w_kc"].shape[1])

    # module output reformat: channel c = feat_idx * n_doa + doa_idx
    # (N, F, T, n_doa_total) -> (N, feat_size * F, T, n_doa)
    N, F, T, _ = y.shape
    n_doa = n_doa_total // feat_size
    y = y.reshape(N, F, T, feat_size, n_doa)
    y = jnp.transpose(y, (0, 3, 1, 2, 4))
    return y.reshape(N, feat_size * F, T, n_doa)


# ----------------------------------------------------------------------------
# Pure-JAX reference (lax.conv, f32) for correctness check
# ----------------------------------------------------------------------------
def _ref_conv_bn(x, p, stride, padding, relu=True):
    y = lax.conv_general_dilated(
        x, p["w"], window_strides=stride,
        padding=[(padding[0], padding[0]), (padding[1], padding[1])],
        dimension_numbers=("NCHW", "OIHW", "NCHW"))
    y = y + p["b"][None, :, None, None]
    y = (y - p["mean"][None, :, None, None]) / jnp.sqrt(
        p["var"][None, :, None, None] + BN_EPS)
    y = y * p["gamma"][None, :, None, None] + p["beta"][None, :, None, None]
    return jnp.maximum(y, 0.0) if relu else y


def ref_forward(params, x, ds_cfg, n_doa_total, feat_size):
    y = x.astype(jnp.float32)
    for lp, (kt, kf, st, sf) in zip(params["ds"], ds_cfg):
        y = _ref_conv_bn(y, lp, (st, sf), (0, 0))
    for blk in params["rblk"]:
        skip = y
        h = _ref_conv_bn(y, blk[0], (1, 1), (1, 1))
        h = _ref_conv_bn(h, blk[1], (1, 1), (1, 1), relu=False)
        y = jnp.maximum(h + skip, 0.0)
    y = _ref_conv_bn(y, params["to_doa"], (1, 1), (0, 0))
    n_data, _, n_time, n_freq = y.shape
    n_doa = n_doa_total // feat_size
    y = y.reshape(n_data, feat_size, n_doa, n_time, n_freq)
    y = jnp.transpose(y, (0, 1, 4, 3, 2))
    return y.reshape(n_data, feat_size * n_freq, n_time, n_doa)


# ----------------------------------------------------------------------------
if __name__ == "__main__":
    key = jax.random.PRNGKey(0)
    k_x, k_p = jax.random.split(key)

    # Small synthetic config consistent with the module.
    N, C_in, T, F = 2, 4, 16, 16                 # x: (data, ch, time, freq)
    n_doa, feat_size = 8, 2
    n_doa_total = n_doa * feat_size              # AbstractDoaResent.n_doa
    n_rblk = 2
    ds_convs = [
        dict(c_in=4, c_out=8, kernel=(3, 3), stride=(1, 2)),
        dict(c_in=8, c_out=16, kernel=(3, 3), stride=(1, 2)),
    ]
    ds_cfg = tuple((l["kernel"][0], l["kernel"][1],
                    l["stride"][0], l["stride"][1]) for l in ds_convs)

    x = jax.random.normal(k_x, (N, C_in, T, F), jnp.float32)
    params = build_params(k_p, C_in, n_doa_total, ds_convs, n_rblk)

    fwd = jax.jit(functools.partial(doa_resnet_trunk_forward, ds_cfg=ds_cfg,
                                    n_doa_total=n_doa_total,
                                    feat_size=feat_size))
    y = jax.block_until_ready(fwd(params, x))

    # Expected output: (data, feat_size * n_freq_trunk, time, n_doa)
    # freq: 16 -> 7 -> 3 ; time: 16 -> 14 -> 12
    assert y.shape == (N, feat_size * 3, 12, n_doa), y.shape
    assert y.dtype == jnp.float32

    y_ref = jax.block_until_ready(
        ref_forward(params, x, ds_cfg, n_doa_total, feat_size))
    max_err = float(jnp.max(jnp.abs(y - y_ref)))
    # bf16 MXU operands / bf16 inter-layer activations vs f32 reference.
    assert jnp.allclose(y, y_ref, rtol=5e-2, atol=5e-2), max_err

    print("KERNEL_OK")
</pallas_src>

<mosaic_0001>
module attributes {stable_mosaic.version = 11 : i64} {
  func.func @_mm_bn_relu_kernel(%arg0: i32, %arg1: memref<196x36xbf16, #tpu.memory_space<vmem>>, %arg2: memref<36x8xbf16, #tpu.memory_space<vmem>>, %arg3: memref<1x8xf32, #tpu.memory_space<vmem>>, %arg4: memref<196x8xbf16, #tpu.memory_space<vmem>>) attributes {dimension_semantics = [#tpu.dimension_semantics<parallel>], iteration_bounds = array<i64: 1>, scalar_prefetch = 0 : i64, scratch_operands = 0 : i64, tpu.core_type = #tpu.core_type<tc>, window_params = [{transform_indices = @transform_0, window_bounds = array<i64: 196, 36>}, {pipeline_mode = #tpu.pipeline_mode<synchronous>, transform_indices = @transform_1, window_bounds = array<i64: 36, 8>}, {pipeline_mode = #tpu.pipeline_mode<synchronous>, transform_indices = @transform_2, window_bounds = array<i64: 1, 8>}, {transform_indices = @transform_3, window_bounds = array<i64: 196, 8>}]} {
    %c0 = arith.constant 0 : index
    %c0_0 = arith.constant 0 : index
    %0 = vector.load %arg1[%c0, %c0_0] : memref<196x36xbf16, #tpu.memory_space<vmem>>, vector<196x36xbf16>
    %c0_1 = arith.constant 0 : index
    %c0_2 = arith.constant 0 : index
    %1 = vector.load %arg2[%c0_1, %c0_2] : memref<36x8xbf16, #tpu.memory_space<vmem>>, vector<36x8xbf16>
    %cst = arith.constant dense<0.000000e+00> : vector<196x8xf32>
    %2 = tpu.matmul %0, %1, %cst {dimension_numbers = #tpu.dot_dimension_numbers<[1], [0], [0], [1], [0, 0, 1, 1], [], []>} : vector<196x36xbf16>, vector<36x8xbf16>, vector<196x8xf32> -> vector<196x8xf32>
    %c0_3 = arith.constant 0 : index
    %c0_4 = arith.constant 0 : index
    %3 = vector.load %arg3[%c0_3, %c0_4] : memref<1x8xf32, #tpu.memory_space<vmem>>, vector<1x8xf32>
    %4 = vector.broadcast %3 : vector<1x8xf32> to vector<196x8xf32>
    %5 = arith.addf %2, %4 : vector<196x8xf32>
    %cst_5 = arith.constant 0.000000e+00 : f32
    %6 = vector.broadcast %cst_5 : f32 to vector<196x8xf32>
    %7 = arith.maximumf %5, %6 : vector<196x8xf32>
    %8 = arith.truncf %7 : vector<196x8xf32> to vector<196x8xbf16>
    %c0_6 = arith.constant 0 : index
    %c0_7 = arith.constant 0 : index
    %9 = vector.load %arg4[%c0_6, %c0_7] : memref<196x8xbf16, #tpu.memory_space<vmem>>, vector<196x8xbf16>
    tpu.vector_store %arg4[%c0_6, %c0_7], %8 {strides = array<i32>} : memref<196x8xbf16, #tpu.memory_space<vmem>>, vector<196x8xbf16>,
    return
  }
  func.func @transform_0(%arg0: i32) -> (i32, i32) {
    %c0_i32 = arith.constant 0 : i32
    %c0_i32_0 = arith.constant 0 : i32
    return %arg0, %c0_i32 : i32, i32
  }
  func.func @transform_1(%arg0: i32) -> (i32, i32) {
    %c0_i32 = arith.constant 0 : i32
    %c0_i32_0 = arith.constant 0 : i32
    %c0_i32_1 = arith.constant 0 : i32
    return %c0_i32, %c0_i32_0 : i32, i32
  }
  func.func @transform_2(%arg0: i32) -> (i32, i32) {
    %c0_i32 = arith.constant 0 : i32
    %c0_i32_0 = arith.constant 0 : i32
    %c0_i32_1 = arith.constant 0 : i32
    return %c0_i32, %c0_i32_0 : i32, i32
  }
  func.func @transform_3(%arg0: i32) -> (i32, i32) {
    %c0_i32 = arith.constant 0 : i32
    %c0_i32_0 = arith.constant 0 : i32
    return %arg0, %c0_i32 : i32, i32
  }
}

module attributes {stable_mosaic.version = 11 : i64} {
  func.func @_mm_bn_relu_kernel(%arg0: i32, %arg1: memref<72x72xbf16, #tpu.memory_space<vmem>>, %arg2: memref<72x16xbf16, #tpu.memory_space<vmem>>, %arg3: memref<1x16xf32, #tpu.memory_space<vmem>>, %arg4: memref<72x16xbf16, #tpu.memory_space<vmem>>) attributes {dimension_semantics = [#tpu.dimension_semantics<parallel>], iteration_bounds = array<i64: 1>, scalar_prefetch = 0 : i64, scratch_operands = 0 : i64, tpu.core_type = #tpu.core_type<tc>, window_params = [{transform_indices = @transform_0, window_bounds = array<i64: 72, 72>}, {pipeline_mode = #tpu.pipeline_mode<synchronous>, transform_indices = @transform_1, window_bounds = array<i64: 72, 16>}, {pipeline_mode = #tpu.pipeline_mode<synchronous>, transform_indices = @transform_2, window_bounds = array<i64: 1, 16>}, {transform_indices = @transform_3, window_bounds = array<i64: 72, 16>}]} {
    %c0 = arith.constant 0 : index
    %c0_0 = arith.constant 0 : index
    %0 = vector.load %arg1[%c0, %c0_0] : memref<72x72xbf16, #tpu.memory_space<vmem>>, vector<72x72xbf16>
    %c0_1 = arith.constant 0 : index
    %c0_2 = arith.constant 0 : index
    %1 = vector.load %arg2[%c0_1, %c0_2] : memref<72x16xbf16, #tpu.memory_space<vmem>>, vector<72x16xbf16>
    %cst = arith.constant dense<0.000000e+00> : vector<72x16xf32>
    %2 = tpu.matmul %0, %1, %cst {dimension_numbers = #tpu.dot_dimension_numbers<[1], [0], [0], [1], [0, 0, 1, 1], [], []>} : vector<72x72xbf16>, vector<72x16xbf16>, vector<72x16xf32> -> vector<72x16xf32>
    %c0_3 = arith.constant 0 : index
    %c0_4 = arith.constant 0 : index
    %3 = vector.load %arg3[%c0_3, %c0_4] : memref<1x16xf32, #tpu.memory_space<vmem>>, vector<1x16xf32>
    %4 = vector.broadcast %3 : vector<1x16xf32> to vector<72x16xf32>
    %5 = arith.addf %2, %4 : vector<72x16xf32>
    %cst_5 = arith.constant 0.000000e+00 : f32
    %6 = vector.broadcast %cst_5 : f32 to vector<72x16xf32>
    %7 = arith.maximumf %5, %6 : vector<72x16xf32>
    %8 = arith.truncf %7 : vector<72x16xf32> to vector<72x16xbf16>
    %c0_6 = arith.constant 0 : index
    %c0_7 = arith.constant 0 : index
    %9 = vector.load %arg4[%c0_6, %c0_7] : memref<72x16xbf16, #tpu.memory_space<vmem>>, vector<72x16xbf16>
    tpu.vector_store %arg4[%c0_6, %c0_7], %8 {strides = array<i32>} : memref<72x16xbf16, #tpu.memory_space<vmem>>, vector<72x16xbf16>,
    return
  }
  func.func @transform_0(%arg0: i32) -> (i32, i32) {
    %c0_i32 = arith.constant 0 : i32
    %c0_i32_0 = arith.constant 0 : i32
    return %arg0, %c0_i32 : i32, i32
  }
  func.func @transform_1(%arg0: i32) -> (i32, i32) {
    %c0_i32 = arith.constant 0 : i32
    %c0_i32_0 = arith.constant 0 : i32
    %c0_i32_1 = arith.constant 0 : i32
    return %c0_i32, %c0_i32_0 : i32, i32
  }
  func.func @transform_2(%arg0: i32) -> (i32, i32) {
    %c0_i32 = arith.constant 0 : i32
    %c0_i32_0 = arith.constant 0 : i32
    %c0_i32_1 = arith.constant 0 : i32
    return %c0_i32, %c0_i32_0 : i32, i32
  }
  func.func @transform_3(%arg0: i32) -> (i32, i32) {
    %c0_i32 = arith.constant 0 : i32
    %c0_i32_0 = arith.constant 0 : i32
    return %arg0, %c0_i32 : i32, i32
  }
}

module attributes {stable_mosaic.version = 11 : i64} {
  func.func @kernel(%arg0: i32, %arg1: memref<1x5x14x16xbf16, #tpu.memory_space<vmem>>, %arg2: memref<9x16x16xbf16, #tpu.memory_space<vmem>>, %arg3: memref<1x16xf32, #tpu.memory_space<vmem>>, %arg4: memref<9x16x16xbf16, #tpu.memory_space<vmem>>, %arg5: memref<1x16xf32, #tpu.memory_space<vmem>>, %arg6: memref<1x5x14x16xbf16, #tpu.memory_space<vmem>>, %arg7: memref<5x14x16xbf16, #tpu.memory_space<vmem>>) attributes {dimension_semantics = [#tpu.dimension_semantics<parallel>], iteration_bounds = array<i64: 2>, scalar_prefetch = 0 : i64, scratch_operands = 1 : i64, tpu.core_type = #tpu.core_type<tc>, window_params = [{transform_indices = @transform_0, window_bounds = array<i64: 1, 5, 14, 16>}, {pipeline_mode = #tpu.pipeline_mode<synchronous>, transform_indices = @transform_1, window_bounds = array<i64: 9, 16, 16>}, {pipeline_mode = #tpu.pipeline_mode<synchronous>, transform_indices = @transform_2, window_bounds = array<i64: 1, 16>}, {pipeline_mode = #tpu.pipeline_mode<synchronous>, transform_indices = @transform_3, window_bounds = array<i64: 9, 16, 16>}, {pipeline_mode = #tpu.pipeline_mode<synchronous>, transform_indices = @transform_4, window_bounds = array<i64: 1, 16>}, {transform_indices = @transform_5, window_bounds = array<i64: 1, 5, 14, 16>}]} {
    %cst = arith.constant 0.000000e+00 : bf16
    %0 = vector.broadcast %cst : bf16 to vector<5x14x16xbf16>
    %c0 = arith.constant 0 : index
    %c0_0 = arith.constant 0 : index
    %c0_1 = arith.constant 0 : index
    %1 = vector.load %arg7[%c0, %c0_0, %c0_1] : memref<5x14x16xbf16, #tpu.memory_space<vmem>>, vector<5x14x16xbf16>
    tpu.vector_store %arg7[%c0, %c0_0, %c0_1], %0 {strides = array<i32>} : memref<5x14x16xbf16, #tpu.memory_space<vmem>>, vector<5x14x16xbf16>,
    %cst_2 = arith.constant 0.000000e+00 : f32
    %2 = vector.broadcast %cst_2 : f32 to vector<12x16xf32>
    %c0_3 = arith.constant 0 : index
    %c0_4 = arith.constant 0 : index
    %c0_5 = arith.constant 0 : index
    %c0_6 = arith.constant 0 : index
    %3 = vector.load %arg1[%c0_3, %c0_4, %c0_5, %c0_6] : memref<1x5x14x16xbf16, #tpu.memory_space<vmem>>, vector<1x1x12x16xbf16>
    %4 = vector.shape_cast %3 : vector<1x1x12x16xbf16> to vector<12x16xbf16>
    %c0_7 = arith.constant 0 : index
    %c0_8 = arith.constant 0 : index
    %c0_9 = arith.constant 0 : index
    %5 = vector.load %arg2[%c0_7, %c0_8, %c0_9] : memref<9x16x16xbf16, #tpu.memory_space<vmem>>, vector<1x16x16xbf16>
    %6 = vector.shape_cast %5 : vector<1x16x16xbf16> to vector<16x16xbf16>
    %cst_10 = arith.constant dense<0.000000e+00> : vector<12x16xf32>
    %7 = tpu.matmul %4, %6, %cst_10 {dimension_numbers = #tpu.dot_dimension_numbers<[1], [0], [0], [1], [0, 0, 1, 1], [], []>} : vector<12x16xbf16>, vector<16x16xbf16>, vector<12x16xf32> -> vector<12x16xf32>
    %8 = arith.addf %2, %7 : vector<12x16xf32>
    %c0_11 = arith.constant 0 : index
    %c1 = arith.constant 1 : index
    %c0_12 = arith.constant 0 : index
    %c0_13 = arith.constant 0 : index
    %9 = vector.load %arg1[%c0_11, %c1, %c0_12, %c0_13] : memref<1x5x14x16xbf16, #tpu.memory_space<vmem>>, vector<1x1x12x16xbf16>
    %10 = vector.shape_cast %9 : vector<1x1x12x16xbf16> to vector<12x16xbf16>
    %c1_14 = arith.constant 1 : index
    %c0_15 = arith.constant 0 : index
    %c0_16 = arith.constant 0 : index
    %11 = vector.load %arg2[%c1_14, %c0_15, %c0_16] : memref<9x16x16xbf16, #tpu.memory_space<vmem>>, vector<1x16x16xbf16>
    %12 = vector.shape_cast %11 : vector<1x16x16xbf16> to vector<16x16xbf16>
    %cst_17 = arith.constant dense<0.000000e+00> : vector<12x16xf32>
    %13 = tpu.matmul %10, %12, %cst_17 {dimension_numbers = #tpu.dot_dimension_numbers<[1], [0], [0], [1], [0, 0, 1, 1], [], []>} : vector<12x16xbf16>, vector<16x16xbf16>, vector<12x16xf32> -> vector<12x16xf32>
    %14 = arith.addf %8, %13 : vector<12x16xf32>
    %c0_18 = arith.constant 0 : index
    %c2 = arith.constant 2 : index
    %c0_19 = arith.constant 0 : index
    %c0_20 = arith.constant 0 : index
    %15 = vector.load %arg1[%c0_18, %c2, %c0_19, %c0_20] : memref<1x5x14x16xbf16, #tpu.memory_space<vmem>>, vector<1x1x12x16xbf16>
    %16 = vector.shape_cast %15 : vector<1x1x12x16xbf16> to vector<12x16xbf16>
    %c2_21 = arith.constant 2 : index
    %c0_22 = arith.constant 0 : index
    %c0_23 = arith.constant 0 : index
    %17 = vector.load %arg2[%c2_21, %c0_22, %c0_23] : memref<9x16x16xbf16, #tpu.memory_space<vmem>>, vector<1x16x16xbf16>
    %18 = vector.shape_cast %17 : vector<1x16x16xbf16> to vector<16x16xbf16>
    %cst_24 = arith.constant dense<0.000000e+00> : vector<12x16xf32>
    %19 = tpu.matmul %16, %18, %cst_24 {dimension_numbers = #tpu.dot_dimension_numbers<[1], [0], [0], [1], [0, 0, 1, 1], [], []>} : vector<12x16xbf16>, vector<16x16xbf16>, vector<12x16xf32> -> vector<12x16xf32>
    %20 = arith.addf %14, %19 : vector<12x16xf32>
    %c0_25 = arith.constant 0 : index
    %c0_26 = arith.constant 0 : index
    %c1_27 = arith.constant 1 : index
    %c0_28 = arith.constant 0 : index
    %21 = vector.load %arg1[%c0_25, %c0_26, %c1_27, %c0_28] : memref<1x5x14x16xbf16, #tpu.memory_space<vmem>>, vector<1x1x12x16xbf16>
    %22 = vector.shape_cast %21 : vector<1x1x12x16xbf16> to vector<12x16xbf16>
    %c3 = arith.constant 3 : index
    %c0_29 = arith.constant 0 : index
    %c0_30 = arith.constant 0 : index
    %23 = vector.load %arg2[%c3, %c0_29, %c0_30] : memref<9x16x16xbf16, #tpu.memory_space<vmem>>, vector<1x16x16xbf16>
    %24 = vector.shape_cast %23 : vector<1x16x16xbf16> to vector<16x16xbf16>
    %cst_31 = arith.constant dense<0.000000e+00> : vector<12x16xf32>
    %25 = tpu.matmul %22, %24, %cst_31 {dimension_numbers = #tpu.dot_dimension_numbers<[1], [0], [0], [1], [0, 0, 1, 1], [], []>} : vector<12x16xbf16>, vector<16x16xbf16>, vector<12x16xf32> -> vector<12x16xf32>
    %26 = arith.addf %20, %25 : vector<12x16xf32>
    %c0_32 = arith.constant 0 : index
    %c1_33 = arith.constant 1 : index
    %c1_34 = arith.constant 1 : index
    %c0_35 = arith.constant 0 : index
    %27 = vector.load %arg1[%c0_32, %c1_33, %c1_34, %c0_35] : memref<1x5x14x16xbf16, #tpu.memory_space<vmem>>, vector<1x1x12x16xbf16>
    %28 = vector.shape_cast %27 : vector<1x1x12x16xbf16> to vector<12x16xbf16>
    %c4 = arith.constant 4 : index
    %c0_36 = arith.constant 0 : index
    %c0_37 = arith.constant 0 : index
    %29 = vector.load %arg2[%c4, %c0_36, %c0_37] : memref<9x16x16xbf16, #tpu.memory_space<vmem>>, vector<1x16x16xbf16>
    %30 = vector.shape_cast %29 : vector<1x16x16xbf16> to vector<16x16xbf16>
    %cst_38 = arith.constant dense<0.000000e+00> : vector<12x16xf32>
    %31 = tpu.matmul %28, %30, %cst_38 {dimension_numbers = #tpu.dot_dimension_numbers<[1], [0], [0], [1], [0, 0, 1, 1], [], []>} : vector<12x16xbf16>, vector<16x16xbf16>, vector<12x16xf32> -> vector<12x16xf32>
    %32 = arith.addf %26, %31 : vector<12x16xf32>
    %c0_39 = arith.constant 0 : index
    %c2_40 = arith.constant 2 : index
    %c1_41 = arith.constant 1 : index
    %c0_42 = arith.constant 0 : index
    %33 = vector.load %arg1[%c0_39, %c2_40, %c1_41, %c0_42] : memref<1x5x14x16xbf16, #tpu.memory_space<vmem>>, vector<1x1x12x16xbf16>
    %34 = vector.shape_cast %33 : vector<1x1x12x16xbf16> to vector<12x16xbf16>
    %c5 = arith.constant 5 : index
    %c0_43 = arith.constant 0 : index
    %c0_44 = arith.constant 0 : index
    %35 = vector.load %arg2[%c5, %c0_43, %c0_44] : memref<9x16x16xbf16, #tpu.memory_space<vmem>>, vector<1x16x16xbf16>
    %36 = vector.shape_cast %35 : vector<1x16x16xbf16> to vector<16x16xbf16>
    %cst_45 = arith.constant dense<0.000000e+00> : vector<12x16xf32>
    %37 = tpu.matmul %34, %36, %cst_45 {dimension_numbers = #tpu.dot_dimension_numbers<[1], [0], [0], [1], [0, 0, 1, 1], [], []>} : vector<12x16xbf16>, vector<16x16xbf16>, vector<12x16xf32> -> vector<12x16xf32>
    %38 = arith.addf %32, %37 : vector<12x16xf32>
    %c0_46 = arith.constant 0 : index
    %c0_47 = arith.constant 0 : index
    %c2_48 = arith.constant 2 : index
    %c0_49 = arith.constant 0 : index
    %39 = vector.load %arg1[%c0_46, %c0_47, %c2_48, %c0_49] : memref<1x5x14x16xbf16, #tpu.memory_space<vmem>>, vector<1x1x12x16xbf16>
    %40 = vector.shape_cast %39 : vector<1x1x12x16xbf16> to vector<12x16xbf16>
    %c6 = arith.constant 6 : index
    %c0_50 = arith.constant 0 : index
    %c0_51 = arith.constant 0 : index
    %41 = vector.load %arg2[%c6, %c0_50, %c0_51] : memref<9x16x16xbf16, #tpu.memory_space<vmem>>, vector<1x16x16xbf16>
    %42 = vector.shape_cast %41 : vector<1x16x16xbf16> to vector<16x16xbf16>
    %cst_52 = arith.constant dense<0.000000e+00> : vector<12x16xf32>
    %43 = tpu.matmul %40, %42, %cst_52 {dimension_numbers = #tpu.dot_dimension_numbers<[1], [0], [0], [1], [0, 0, 1, 1], [], []>} : vector<12x16xbf16>, vector<16x16xbf16>, vector<12x16xf32> -> vector<12x16xf32>
    %44 = arith.addf %38, %43 : vector<12x16xf32>
    %c0_53 = arith.constant 0 : index
    %c1_54 = arith.constant 1 : index
    %c2_55 = arith.constant 2 : index
    %c0_56 = arith.constant 0 : index
    %45 = vector.load %arg1[%c0_53, %c1_54, %c2_55, %c0_56] : memref<1x5x14x16xbf16, #tpu.memory_space<vmem>>, vector<1x1x12x16xbf16>
    %46 = vector.shape_cast %45 : vector<1x1x12x16xbf16> to vector<12x16xbf16>
    %c7 = arith.constant 7 : index
    %c0_57 = arith.constant 0 : index
    %c0_58 = arith.constant 0 : index
    %47 = vector.load %arg2[%c7, %c0_57, %c0_58] : memref<9x16x16xbf16, #tpu.memory_space<vmem>>, vector<1x16x16xbf16>
    %48 = vector.shape_cast %47 : vector<1x16x16xbf16> to vector<16x16xbf16>
    %cst_59 = arith.constant dense<0.000000e+00> : vector<12x16xf32>
    %49 = tpu.matmul %46, %48, %cst_59 {dimension_numbers = #tpu.dot_dimension_numbers<[1], [0], [0], [1], [0, 0, 1, 1], [], []>} : vector<12x16xbf16>, vector<16x16xbf16>, vector<12x16xf32> -> vector<12x16xf32>
    %50 = arith.addf %44, %49 : vector<12x16xf32>
    %c0_60 = arith.constant 0 : index
    %c2_61 = arith.constant 2 : index
    %c2_62 = arith.constant 2 : index
    %c0_63 = arith.constant 0 : index
    %51 = vector.load %arg1[%c0_60, %c2_61, %c2_62, %c0_63] : memref<1x5x14x16xbf16, #tpu.memory_space<vmem>>, vector<1x1x12x16xbf16>
    %52 = vector.shape_cast %51 : vector<1x1x12x16xbf16> to vector<12x16xbf16>
    %c8 = arith.constant 8 : index
    %c0_64 = arith.constant 0 : index
    %c0_65 = arith.constant 0 : index
    %53 = vector.load %arg2[%c8, %c0_64, %c0_65] : memref<9x16x16xbf16, #tpu.memory_space<vmem>>, vector<1x16x16xbf16>
    %54 = vector.shape_cast %53 : vector<1x16x16xbf16> to vector<16x16xbf16>
    %cst_66 = arith.constant dense<0.000000e+00> : vector<12x16xf32>
    %55 = tpu.matmul %52, %54, %cst_66 {dimension_numbers = #tpu.dot_dimension_numbers<[1], [0], [0], [1], [0, 0, 1, 1], [], []>} : vector<12x16xbf16>, vector<16x16xbf16>, vector<12x16xf32> -> vector<12x16xf32>
    %56 = arith.addf %50, %55 : vector<12x16xf32>
    %c0_67 = arith.constant 0 : index
    %c0_68 = arith.constant 0 : index
    %57 = vector.load %arg3[%c0_67, %c0_68] : memref<1x16xf32, #tpu.memory_space<vmem>>, vector<1x16xf32>
    %58 = vector.broadcast %57 : vector<1x16xf32> to vector<12x16xf32>
    %59 = arith.addf %56, %58 : vector<12x16xf32>
    %cst_69 = arith.constant 0.000000e+00 : f32
    %60 = vector.broadcast %cst_69 : f32 to vector<12x16xf32>
    %61 = arith.maximumf %59, %60 : vector<12x16xf32>
    %62 = arith.truncf %61 : vector<12x16xf32> to vector<12x16xbf16>
    %c1_70 = arith.constant 1 : index
    %c1_71 = arith.constant 1 : index
    %c0_72 = arith.constant 0 : index
    %63 = vector.load %arg7[%c1_70, %c1_71, %c0_72] : memref<5x14x16xbf16, #tpu.memory_space<vmem>>, vector<1x12x16xbf16>
    %64 = vector.shape_cast %63 : vector<1x12x16xbf16> to vector<12x16xbf16>
    %65 = vector.shape_cast %62 : vector<12x16xbf16> to vector<1x12x16xbf16>
    tpu.vector_store %arg7[%c1_70, %c1_71, %c0_72], %65 {strides = array<i32>} : memref<5x14x16xbf16, #tpu.memory_space<vmem>>, vector<1x12x16xbf16>,
    %cst_73 = arith.constant 0.000000e+00 : f32
    %66 = vector.broadcast %cst_73 : f32 to vector<12x16xf32>
    %c0_74 = arith.constant 0 : index
    %c1_75 = arith.constant 1 : index
    %c0_76 = arith.constant 0 : index
    %c0_77 = arith.constant 0 : index
    %67 = vector.load %arg1[%c0_74, %c1_75, %c0_76, %c0_77] : memref<1x5x14x16xbf16, #tpu.memory_space<vmem>>, vector<1x1x12x16xbf16>
    %68 = vector.shape_cast %67 : vector<1x1x12x16xbf16> to vector<12x16xbf16>
    %c0_78 = arith.constant 0 : index
    %c0_79 = arith.constant 0 : index
    %c0_80 = arith.constant 0 : index
    %69 = vector.load %arg2[%c0_78, %c0_79, %c0_80] : memref<9x16x16xbf16, #tpu.memory_space<vmem>>, vector<1x16x16xbf16>
    %70 = vector.shape_cast %69 : vector<1x16x16xbf16> to vector<16x16xbf16>
    %cst_81 = arith.constant dense<0.000000e+00> : vector<12x16xf32>
    %71 = tpu.matmul %68, %70, %cst_81 {dimension_numbers = #tpu.dot_dimension_numbers<[1], [0], [0], [1], [0, 0, 1, 1], [], []>} : vector<12x16xbf16>, vector<16x16xbf16>, vector<12x16xf32> -> vector<12x16xf32>
    %72 = arith.addf %66, %71 : vector<12x16xf32>
    %c0_82 = arith.constant 0 : index
    %c2_83 = arith.constant 2 : index
    %c0_84 = arith.constant 0 : index
    %c0_85 = arith.constant 0 : index
    %73 = vector.load %arg1[%c0_82, %c2_83, %c0_84, %c0_85] : memref<1x5x14x16xbf16, #tpu.memory_space<vmem>>, vector<1x1x12x16xbf16>
    %74 = vector.shape_cast %73 : vector<1x1x12x16xbf16> to vector<12x16xbf16>
    %c1_86 = arith.constant 1 : index
    %c0_87 = arith.constant 0 : index
    %c0_88 = arith.constant 0 : index
    %75 = vector.load %arg2[%c1_86, %c0_87, %c0_88] : memref<9x16x16xbf16, #tpu.memory_space<vmem>>, vector<1x16x16xbf16>
    %76 = vector.shape_cast %75 : vector<1x16x16xbf16> to vector<16x16xbf16>
    %cst_89 = arith.constant dense<0.000000e+00> : vector<12x16xf32>
    %77 = tpu.matmul %74, %76, %cst_89 {dimension_numbers = #tpu.dot_dimension_numbers<[1], [0], [0], [1], [0, 0, 1, 1], [], []>} : vector<12x16xbf16>, vector<16x16xbf16>, vector<12x16xf32> -> vector<12x16xf32>
    %78 = arith.addf %72, %77 : vector<12x16xf32>
    %c0_90 = arith.constant 0 : index
    %c3_91 = arith.constant 3 : index
    %c0_92 = arith.constant 0 : index
    %c0_93 = arith.constant 0 : index
    %79 = vector.load %arg1[%c0_90, %c3_91, %c0_92, %c0_93] : memref<1x5x14x16xbf16, #tpu.memory_space<vmem>>, vector<1x1x12x16xbf16>
    %80 = vector.shape_cast %79 : vector<1x1x12x16xbf16> to vector<12x16xbf16>
    %c2_94 = arith.constant 2 : index
    %c0_95 = arith.constant 0 : index
    %c0_96 = arith.constant 0 : index
    %81 = vector.load %arg2[%c2_94, %c0_95, %c0_96] : memref<9x16x16xbf16, #tpu.memory_space<vmem>>, vector<1x16x16xbf16>
    %82 = vector.shape_cast %81 : vector<1x16x16xbf16> to vector<16x16xbf16>
    %cst_97 = arith.constant dense<0.000000e+00> : vector<12x16xf32>
    %83 = tpu.matmul %80, %82, %cst_97 {dimension_numbers = #tpu.dot_dimension_numbers<[1], [0], [0], [1], [0, 0, 1, 1], [], []>} : vector<12x16xbf16>, vector<16x16xbf16>, vector<12x16xf32> -> vector<12x16xf32>
    %84 = arith.addf %78, %83 : vector<12x16xf32>
    %c0_98 = arith.constant 0 : index
    %c1_99 = arith.constant 1 : index
    %c1_100 = arith.constant 1 : index
    %c0_101 = arith.constant 0 : index
    %85 = vector.load %arg1[%c0_98, %c1_99, %c1_100, %c0_101] : memref<1x5x14x16xbf16, #tpu.memory_space<vmem>>, vector<1x1x12x16xbf16>
    %86 = vector.shape_cast %85 : vector<1x1x12x16xbf16> to vector<12x16xbf16>
    %c3_102 = arith.constant 3 : index
    %c0_103 = arith.constant 0 : index
    %c0_104 = arith.constant 0 : index
    %87 = vector.load %arg2[%c3_102, %c0_103, %c0_104] : memref<9x16x16xbf16, #tpu.memory_space<vmem>>, vector<1x16x16xbf16>
    %88 = vector.shape_cast %87 : vector<1x16x16xbf16> to vector<16x16xbf16>
    %cst_105 = arith.constant dense<0.000000e+00> : vector<12x16xf32>
    %89 = tpu.matmul %86, %88, %cst_105 {dimension_numbers = #tpu.dot_dimension_numbers<[1], [0], [0], [1], [0, 0, 1, 1], [], []>} : vector<12x16xbf16>, vector<16x16xbf16>, vector<12x16xf32> -> vector<12x16xf32>
    %90 = arith.addf %84, %89 : vector<12x16xf32>
    %c0_106 = arith.constant 0 : index
    %c2_107 = arith.constant 2 : index
    %c1_108 = arith.constant 1 : index
    %c0_109 = arith.constant 0 : index
    %91 = vector.load %arg1[%c0_106, %c2_107, %c1_108, %c0_109] : memref<1x5x14x16xbf16, #tpu.memory_space<vmem>>, vector<1x1x12x16xbf16>
    %92 = vector.shape_cast %91 : vector<1x1x12x16xbf16> to vector<12x16xbf16>
    %c4_110 = arith.constant 4 : index
    %c0_111 = arith.constant 0 : index
    %c0_112 = arith.constant 0 : index
    %93 = vector.load %arg2[%c4_110, %c0_111, %c0_112] : memref<9x16x16xbf16, #tpu.memory_space<vmem>>, vector<1x16x16xbf16>
    %94 = vector.shape_cast %93 : vector<1x16x16xbf16> to vector<16x16xbf16>
    %cst_113 = arith.constant dense<0.000000e+00> : vector<12x16xf32>
    %95 = tpu.matmul %92, %94, %cst_113 {dimension_numbers = #tpu.dot_dimension_numbers<[1], [0], [0], [1], [0, 0, 1, 1], [], []>} : vector<12x16xbf16>, vector<16x16xbf16>, vector<12x16xf32> -> vector<12x16xf32>
    %96 = arith.addf %90, %95 : vector<12x16xf32>
    %c0_114 = arith.constant 0 : index
    %c3_115 = arith.constant 3 : index
    %c1_116 = arith.constant 1 : index
    %c0_117 = arith.constant 0 : index
    %97 = vector.load %arg1[%c0_114, %c3_115, %c1_116, %c0_117] : memref<1x5x14x16xbf16, #tpu.memory_space<vmem>>, vector<1x1x12x16xbf16>
    %98 = vector.shape_cast %97 : vector<1x1x12x16xbf16> to vector<12x16xbf16>
    %c5_118 = arith.constant 5 : index
    %c0_119 = arith.constant 0 : index
    %c0_120 = arith.constant 0 : index
    %99 = vector.load %arg2[%c5_118, %c0_119, %c0_120] : memref<9x16x16xbf16, #tpu.memory_space<vmem>>, vector<1x16x16xbf16>
    %100 = vector.shape_cast %99 : vector<1x16x16xbf16> to vector<16x16xbf16>
    %cst_121 = arith.constant dense<0.000000e+00> : vector<12x16xf32>
    %101 = tpu.matmul %98, %100, %cst_121 {dimension_numbers = #tpu.dot_dimension_numbers<[1], [0], [0], [1], [0, 0, 1, 1], [], []>} : vector<12x16xbf16>, vector<16x16xbf16>, vector<12x16xf32> -> vector<12x16xf32>
    %102 = arith.addf %96, %101 : vector<12x16xf32>
    %c0_122 = arith.constant 0 : index
    %c1_123 = arith.constant 1 : index
    %c2_124 = arith.constant 2 : index
    %c0_125 = arith.constant 0 : index
    %103 = vector.load %arg1[%c0_122, %c1_123, %c2_124, %c0_125] : memref<1x5x14x16xbf16, #tpu.memory_space<vmem>>, vector<1x1x12x16xbf16>
    %104 = vector.shape_cast %103 : vector<1x1x12x16xbf16> to vector<12x16xbf16>
    %c6_126 = arith.constant 6 : index
    %c0_127 = arith.constant 0 : index
    %c0_128 = arith.constant 0 : index
    %105 = vector.load %arg2[%c6_126, %c0_127, %c0_128] : memref<9x16x16xbf16, #tpu.memory_space<vmem>>, vector<1x16x16xbf16>
    %106 = vector.shape_cast %105 : vector<1x16x16xbf16> to vector<16x16xbf16>
    %cst_129 = arith.constant dense<0.000000e+00> : vector<12x16xf32>
    %107 = tpu.matmul %104, %106, %cst_129 {dimension_numbers = #tpu.dot_dimension_numbers<[1], [0], [0], [1], [0, 0, 1, 1], [], []>} : vector<12x16xbf16>, vector<16x16xbf16>, vector<12x16xf32> -> vector<12x16xf32>
    %108 = arith.addf %102, %107 : vector<12x16xf32>
    %c0_130 = arith.constant 0 : index
    %c2_131 = arith.constant 2 : index
    %c2_132 = arith.constant 2 : index
    %c0_133 = arith.constant 0 : index
    %109 = vector.load %arg1[%c0_130, %c2_131, %c2_132, %c0_133] : memref<1x5x14x16xbf16, #tpu.memory_space<vmem>>, vector<1x1x12x16xbf16>
    %110 = vector.shape_cast %109 : vector<1x1x12x16xbf16> to vector<12x16xbf16>
    %c7_134 = arith.constant 7 : index
    %c0_135 = arith.constant 0 : index
    %c0_136 = arith.constant 0 : index
    %111 = vector.load %arg2[%c7_134, %c0_135, %c0_136] : memref<9x16x16xbf16, #tpu.memory_space<vmem>>, vector<1x16x16xbf16>
    %112 = vector.shape_cast %111 : vector<1x16x16xbf16> to vector<16x16xbf16>
    %cst_137 = arith.constant dense<0.000000e+00> : vector<12x16xf32>
    %113 = tpu.matmul %110, %112, %cst_137 {dimension_numbers = #tpu.dot_dimension_numbers<[1], [0], [0], [1], [0, 0, 1, 1], [], []>} : vector<12x16xbf16>, vector<16x16xbf16>, vector<12x16xf32> -> vector<12x16xf32>
    %114 = arith.addf %108, %113 : vector<12x16xf32>
    %c0_138 = arith.constant 0 : index
    %c3_139 = arith.constant 3 : index
    %c2_140 = arith.constant 2 : index
    %c0_141 = arith.constant 0 : index
    %115 = vector.load %arg1[%c0_138, %c3_139, %c2_140, %c0_141] : memref<1x5x14x16xbf16, #tpu.memory_space<vmem>>, vector<1x1x12x16xbf16>
    %116 = vector.shape_cast %115 : vector<1x1x12x16xbf16> to vector<12x16xbf16>
    %c8_142 = arith.constant 8 : index
    %c0_143 = arith.constant 0 : index
    %c0_144 = arith.constant 0 : index
    %117 = vector.load %arg2[%c8_142, %c0_143, %c0_144] : memref<9x16x16xbf16, #tpu.memory_space<vmem>>, vector<1x16x16xbf16>
    %118 = vector.shape_cast %117 : vector<1x16x16xbf16> to vector<16x16xbf16>
    %cst_145 = arith.constant dense<0.000000e+00> : vector<12x16xf32>
    %119 = tpu.matmul %116, %118, %cst_145 {dimension_numbers = #tpu.dot_dimension_numbers<[1], [0], [0], [1], [0, 0, 1, 1], [], []>} : vector<12x16xbf16>, vector<16x16xbf16>, vector<12x16xf32> -> vector<12x16xf32>
    %120 = arith.addf %114, %119 : vector<12x16xf32>
    %c0_146 = arith.constant 0 : index
    %c0_147 = arith.constant 0 : index
    %121 = vector.load %arg3[%c0_146, %c0_147] : memref<1x16xf32, #tpu.memory_space<vmem>>, vector<1x16xf32>
    %122 = vector.broadcast %121 : vector<1x16xf32> to vector<12x16xf32>
    %123 = arith.addf %120, %122 : vector<12x16xf32>
    %cst_148 = arith.constant 0.000000e+00 : f32
    %124 = vector.broadcast %cst_148 : f32 to vector<12x16xf32>
    %125 = arith.maximumf %123, %124 : vector<12x16xf32>
    %126 = arith.truncf %125 : vector<12x16xf32> to vector<12x16xbf16>
    %c2_149 = arith.constant 2 : index
    %c1_150 = arith.constant 1 : index
    %c0_151 = arith.constant 0 : index
    %127 = vector.load %arg7[%c2_149, %c1_150, %c0_151] : memref<5x14x16xbf16, #tpu.memory_space<vmem>>, vector<1x12x16xbf16>
    %128 = vector.shape_cast %127 : vector<1x12x16xbf16> to vector<12x16xbf16>
    %129 = vector.shape_cast %126 : vector<12x16xbf16> to vector<1x12x16xbf16>
    tpu.vector_store %arg7[%c2_149, %c1_150, %c0_151], %129 {strides = array<i32>} : memref<5x14x16xbf16, #tpu.memory_space<vmem>>, vector<1x12x16xbf16>,
    %cst_152 = arith.constant 0.000000e+00 : f32
    %130 = vector.broadcast %cst_152 : f32 to vector<12x16xf32>
    %c0_153 = arith.constant 0 : index
    %c2_154 = arith.constant 2 : index
    %c0_155 = arith.constant 0 : index
    %c0_156 = arith.constant 0 : index
    %131 = vector.load %arg1[%c0_153, %c2_154, %c0_155, %c0_156] : memref<1x5x14x16xbf16, #tpu.memory_space<vmem>>, vector<1x1x12x16xbf16>
    %132 = vector.shape_cast %131 : vector<1x1x12x16xbf16> to vector<12x16xbf16>
    %c0_157 = arith.constant 0 : index
    %c0_158 = arith.constant 0 : index
    %c0_159 = arith.constant 0 : index
    %133 = vector.load %arg2[%c0_157, %c0_158, %c0_159] : memref<9x16x16xbf16, #tpu.memory_space<vmem>>, vector<1x16x16xbf16>
    %134 = vector.shape_cast %133 : vector<1x16x16xbf16> to vector<16x16xbf16>
    %cst_160 = arith.constant dense<0.000000e+00> : vector<12x16xf32>
    %135 = tpu.matmul %132, %134, %cst_160 {dimension_numbers = #tpu.dot_dimension_numbers<[1], [0], [0], [1], [0, 0, 1, 1], [], []>} : vector<12x16xbf16>, vector<16x16xbf16>, vector<12x16xf32> -> vector<12x16xf32>
    %136 = arith.addf %130, %135 : vector<12x16xf32>
    %c0_161 = arith.constant 0 : index
    %c3_162 = arith.constant 3 : index
    %c0_163 = arith.constant 0 : index
    %c0_164 = arith.constant 0 : index
    %137 = vector.load %arg1[%c0_161, %c3_162, %c0_163, %c0_164] : memref<1x5x14x16xbf16, #tpu.memory_space<vmem>>, vector<1x1x12x16xbf16>
    %138 = vector.shape_cast %137 : vector<1x1x12x16xbf16> to vector<12x16xbf16>
    %c1_165 = arith.constant 1 : index
    %c0_166 = arith.constant 0 : index
    %c0_167 = arith.constant 0 : index
    %139 = vector.load %arg2[%c1_165, %c0_166, %c0_167] : memref<9x16x16xbf16, #tpu.memory_space<vmem>>, vector<1x16x16xbf16>
    %140 = vector.shape_cast %139 : vector<1x16x16xbf16> to vector<16x16xbf16>
    %cst_168 = arith.constant dense<0.000000e+00> : vector<12x16xf32>
    %141 = tpu.matmul %138, %140, %cst_168 {dimension_numbers = #tpu.dot_dimension_numbers<[1], [0], [0], [1], [0, 0, 1, 1], [], []>} : vector<12x16xbf16>, vector<16x16xbf16>, vector<12x16xf32> -> vector<12x16xf32>
    %142 = arith.addf %136, %141 : vector<12x16xf32>
    %c0_169 = arith.constant 0 : index
    %c4_170 = arith.constant 4 : index
    %c0_171 = arith.constant 0 : index
    %c0_172 = arith.constant 0 : index
    %143 = vector.load %arg1[%c0_169, %c4_170, %c0_171, %c0_172] : memref<1x5x14x16xbf16, #tpu.memory_space<vmem>>, vector<1x1x12x16xbf16>
    %144 = vector.shape_cast %143 : vector<1x1x12x16xbf16> to vector<12x16xbf16>
    %c2_173 = arith.constant 2 : index
    %c0_174 = arith.constant 0 : index
    %c0_175 = arith.constant 0 : index
    %145 = vector.load %arg2[%c2_173, %c0_174, %c0_175] : memref<9x16x16xbf16, #tpu.memory_space<vmem>>, vector<1x16x16xbf16>
    %146 = vector.shape_cast %145 : vector<1x16x16xbf16> to vector<16x16xbf16>
    %cst_176 = arith.constant dense<0.000000e+00> : vector<12x16xf32>
    %147 = tpu.matmul %144, %146, %cst_176 {dimension_numbers = #tpu.dot_dimension_numbers<[1], [0], [0], [1], [0, 0, 1, 1], [], []>} : vector<12x16xbf16>, vector<16x16xbf16>, vector<12x16xf32> -> vector<12x16xf32>
    %148 = arith.addf %142, %147 : vector<12x16xf32>
    %c0_177 = arith.constant 0 : index
    %c2_178 = arith.constant 2 : index
    %c1_179 = arith.constant 1 : index
    %c0_180 = arith.constant 0 : index
    %149 = vector.load %arg1[%c0_177, %c2_178, %c1_179, %c0_180] : memref<1x5x14x16xbf16, #tpu.memory_space<vmem>>, vector<1x1x12x16xbf16>
    %150 = vector.shape_cast %149 : vector<1x1x12x16xbf16> to vector<12x16xbf16>
    %c3_181 = arith.constant 3 : index
    %c0_182 = arith.constant 0 : index
    %c0_183 = arith.constant 0 : index
    %151 = vector.load %arg2[%c3_181, %c0_182, %c0_183] : memref<9x16x16xbf16, #tpu.memory_space<vmem>>, vector<1x16x16xbf16>
    %152 = vector.shape_cast %151 : vector<1x16x16xbf16> to vector<16x16xbf16>
    %cst_184 = arith.constant dense<0.000000e+00> : vector<12x16xf32>
    %153 = tpu.matmul %150, %152, %cst_184 {dimension_numbers = #tpu.dot_dimension_numbers<[1], [0], [0], [1], [0, 0, 1, 1], [], []>} : vector<12x16xbf16>, vector<16x16xbf16>, vector<12x16xf32> -> vector<12x16xf32>
    %154 = arith.addf %148, %153 : vector<12x16xf32>
    %c0_185 = arith.constant 0 : index
    %c3_186 = arith.constant 3 : index
    %c1_187 = arith.constant 1 : index
    %c0_188 = arith.constant 0 : index
    %155 = vector.load %arg1[%c0_185, %c3_186, %c1_187, %c0_188] : memref<1x5x14x16xbf16, #tpu.memory_space<vmem>>, vector<1x1x12x16xbf16>
    %156 = vector.shape_cast %155 : vector<1x1x12x16xbf16> to vector<12x16xbf16>
    %c4_189 = arith.constant 4 : index
    %c0_190 = arith.constant 0 : index
    %c0_191 = arith.constant 0 : index
    %157 = vector.load %arg2[%c4_189, %c0_190, %c0_191] : memref<9x16x16xbf16, #tpu.memory_space<vmem>>, vector<1x16x16xbf16>
    %158 = vector.shape_cast %157 : vector<1x16x16xbf16> to vector<16x16xbf16>
    %cst_192 = arith.constant dense<0.000000e+00> : vector<12x16xf32>
    %159 = tpu.matmul %156, %158, %cst_192 {dimension_numbers = #tpu.dot_dimension_numbers<[1], [0], [0], [1], [0, 0, 1, 1], [], []>} : vector<12x16xbf16>, vector<16x16xbf16>, vector<12x16xf32> -> vector<12x16xf32>
    %160 = arith.addf %154, %159 : vector<12x16xf32>
    %c0_193 = arith.constant 0 : index
    %c4_194 = arith.constant 4 : index
    %c1_195 = arith.constant 1 : index
    %c0_196 = arith.constant 0 : index
    %161 = vector.load %arg1[%c0_193, %c4_194, %c1_195, %c0_196] : memref<1x5x14x16xbf16, #tpu.memory_space<vmem>>, vector<1x1x12x16xbf16>
    %162 = vector.shape_cast %161 : vector<1x1x12x16xbf16> to vector<12x16xbf16>
    %c5_197 = arith.constant 5 : index
    %c0_198 = arith.constant 0 : index
    %c0_199 = arith.constant 0 : index
    %163 = vector.load %arg2[%c5_197, %c0_198, %c0_199] : memref<9x16x16xbf16, #tpu.memory_space<vmem>>, vector<1x16x16xbf16>
    %164 = vector.shape_cast %163 : vector<1x16x16xbf16> to vector<16x16xbf16>
    %cst_200 = arith.constant dense<0.000000e+00> : vector<12x16xf32>
    %165 = tpu.matmul %162, %164, %cst_200 {dimension_numbers = #tpu.dot_dimension_numbers<[1], [0], [0], [1], [0, 0, 1, 1], [], []>} : vector<12x16xbf16>, vector<16x16xbf16>, vector<12x16xf32> -> vector<12x16xf32>
    %166 = arith.addf %160, %165 : vector<12x16xf32>
    %c0_201 = arith.constant 0 : index
    %c2_202 = arith.constant 2 : index
    %c2_203 = arith.constant 2 : index
    %c0_204 = arith.constant 0 : index
    %167 = vector.load %arg1[%c0_201, %c2_202, %c2_203, %c0_204] : memref<1x5x14x16xbf16, #tpu.memory_space<vmem>>, vector<1x1x12x16xbf16>
    %168 = vector.shape_cast %167 : vector<1x1x12x16xbf16> to vector<12x16xbf16>
    %c6_205 = arith.constant 6 : index
    %c0_206 = arith.constant 0 : index
    %c0_207 = arith.constant 0 : index
    %169 = vector.load %arg2[%c6_205, %c0_206, %c0_207] : memref<9x16x16xbf16, #tpu.memory_space<vmem>>, vector<1x16x16xbf16>
    %170 = vector.shape_cast %169 : vector<1x16x16xbf16> to vector<16x16xbf16>
    %cst_208 = arith.constant dense<0.000000e+00> : vector<12x16xf32>
    %171 = tpu.matmul %168, %170, %cst_208 {dimension_numbers = #tpu.dot_dimension_numbers<[1], [0], [0], [1], [0, 0, 1, 1], [], []>} : vector<12x16xbf16>, vector<16x16xbf16>, vector<12x16xf32> -> vector<12x16xf32>
    %172 = arith.addf %166, %171 : vector<12x16xf32>
    %c0_209 = arith.constant 0 : index
    %c3_210 = arith.constant 3 : index
    %c2_211 = arith.constant 2 : index
    %c0_212 = arith.constant 0 : index
    %173 = vector.load %arg1[%c0_209, %c3_210, %c2_211, %c0_212] : memref<1x5x14x16xbf16, #tpu.memory_space<vmem>>, vector<1x1x12x16xbf16>
    %174 = vector.shape_cast %173 : vector<1x1x12x16xbf16> to vector<12x16xbf16>
    %c7_213 = arith.constant 7 : index
    %c0_214 = arith.constant 0 : index
    %c0_215 = arith.constant 0 : index
    %175 = vector.load %arg2[%c7_213, %c0_214, %c0_215] : memref<9x16x16xbf16, #tpu.memory_space<vmem>>, vector<1x16x16xbf16>
    %176 = vector.shape_cast %175 : vector<1x16x16xbf16> to vector<16x16xbf16>
    %cst_216 = arith.constant dense<0.000000e+00> : vector<12x16xf32>
    %177 = tpu.matmul %174, %176, %cst_216 {dimension_numbers = #tpu.dot_dimension_numbers<[1], [0], [0], [1], [0, 0, 1, 1], [], []>} : vector<12x16xbf16>, vector<16x16xbf16>, vector<12x16xf32> -> vector<12x16xf32>
    %178 = arith.addf %172, %177 : vector<12x16xf32>
    %c0_217 = arith.constant 0 : index
    %c4_218 = arith.constant 4 : index
    %c2_219 = arith.constant 2 : index
    %c0_220 = arith.constant 0 : index
    %179 = vector.load %arg1[%c0_217, %c4_218, %c2_219, %c0_220] : memref<1x5x14x16xbf16, #tpu.memory_space<vmem>>, vector<1x1x12x16xbf16>
    %180 = vector.shape_cast %179 : vector<1x1x12x16xbf16> to vector<12x16xbf16>
    %c8_221 = arith.constant 8 : index
    %c0_222 = arith.constant 0 : index
    %c0_223 = arith.constant 0 : index
    %181 = vector.load %arg2[%c8_221, %c0_222, %c0_223] : memref<9x16x16xbf16, #tpu.memory_space<vmem>>, vector<1x16x16xbf16>
    %182 = vector.shape_cast %181 : vector<1x16x16xbf16> to vector<16x16xbf16>
    %cst_224 = arith.constant dense<0.000000e+00> : vector<12x16xf32>
    %183 = tpu.matmul %180, %182, %cst_224 {dimension_numbers = #tpu.dot_dimension_numbers<[1], [0], [0], [1], [0, 0, 1, 1], [], []>} : vector<12x16xbf16>, vector<16x16xbf16>, vector<12x16xf32> -> vector<12x16xf32>
    %184 = arith.addf %178, %183 : vector<12x16xf32>
    %c0_225 = arith.constant 0 : index
    %c0_226 = arith.constant 0 : index
    %185 = vector.load %arg3[%c0_225, %c0_226] : memref<1x16xf32, #tpu.memory_space<vmem>>, vector<1x16xf32>
    %186 = vector.broadcast %185 : vector<1x16xf32> to vector<12x16xf32>
    %187 = arith.addf %184, %186 : vector<12x16xf32>
    %cst_227 = arith.constant 0.000000e+00 : f32
    %188 = vector.broadcast %cst_227 : f32 to vector<12x16xf32>
    %189 = arith.maximumf %187, %188 : vector<12x16xf32>
    %190 = arith.truncf %189 : vector<12x16xf32> to vector<12x16xbf16>
    %c3_228 = arith.constant 3 : index
    %c1_229 = arith.constant 1 : index
    %c0_230 = arith.constant 0 : index
    %191 = vector.load %arg7[%c3_228, %c1_229, %c0_230] : memref<5x14x16xbf16, #tpu.memory_space<vmem>>, vector<1x12x16xbf16>
    %192 = vector.shape_cast %191 : vector<1x12x16xbf16> to vector<12x16xbf16>
    %193 = vector.shape_cast %190 : vector<12x16xbf16> to vector<1x12x16xbf16>
    tpu.vector_store %arg7[%c3_228, %c1_229, %c0_230], %193 {strides = array<i32>} : memref<5x14x16xbf16, #tpu.memory_space<vmem>>, vector<1x12x16xbf16>,
    %cst_231 = arith.constant 0.000000e+00 : bf16
    %194 = vector.broadcast %cst_231 : bf16 to vector<5x14x16xbf16>
    %c0_232 = arith.constant 0 : index
    %c0_233 = arith.constant 0 : index
    %c0_234 = arith.constant 0 : index
    %c0_235 = arith.constant 0 : index
    %195 = vector.load %arg6[%c0_232, %c0_233, %c0_234, %c0_235] : memref<1x5x14x16xbf16, #tpu.memory_space<vmem>>, vector<1x5x14x16xbf16>
    %196 = vector.shape_cast %195 : vector<1x5x14x16xbf16> to vector<5x14x16xbf16>
    %197 = vector.shape_cast %194 : vector<5x14x16xbf16> to vector<1x5x14x16xbf16>
    tpu.vector_store %arg6[%c0_232, %c0_233, %c0_234, %c0_235], %197 {strides = array<i32>} : memref<1x5x14x16xbf16, #tpu.memory_space<vmem>>, vector<1x5x14x16xbf16>,
    %cst_236 = arith.constant 0.000000e+00 : f32
    %198 = vector.broadcast %cst_236 : f32 to vector<12x16xf32>
    %c0_237 = arith.constant 0 : index
    %c0_238 = arith.constant 0 : index
    %c0_239 = arith.constant 0 : index
    %199 = vector.load %arg7[%c0_237, %c0_238, %c0_239] : memref<5x14x16xbf16, #tpu.memory_space<vmem>>, vector<1x12x16xbf16>
    %200 = vector.shape_cast %199 : vector<1x12x16xbf16> to vector<12x16xbf16>
    %c0_240 = arith.constant 0 : index
    %c0_241 = arith.constant 0 : index
    %c0_242 = arith.constant 0 : index
    %201 = vector.load %arg4[%c0_240, %c0_241, %c0_242] : memref<9x16x16xbf16, #tpu.memory_space<vmem>>, vector<1x16x16xbf16>
    %202 = vector.shape_cast %201 : vector<1x16x16xbf16> to vector<16x16xbf16>
    %cst_243 = arith.constant dense<0.000000e+00> : vector<12x16xf32>
    %203 = tpu.matmul %200, %202, %cst_243 {dimension_numbers = #tpu.dot_dimension_numbers<[1], [0], [0], [1], [0, 0, 1, 1], [], []>} : vector<12x16xbf16>, vector<16x16xbf16>, vector<12x16xf32> -> vector<12x16xf32>
    %204 = arith.addf %198, %203 : vector<12x16xf32>
    %c1_244 = arith.constant 1 : index
    %c0_245 = arith.constant 0 : index
    %c0_246 = arith.constant 0 : index
    %205 = vector.load %arg7[%c1_244, %c0_245, %c0_246] : memref<5x14x16xbf16, #tpu.memory_space<vmem>>, vector<1x12x16xbf16>
    %206 = vector.shape_cast %205 : vector<1x12x16xbf16> to vector<12x16xbf16>
    %c1_247 = arith.constant 1 : index
    %c0_248 = arith.constant 0 : index
    %c0_249 = arith.constant 0 : index
    %207 = vector.load %arg4[%c1_247, %c0_248, %c0_249] : memref<9x16x16xbf16, #tpu.memory_space<vmem>>, vector<1x16x16xbf16>
    %208 = vector.shape_cast %207 : vector<1x16x16xbf16> to vector<16x16xbf16>
    %cst_250 = arith.constant dense<0.000000e+00> : vector<12x16xf32>
    %209 = tpu.matmul %206, %208, %cst_250 {dimension_numbers = #tpu.dot_dimension_numbers<[1], [0], [0], [1], [0, 0, 1, 1], [], []>} : vector<12x16xbf16>, vector<16x16xbf16>, vector<12x16xf32> -> vector<12x16xf32>
    %210 = arith.addf %204, %209 : vector<12x16xf32>
    %c2_251 = arith.constant 2 : index
    %c0_252 = arith.constant 0 : index
    %c0_253 = arith.constant 0 : index
    %211 = vector.load %arg7[%c2_251, %c0_252, %c0_253] : memref<5x14x16xbf16, #tpu.memory_space<vmem>>, vector<1x12x16xbf16>
    %212 = vector.shape_cast %211 : vector<1x12x16xbf16> to vector<12x16xbf16>
    %c2_254 = arith.constant 2 : index
    %c0_255 = arith.constant 0 : index
    %c0_256 = arith.constant 0 : index
    %213 = vector.load %arg4[%c2_254, %c0_255, %c0_256] : memref<9x16x16xbf16, #tpu.memory_space<vmem>>, vector<1x16x16xbf16>
    %214 = vector.shape_cast %213 : vector<1x16x16xbf16> to vector<16x16xbf16>
    %cst_257 = arith.constant dense<0.000000e+00> : vector<12x16xf32>
    %215 = tpu.matmul %212, %214, %cst_257 {dimension_numbers = #tpu.dot_dimension_numbers<[1], [0], [0], [1], [0, 0, 1, 1], [], []>} : vector<12x16xbf16>, vector<16x16xbf16>, vector<12x16xf32> -> vector<12x16xf32>
    %216 = arith.addf %210, %215 : vector<12x16xf32>
    %c0_258 = arith.constant 0 : index
    %c1_259 = arith.constant 1 : index
    %c0_260 = arith.constant 0 : index
    %217 = vector.load %arg7[%c0_258, %c1_259, %c0_260] : memref<5x14x16xbf16, #tpu.memory_space<vmem>>, vector<1x12x16xbf16>
    %218 = vector.shape_cast %217 : vector<1x12x16xbf16> to vector<12x16xbf16>
    %c3_261 = arith.constant 3 : index
    %c0_262 = arith.constant 0 : index
    %c0_263 = arith.constant 0 : index
    %219 = vector.load %arg4[%c3_261, %c0_262, %c0_263] : memref<9x16x16xbf16, #tpu.memory_space<vmem>>, vector<1x16x16xbf16>
    %220 = vector.shape_cast %219 : vector<1x16x16xbf16> to vector<16x16xbf16>
    %cst_264 = arith.constant dense<0.000000e+00> : vector<12x16xf32>
    %221 = tpu.matmul %218, %220, %cst_264 {dimension_numbers = #tpu.dot_dimension_numbers<[1], [0], [0], [1], [0, 0, 1, 1], [], []>} : vector<12x16xbf16>, vector<16x16xbf16>, vector<12x16xf32> -> vector<12x16xf32>
    %222 = arith.addf %216, %221 : vector<12x16xf32>
    %c1_265 = arith.constant 1 : index
    %c1_266 = arith.constant 1 : index
    %c0_267 = arith.constant 0 : index
    %223 = vector.load %arg7[%c1_265, %c1_266, %c0_267] : memref<5x14x16xbf16, #tpu.memory_space<vmem>>, vector<1x12x16xbf16>
    %224 = vector.shape_cast %223 : vector<1x12x16xbf16> to vector<12x16xbf16>
    %c4_268 = arith.constant 4 : index
    %c0_269 = arith.constant 0 : index
    %c0_270 = arith.constant 0 : index
    %225 = vector.load %arg4[%c4_268, %c0_269, %c0_270] : memref<9x16x16xbf16, #tpu.memory_space<vmem>>, vector<1x16x16xbf16>
    %226 = vector.shape_cast %225 : vector<1x16x16xbf16> to vector<16x16xbf16>
    %cst_271 = arith.constant dense<0.000000e+00> : vector<12x16xf32>
    %227 = tpu.matmul %224, %226, %cst_271 {dimension_numbers = #tpu.dot_dimension_numbers<[1], [0], [0], [1], [0, 0, 1, 1], [], []>} : vector<12x16xbf16>, vector<16x16xbf16>, vector<12x16xf32> -> vector<12x16xf32>
    %228 = arith.addf %222, %227 : vector<12x16xf32>
    %c2_272 = arith.constant 2 : index
    %c1_273 = arith.constant 1 : index
    %c0_274 = arith.constant 0 : index
    %229 = vector.load %arg7[%c2_272, %c1_273, %c0_274] : memref<5x14x16xbf16, #tpu.memory_space<vmem>>, vector<1x12x16xbf16>
    %230 = vector.shape_cast %229 : vector<1x12x16xbf16> to vector<12x16xbf16>
    %c5_275 = arith.constant 5 : index
    %c0_276 = arith.constant 0 : index
    %c0_277 = arith.constant 0 : index
    %231 = vector.load %arg4[%c5_275, %c0_276, %c0_277] : memref<9x16x16xbf16, #tpu.memory_space<vmem>>, vector<1x16x16xbf16>
    %232 = vector.shape_cast %231 : vector<1x16x16xbf16> to vector<16x16xbf16>
    %cst_278 = arith.constant dense<0.000000e+00> : vector<12x16xf32>
    %233 = tpu.matmul %230, %232, %cst_278 {dimension_numbers = #tpu.dot_dimension_numbers<[1], [0], [0], [1], [0, 0, 1, 1], [], []>} : vector<12x16xbf16>, vector<16x16xbf16>, vector<12x16xf32> -> vector<12x16xf32>
    %234 = arith.addf %228, %233 : vector<12x16xf32>
    %c0_279 = arith.constant 0 : index
    %c2_280 = arith.constant 2 : index
    %c0_281 = arith.constant 0 : index
    %235 = vector.load %arg7[%c0_279, %c2_280, %c0_281] : memref<5x14x16xbf16, #tpu.memory_space<vmem>>, vector<1x12x16xbf16>
    %236 = vector.shape_cast %235 : vector<1x12x16xbf16> to vector<12x16xbf16>
    %c6_282 = arith.constant 6 : index
    %c0_283 = arith.constant 0 : index
    %c0_284 = arith.constant 0 : index
    %237 = vector.load %arg4[%c6_282, %c0_283, %c0_284] : memref<9x16x16xbf16, #tpu.memory_space<vmem>>, vector<1x16x16xbf16>
    %238 = vector.shape_cast %237 : vector<1x16x16xbf16> to vector<16x16xbf16>
    %cst_285 = arith.constant dense<0.000000e+00> : vector<12x16xf32>
    %239 = tpu.matmul %236, %238, %cst_285 {dimension_numbers = #tpu.dot_dimension_numbers<[1], [0], [0], [1], [0, 0, 1, 1], [], []>} : vector<12x16xbf16>, vector<16x16xbf16>, vector<12x16xf32> -> vector<12x16xf32>
    %240 = arith.addf %234, %239 : vector<12x16xf32>
    %c1_286 = arith.constant 1 : index
    %c2_287 = arith.constant 2 : index
    %c0_288 = arith.constant 0 : index
    %241 = vector.load %arg7[%c1_286, %c2_287, %c0_288] : memref<5x14x16xbf16, #tpu.memory_space<vmem>>, vector<1x12x16xbf16>
    %242 = vector.shape_cast %241 : vector<1x12x16xbf16> to vector<12x16xbf16>
    %c7_289 = arith.constant 7 : index
    %c0_290 = arith.constant 0 : index
    %c0_291 = arith.constant 0 : index
    %243 = vector.load %arg4[%c7_289, %c0_290, %c0_291] : memref<9x16x16xbf16, #tpu.memory_space<vmem>>, vector<1x16x16xbf16>
    %244 = vector.shape_cast %243 : vector<1x16x16xbf16> to vector<16x16xbf16>
    %cst_292 = arith.constant dense<0.000000e+00> : vector<12x16xf32>
    %245 = tpu.matmul %242, %244, %cst_292 {dimension_numbers = #tpu.dot_dimension_numbers<[1], [0], [0], [1], [0, 0, 1, 1], [], []>} : vector<12x16xbf16>, vector<16x16xbf16>, vector<12x16xf32> -> vector<12x16xf32>
    %246 = arith.addf %240, %245 : vector<12x16xf32>
    %c2_293 = arith.constant 2 : index
    %c2_294 = arith.constant 2 : index
    %c0_295 = arith.constant 0 : index
    %247 = vector.load %arg7[%c2_293, %c2_294, %c0_295] : memref<5x14x16xbf16, #tpu.memory_space<vmem>>, vector<1x12x16xbf16>
    %248 = vector.shape_cast %247 : vector<1x12x16xbf16> to vector<12x16xbf16>
    %c8_296 = arith.constant 8 : index
    %c0_297 = arith.constant 0 : index
    %c0_298 = arith.constant 0 : index
    %249 = vector.load %arg4[%c8_296, %c0_297, %c0_298] : memref<9x16x16xbf16, #tpu.memory_space<vmem>>, vector<1x16x16xbf16>
    %250 = vector.shape_cast %249 : vector<1x16x16xbf16> to vector<16x16xbf16>
    %cst_299 = arith.constant dense<0.000000e+00> : vector<12x16xf32>
    %251 = tpu.matmul %248, %250, %cst_299 {dimension_numbers = #tpu.dot_dimension_numbers<[1], [0], [0], [1], [0, 0, 1, 1], [], []>} : vector<12x16xbf16>, vector<16x16xbf16>, vector<12x16xf32> -> vector<12x16xf32>
    %252 = arith.addf %246, %251 : vector<12x16xf32>
    %c0_300 = arith.constant 0 : index
    %c1_301 = arith.constant 1 : index
    %c1_302 = arith.constant 1 : index
    %c0_303 = arith.constant 0 : index
    %253 = vector.load %arg1[%c0_300, %c1_301, %c1_302, %c0_303] : memref<1x5x14x16xbf16, #tpu.memory_space<vmem>>, vector<1x1x12x16xbf16>
    %254 = vector.shape_cast %253 : vector<1x1x12x16xbf16> to vector<12x16xbf16>
    %255 = arith.extf %254 : vector<12x16xbf16> to vector<12x16xf32>
    %c0_304 = arith.constant 0 : index
    %c0_305 = arith.constant 0 : index
    %256 = vector.load %arg5[%c0_304, %c0_305] : memref<1x16xf32, #tpu.memory_space<vmem>>, vector<1x16xf32>
    %257 = vector.broadcast %256 : vector<1x16xf32> to vector<12x16xf32>
    %258 = arith.addf %252, %257 : vector<12x16xf32>
    %259 = arith.addf %258, %255 : vector<12x16xf32>
    %cst_306 = arith.constant 0.000000e+00 : f32
    %260 = vector.broadcast %cst_306 : f32 to vector<12x16xf32>
    %261 = arith.maximumf %259, %260 : vector<12x16xf32>
    %262 = arith.truncf %261 : vector<12x16xf32> to vector<12x16xbf16>
    %c0_307 = arith.constant 0 : index
    %c1_308 = arith.constant 1 : index
    %c1_309 = arith.constant 1 : index
    %c0_310 = arith.constant 0 : index
    %263 = vector.load %arg6[%c0_307, %c1_308, %c1_309, %c0_310] : memref<1x5x14x16xbf16, #tpu.memory_space<vmem>>, vector<1x1x12x16xbf16>
    %264 = vector.shape_cast %263 : vector<1x1x12x16xbf16> to vector<12x16xbf16>
    %265 = vector.shape_cast %262 : vector<12x16xbf16> to vector<1x1x12x16xbf16>
    tpu.vector_store %arg6[%c0_307, %c1_308, %c1_309, %c0_310], %265 {strides = array<i32>} : memref<1x5x14x16xbf16, #tpu.memory_space<vmem>>, vector<1x1x12x16xbf16>,
    %cst_311 = arith.constant 0.000000e+00 : f32
    %266 = vector.broadcast %cst_311 : f32 to vector<12x16xf32>
    %c1_312 = arith.constant 1 : index
    %c0_313 = arith.constant 0 : index
    %c0_314 = arith.constant 0 : index
    %267 = vector.load %arg7[%c1_312, %c0_313, %c0_314] : memref<5x14x16xbf16, #tpu.memory_space<vmem>>, vector<1x12x16xbf16>
    %268 = vector.shape_cast %267 : vector<1x12x16xbf16> to vector<12x16xbf16>
    %c0_315 = arith.constant 0 : index
    %c0_316 = arith.constant 0 : index
    %c0_317 = arith.constant 0 : index
    %269 = vector.load %arg4[%c0_315, %c0_316, %c0_317] : memref<9x16x16xbf16, #tpu.memory_space<vmem>>, vector<1x16x16xbf16>
    %270 = vector.shape_cast %269 : vector<1x16x16xbf16> to vector<16x16xbf16>
    %cst_318 = arith.constant dense<0.000000e+00> : vector<12x16xf32>
    %271 = tpu.matmul %268, %270, %cst_318 {dimension_numbers = #tpu.dot_dimension_numbers<[1], [0], [0], [1], [0, 0, 1, 1], [], []>} : vector<12x16xbf16>, vector<16x16xbf16>, vector<12x16xf32> -> vector<12x16xf32>
    %272 = arith.addf %266, %271 : vector<12x16xf32>
    %c2_319 = arith.constant 2 : index
    %c0_320 = arith.constant 0 : index
    %c0_321 = arith.constant 0 : index
    %273 = vector.load %arg7[%c2_319, %c0_320, %c0_321] : memref<5x14x16xbf16, #tpu.memory_space<vmem>>, vector<1x12x16xbf16>
    %274 = vector.shape_cast %273 : vector<1x12x16xbf16> to vector<12x16xbf16>
    %c1_322 = arith.constant 1 : index
    %c0_323 = arith.constant 0 : index
    %c0_324 = arith.constant 0 : index
    %275 = vector.load %arg4[%c1_322, %c0_323, %c0_324] : memref<9x16x16xbf16, #tpu.memory_space<vmem>>, vector<1x16x16xbf16>
    %276 = vector.shape_cast %275 : vector<1x16x16xbf16> to vector<16x16xbf16>
    %cst_325 = arith.constant dense<0.000000e+00> : vector<12x16xf32>
    %277 = tpu.matmul %274, %276, %cst_325 {dimension_numbers = #tpu.dot_dimension_numbers<[1], [0], [0], [1], [0, 0, 1, 1], [], []>} : vector<12x16xbf16>, vector<16x16xbf16>, vector<12x16xf32> -> vector<12x16xf32>
    %278 = arith.addf %272, %277 : vector<12x16xf32>
    %c3_326 = arith.constant 3 : index
    %c0_327 = arith.constant 0 : index
    %c0_328 = arith.constant 0 : index
    %279 = vector.load %arg7[%c3_326, %c0_327, %c0_328] : memref<5x14x16xbf16, #tpu.memory_space<vmem>>, vector<1x12x16xbf16>
    %280 = vector.shape_cast %279 : vector<1x12x16xbf16> to vector<12x16xbf16>
    %c2_329 = arith.constant 2 : index
    %c0_330 = arith.constant 0 : index
    %c0_331 = arith.constant 0 : index
    %281 = vector.load %arg4[%c2_329, %c0_330, %c0_331] : memref<9x16x16xbf16, #tpu.memory_space<vmem>>, vector<1x16x16xbf16>
    %282 = vector.shape_cast %281 : vector<1x16x16xbf16> to vector<16x16xbf16>
    %cst_332 = arith.constant dense<0.000000e+00> : vector<12x16xf32>
    %283 = tpu.matmul %280, %282, %cst_332 {dimension_numbers = #tpu.dot_dimension_numbers<[1], [0], [0], [1], [0, 0, 1, 1], [], []>} : vector<12x16xbf16>, vector<16x16xbf16>, vector<12x16xf32> -> vector<12x16xf32>
    %284 = arith.addf %278, %283 : vector<12x16xf32>
    %c1_333 = arith.constant 1 : index
    %c1_334 = arith.constant 1 : index
    %c0_335 = arith.constant 0 : index
    %285 = vector.load %arg7[%c1_333, %c1_334, %c0_335] : memref<5x14x16xbf16, #tpu.memory_space<vmem>>, vector<1x12x16xbf16>
    %286 = vector.shape_cast %285 : vector<1x12x16xbf16> to vector<12x16xbf16>
    %c3_336 = arith.constant 3 : index
    %c0_337 = arith.constant 0 : index
    %c0_338 = arith.constant 0 : index
    %287 = vector.load %arg4[%c3_336, %c0_337, %c0_338] : memref<9x16x16xbf16, #tpu.memory_space<vmem>>, vector<1x16x16xbf16>
    %288 = vector.shape_cast %287 : vector<1x16x16xbf16> to vector<16x16xbf16>
    %cst_339 = arith.constant dense<0.000000e+00> : vector<12x16xf32>
    %289 = tpu.matmul %286, %288, %cst_339 {dimension_numbers = #tpu.dot_dimension_numbers<[1], [0], [0], [1], [0, 0, 1, 1], [], []>} : vector<12x16xbf16>, vector<16x16xbf16>, vector<12x16xf32> -> vector<12x16xf32>
    %290 = arith.addf %284, %289 : vector<12x16xf32>
    %c2_340 = arith.constant 2 : index
    %c1_341 = arith.constant 1 : index
    %c0_342 = arith.constant 0 : index
    %291 = vector.load %arg7[%c2_340, %c1_341, %c0_342] : memref<5x14x16xbf16, #tpu.memory_space<vmem>>, vector<1x12x16xbf16>
    %292 = vector.shape_cast %291 : vector<1x12x16xbf16> to vector<12x16xbf16>
    %c4_343 = arith.constant 4 : index
    %c0_344 = arith.constant 0 : index
    %c0_345 = arith.constant 0 : index
    %293 = vector.load %arg4[%c4_343, %c0_344, %c0_345] : memref<9x16x16xbf16, #tpu.memory_space<vmem>>, vector<1x16x16xbf16>
    %294 = vector.shape_cast %293 : vector<1x16x16xbf16> to vector<16x16xbf16>
    %cst_346 = arith.constant dense<0.000000e+00> : vector<12x16xf32>
    %295 = tpu.matmul %292, %294, %cst_346 {dimension_numbers = #tpu.dot_dimension_numbers<[1], [0], [0], [1], [0, 0, 1, 1], [], []>} : vector<12x16xbf16>, vector<16x16xbf16>, vector<12x16xf32> -> vector<12x16xf32>
    %296 = arith.addf %290, %295 : vector<12x16xf32>
    %c3_347 = arith.constant 3 : index
    %c1_348 = arith.constant 1 : index
    %c0_349 = arith.constant 0 : index
    %297 = vector.load %arg7[%c3_347, %c1_348, %c0_349] : memref<5x14x16xbf16, #tpu.memory_space<vmem>>, vector<1x12x16xbf16>
    %298 = vector.shape_cast %297 : vector<1x12x16xbf16> to vector<12x16xbf16>
    %c5_350 = arith.constant 5 : index
    %c0_351 = arith.constant 0 : index
    %c0_352 = arith.constant 0 : index
    %299 = vector.load %arg4[%c5_350, %c0_351, %c0_352] : memref<9x16x16xbf16, #tpu.memory_space<vmem>>, vector<1x16x16xbf16>
    %300 = vector.shape_cast %299 : vector<1x16x16xbf16> to vector<16x16xbf16>
    %cst_353 = arith.constant dense<0.000000e+00> : vector<12x16xf32>
    %301 = tpu.matmul %298, %300, %cst_353 {dimension_numbers = #tpu.dot_dimension_numbers<[1], [0], [0], [1], [0, 0, 1, 1], [], []>} : vector<12x16xbf16>, vector<16x16xbf16>, vector<12x16xf32> -> vector<12x16xf32>
    %302 = arith.addf %296, %301 : vector<12x16xf32>
    %c1_354 = arith.constant 1 : index
    %c2_355 = arith.constant 2 : index
    %c0_356 = arith.constant 0 : index
    %303 = vector.load %arg7[%c1_354, %c2_355, %c0_356] : memref<5x14x16xbf16, #tpu.memory_space<vmem>>, vector<1x12x16xbf16>
    %304 = vector.shape_cast %303 : vector<1x12x16xbf16> to vector<12x16xbf16>
    %c6_357 = arith.constant 6 : index
    %c0_358 = arith.constant 0 : index
    %c0_359 = arith.constant 0 : index
    %305 = vector.load %arg4[%c6_357, %c0_358, %c0_359] : memref<9x16x16xbf16, #tpu.memory_space<vmem>>, vector<1x16x16xbf16>
    %306 = vector.shape_cast %305 : vector<1x16x16xbf16> to vector<16x16xbf16>
    %cst_360 = arith.constant dense<0.000000e+00> : vector<12x16xf32>
    %307 = tpu.matmul %304, %306, %cst_360 {dimension_numbers = #tpu.dot_dimension_numbers<[1], [0], [0], [1], [0, 0, 1, 1], [], []>} : vector<12x16xbf16>, vector<16x16xbf16>, vector<12x16xf32> -> vector<12x16xf32>
    %308 = arith.addf %302, %307 : vector<12x16xf32>
    %c2_361 = arith.constant 2 : index
    %c2_362 = arith.constant 2 : index
    %c0_363 = arith.constant 0 : index
    %309 = vector.load %arg7[%c2_361, %c2_362, %c0_363] : memref<5x14x16xbf16, #tpu.memory_space<vmem>>, vector<1x12x16xbf16>
    %310 = vector.shape_cast %309 : vector<1x12x16xbf16> to vector<12x16xbf16>
    %c7_364 = arith.constant 7 : index
    %c0_365 = arith.constant 0 : index
    %c0_366 = arith.constant 0 : index
    %311 = vector.load %arg4[%c7_364, %c0_365, %c0_366] : memref<9x16x16xbf16, #tpu.memory_space<vmem>>, vector<1x16x16xbf16>
    %312 = vector.shape_cast %311 : vector<1x16x16xbf16> to vector<16x16xbf16>
    %cst_367 = arith.constant dense<0.000000e+00> : vector<12x16xf32>
    %313 = tpu.matmul %310, %312, %cst_367 {dimension_numbers = #tpu.dot_dimension_numbers<[1], [0], [0], [1], [0, 0, 1, 1], [], []>} : vector<12x16xbf16>, vector<16x16xbf16>, vector<12x16xf32> -> vector<12x16xf32>
    %314 = arith.addf %308, %313 : vector<12x16xf32>
    %c3_368 = arith.constant 3 : index
    %c2_369 = arith.constant 2 : index
    %c0_370 = arith.constant 0 : index
    %315 = vector.load %arg7[%c3_368, %c2_369, %c0_370] : memref<5x14x16xbf16, #tpu.memory_space<vmem>>, vector<1x12x16xbf16>
    %316 = vector.shape_cast %315 : vector<1x12x16xbf16> to vector<12x16xbf16>
    %c8_371 = arith.constant 8 : index
    %c0_372 = arith.constant 0 : index
    %c0_373 = arith.constant 0 : index
    %317 = vector.load %arg4[%c8_371, %c0_372, %c0_373] : memref<9x16x16xbf16, #tpu.memory_space<vmem>>, vector<1x16x16xbf16>
    %318 = vector.shape_cast %317 : vector<1x16x16xbf16> to vector<16x16xbf16>
    %cst_374 = arith.constant dense<0.000000e+00> : vector<12x16xf32>
    %319 = tpu.matmul %316, %318, %cst_374 {dimension_numbers = #tpu.dot_dimension_numbers<[1], [0], [0], [1], [0, 0, 1, 1], [], []>} : vector<12x16xbf16>, vector<16x16xbf16>, vector<12x16xf32> -> vector<12x16xf32>
    %320 = arith.addf %314, %319 : vector<12x16xf32>
    %c0_375 = arith.constant 0 : index
    %c2_376 = arith.constant 2 : index
    %c1_377 = arith.constant 1 : index
    %c0_378 = arith.constant 0 : index
    %321 = vector.load %arg1[%c0_375, %c2_376, %c1_377, %c0_378] : memref<1x5x14x16xbf16, #tpu.memory_space<vmem>>, vector<1x1x12x16xbf16>
    %322 = vector.shape_cast %321 : vector<1x1x12x16xbf16> to vector<12x16xbf16>
    %323 = arith.extf %322 : vector<12x16xbf16> to vector<12x16xf32>
    %c0_379 = arith.constant 0 : index
    %c0_380 = arith.constant 0 : index
    %324 = vector.load %arg5[%c0_379, %c0_380] : memref<1x16xf32, #tpu.memory_space<vmem>>, vector<1x16xf32>
    %325 = vector.broadcast %324 : vector<1x16xf32> to vector<12x16xf32>
    %326 = arith.addf %320, %325 : vector<12x16xf32>
    %327 = arith.addf %326, %323 : vector<12x16xf32>
    %cst_381 = arith.constant 0.000000e+00 : f32
    %328 = vector.broadcast %cst_381 : f32 to vector<12x16xf32>
    %329 = arith.maximumf %327, %328 : vector<12x16xf32>
    %330 = arith.truncf %329 : vector<12x16xf32> to vector<12x16xbf16>
    %c0_382 = arith.constant 0 : index
    %c2_383 = arith.constant 2 : index
    %c1_384 = arith.constant 1 : index
    %c0_385 = arith.constant 0 : index
    %331 = vector.load %arg6[%c0_382, %c2_383, %c1_384, %c0_385] : memref<1x5x14x16xbf16, #tpu.memory_space<vmem>>, vector<1x1x12x16xbf16>
    %332 = vector.shape_cast %331 : vector<1x1x12x16xbf16> to vector<12x16xbf16>
    %333 = vector.shape_cast %330 : vector<12x16xbf16> to vector<1x1x12x16xbf16>
    tpu.vector_store %arg6[%c0_382, %c2_383, %c1_384, %c0_385], %333 {strides = array<i32>} : memref<1x5x14x16xbf16, #tpu.memory_space<vmem>>, vector<1x1x12x16xbf16>,
    %cst_386 = arith.constant 0.000000e+00 : f32
    %334 = vector.broadcast %cst_386 : f32 to vector<12x16xf32>
    %c2_387 = arith.constant 2 : index
    %c0_388 = arith.constant 0 : index
    %c0_389 = arith.constant 0 : index
    %335 = vector.load %arg7[%c2_387, %c0_388, %c0_389] : memref<5x14x16xbf16, #tpu.memory_space<vmem>>, vector<1x12x16xbf16>
    %336 = vector.shape_cast %335 : vector<1x12x16xbf16> to vector<12x16xbf16>
    %c0_390 = arith.constant 0 : index
    %c0_391 = arith.constant 0 : index
    %c0_392 = arith.constant 0 : index
    %337 = vector.load %arg4[%c0_390, %c0_391, %c0_392] : memref<9x16x16xbf16, #tpu.memory_space<vmem>>, vector<1x16x16xbf16>
    %338 = vector.shape_cast %337 : vector<1x16x16xbf16> to vector<16x16xbf16>
    %cst_393 = arith.constant dense<0.000000e+00> : vector<12x16xf32>
    %339 = tpu.matmul %336, %338, %cst_393 {dimension_numbers = #tpu.dot_dimension_numbers<[1], [0], [0], [1], [0, 0, 1, 1], [], []>} : vector<12x16xbf16>, vector<16x16xbf16>, vector<12x16xf32> -> vector<12x16xf32>
    %340 = arith.addf %334, %339 : vector<12x16xf32>
    %c3_394 = arith.constant 3 : index
    %c0_395 = arith.constant 0 : index
    %c0_396 = arith.constant 0 : index
    %341 = vector.load %arg7[%c3_394, %c0_395, %c0_396] : memref<5x14x16xbf16, #tpu.memory_space<vmem>>, vector<1x12x16xbf16>
    %342 = vector.shape_cast %341 : vector<1x12x16xbf16> to vector<12x16xbf16>
    %c1_397 = arith.constant 1 : index
    %c0_398 = arith.constant 0 : index
    %c0_399 = arith.constant 0 : index
    %343 = vector.load %arg4[%c1_397, %c0_398, %c0_399] : memref<9x16x16xbf16, #tpu.memory_space<vmem>>, vector<1x16x16xbf16>
    %344 = vector.shape_cast %343 : vector<1x16x16xbf16> to vector<16x16xbf16>
    %cst_400 = arith.constant dense<0.000000e+00> : vector<12x16xf32>
    %345 = tpu.matmul %342, %344, %cst_400 {dimension_numbers = #tpu.dot_dimension_numbers<[1], [0], [0], [1], [0, 0, 1, 1], [], []>} : vector<12x16xbf16>, vector<16x16xbf16>, vector<12x16xf32> -> vector<12x16xf32>
    %346 = arith.addf %340, %345 : vector<12x16xf32>
    %c4_401 = arith.constant 4 : index
    %c0_402 = arith.constant 0 : index
    %c0_403 = arith.constant 0 : index
    %347 = vector.load %arg7[%c4_401, %c0_402, %c0_403] : memref<5x14x16xbf16, #tpu.memory_space<vmem>>, vector<1x12x16xbf16>
    %348 = vector.shape_cast %347 : vector<1x12x16xbf16> to vector<12x16xbf16>
    %c2_404 = arith.constant 2 : index
    %c0_405 = arith.constant 0 : index
    %c0_406 = arith.constant 0 : index
    %349 = vector.load %arg4[%c2_404, %c0_405, %c0_406] : memref<9x16x16xbf16, #tpu.memory_space<vmem>>, vector<1x16x16xbf16>
    %350 = vector.shape_cast %349 : vector<1x16x16xbf16> to vector<16x16xbf16>
    %cst_407 = arith.constant dense<0.000000e+00> : vector<12x16xf32>
    %351 = tpu.matmul %348, %350, %cst_407 {dimension_numbers = #tpu.dot_dimension_numbers<[1], [0], [0], [1], [0, 0, 1, 1], [], []>} : vector<12x16xbf16>, vector<16x16xbf16>, vector<12x16xf32> -> vector<12x16xf32>
    %352 = arith.addf %346, %351 : vector<12x16xf32>
    %c2_408 = arith.constant 2 : index
    %c1_409 = arith.constant 1 : index
    %c0_410 = arith.constant 0 : index
    %353 = vector.load %arg7[%c2_408, %c1_409, %c0_410] : memref<5x14x16xbf16, #tpu.memory_space<vmem>>, vector<1x12x16xbf16>
    %354 = vector.shape_cast %353 : vector<1x12x16xbf16> to vector<12x16xbf16>
    %c3_411 = arith.constant 3 : index
    %c0_412 = arith.constant 0 : index
    %c0_413 = arith.constant 0 : index
    %355 = vector.load %arg4[%c3_411, %c0_412, %c0_413] : memref<9x16x16xbf16, #tpu.memory_space<vmem>>, vector<1x16x16xbf16>
    %356 = vector.shape_cast %355 : vector<1x16x16xbf16> to vector<16x16xbf16>
    %cst_414 = arith.constant dense<0.000000e+00> : vector<12x16xf32>
    %357 = tpu.matmul %354, %356, %cst_414 {dimension_numbers = #tpu.dot_dimension_numbers<[1], [0], [0], [1], [0, 0, 1, 1], [], []>} : vector<12x16xbf16>, vector<16x16xbf16>, vector<12x16xf32> -> vector<12x16xf32>
    %358 = arith.addf %352, %357 : vector<12x16xf32>
    %c3_415 = arith.constant 3 : index
    %c1_416 = arith.constant 1 : index
    %c0_417 = arith.constant 0 : index
    %359 = vector.load %arg7[%c3_415, %c1_416, %c0_417] : memref<5x14x16xbf16, #tpu.memory_space<vmem>>, vector<1x12x16xbf16>
    %360 = vector.shape_cast %359 : vector<1x12x16xbf16> to vector<12x16xbf16>
    %c4_418 = arith.constant 4 : index
    %c0_419 = arith.constant 0 : index
    %c0_420 = arith.constant 0 : index
    %361 = vector.load %arg4[%c4_418, %c0_419, %c0_420] : memref<9x16x16xbf16, #tpu.memory_space<vmem>>, vector<1x16x16xbf16>
    %362 = vector.shape_cast %361 : vector<1x16x16xbf16> to vector<16x16xbf16>
    %cst_421 = arith.constant dense<0.000000e+00> : vector<12x16xf32>
    %363 = tpu.matmul %360, %362, %cst_421 {dimension_numbers = #tpu.dot_dimension_numbers<[1], [0], [0], [1], [0, 0, 1, 1], [], []>} : vector<12x16xbf16>, vector<16x16xbf16>, vector<12x16xf32> -> vector<12x16xf32>
    %364 = arith.addf %358, %363 : vector<12x16xf32>
    %c4_422 = arith.constant 4 : index
    %c1_423 = arith.constant 1 : index
    %c0_424 = arith.constant 0 : index
    %365 = vector.load %arg7[%c4_422, %c1_423, %c0_424] : memref<5x14x16xbf16, #tpu.memory_space<vmem>>, vector<1x12x16xbf16>
    %366 = vector.shape_cast %365 : vector<1x12x16xbf16> to vector<12x16xbf16>
    %c5_425 = arith.constant 5 : index
    %c0_426 = arith.constant 0 : index
    %c0_427 = arith.constant 0 : index
    %367 = vector.load %arg4[%c5_425, %c0_426, %c0_427] : memref<9x16x16xbf16, #tpu.memory_space<vmem>>, vector<1x16x16xbf16>
    %368 = vector.shape_cast %367 : vector<1x16x16xbf16> to vector<16x16xbf16>
    %cst_428 = arith.constant dense<0.000000e+00> : vector<12x16xf32>
    %369 = tpu.matmul %366, %368, %cst_428 {dimension_numbers = #tpu.dot_dimension_numbers<[1], [0], [0], [1], [0, 0, 1, 1], [], []>} : vector<12x16xbf16>, vector<16x16xbf16>, vector<12x16xf32> -> vector<12x16xf32>
    %370 = arith.addf %364, %369 : vector<12x16xf32>
    %c2_429 = arith.constant 2 : index
    %c2_430 = arith.constant 2 : index
    %c0_431 = arith.constant 0 : index
    %371 = vector.load %arg7[%c2_429, %c2_430, %c0_431] : memref<5x14x16xbf16, #tpu.memory_space<vmem>>, vector<1x12x16xbf16>
    %372 = vector.shape_cast %371 : vector<1x12x16xbf16> to vector<12x16xbf16>
    %c6_432 = arith.constant 6 : index
    %c0_433 = arith.constant 0 : index
    %c0_434 = arith.constant 0 : index
    %373 = vector.load %arg4[%c6_432, %c0_433, %c0_434] : memref<9x16x16xbf16, #tpu.memory_space<vmem>>, vector<1x16x16xbf16>
    %374 = vector.shape_cast %373 : vector<1x16x16xbf16> to vector<16x16xbf16>
    %cst_435 = arith.constant dense<0.000000e+00> : vector<12x16xf32>
    %375 = tpu.matmul %372, %374, %cst_435 {dimension_numbers = #tpu.dot_dimension_numbers<[1], [0], [0], [1], [0, 0, 1, 1], [], []>} : vector<12x16xbf16>, vector<16x16xbf16>, vector<12x16xf32> -> vector<12x16xf32>
    %376 = arith.addf %370, %375 : vector<12x16xf32>
    %c3_436 = arith.constant 3 : index
    %c2_437 = arith.constant 2 : index
    %c0_438 = arith.constant 0 : index
    %377 = vector.load %arg7[%c3_436, %c2_437, %c0_438] : memref<5x14x16xbf16, #tpu.memory_space<vmem>>, vector<1x12x16xbf16>
    %378 = vector.shape_cast %377 : vector<1x12x16xbf16> to vector<12x16xbf16>
    %c7_439 = arith.constant 7 : index
    %c0_440 = arith.constant 0 : index
    %c0_441 = arith.constant 0 : index
    %379 = vector.load %arg4[%c7_439, %c0_440, %c0_441] : memref<9x16x16xbf16, #tpu.memory_space<vmem>>, vector<1x16x16xbf16>
    %380 = vector.shape_cast %379 : vector<1x16x16xbf16> to vector<16x16xbf16>
    %cst_442 = arith.constant dense<0.000000e+00> : vector<12x16xf32>
    %381 = tpu.matmul %378, %380, %cst_442 {dimension_numbers = #tpu.dot_dimension_numbers<[1], [0], [0], [1], [0, 0, 1, 1], [], []>} : vector<12x16xbf16>, vector<16x16xbf16>, vector<12x16xf32> -> vector<12x16xf32>
    %382 = arith.addf %376, %381 : vector<12x16xf32>
    %c4_443 = arith.constant 4 : index
    %c2_444 = arith.constant 2 : index
    %c0_445 = arith.constant 0 : index
    %383 = vector.load %arg7[%c4_443, %c2_444, %c0_445] : memref<5x14x16xbf16, #tpu.memory_space<vmem>>, vector<1x12x16xbf16>
    %384 = vector.shape_cast %383 : vector<1x12x16xbf16> to vector<12x16xbf16>
    %c8_446 = arith.constant 8 : index
    %c0_447 = arith.constant 0 : index
    %c0_448 = arith.constant 0 : index
    %385 = vector.load %arg4[%c8_446, %c0_447, %c0_448] : memref<9x16x16xbf16, #tpu.memory_space<vmem>>, vector<1x16x16xbf16>
    %386 = vector.shape_cast %385 : vector<1x16x16xbf16> to vector<16x16xbf16>
    %cst_449 = arith.constant dense<0.000000e+00> : vector<12x16xf32>
    %387 = tpu.matmul %384, %386, %cst_449 {dimension_numbers = #tpu.dot_dimension_numbers<[1], [0], [0], [1], [0, 0, 1, 1], [], []>} : vector<12x16xbf16>, vector<16x16xbf16>, vector<12x16xf32> -> vector<12x16xf32>
    %388 = arith.addf %382, %387 : vector<12x16xf32>
    %c0_450 = arith.constant 0 : index
    %c3_451 = arith.constant 3 : index
    %c1_452 = arith.constant 1 : index
    %c0_453 = arith.constant 0 : index
    %389 = vector.load %arg1[%c0_450, %c3_451, %c1_452, %c0_453] : memref<1x5x14x16xbf16, #tpu.memory_space<vmem>>, vector<1x1x12x16xbf16>
    %390 = vector.shape_cast %389 : vector<1x1x12x16xbf16> to vector<12x16xbf16>
    %391 = arith.extf %390 : vector<12x16xbf16> to vector<12x16xf32>
    %c0_454 = arith.constant 0 : index
    %c0_455 = arith.constant 0 : index
    %392 = vector.load %arg5[%c0_454, %c0_455] : memref<1x16xf32, #tpu.memory_space<vmem>>, vector<1x16xf32>
    %393 = vector.broadcast %392 : vector<1x16xf32> to vector<12x16xf32>
    %394 = arith.addf %388, %393 : vector<12x16xf32>
    %395 = arith.addf %394, %391 : vector<12x16xf32>
    %cst_456 = arith.constant 0.000000e+00 : f32
    %396 = vector.broadcast %cst_456 : f32 to vector<12x16xf32>
    %397 = arith.maximumf %395, %396 : vector<12x16xf32>
    %398 = arith.truncf %397 : vector<12x16xf32> to vector<12x16xbf16>
    %c0_457 = arith.constant 0 : index
    %c3_458 = arith.constant 3 : index
    %c1_459 = arith.constant 1 : index
    %c0_460 = arith.constant 0 : index
    %399 = vector.load %arg6[%c0_457, %c3_458, %c1_459, %c0_460] : memref<1x5x14x16xbf16, #tpu.memory_space<vmem>>, vector<1x1x12x16xbf16>
    %400 = vector.shape_cast %399 : vector<1x1x12x16xbf16> to vector<12x16xbf16>
    %401 = vector.shape_cast %398 : vector<12x16xbf16> to vector<1x1x12x16xbf16>
    tpu.vector_store %arg6[%c0_457, %c3_458, %c1_459, %c0_460], %401 {strides = array<i32>} : memref<1x5x14x16xbf16, #tpu.memory_space<vmem>>, vector<1x1x12x16xbf16>,
    return
  }
  func.func @transform_0(%arg0: i32) -> (i32, i32, i32, i32) {
    %c0_i32 = arith.constant 0 : i32
    %c0_i32_0 = arith.constant 0 : i32
    %c0_i32_1 = arith.constant 0 : i32
    %c0_i32_2 = arith.constant 0 : i32
    return %arg0, %c0_i32, %c0_i32_0, %c0_i32_1 : i32, i32, i32, i32
  }
  func.func @transform_1(%arg0: i32) -> (i32, i32, i32) {
    %c0_i32 = arith.constant 0 : i32
    %c0_i32_0 = arith.constant 0 : i32
    %c0_i32_1 = arith.constant 0 : i32
    %c0_i32_2 = arith.constant 0 : i32
    return %c0_i32, %c0_i32_0, %c0_i32_1 : i32, i32, i32
  }
  func.func @transform_2(%arg0: i32) -> (i32, i32) {
    %c0_i32 = arith.constant 0 : i32
    %c0_i32_0 = arith.constant 0 : i32
    %c0_i32_1 = arith.constant 0 : i32
    return %c0_i32, %c0_i32_0 : i32, i32
  }
  func.func @transform_3(%arg0: i32) -> (i32, i32, i32) {
    %c0_i32 = arith.constant 0 : i32
    %c0_i32_0 = arith.constant 0 : i32
    %c0_i32_1 = arith.constant 0 : i32
    %c0_i32_2 = arith.constant 0 : i32
    return %c0_i32, %c0_i32_0, %c0_i32_1 : i32, i32, i32
  }
  func.func @transform_4(%arg0: i32) -> (i32, i32) {
    %c0_i32 = arith.constant 0 : i32
    %c0_i32_0 = arith.constant 0 : i32
    %c0_i32_1 = arith.constant 0 : i32
    return %c0_i32, %c0_i32_0 : i32, i32
  }
  func.func @transform_5(%arg0: i32) -> (i32, i32, i32, i32) {
    %c0_i32 = arith.constant 0 : i32
    %c0_i32_0 = arith.constant 0 : i32
    %c0_i32_1 = arith.constant 0 : i32
    %c0_i32_2 = arith.constant 0 : i32
    return %arg0, %c0_i32, %c0_i32_0, %c0_i32_1 : i32, i32, i32, i32
  }
}

module attributes {stable_mosaic.version = 11 : i64} {
  func.func @kernel(%arg0: i32, %arg1: memref<1x5x14x16xbf16, #tpu.memory_space<vmem>>, %arg2: memref<9x16x16xbf16, #tpu.memory_space<vmem>>, %arg3: memref<1x16xf32, #tpu.memory_space<vmem>>, %arg4: memref<9x16x16xbf16, #tpu.memory_space<vmem>>, %arg5: memref<1x16xf32, #tpu.memory_space<vmem>>, %arg6: memref<16x16xbf16, #tpu.memory_space<vmem>>, %arg7: memref<1x16xf32, #tpu.memory_space<vmem>>, %arg8: memref<1x3x12x16xf32, #tpu.memory_space<vmem>>, %arg9: memref<5x14x16xbf16, #tpu.memory_space<vmem>>) attributes {dimension_semantics = [#tpu.dimension_semantics<parallel>], iteration_bounds = array<i64: 2>, scalar_prefetch = 0 : i64, scratch_operands = 1 : i64, tpu.core_type = #tpu.core_type<tc>, window_params = [{transform_indices = @transform_0, window_bounds = array<i64: 1, 5, 14, 16>}, {pipeline_mode = #tpu.pipeline_mode<synchronous>, transform_indices = @transform_1, window_bounds = array<i64: 9, 16, 16>}, {pipeline_mode = #tpu.pipeline_mode<synchronous>, transform_indices = @transform_2, window_bounds = array<i64: 1, 16>}, {pipeline_mode = #tpu.pipeline_mode<synchronous>, transform_indices = @transform_3, window_bounds = array<i64: 9, 16, 16>}, {pipeline_mode = #tpu.pipeline_mode<synchronous>, transform_indices = @transform_4, window_bounds = array<i64: 1, 16>}, {pipeline_mode = #tpu.pipeline_mode<synchronous>, transform_indices = @transform_5, window_bounds = array<i64: 16, 16>}, {pipeline_mode = #tpu.pipeline_mode<synchronous>, transform_indices = @transform_6, window_bounds = array<i64: 1, 16>}, {transform_indices = @transform_7, window_bounds = array<i64: 1, 3, 12, 16>}]} {
    %cst = arith.constant 0.000000e+00 : bf16
    %0 = vector.broadcast %cst : bf16 to vector<5x14x16xbf16>
    %c0 = arith.constant 0 : index
    %c0_0 = arith.constant 0 : index
    %c0_1 = arith.constant 0 : index
    %1 = vector.load %arg9[%c0, %c0_0, %c0_1] : memref<5x14x16xbf16, #tpu.memory_space<vmem>>, vector<5x14x16xbf16>
    tpu.vector_store %arg9[%c0, %c0_0, %c0_1], %0 {strides = array<i32>} : memref<5x14x16xbf16, #tpu.memory_space<vmem>>, vector<5x14x16xbf16>,
    %cst_2 = arith.constant 0.000000e+00 : f32
    %2 = vector.broadcast %cst_2 : f32 to vector<12x16xf32>
    %c0_3 = arith.constant 0 : index
    %c0_4 = arith.constant 0 : index
    %c0_5 = arith.constant 0 : index
    %c0_6 = arith.constant 0 : index
    %3 = vector.load %arg1[%c0_3, %c0_4, %c0_5, %c0_6] : memref<1x5x14x16xbf16, #tpu.memory_space<vmem>>, vector<1x1x12x16xbf16>
    %4 = vector.shape_cast %3 : vector<1x1x12x16xbf16> to vector<12x16xbf16>
    %c0_7 = arith.constant 0 : index
    %c0_8 = arith.constant 0 : index
    %c0_9 = arith.constant 0 : index
    %5 = vector.load %arg2[%c0_7, %c0_8, %c0_9] : memref<9x16x16xbf16, #tpu.memory_space<vmem>>, vector<1x16x16xbf16>
    %6 = vector.shape_cast %5 : vector<1x16x16xbf16> to vector<16x16xbf16>
    %cst_10 = arith.constant dense<0.000000e+00> : vector<12x16xf32>
    %7 = tpu.matmul %4, %6, %cst_10 {dimension_numbers = #tpu.dot_dimension_numbers<[1], [0], [0], [1], [0, 0, 1, 1], [], []>} : vector<12x16xbf16>, vector<16x16xbf16>, vector<12x16xf32> -> vector<12x16xf32>
    %8 = arith.addf %2, %7 : vector<12x16xf32>
    %c0_11 = arith.constant 0 : index
    %c1 = arith.constant 1 : index
    %c0_12 = arith.constant 0 : index
    %c0_13 = arith.constant 0 : index
    %9 = vector.load %arg1[%c0_11, %c1, %c0_12, %c0_13] : memref<1x5x14x16xbf16, #tpu.memory_space<vmem>>, vector<1x1x12x16xbf16>
    %10 = vector.shape_cast %9 : vector<1x1x12x16xbf16> to vector<12x16xbf16>
    %c1_14 = arith.constant 1 : index
    %c0_15 = arith.constant 0 : index
    %c0_16 = arith.constant 0 : index
    %11 = vector.load %arg2[%c1_14, %c0_15, %c0_16] : memref<9x16x16xbf16, #tpu.memory_space<vmem>>, vector<1x16x16xbf16>
    %12 = vector.shape_cast %11 : vector<1x16x16xbf16> to vector<16x16xbf16>
    %cst_17 = arith.constant dense<0.000000e+00> : vector<12x16xf32>
    %13 = tpu.matmul %10, %12, %cst_17 {dimension_numbers = #tpu.dot_dimension_numbers<[1], [0], [0], [1], [0, 0, 1, 1], [], []>} : vector<12x16xbf16>, vector<16x16xbf16>, vector<12x16xf32> -> vector<12x16xf32>
    %14 = arith.addf %8, %13 : vector<12x16xf32>
    %c0_18 = arith.constant 0 : index
    %c2 = arith.constant 2 : index
    %c0_19 = arith.constant 0 : index
    %c0_20 = arith.constant 0 : index
    %15 = vector.load %arg1[%c0_18, %c2, %c0_19, %c0_20] : memref<1x5x14x16xbf16, #tpu.memory_space<vmem>>, vector<1x1x12x16xbf16>
    %16 = vector.shape_cast %15 : vector<1x1x12x16xbf16> to vector<12x16xbf16>
    %c2_21 = arith.constant 2 : index
    %c0_22 = arith.constant 0 : index
    %c0_23 = arith.constant 0 : index
    %17 = vector.load %arg2[%c2_21, %c0_22, %c0_23] : memref<9x16x16xbf16, #tpu.memory_space<vmem>>, vector<1x16x16xbf16>
    %18 = vector.shape_cast %17 : vector<1x16x16xbf16> to vector<16x16xbf16>
    %cst_24 = arith.constant dense<0.000000e+00> : vector<12x16xf32>
    %19 = tpu.matmul %16, %18, %cst_24 {dimension_numbers = #tpu.dot_dimension_numbers<[1], [0], [0], [1], [0, 0, 1, 1], [], []>} : vector<12x16xbf16>, vector<16x16xbf16>, vector<12x16xf32> -> vector<12x16xf32>
    %20 = arith.addf %14, %19 : vector<12x16xf32>
    %c0_25 = arith.constant 0 : index
    %c0_26 = arith.constant 0 : index
    %c1_27 = arith.constant 1 : index
    %c0_28 = arith.constant 0 : index
    %21 = vector.load %arg1[%c0_25, %c0_26, %c1_27, %c0_28] : memref<1x5x14x16xbf16, #tpu.memory_space<vmem>>, vector<1x1x12x16xbf16>
    %22 = vector.shape_cast %21 : vector<1x1x12x16xbf16> to vector<12x16xbf16>
    %c3 = arith.constant 3 : index
    %c0_29 = arith.constant 0 : index
    %c0_30 = arith.constant 0 : index
    %23 = vector.load %arg2[%c3, %c0_29, %c0_30] : memref<9x16x16xbf16, #tpu.memory_space<vmem>>, vector<1x16x16xbf16>
    %24 = vector.shape_cast %23 : vector<1x16x16xbf16> to vector<16x16xbf16>
    %cst_31 = arith.constant dense<0.000000e+00> : vector<12x16xf32>
    %25 = tpu.matmul %22, %24, %cst_31 {dimension_numbers = #tpu.dot_dimension_numbers<[1], [0], [0], [1], [0, 0, 1, 1], [], []>} : vector<12x16xbf16>, vector<16x16xbf16>, vector<12x16xf32> -> vector<12x16xf32>
    %26 = arith.addf %20, %25 : vector<12x16xf32>
    %c0_32 = arith.constant 0 : index
    %c1_33 = arith.constant 1 : index
    %c1_34 = arith.constant 1 : index
    %c0_35 = arith.constant 0 : index
    %27 = vector.load %arg1[%c0_32, %c1_33, %c1_34, %c0_35] : memref<1x5x14x16xbf16, #tpu.memory_space<vmem>>, vector<1x1x12x16xbf16>
    %28 = vector.shape_cast %27 : vector<1x1x12x16xbf16> to vector<12x16xbf16>
    %c4 = arith.constant 4 : index
    %c0_36 = arith.constant 0 : index
    %c0_37 = arith.constant 0 : index
    %29 = vector.load %arg2[%c4, %c0_36, %c0_37] : memref<9x16x16xbf16, #tpu.memory_space<vmem>>, vector<1x16x16xbf16>
    %30 = vector.shape_cast %29 : vector<1x16x16xbf16> to vector<16x16xbf16>
    %cst_38 = arith.constant dense<0.000000e+00> : vector<12x16xf32>
    %31 = tpu.matmul %28, %30, %cst_38 {dimension_numbers = #tpu.dot_dimension_numbers<[1], [0], [0], [1], [0, 0, 1, 1], [], []>} : vector<12x16xbf16>, vector<16x16xbf16>, vector<12x16xf32> -> vector<12x16xf32>
    %32 = arith.addf %26, %31 : vector<12x16xf32>
    %c0_39 = arith.constant 0 : index
    %c2_40 = arith.constant 2 : index
    %c1_41 = arith.constant 1 : index
    %c0_42 = arith.constant 0 : index
    %33 = vector.load %arg1[%c0_39, %c2_40, %c1_41, %c0_42] : memref<1x5x14x16xbf16, #tpu.memory_space<vmem>>, vector<1x1x12x16xbf16>
    %34 = vector.shape_cast %33 : vector<1x1x12x16xbf16> to vector<12x16xbf16>
    %c5 = arith.constant 5 : index
    %c0_43 = arith.constant 0 : index
    %c0_44 = arith.constant 0 : index
    %35 = vector.load %arg2[%c5, %c0_43, %c0_44] : memref<9x16x16xbf16, #tpu.memory_space<vmem>>, vector<1x16x16xbf16>
    %36 = vector.shape_cast %35 : vector<1x16x16xbf16> to vector<16x16xbf16>
    %cst_45 = arith.constant dense<0.000000e+00> : vector<12x16xf32>
    %37 = tpu.matmul %34, %36, %cst_45 {dimension_numbers = #tpu.dot_dimension_numbers<[1], [0], [0], [1], [0, 0, 1, 1], [], []>} : vector<12x16xbf16>, vector<16x16xbf16>, vector<12x16xf32> -> vector<12x16xf32>
    %38 = arith.addf %32, %37 : vector<12x16xf32>
    %c0_46 = arith.constant 0 : index
    %c0_47 = arith.constant 0 : index
    %c2_48 = arith.constant 2 : index
    %c0_49 = arith.constant 0 : index
    %39 = vector.load %arg1[%c0_46, %c0_47, %c2_48, %c0_49] : memref<1x5x14x16xbf16, #tpu.memory_space<vmem>>, vector<1x1x12x16xbf16>
    %40 = vector.shape_cast %39 : vector<1x1x12x16xbf16> to vector<12x16xbf16>
    %c6 = arith.constant 6 : index
    %c0_50 = arith.constant 0 : index
    %c0_51 = arith.constant 0 : index
    %41 = vector.load %arg2[%c6, %c0_50, %c0_51] : memref<9x16x16xbf16, #tpu.memory_space<vmem>>, vector<1x16x16xbf16>
    %42 = vector.shape_cast %41 : vector<1x16x16xbf16> to vector<16x16xbf16>
    %cst_52 = arith.constant dense<0.000000e+00> : vector<12x16xf32>
    %43 = tpu.matmul %40, %42, %cst_52 {dimension_numbers = #tpu.dot_dimension_numbers<[1], [0], [0], [1], [0, 0, 1, 1], [], []>} : vector<12x16xbf16>, vector<16x16xbf16>, vector<12x16xf32> -> vector<12x16xf32>
    %44 = arith.addf %38, %43 : vector<12x16xf32>
    %c0_53 = arith.constant 0 : index
    %c1_54 = arith.constant 1 : index
    %c2_55 = arith.constant 2 : index
    %c0_56 = arith.constant 0 : index
    %45 = vector.load %arg1[%c0_53, %c1_54, %c2_55, %c0_56] : memref<1x5x14x16xbf16, #tpu.memory_space<vmem>>, vector<1x1x12x16xbf16>
    %46 = vector.shape_cast %45 : vector<1x1x12x16xbf16> to vector<12x16xbf16>
    %c7 = arith.constant 7 : index
    %c0_57 = arith.constant 0 : index
    %c0_58 = arith.constant 0 : index
    %47 = vector.load %arg2[%c7, %c0_57, %c0_58] : memref<9x16x16xbf16, #tpu.memory_space<vmem>>, vector<1x16x16xbf16>
    %48 = vector.shape_cast %47 : vector<1x16x16xbf16> to vector<16x16xbf16>
    %cst_59 = arith.constant dense<0.000000e+00> : vector<12x16xf32>
    %49 = tpu.matmul %46, %48, %cst_59 {dimension_numbers = #tpu.dot_dimension_numbers<[1], [0], [0], [1], [0, 0, 1, 1], [], []>} : vector<12x16xbf16>, vector<16x16xbf16>, vector<12x16xf32> -> vector<12x16xf32>
    %50 = arith.addf %44, %49 : vector<12x16xf32>
    %c0_60 = arith.constant 0 : index
    %c2_61 = arith.constant 2 : index
    %c2_62 = arith.constant 2 : index
    %c0_63 = arith.constant 0 : index
    %51 = vector.load %arg1[%c0_60, %c2_61, %c2_62, %c0_63] : memref<1x5x14x16xbf16, #tpu.memory_space<vmem>>, vector<1x1x12x16xbf16>
    %52 = vector.shape_cast %51 : vector<1x1x12x16xbf16> to vector<12x16xbf16>
    %c8 = arith.constant 8 : index
    %c0_64 = arith.constant 0 : index
    %c0_65 = arith.constant 0 : index
    %53 = vector.load %arg2[%c8, %c0_64, %c0_65] : memref<9x16x16xbf16, #tpu.memory_space<vmem>>, vector<1x16x16xbf16>
    %54 = vector.shape_cast %53 : vector<1x16x16xbf16> to vector<16x16xbf16>
    %cst_66 = arith.constant dense<0.000000e+00> : vector<12x16xf32>
    %55 = tpu.matmul %52, %54, %cst_66 {dimension_numbers = #tpu.dot_dimension_numbers<[1], [0], [0], [1], [0, 0, 1, 1], [], []>} : vector<12x16xbf16>, vector<16x16xbf16>, vector<12x16xf32> -> vector<12x16xf32>
    %56 = arith.addf %50, %55 : vector<12x16xf32>
    %c0_67 = arith.constant 0 : index
    %c0_68 = arith.constant 0 : index
    %57 = vector.load %arg3[%c0_67, %c0_68] : memref<1x16xf32, #tpu.memory_space<vmem>>, vector<1x16xf32>
    %58 = vector.broadcast %57 : vector<1x16xf32> to vector<12x16xf32>
    %59 = arith.addf %56, %58 : vector<12x16xf32>
    %cst_69 = arith.constant 0.000000e+00 : f32
    %60 = vector.broadcast %cst_69 : f32 to vector<12x16xf32>
    %61 = arith.maximumf %59, %60 : vector<12x16xf32>
    %62 = arith.truncf %61 : vector<12x16xf32> to vector<12x16xbf16>
    %c1_70 = arith.constant 1 : index
    %c1_71 = arith.constant 1 : index
    %c0_72 = arith.constant 0 : index
    %63 = vector.load %arg9[%c1_70, %c1_71, %c0_72] : memref<5x14x16xbf16, #tpu.memory_space<vmem>>, vector<1x12x16xbf16>
    %64 = vector.shape_cast %63 : vector<1x12x16xbf16> to vector<12x16xbf16>
    %65 = vector.shape_cast %62 : vector<12x16xbf16> to vector<1x12x16xbf16>
    tpu.vector_store %arg9[%c1_70, %c1_71, %c0_72], %65 {strides = array<i32>} : memref<5x14x16xbf16, #tpu.memory_space<vmem>>, vector<1x12x16xbf16>,
    %cst_73 = arith.constant 0.000000e+00 : f32
    %66 = vector.broadcast %cst_73 : f32 to vector<12x16xf32>
    %c0_74 = arith.constant 0 : index
    %c1_75 = arith.constant 1 : index
    %c0_76 = arith.constant 0 : index
    %c0_77 = arith.constant 0 : index
    %67 = vector.load %arg1[%c0_74, %c1_75, %c0_76, %c0_77] : memref<1x5x14x16xbf16, #tpu.memory_space<vmem>>, vector<1x1x12x16xbf16>
    %68 = vector.shape_cast %67 : vector<1x1x12x16xbf16> to vector<12x16xbf16>
    %c0_78 = arith.constant 0 : index
    %c0_79 = arith.constant 0 : index
    %c0_80 = arith.constant 0 : index
    %69 = vector.load %arg2[%c0_78, %c0_79, %c0_80] : memref<9x16x16xbf16, #tpu.memory_space<vmem>>, vector<1x16x16xbf16>
    %70 = vector.shape_cast %69 : vector<1x16x16xbf16> to vector<16x16xbf16>
    %cst_81 = arith.constant dense<0.000000e+00> : vector<12x16xf32>
    %71 = tpu.matmul %68, %70, %cst_81 {dimension_numbers = #tpu.dot_dimension_numbers<[1], [0], [0], [1], [0, 0, 1, 1], [], []>} : vector<12x16xbf16>, vector<16x16xbf16>, vector<12x16xf32> -> vector<12x16xf32>
    %72 = arith.addf %66, %71 : vector<12x16xf32>
    %c0_82 = arith.constant 0 : index
    %c2_83 = arith.constant 2 : index
    %c0_84 = arith.constant 0 : index
    %c0_85 = arith.constant 0 : index
    %73 = vector.load %arg1[%c0_82, %c2_83, %c0_84, %c0_85] : memref<1x5x14x16xbf16, #tpu.memory_space<vmem>>, vector<1x1x12x16xbf16>
    %74 = vector.shape_cast %73 : vector<1x1x12x16xbf16> to vector<12x16xbf16>
    %c1_86 = arith.constant 1 : index
    %c0_87 = arith.constant 0 : index
    %c0_88 = arith.constant 0 : index
    %75 = vector.load %arg2[%c1_86, %c0_87, %c0_88] : memref<9x16x16xbf16, #tpu.memory_space<vmem>>, vector<1x16x16xbf16>
    %76 = vector.shape_cast %75 : vector<1x16x16xbf16> to vector<16x16xbf16>
    %cst_89 = arith.constant dense<0.000000e+00> : vector<12x16xf32>
    %77 = tpu.matmul %74, %76, %cst_89 {dimension_numbers = #tpu.dot_dimension_numbers<[1], [0], [0], [1], [0, 0, 1, 1], [], []>} : vector<12x16xbf16>, vector<16x16xbf16>, vector<12x16xf32> -> vector<12x16xf32>
    %78 = arith.addf %72, %77 : vector<12x16xf32>
    %c0_90 = arith.constant 0 : index
    %c3_91 = arith.constant 3 : index
    %c0_92 = arith.constant 0 : index
    %c0_93 = arith.constant 0 : index
    %79 = vector.load %arg1[%c0_90, %c3_91, %c0_92, %c0_93] : memref<1x5x14x16xbf16, #tpu.memory_space<vmem>>, vector<1x1x12x16xbf16>
    %80 = vector.shape_cast %79 : vector<1x1x12x16xbf16> to vector<12x16xbf16>
    %c2_94 = arith.constant 2 : index
    %c0_95 = arith.constant 0 : index
    %c0_96 = arith.constant 0 : index
    %81 = vector.load %arg2[%c2_94, %c0_95, %c0_96] : memref<9x16x16xbf16, #tpu.memory_space<vmem>>, vector<1x16x16xbf16>
    %82 = vector.shape_cast %81 : vector<1x16x16xbf16> to vector<16x16xbf16>
    %cst_97 = arith.constant dense<0.000000e+00> : vector<12x16xf32>
    %83 = tpu.matmul %80, %82, %cst_97 {dimension_numbers = #tpu.dot_dimension_numbers<[1], [0], [0], [1], [0, 0, 1, 1], [], []>} : vector<12x16xbf16>, vector<16x16xbf16>, vector<12x16xf32> -> vector<12x16xf32>
    %84 = arith.addf %78, %83 : vector<12x16xf32>
    %c0_98 = arith.constant 0 : index
    %c1_99 = arith.constant 1 : index
    %c1_100 = arith.constant 1 : index
    %c0_101 = arith.constant 0 : index
    %85 = vector.load %arg1[%c0_98, %c1_99, %c1_100, %c0_101] : memref<1x5x14x16xbf16, #tpu.memory_space<vmem>>, vector<1x1x12x16xbf16>
    %86 = vector.shape_cast %85 : vector<1x1x12x16xbf16> to vector<12x16xbf16>
    %c3_102 = arith.constant 3 : index
    %c0_103 = arith.constant 0 : index
    %c0_104 = arith.constant 0 : index
    %87 = vector.load %arg2[%c3_102, %c0_103, %c0_104] : memref<9x16x16xbf16, #tpu.memory_space<vmem>>, vector<1x16x16xbf16>
    %88 = vector.shape_cast %87 : vector<1x16x16xbf16> to vector<16x16xbf16>
    %cst_105 = arith.constant dense<0.000000e+00> : vector<12x16xf32>
    %89 = tpu.matmul %86, %88, %cst_105 {dimension_numbers = #tpu.dot_dimension_numbers<[1], [0], [0], [1], [0, 0, 1, 1], [], []>} : vector<12x16xbf16>, vector<16x16xbf16>, vector<12x16xf32> -> vector<12x16xf32>
    %90 = arith.addf %84, %89 : vector<12x16xf32>
    %c0_106 = arith.constant 0 : index
    %c2_107 = arith.constant 2 : index
    %c1_108 = arith.constant 1 : index
    %c0_109 = arith.constant 0 : index
    %91 = vector.load %arg1[%c0_106, %c2_107, %c1_108, %c0_109] : memref<1x5x14x16xbf16, #tpu.memory_space<vmem>>, vector<1x1x12x16xbf16>
    %92 = vector.shape_cast %91 : vector<1x1x12x16xbf16> to vector<12x16xbf16>
    %c4_110 = arith.constant 4 : index
    %c0_111 = arith.constant 0 : index
    %c0_112 = arith.constant 0 : index
    %93 = vector.load %arg2[%c4_110, %c0_111, %c0_112] : memref<9x16x16xbf16, #tpu.memory_space<vmem>>, vector<1x16x16xbf16>
    %94 = vector.shape_cast %93 : vector<1x16x16xbf16> to vector<16x16xbf16>
    %cst_113 = arith.constant dense<0.000000e+00> : vector<12x16xf32>
    %95 = tpu.matmul %92, %94, %cst_113 {dimension_numbers = #tpu.dot_dimension_numbers<[1], [0], [0], [1], [0, 0, 1, 1], [], []>} : vector<12x16xbf16>, vector<16x16xbf16>, vector<12x16xf32> -> vector<12x16xf32>
    %96 = arith.addf %90, %95 : vector<12x16xf32>
    %c0_114 = arith.constant 0 : index
    %c3_115 = arith.constant 3 : index
    %c1_116 = arith.constant 1 : index
    %c0_117 = arith.constant 0 : index
    %97 = vector.load %arg1[%c0_114, %c3_115, %c1_116, %c0_117] : memref<1x5x14x16xbf16, #tpu.memory_space<vmem>>, vector<1x1x12x16xbf16>
    %98 = vector.shape_cast %97 : vector<1x1x12x16xbf16> to vector<12x16xbf16>
    %c5_118 = arith.constant 5 : index
    %c0_119 = arith.constant 0 : index
    %c0_120 = arith.constant 0 : index
    %99 = vector.load %arg2[%c5_118, %c0_119, %c0_120] : memref<9x16x16xbf16, #tpu.memory_space<vmem>>, vector<1x16x16xbf16>
    %100 = vector.shape_cast %99 : vector<1x16x16xbf16> to vector<16x16xbf16>
    %cst_121 = arith.constant dense<0.000000e+00> : vector<12x16xf32>
    %101 = tpu.matmul %98, %100, %cst_121 {dimension_numbers = #tpu.dot_dimension_numbers<[1], [0], [0], [1], [0, 0, 1, 1], [], []>} : vector<12x16xbf16>, vector<16x16xbf16>, vector<12x16xf32> -> vector<12x16xf32>
    %102 = arith.addf %96, %101 : vector<12x16xf32>
    %c0_122 = arith.constant 0 : index
    %c1_123 = arith.constant 1 : index
    %c2_124 = arith.constant 2 : index
    %c0_125 = arith.constant 0 : index
    %103 = vector.load %arg1[%c0_122, %c1_123, %c2_124, %c0_125] : memref<1x5x14x16xbf16, #tpu.memory_space<vmem>>, vector<1x1x12x16xbf16>
    %104 = vector.shape_cast %103 : vector<1x1x12x16xbf16> to vector<12x16xbf16>
    %c6_126 = arith.constant 6 : index
    %c0_127 = arith.constant 0 : index
    %c0_128 = arith.constant 0 : index
    %105 = vector.load %arg2[%c6_126, %c0_127, %c0_128] : memref<9x16x16xbf16, #tpu.memory_space<vmem>>, vector<1x16x16xbf16>
    %106 = vector.shape_cast %105 : vector<1x16x16xbf16> to vector<16x16xbf16>
    %cst_129 = arith.constant dense<0.000000e+00> : vector<12x16xf32>
    %107 = tpu.matmul %104, %106, %cst_129 {dimension_numbers = #tpu.dot_dimension_numbers<[1], [0], [0], [1], [0, 0, 1, 1], [], []>} : vector<12x16xbf16>, vector<16x16xbf16>, vector<12x16xf32> -> vector<12x16xf32>
    %108 = arith.addf %102, %107 : vector<12x16xf32>
    %c0_130 = arith.constant 0 : index
    %c2_131 = arith.constant 2 : index
    %c2_132 = arith.constant 2 : index
    %c0_133 = arith.constant 0 : index
    %109 = vector.load %arg1[%c0_130, %c2_131, %c2_132, %c0_133] : memref<1x5x14x16xbf16, #tpu.memory_space<vmem>>, vector<1x1x12x16xbf16>
    %110 = vector.shape_cast %109 : vector<1x1x12x16xbf16> to vector<12x16xbf16>
    %c7_134 = arith.constant 7 : index
    %c0_135 = arith.constant 0 : index
    %c0_136 = arith.constant 0 : index
    %111 = vector.load %arg2[%c7_134, %c0_135, %c0_136] : memref<9x16x16xbf16, #tpu.memory_space<vmem>>, vector<1x16x16xbf16>
    %112 = vector.shape_cast %111 : vector<1x16x16xbf16> to vector<16x16xbf16>
    %cst_137 = arith.constant dense<0.000000e+00> : vector<12x16xf32>
    %113 = tpu.matmul %110, %112, %cst_137 {dimension_numbers = #tpu.dot_dimension_numbers<[1], [0], [0], [1], [0, 0, 1, 1], [], []>} : vector<12x16xbf16>, vector<16x16xbf16>, vector<12x16xf32> -> vector<12x16xf32>
    %114 = arith.addf %108, %113 : vector<12x16xf32>
    %c0_138 = arith.constant 0 : index
    %c3_139 = arith.constant 3 : index
    %c2_140 = arith.constant 2 : index
    %c0_141 = arith.constant 0 : index
    %115 = vector.load %arg1[%c0_138, %c3_139, %c2_140, %c0_141] : memref<1x5x14x16xbf16, #tpu.memory_space<vmem>>, vector<1x1x12x16xbf16>
    %116 = vector.shape_cast %115 : vector<1x1x12x16xbf16> to vector<12x16xbf16>
    %c8_142 = arith.constant 8 : index
    %c0_143 = arith.constant 0 : index
    %c0_144 = arith.constant 0 : index
    %117 = vector.load %arg2[%c8_142, %c0_143, %c0_144] : memref<9x16x16xbf16, #tpu.memory_space<vmem>>, vector<1x16x16xbf16>
    %118 = vector.shape_cast %117 : vector<1x16x16xbf16> to vector<16x16xbf16>
    %cst_145 = arith.constant dense<0.000000e+00> : vector<12x16xf32>
    %119 = tpu.matmul %116, %118, %cst_145 {dimension_numbers = #tpu.dot_dimension_numbers<[1], [0], [0], [1], [0, 0, 1, 1], [], []>} : vector<12x16xbf16>, vector<16x16xbf16>, vector<12x16xf32> -> vector<12x16xf32>
    %120 = arith.addf %114, %119 : vector<12x16xf32>
    %c0_146 = arith.constant 0 : index
    %c0_147 = arith.constant 0 : index
    %121 = vector.load %arg3[%c0_146, %c0_147] : memref<1x16xf32, #tpu.memory_space<vmem>>, vector<1x16xf32>
    %122 = vector.broadcast %121 : vector<1x16xf32> to vector<12x16xf32>
    %123 = arith.addf %120, %122 : vector<12x16xf32>
    %cst_148 = arith.constant 0.000000e+00 : f32
    %124 = vector.broadcast %cst_148 : f32 to vector<12x16xf32>
    %125 = arith.maximumf %123, %124 : vector<12x16xf32>
    %126 = arith.truncf %125 : vector<12x16xf32> to vector<12x16xbf16>
    %c2_149 = arith.constant 2 : index
    %c1_150 = arith.constant 1 : index
    %c0_151 = arith.constant 0 : index
    %127 = vector.load %arg9[%c2_149, %c1_150, %c0_151] : memref<5x14x16xbf16, #tpu.memory_space<vmem>>, vector<1x12x16xbf16>
    %128 = vector.shape_cast %127 : vector<1x12x16xbf16> to vector<12x16xbf16>
    %129 = vector.shape_cast %126 : vector<12x16xbf16> to vector<1x12x16xbf16>
    tpu.vector_store %arg9[%c2_149, %c1_150, %c0_151], %129 {strides = array<i32>} : memref<5x14x16xbf16, #tpu.memory_space<vmem>>, vector<1x12x16xbf16>,
    %cst_152 = arith.constant 0.000000e+00 : f32
    %130 = vector.broadcast %cst_152 : f32 to vector<12x16xf32>
    %c0_153 = arith.constant 0 : index
    %c2_154 = arith.constant 2 : index
    %c0_155 = arith.constant 0 : index
    %c0_156 = arith.constant 0 : index
    %131 = vector.load %arg1[%c0_153, %c2_154, %c0_155, %c0_156] : memref<1x5x14x16xbf16, #tpu.memory_space<vmem>>, vector<1x1x12x16xbf16>
    %132 = vector.shape_cast %131 : vector<1x1x12x16xbf16> to vector<12x16xbf16>
    %c0_157 = arith.constant 0 : index
    %c0_158 = arith.constant 0 : index
    %c0_159 = arith.constant 0 : index
    %133 = vector.load %arg2[%c0_157, %c0_158, %c0_159] : memref<9x16x16xbf16, #tpu.memory_space<vmem>>, vector<1x16x16xbf16>
    %134 = vector.shape_cast %133 : vector<1x16x16xbf16> to vector<16x16xbf16>
    %cst_160 = arith.constant dense<0.000000e+00> : vector<12x16xf32>
    %135 = tpu.matmul %132, %134, %cst_160 {dimension_numbers = #tpu.dot_dimension_numbers<[1], [0], [0], [1], [0, 0, 1, 1], [], []>} : vector<12x16xbf16>, vector<16x16xbf16>, vector<12x16xf32> -> vector<12x16xf32>
    %136 = arith.addf %130, %135 : vector<12x16xf32>
    %c0_161 = arith.constant 0 : index
    %c3_162 = arith.constant 3 : index
    %c0_163 = arith.constant 0 : index
    %c0_164 = arith.constant 0 : index
    %137 = vector.load %arg1[%c0_161, %c3_162, %c0_163, %c0_164] : memref<1x5x14x16xbf16, #tpu.memory_space<vmem>>, vector<1x1x12x16xbf16>
    %138 = vector.shape_cast %137 : vector<1x1x12x16xbf16> to vector<12x16xbf16>
    %c1_165 = arith.constant 1 : index
    %c0_166 = arith.constant 0 : index
    %c0_167 = arith.constant 0 : index
    %139 = vector.load %arg2[%c1_165, %c0_166, %c0_167] : memref<9x16x16xbf16, #tpu.memory_space<vmem>>, vector<1x16x16xbf16>
    %140 = vector.shape_cast %139 : vector<1x16x16xbf16> to vector<16x16xbf16>
    %cst_168 = arith.constant dense<0.000000e+00> : vector<12x16xf32>
    %141 = tpu.matmul %138, %140, %cst_168 {dimension_numbers = #tpu.dot_dimension_numbers<[1], [0], [0], [1], [0, 0, 1, 1], [], []>} : vector<12x16xbf16>, vector<16x16xbf16>, vector<12x16xf32> -> vector<12x16xf32>
    %142 = arith.addf %136, %141 : vector<12x16xf32>
    %c0_169 = arith.constant 0 : index
    %c4_170 = arith.constant 4 : index
    %c0_171 = arith.constant 0 : index
    %c0_172 = arith.constant 0 : index
    %143 = vector.load %arg1[%c0_169, %c4_170, %c0_171, %c0_172] : memref<1x5x14x16xbf16, #tpu.memory_space<vmem>>, vector<1x1x12x16xbf16>
    %144 = vector.shape_cast %143 : vector<1x1x12x16xbf16> to vector<12x16xbf16>
    %c2_173 = arith.constant 2 : index
    %c0_174 = arith.constant 0 : index
    %c0_175 = arith.constant 0 : index
    %145 = vector.load %arg2[%c2_173, %c0_174, %c0_175] : memref<9x16x16xbf16, #tpu.memory_space<vmem>>, vector<1x16x16xbf16>
    %146 = vector.shape_cast %145 : vector<1x16x16xbf16> to vector<16x16xbf16>
    %cst_176 = arith.constant dense<0.000000e+00> : vector<12x16xf32>
    %147 = tpu.matmul %144, %146, %cst_176 {dimension_numbers = #tpu.dot_dimension_numbers<[1], [0], [0], [1], [0, 0, 1, 1], [], []>} : vector<12x16xbf16>, vector<16x16xbf16>, vector<12x16xf32> -> vector<12x16xf32>
    %148 = arith.addf %142, %147 : vector<12x16xf32>
    %c0_177 = arith.constant 0 : index
    %c2_178 = arith.constant 2 : index
    %c1_179 = arith.constant 1 : index
    %c0_180 = arith.constant 0 : index
    %149 = vector.load %arg1[%c0_177, %c2_178, %c1_179, %c0_180] : memref<1x5x14x16xbf16, #tpu.memory_space<vmem>>, vector<1x1x12x16xbf16>
    %150 = vector.shape_cast %149 : vector<1x1x12x16xbf16> to vector<12x16xbf16>
    %c3_181 = arith.constant 3 : index
    %c0_182 = arith.constant 0 : index
    %c0_183 = arith.constant 0 : index
    %151 = vector.load %arg2[%c3_181, %c0_182, %c0_183] : memref<9x16x16xbf16, #tpu.memory_space<vmem>>, vector<1x16x16xbf16>
    %152 = vector.shape_cast %151 : vector<1x16x16xbf16> to vector<16x16xbf16>
    %cst_184 = arith.constant dense<0.000000e+00> : vector<12x16xf32>
    %153 = tpu.matmul %150, %152, %cst_184 {dimension_numbers = #tpu.dot_dimension_numbers<[1], [0], [0], [1], [0, 0, 1, 1], [], []>} : vector<12x16xbf16>, vector<16x16xbf16>, vector<12x16xf32> -> vector<12x16xf32>
    %154 = arith.addf %148, %153 : vector<12x16xf32>
    %c0_185 = arith.constant 0 : index
    %c3_186 = arith.constant 3 : index
    %c1_187 = arith.constant 1 : index
    %c0_188 = arith.constant 0 : index
    %155 = vector.load %arg1[%c0_185, %c3_186, %c1_187, %c0_188] : memref<1x5x14x16xbf16, #tpu.memory_space<vmem>>, vector<1x1x12x16xbf16>
    %156 = vector.shape_cast %155 : vector<1x1x12x16xbf16> to vector<12x16xbf16>
    %c4_189 = arith.constant 4 : index
    %c0_190 = arith.constant 0 : index
    %c0_191 = arith.constant 0 : index
    %157 = vector.load %arg2[%c4_189, %c0_190, %c0_191] : memref<9x16x16xbf16, #tpu.memory_space<vmem>>, vector<1x16x16xbf16>
    %158 = vector.shape_cast %157 : vector<1x16x16xbf16> to vector<16x16xbf16>
    %cst_192 = arith.constant dense<0.000000e+00> : vector<12x16xf32>
    %159 = tpu.matmul %156, %158, %cst_192 {dimension_numbers = #tpu.dot_dimension_numbers<[1], [0], [0], [1], [0, 0, 1, 1], [], []>} : vector<12x16xbf16>, vector<16x16xbf16>, vector<12x16xf32> -> vector<12x16xf32>
    %160 = arith.addf %154, %159 : vector<12x16xf32>
    %c0_193 = arith.constant 0 : index
    %c4_194 = arith.constant 4 : index
    %c1_195 = arith.constant 1 : index
    %c0_196 = arith.constant 0 : index
    %161 = vector.load %arg1[%c0_193, %c4_194, %c1_195, %c0_196] : memref<1x5x14x16xbf16, #tpu.memory_space<vmem>>, vector<1x1x12x16xbf16>
    %162 = vector.shape_cast %161 : vector<1x1x12x16xbf16> to vector<12x16xbf16>
    %c5_197 = arith.constant 5 : index
    %c0_198 = arith.constant 0 : index
    %c0_199 = arith.constant 0 : index
    %163 = vector.load %arg2[%c5_197, %c0_198, %c0_199] : memref<9x16x16xbf16, #tpu.memory_space<vmem>>, vector<1x16x16xbf16>
    %164 = vector.shape_cast %163 : vector<1x16x16xbf16> to vector<16x16xbf16>
    %cst_200 = arith.constant dense<0.000000e+00> : vector<12x16xf32>
    %165 = tpu.matmul %162, %164, %cst_200 {dimension_numbers = #tpu.dot_dimension_numbers<[1], [0], [0], [1], [0, 0, 1, 1], [], []>} : vector<12x16xbf16>, vector<16x16xbf16>, vector<12x16xf32> -> vector<12x16xf32>
    %166 = arith.addf %160, %165 : vector<12x16xf32>
    %c0_201 = arith.constant 0 : index
    %c2_202 = arith.constant 2 : index
    %c2_203 = arith.constant 2 : index
    %c0_204 = arith.constant 0 : index
    %167 = vector.load %arg1[%c0_201, %c2_202, %c2_203, %c0_204] : memref<1x5x14x16xbf16, #tpu.memory_space<vmem>>, vector<1x1x12x16xbf16>
    %168 = vector.shape_cast %167 : vector<1x1x12x16xbf16> to vector<12x16xbf16>
    %c6_205 = arith.constant 6 : index
    %c0_206 = arith.constant 0 : index
    %c0_207 = arith.constant 0 : index
    %169 = vector.load %arg2[%c6_205, %c0_206, %c0_207] : memref<9x16x16xbf16, #tpu.memory_space<vmem>>, vector<1x16x16xbf16>
    %170 = vector.shape_cast %169 : vector<1x16x16xbf16> to vector<16x16xbf16>
    %cst_208 = arith.constant dense<0.000000e+00> : vector<12x16xf32>
    %171 = tpu.matmul %168, %170, %cst_208 {dimension_numbers = #tpu.dot_dimension_numbers<[1], [0], [0], [1], [0, 0, 1, 1], [], []>} : vector<12x16xbf16>, vector<16x16xbf16>, vector<12x16xf32> -> vector<12x16xf32>
    %172 = arith.addf %166, %171 : vector<12x16xf32>
    %c0_209 = arith.constant 0 : index
    %c3_210 = arith.constant 3 : index
    %c2_211 = arith.constant 2 : index
    %c0_212 = arith.constant 0 : index
    %173 = vector.load %arg1[%c0_209, %c3_210, %c2_211, %c0_212] : memref<1x5x14x16xbf16, #tpu.memory_space<vmem>>, vector<1x1x12x16xbf16>
    %174 = vector.shape_cast %173 : vector<1x1x12x16xbf16> to vector<12x16xbf16>
    %c7_213 = arith.constant 7 : index
    %c0_214 = arith.constant 0 : index
    %c0_215 = arith.constant 0 : index
    %175 = vector.load %arg2[%c7_213, %c0_214, %c0_215] : memref<9x16x16xbf16, #tpu.memory_space<vmem>>, vector<1x16x16xbf16>
    %176 = vector.shape_cast %175 : vector<1x16x16xbf16> to vector<16x16xbf16>
    %cst_216 = arith.constant dense<0.000000e+00> : vector<12x16xf32>
    %177 = tpu.matmul %174, %176, %cst_216 {dimension_numbers = #tpu.dot_dimension_numbers<[1], [0], [0], [1], [0, 0, 1, 1], [], []>} : vector<12x16xbf16>, vector<16x16xbf16>, vector<12x16xf32> -> vector<12x16xf32>
    %178 = arith.addf %172, %177 : vector<12x16xf32>
    %c0_217 = arith.constant 0 : index
    %c4_218 = arith.constant 4 : index
    %c2_219 = arith.constant 2 : index
    %c0_220 = arith.constant 0 : index
    %179 = vector.load %arg1[%c0_217, %c4_218, %c2_219, %c0_220] : memref<1x5x14x16xbf16, #tpu.memory_space<vmem>>, vector<1x1x12x16xbf16>
    %180 = vector.shape_cast %179 : vector<1x1x12x16xbf16> to vector<12x16xbf16>
    %c8_221 = arith.constant 8 : index
    %c0_222 = arith.constant 0 : index
    %c0_223 = arith.constant 0 : index
    %181 = vector.load %arg2[%c8_221, %c0_222, %c0_223] : memref<9x16x16xbf16, #tpu.memory_space<vmem>>, vector<1x16x16xbf16>
    %182 = vector.shape_cast %181 : vector<1x16x16xbf16> to vector<16x16xbf16>
    %cst_224 = arith.constant dense<0.000000e+00> : vector<12x16xf32>
    %183 = tpu.matmul %180, %182, %cst_224 {dimension_numbers = #tpu.dot_dimension_numbers<[1], [0], [0], [1], [0, 0, 1, 1], [], []>} : vector<12x16xbf16>, vector<16x16xbf16>, vector<12x16xf32> -> vector<12x16xf32>
    %184 = arith.addf %178, %183 : vector<12x16xf32>
    %c0_225 = arith.constant 0 : index
    %c0_226 = arith.constant 0 : index
    %185 = vector.load %arg3[%c0_225, %c0_226] : memref<1x16xf32, #tpu.memory_space<vmem>>, vector<1x16xf32>
    %186 = vector.broadcast %185 : vector<1x16xf32> to vector<12x16xf32>
    %187 = arith.addf %184, %186 : vector<12x16xf32>
    %cst_227 = arith.constant 0.000000e+00 : f32
    %188 = vector.broadcast %cst_227 : f32 to vector<12x16xf32>
    %189 = arith.maximumf %187, %188 : vector<12x16xf32>
    %190 = arith.truncf %189 : vector<12x16xf32> to vector<12x16xbf16>
    %c3_228 = arith.constant 3 : index
    %c1_229 = arith.constant 1 : index
    %c0_230 = arith.constant 0 : index
    %191 = vector.load %arg9[%c3_228, %c1_229, %c0_230] : memref<5x14x16xbf16, #tpu.memory_space<vmem>>, vector<1x12x16xbf16>
    %192 = vector.shape_cast %191 : vector<1x12x16xbf16> to vector<12x16xbf16>
    %193 = vector.shape_cast %190 : vector<12x16xbf16> to vector<1x12x16xbf16>
    tpu.vector_store %arg9[%c3_228, %c1_229, %c0_230], %193 {strides = array<i32>} : memref<5x14x16xbf16, #tpu.memory_space<vmem>>, vector<1x12x16xbf16>,
    %cst_231 = arith.constant 0.000000e+00 : f32
    %194 = vector.broadcast %cst_231 : f32 to vector<12x16xf32>
    %c0_232 = arith.constant 0 : index
    %c0_233 = arith.constant 0 : index
    %c0_234 = arith.constant 0 : index
    %195 = vector.load %arg9[%c0_232, %c0_233, %c0_234] : memref<5x14x16xbf16, #tpu.memory_space<vmem>>, vector<1x12x16xbf16>
    %196 = vector.shape_cast %195 : vector<1x12x16xbf16> to vector<12x16xbf16>
    %c0_235 = arith.constant 0 : index
    %c0_236 = arith.constant 0 : index
    %c0_237 = arith.constant 0 : index
    %197 = vector.load %arg4[%c0_235, %c0_236, %c0_237] : memref<9x16x16xbf16, #tpu.memory_space<vmem>>, vector<1x16x16xbf16>
    %198 = vector.shape_cast %197 : vector<1x16x16xbf16> to vector<16x16xbf16>
    %cst_238 = arith.constant dense<0.000000e+00> : vector<12x16xf32>
    %199 = tpu.matmul %196, %198, %cst_238 {dimension_numbers = #tpu.dot_dimension_numbers<[1], [0], [0], [1], [0, 0, 1, 1], [], []>} : vector<12x16xbf16>, vector<16x16xbf16>, vector<12x16xf32> -> vector<12x16xf32>
    %200 = arith.addf %194, %199 : vector<12x16xf32>
    %c1_239 = arith.constant 1 : index
    %c0_240 = arith.constant 0 : index
    %c0_241 = arith.constant 0 : index
    %201 = vector.load %arg9[%c1_239, %c0_240, %c0_241] : memref<5x14x16xbf16, #tpu.memory_space<vmem>>, vector<1x12x16xbf16>
    %202 = vector.shape_cast %201 : vector<1x12x16xbf16> to vector<12x16xbf16>
    %c1_242 = arith.constant 1 : index
    %c0_243 = arith.constant 0 : index
    %c0_244 = arith.constant 0 : index
    %203 = vector.load %arg4[%c1_242, %c0_243, %c0_244] : memref<9x16x16xbf16, #tpu.memory_space<vmem>>, vector<1x16x16xbf16>
    %204 = vector.shape_cast %203 : vector<1x16x16xbf16> to vector<16x16xbf16>
    %cst_245 = arith.constant dense<0.000000e+00> : vector<12x16xf32>
    %205 = tpu.matmul %202, %204, %cst_245 {dimension_numbers = #tpu.dot_dimension_numbers<[1], [0], [0], [1], [0, 0, 1, 1], [], []>} : vector<12x16xbf16>, vector<16x16xbf16>, vector<12x16xf32> -> vector<12x16xf32>
    %206 = arith.addf %200, %205 : vector<12x16xf32>
    %c2_246 = arith.constant 2 : index
    %c0_247 = arith.constant 0 : index
    %c0_248 = arith.constant 0 : index
    %207 = vector.load %arg9[%c2_246, %c0_247, %c0_248] : memref<5x14x16xbf16, #tpu.memory_space<vmem>>, vector<1x12x16xbf16>
    %208 = vector.shape_cast %207 : vector<1x12x16xbf16> to vector<12x16xbf16>
    %c2_249 = arith.constant 2 : index
    %c0_250 = arith.constant 0 : index
    %c0_251 = arith.constant 0 : index
    %209 = vector.load %arg4[%c2_249, %c0_250, %c0_251] : memref<9x16x16xbf16, #tpu.memory_space<vmem>>, vector<1x16x16xbf16>
    %210 = vector.shape_cast %209 : vector<1x16x16xbf16> to vector<16x16xbf16>
    %cst_252 = arith.constant dense<0.000000e+00> : vector<12x16xf32>
    %211 = tpu.matmul %208, %210, %cst_252 {dimension_numbers = #tpu.dot_dimension_numbers<[1], [0], [0], [1], [0, 0, 1, 1], [], []>} : vector<12x16xbf16>, vector<16x16xbf16>, vector<12x16xf32> -> vector<12x16xf32>
    %212 = arith.addf %206, %211 : vector<12x16xf32>
    %c0_253 = arith.constant 0 : index
    %c1_254 = arith.constant 1 : index
    %c0_255 = arith.constant 0 : index
    %213 = vector.load %arg9[%c0_253, %c1_254, %c0_255] : memref<5x14x16xbf16, #tpu.memory_space<vmem>>, vector<1x12x16xbf16>
    %214 = vector.shape_cast %213 : vector<1x12x16xbf16> to vector<12x16xbf16>
    %c3_256 = arith.constant 3 : index
    %c0_257 = arith.constant 0 : index
    %c0_258 = arith.constant 0 : index
    %215 = vector.load %arg4[%c3_256, %c0_257, %c0_258] : memref<9x16x16xbf16, #tpu.memory_space<vmem>>, vector<1x16x16xbf16>
    %216 = vector.shape_cast %215 : vector<1x16x16xbf16> to vector<16x16xbf16>
    %cst_259 = arith.constant dense<0.000000e+00> : vector<12x16xf32>
    %217 = tpu.matmul %214, %216, %cst_259 {dimension_numbers = #tpu.dot_dimension_numbers<[1], [0], [0], [1], [0, 0, 1, 1], [], []>} : vector<12x16xbf16>, vector<16x16xbf16>, vector<12x16xf32> -> vector<12x16xf32>
    %218 = arith.addf %212, %217 : vector<12x16xf32>
    %c1_260 = arith.constant 1 : index
    %c1_261 = arith.constant 1 : index
    %c0_262 = arith.constant 0 : index
    %219 = vector.load %arg9[%c1_260, %c1_261, %c0_262] : memref<5x14x16xbf16, #tpu.memory_space<vmem>>, vector<1x12x16xbf16>
    %220 = vector.shape_cast %219 : vector<1x12x16xbf16> to vector<12x16xbf16>
    %c4_263 = arith.constant 4 : index
    %c0_264 = arith.constant 0 : index
    %c0_265 = arith.constant 0 : index
    %221 = vector.load %arg4[%c4_263, %c0_264, %c0_265] : memref<9x16x16xbf16, #tpu.memory_space<vmem>>, vector<1x16x16xbf16>
    %222 = vector.shape_cast %221 : vector<1x16x16xbf16> to vector<16x16xbf16>
    %cst_266 = arith.constant dense<0.000000e+00> : vector<12x16xf32>
    %223 = tpu.matmul %220, %222, %cst_266 {dimension_numbers = #tpu.dot_dimension_numbers<[1], [0], [0], [1], [0, 0, 1, 1], [], []>} : vector<12x16xbf16>, vector<16x16xbf16>, vector<12x16xf32> -> vector<12x16xf32>
    %224 = arith.addf %218, %223 : vector<12x16xf32>
    %c2_267 = arith.constant 2 : index
    %c1_268 = arith.constant 1 : index
    %c0_269 = arith.constant 0 : index
    %225 = vector.load %arg9[%c2_267, %c1_268, %c0_269] : memref<5x14x16xbf16, #tpu.memory_space<vmem>>, vector<1x12x16xbf16>
    %226 = vector.shape_cast %225 : vector<1x12x16xbf16> to vector<12x16xbf16>
    %c5_270 = arith.constant 5 : index
    %c0_271 = arith.constant 0 : index
    %c0_272 = arith.constant 0 : index
    %227 = vector.load %arg4[%c5_270, %c0_271, %c0_272] : memref<9x16x16xbf16, #tpu.memory_space<vmem>>, vector<1x16x16xbf16>
    %228 = vector.shape_cast %227 : vector<1x16x16xbf16> to vector<16x16xbf16>
    %cst_273 = arith.constant dense<0.000000e+00> : vector<12x16xf32>
    %229 = tpu.matmul %226, %228, %cst_273 {dimension_numbers = #tpu.dot_dimension_numbers<[1], [0], [0], [1], [0, 0, 1, 1], [], []>} : vector<12x16xbf16>, vector<16x16xbf16>, vector<12x16xf32> -> vector<12x16xf32>
    %230 = arith.addf %224, %229 : vector<12x16xf32>
    %c0_274 = arith.constant 0 : index
    %c2_275 = arith.constant 2 : index
    %c0_276 = arith.constant 0 : index
    %231 = vector.load %arg9[%c0_274, %c2_275, %c0_276] : memref<5x14x16xbf16, #tpu.memory_space<vmem>>, vector<1x12x16xbf16>
    %232 = vector.shape_cast %231 : vector<1x12x16xbf16> to vector<12x16xbf16>
    %c6_277 = arith.constant 6 : index
    %c0_278 = arith.constant 0 : index
    %c0_279 = arith.constant 0 : index
    %233 = vector.load %arg4[%c6_277, %c0_278, %c0_279] : memref<9x16x16xbf16, #tpu.memory_space<vmem>>, vector<1x16x16xbf16>
    %234 = vector.shape_cast %233 : vector<1x16x16xbf16> to vector<16x16xbf16>
    %cst_280 = arith.constant dense<0.000000e+00> : vector<12x16xf32>
    %235 = tpu.matmul %232, %234, %cst_280 {dimension_numbers = #tpu.dot_dimension_numbers<[1], [0], [0], [1], [0, 0, 1, 1], [], []>} : vector<12x16xbf16>, vector<16x16xbf16>, vector<12x16xf32> -> vector<12x16xf32>
    %236 = arith.addf %230, %235 : vector<12x16xf32>
    %c1_281 = arith.constant 1 : index
    %c2_282 = arith.constant 2 : index
    %c0_283 = arith.constant 0 : index
    %237 = vector.load %arg9[%c1_281, %c2_282, %c0_283] : memref<5x14x16xbf16, #tpu.memory_space<vmem>>, vector<1x12x16xbf16>
    %238 = vector.shape_cast %237 : vector<1x12x16xbf16> to vector<12x16xbf16>
    %c7_284 = arith.constant 7 : index
    %c0_285 = arith.constant 0 : index
    %c0_286 = arith.constant 0 : index
    %239 = vector.load %arg4[%c7_284, %c0_285, %c0_286] : memref<9x16x16xbf16, #tpu.memory_space<vmem>>, vector<1x16x16xbf16>
    %240 = vector.shape_cast %239 : vector<1x16x16xbf16> to vector<16x16xbf16>
    %cst_287 = arith.constant dense<0.000000e+00> : vector<12x16xf32>
    %241 = tpu.matmul %238, %240, %cst_287 {dimension_numbers = #tpu.dot_dimension_numbers<[1], [0], [0], [1], [0, 0, 1, 1], [], []>} : vector<12x16xbf16>, vector<16x16xbf16>, vector<12x16xf32> -> vector<12x16xf32>
    %242 = arith.addf %236, %241 : vector<12x16xf32>
    %c2_288 = arith.constant 2 : index
    %c2_289 = arith.constant 2 : index
    %c0_290 = arith.constant 0 : index
    %243 = vector.load %arg9[%c2_288, %c2_289, %c0_290] : memref<5x14x16xbf16, #tpu.memory_space<vmem>>, vector<1x12x16xbf16>
    %244 = vector.shape_cast %243 : vector<1x12x16xbf16> to vector<12x16xbf16>
    %c8_291 = arith.constant 8 : index
    %c0_292 = arith.constant 0 : index
    %c0_293 = arith.constant 0 : index
    %245 = vector.load %arg4[%c8_291, %c0_292, %c0_293] : memref<9x16x16xbf16, #tpu.memory_space<vmem>>, vector<1x16x16xbf16>
    %246 = vector.shape_cast %245 : vector<1x16x16xbf16> to vector<16x16xbf16>
    %cst_294 = arith.constant dense<0.000000e+00> : vector<12x16xf32>
    %247 = tpu.matmul %244, %246, %cst_294 {dimension_numbers = #tpu.dot_dimension_numbers<[1], [0], [0], [1], [0, 0, 1, 1], [], []>} : vector<12x16xbf16>, vector<16x16xbf16>, vector<12x16xf32> -> vector<12x16xf32>
    %248 = arith.addf %242, %247 : vector<12x16xf32>
    %c0_295 = arith.constant 0 : index
    %c1_296 = arith.constant 1 : index
    %c1_297 = arith.constant 1 : index
    %c0_298 = arith.constant 0 : index
    %249 = vector.load %arg1[%c0_295, %c1_296, %c1_297, %c0_298] : memref<1x5x14x16xbf16, #tpu.memory_space<vmem>>, vector<1x1x12x16xbf16>
    %250 = vector.shape_cast %249 : vector<1x1x12x16xbf16> to vector<12x16xbf16>
    %251 = arith.extf %250 : vector<12x16xbf16> to vector<12x16xf32>
    %c0_299 = arith.constant 0 : index
    %c0_300 = arith.constant 0 : index
    %252 = vector.load %arg5[%c0_299, %c0_300] : memref<1x16xf32, #tpu.memory_space<vmem>>, vector<1x16xf32>
    %253 = vector.broadcast %252 : vector<1x16xf32> to vector<12x16xf32>
    %254 = arith.addf %248, %253 : vector<12x16xf32>
    %255 = arith.addf %254, %251 : vector<12x16xf32>
    %cst_301 = arith.constant 0.000000e+00 : f32
    %256 = vector.broadcast %cst_301 : f32 to vector<12x16xf32>
    %257 = arith.maximumf %255, %256 : vector<12x16xf32>
    %258 = arith.truncf %257 : vector<12x16xf32> to vector<12x16xbf16>
    %c0_302 = arith.constant 0 : index
    %c0_303 = arith.constant 0 : index
    %259 = vector.load %arg6[%c0_302, %c0_303] : memref<16x16xbf16, #tpu.memory_space<vmem>>, vector<16x16xbf16>
    %cst_304 = arith.constant dense<0.000000e+00> : vector<12x16xf32>
    %260 = tpu.matmul %258, %259, %cst_304 {dimension_numbers = #tpu.dot_dimension_numbers<[1], [0], [0], [1], [0, 0, 1, 1], [], []>} : vector<12x16xbf16>, vector<16x16xbf16>, vector<12x16xf32> -> vector<12x16xf32>
    %c0_305 = arith.constant 0 : index
    %c0_306 = arith.constant 0 : index
    %261 = vector.load %arg7[%c0_305, %c0_306] : memref<1x16xf32, #tpu.memory_space<vmem>>, vector<1x16xf32>
    %262 = vector.broadcast %261 : vector<1x16xf32> to vector<12x16xf32>
    %263 = arith.addf %260, %262 : vector<12x16xf32>
    %cst_307 = arith.constant 0.000000e+00 : f32
    %264 = vector.broadcast %cst_307 : f32 to vector<12x16xf32>
    %265 = arith.maximumf %263, %264 : vector<12x16xf32>
    %c0_308 = arith.constant 0 : index
    %c0_309 = arith.constant 0 : index
    %c0_310 = arith.constant 0 : index
    %c0_311 = arith.constant 0 : index
    %266 = vector.load %arg8[%c0_308, %c0_309, %c0_310, %c0_311] : memref<1x3x12x16xf32, #tpu.memory_space<vmem>>, vector<1x1x12x16xf32>
    %267 = vector.shape_cast %266 : vector<1x1x12x16xf32> to vector<12x16xf32>
    %268 = vector.shape_cast %265 : vector<12x16xf32> to vector<1x1x12x16xf32>
    tpu.vector_store %arg8[%c0_308, %c0_309, %c0_310, %c0_311], %268 {strides = array<i32>} : memref<1x3x12x16xf32, #tpu.memory_space<vmem>>, vector<1x1x12x16xf32>,
    %cst_312 = arith.constant 0.000000e+00 : f32
    %269 = vector.broadcast %cst_312 : f32 to vector<12x16xf32>
    %c1_313 = arith.constant 1 : index
    %c0_314 = arith.constant 0 : index
    %c0_315 = arith.constant 0 : index
    %270 = vector.load %arg9[%c1_313, %c0_314, %c0_315] : memref<5x14x16xbf16, #tpu.memory_space<vmem>>, vector<1x12x16xbf16>
    %271 = vector.shape_cast %270 : vector<1x12x16xbf16> to vector<12x16xbf16>
    %c0_316 = arith.constant 0 : index
    %c0_317 = arith.constant 0 : index
    %c0_318 = arith.constant 0 : index
    %272 = vector.load %arg4[%c0_316, %c0_317, %c0_318] : memref<9x16x16xbf16, #tpu.memory_space<vmem>>, vector<1x16x16xbf16>
    %273 = vector.shape_cast %272 : vector<1x16x16xbf16> to vector<16x16xbf16>
    %cst_319 = arith.constant dense<0.000000e+00> : vector<12x16xf32>
    %274 = tpu.matmul %271, %273, %cst_319 {dimension_numbers = #tpu.dot_dimension_numbers<[1], [0], [0], [1], [0, 0, 1, 1], [], []>} : vector<12x16xbf16>, vector<16x16xbf16>, vector<12x16xf32> -> vector<12x16xf32>
    %275 = arith.addf %269, %274 : vector<12x16xf32>
    %c2_320 = arith.constant 2 : index
    %c0_321 = arith.constant 0 : index
    %c0_322 = arith.constant 0 : index
    %276 = vector.load %arg9[%c2_320, %c0_321, %c0_322] : memref<5x14x16xbf16, #tpu.memory_space<vmem>>, vector<1x12x16xbf16>
    %277 = vector.shape_cast %276 : vector<1x12x16xbf16> to vector<12x16xbf16>
    %c1_323 = arith.constant 1 : index
    %c0_324 = arith.constant 0 : index
    %c0_325 = arith.constant 0 : index
    %278 = vector.load %arg4[%c1_323, %c0_324, %c0_325] : memref<9x16x16xbf16, #tpu.memory_space<vmem>>, vector<1x16x16xbf16>
    %279 = vector.shape_cast %278 : vector<1x16x16xbf16> to vector<16x16xbf16>
    %cst_326 = arith.constant dense<0.000000e+00> : vector<12x16xf32>
    %280 = tpu.matmul %277, %279, %cst_326 {dimension_numbers = #tpu.dot_dimension_numbers<[1], [0], [0], [1], [0, 0, 1, 1], [], []>} : vector<12x16xbf16>, vector<16x16xbf16>, vector<12x16xf32> -> vector<12x16xf32>
    %281 = arith.addf %275, %280 : vector<12x16xf32>
    %c3_327 = arith.constant 3 : index
    %c0_328 = arith.constant 0 : index
    %c0_329 = arith.constant 0 : index
    %282 = vector.load %arg9[%c3_327, %c0_328, %c0_329] : memref<5x14x16xbf16, #tpu.memory_space<vmem>>, vector<1x12x16xbf16>
    %283 = vector.shape_cast %282 : vector<1x12x16xbf16> to vector<12x16xbf16>
    %c2_330 = arith.constant 2 : index
    %c0_331 = arith.constant 0 : index
    %c0_332 = arith.constant 0 : index
    %284 = vector.load %arg4[%c2_330, %c0_331, %c0_332] : memref<9x16x16xbf16, #tpu.memory_space<vmem>>, vector<1x16x16xbf16>
    %285 = vector.shape_cast %284 : vector<1x16x16xbf16> to vector<16x16xbf16>
    %cst_333 = arith.constant dense<0.000000e+00> : vector<12x16xf32>
    %286 = tpu.matmul %283, %285, %cst_333 {dimension_numbers = #tpu.dot_dimension_numbers<[1], [0], [0], [1], [0, 0, 1, 1], [], []>} : vector<12x16xbf16>, vector<16x16xbf16>, vector<12x16xf32> -> vector<12x16xf32>
    %287 = arith.addf %281, %286 : vector<12x16xf32>
    %c1_334 = arith.constant 1 : index
    %c1_335 = arith.constant 1 : index
    %c0_336 = arith.constant 0 : index
    %288 = vector.load %arg9[%c1_334, %c1_335, %c0_336] : memref<5x14x16xbf16, #tpu.memory_space<vmem>>, vector<1x12x16xbf16>
    %289 = vector.shape_cast %288 : vector<1x12x16xbf16> to vector<12x16xbf16>
    %c3_337 = arith.constant 3 : index
    %c0_338 = arith.constant 0 : index
    %c0_339 = arith.constant 0 : index
    %290 = vector.load %arg4[%c3_337, %c0_338, %c0_339] : memref<9x16x16xbf16, #tpu.memory_space<vmem>>, vector<1x16x16xbf16>
    %291 = vector.shape_cast %290 : vector<1x16x16xbf16> to vector<16x16xbf16>
    %cst_340 = arith.constant dense<0.000000e+00> : vector<12x16xf32>
    %292 = tpu.matmul %289, %291, %cst_340 {dimension_numbers = #tpu.dot_dimension_numbers<[1], [0], [0], [1], [0, 0, 1, 1], [], []>} : vector<12x16xbf16>, vector<16x16xbf16>, vector<12x16xf32> -> vector<12x16xf32>
    %293 = arith.addf %287, %292 : vector<12x16xf32>
    %c2_341 = arith.constant 2 : index
    %c1_342 = arith.constant 1 : index
    %c0_343 = arith.constant 0 : index
    %294 = vector.load %arg9[%c2_341, %c1_342, %c0_343] : memref<5x14x16xbf16, #tpu.memory_space<vmem>>, vector<1x12x16xbf16>
    %295 = vector.shape_cast %294 : vector<1x12x16xbf16> to vector<12x16xbf16>
    %c4_344 = arith.constant 4 : index
    %c0_345 = arith.constant 0 : index
    %c0_346 = arith.constant 0 : index
    %296 = vector.load %arg4[%c4_344, %c0_345, %c0_346] : memref<9x16x16xbf16, #tpu.memory_space<vmem>>, vector<1x16x16xbf16>
    %297 = vector.shape_cast %296 : vector<1x16x16xbf16> to vector<16x16xbf16>
    %cst_347 = arith.constant dense<0.000000e+00> : vector<12x16xf32>
    %298 = tpu.matmul %295, %297, %cst_347 {dimension_numbers = #tpu.dot_dimension_numbers<[1], [0], [0], [1], [0, 0, 1, 1], [], []>} : vector<12x16xbf16>, vector<16x16xbf16>, vector<12x16xf32> -> vector<12x16xf32>
    %299 = arith.addf %293, %298 : vector<12x16xf32>
    %c3_348 = arith.constant 3 : index
    %c1_349 = arith.constant 1 : index
    %c0_350 = arith.constant 0 : index
    %300 = vector.load %arg9[%c3_348, %c1_349, %c0_350] : memref<5x14x16xbf16, #tpu.memory_space<vmem>>, vector<1x12x16xbf16>
    %301 = vector.shape_cast %300 : vector<1x12x16xbf16> to vector<12x16xbf16>
    %c5_351 = arith.constant 5 : index
    %c0_352 = arith.constant 0 : index
    %c0_353 = arith.constant 0 : index
    %302 = vector.load %arg4[%c5_351, %c0_352, %c0_353] : memref<9x16x16xbf16, #tpu.memory_space<vmem>>, vector<1x16x16xbf16>
    %303 = vector.shape_cast %302 : vector<1x16x16xbf16> to vector<16x16xbf16>
    %cst_354 = arith.constant dense<0.000000e+00> : vector<12x16xf32>
    %304 = tpu.matmul %301, %303, %cst_354 {dimension_numbers = #tpu.dot_dimension_numbers<[1], [0], [0], [1], [0, 0, 1, 1], [], []>} : vector<12x16xbf16>, vector<16x16xbf16>, vector<12x16xf32> -> vector<12x16xf32>
    %305 = arith.addf %299, %304 : vector<12x16xf32>
    %c1_355 = arith.constant 1 : index
    %c2_356 = arith.constant 2 : index
    %c0_357 = arith.constant 0 : index
    %306 = vector.load %arg9[%c1_355, %c2_356, %c0_357] : memref<5x14x16xbf16, #tpu.memory_space<vmem>>, vector<1x12x16xbf16>
    %307 = vector.shape_cast %306 : vector<1x12x16xbf16> to vector<12x16xbf16>
    %c6_358 = arith.constant 6 : index
    %c0_359 = arith.constant 0 : index
    %c0_360 = arith.constant 0 : index
    %308 = vector.load %arg4[%c6_358, %c0_359, %c0_360] : memref<9x16x16xbf16, #tpu.memory_space<vmem>>, vector<1x16x16xbf16>
    %309 = vector.shape_cast %308 : vector<1x16x16xbf16> to vector<16x16xbf16>
    %cst_361 = arith.constant dense<0.000000e+00> : vector<12x16xf32>
    %310 = tpu.matmul %307, %309, %cst_361 {dimension_numbers = #tpu.dot_dimension_numbers<[1], [0], [0], [1], [0, 0, 1, 1], [], []>} : vector<12x16xbf16>, vector<16x16xbf16>, vector<12x16xf32> -> vector<12x16xf32>
    %311 = arith.addf %305, %310 : vector<12x16xf32>
    %c2_362 = arith.constant 2 : index
    %c2_363 = arith.constant 2 : index
    %c0_364 = arith.constant 0 : index
    %312 = vector.load %arg9[%c2_362, %c2_363, %c0_364] : memref<5x14x16xbf16, #tpu.memory_space<vmem>>, vector<1x12x16xbf16>
    %313 = vector.shape_cast %312 : vector<1x12x16xbf16> to vector<12x16xbf16>
    %c7_365 = arith.constant 7 : index
    %c0_366 = arith.constant 0 : index
    %c0_367 = arith.constant 0 : index
    %314 = vector.load %arg4[%c7_365, %c0_366, %c0_367] : memref<9x16x16xbf16, #tpu.memory_space<vmem>>, vector<1x16x16xbf16>
    %315 = vector.shape_cast %314 : vector<1x16x16xbf16> to vector<16x16xbf16>
    %cst_368 = arith.constant dense<0.000000e+00> : vector<12x16xf32>
    %316 = tpu.matmul %313, %315, %cst_368 {dimension_numbers = #tpu.dot_dimension_numbers<[1], [0], [0], [1], [0, 0, 1, 1], [], []>} : vector<12x16xbf16>, vector<16x16xbf16>, vector<12x16xf32> -> vector<12x16xf32>
    %317 = arith.addf %311, %316 : vector<12x16xf32>
    %c3_369 = arith.constant 3 : index
    %c2_370 = arith.constant 2 : index
    %c0_371 = arith.constant 0 : index
    %318 = vector.load %arg9[%c3_369, %c2_370, %c0_371] : memref<5x14x16xbf16, #tpu.memory_space<vmem>>, vector<1x12x16xbf16>
    %319 = vector.shape_cast %318 : vector<1x12x16xbf16> to vector<12x16xbf16>
    %c8_372 = arith.constant 8 : index
    %c0_373 = arith.constant 0 : index
    %c0_374 = arith.constant 0 : index
    %320 = vector.load %arg4[%c8_372, %c0_373, %c0_374] : memref<9x16x16xbf16, #tpu.memory_space<vmem>>, vector<1x16x16xbf16>
    %321 = vector.shape_cast %320 : vector<1x16x16xbf16> to vector<16x16xbf16>
    %cst_375 = arith.constant dense<0.000000e+00> : vector<12x16xf32>
    %322 = tpu.matmul %319, %321, %cst_375 {dimension_numbers = #tpu.dot_dimension_numbers<[1], [0], [0], [1], [0, 0, 1, 1], [], []>} : vector<12x16xbf16>, vector<16x16xbf16>, vector<12x16xf32> -> vector<12x16xf32>
    %323 = arith.addf %317, %322 : vector<12x16xf32>
    %c0_376 = arith.constant 0 : index
    %c2_377 = arith.constant 2 : index
    %c1_378 = arith.constant 1 : index
    %c0_379 = arith.constant 0 : index
    %324 = vector.load %arg1[%c0_376, %c2_377, %c1_378, %c0_379] : memref<1x5x14x16xbf16, #tpu.memory_space<vmem>>, vector<1x1x12x16xbf16>
    %325 = vector.shape_cast %324 : vector<1x1x12x16xbf16> to vector<12x16xbf16>
    %326 = arith.extf %325 : vector<12x16xbf16> to vector<12x16xf32>
    %c0_380 = arith.constant 0 : index
    %c0_381 = arith.constant 0 : index
    %327 = vector.load %arg5[%c0_380, %c0_381] : memref<1x16xf32, #tpu.memory_space<vmem>>, vector<1x16xf32>
    %328 = vector.broadcast %327 : vector<1x16xf32> to vector<12x16xf32>
    %329 = arith.addf %323, %328 : vector<12x16xf32>
    %330 = arith.addf %329, %326 : vector<12x16xf32>
    %cst_382 = arith.constant 0.000000e+00 : f32
    %331 = vector.broadcast %cst_382 : f32 to vector<12x16xf32>
    %332 = arith.maximumf %330, %331 : vector<12x16xf32>
    %333 = arith.truncf %332 : vector<12x16xf32> to vector<12x16xbf16>
    %c0_383 = arith.constant 0 : index
    %c0_384 = arith.constant 0 : index
    %334 = vector.load %arg6[%c0_383, %c0_384] : memref<16x16xbf16, #tpu.memory_space<vmem>>, vector<16x16xbf16>
    %cst_385 = arith.constant dense<0.000000e+00> : vector<12x16xf32>
    %335 = tpu.matmul %333, %334, %cst_385 {dimension_numbers = #tpu.dot_dimension_numbers<[1], [0], [0], [1], [0, 0, 1, 1], [], []>} : vector<12x16xbf16>, vector<16x16xbf16>, vector<12x16xf32> -> vector<12x16xf32>
    %c0_386 = arith.constant 0 : index
    %c0_387 = arith.constant 0 : index
    %336 = vector.load %arg7[%c0_386, %c0_387] : memref<1x16xf32, #tpu.memory_space<vmem>>, vector<1x16xf32>
    %337 = vector.broadcast %336 : vector<1x16xf32> to vector<12x16xf32>
    %338 = arith.addf %335, %337 : vector<12x16xf32>
    %cst_388 = arith.constant 0.000000e+00 : f32
    %339 = vector.broadcast %cst_388 : f32 to vector<12x16xf32>
    %340 = arith.maximumf %338, %339 : vector<12x16xf32>
    %c0_389 = arith.constant 0 : index
    %c1_390 = arith.constant 1 : index
    %c0_391 = arith.constant 0 : index
    %c0_392 = arith.constant 0 : index
    %341 = vector.load %arg8[%c0_389, %c1_390, %c0_391, %c0_392] : memref<1x3x12x16xf32, #tpu.memory_space<vmem>>, vector<1x1x12x16xf32>
    %342 = vector.shape_cast %341 : vector<1x1x12x16xf32> to vector<12x16xf32>
    %343 = vector.shape_cast %340 : vector<12x16xf32> to vector<1x1x12x16xf32>
    tpu.vector_store %arg8[%c0_389, %c1_390, %c0_391, %c0_392], %343 {strides = array<i32>} : memref<1x3x12x16xf32, #tpu.memory_space<vmem>>, vector<1x1x12x16xf32>,
    %cst_393 = arith.constant 0.000000e+00 : f32
    %344 = vector.broadcast %cst_393 : f32 to vector<12x16xf32>
    %c2_394 = arith.constant 2 : index
    %c0_395 = arith.constant 0 : index
    %c0_396 = arith.constant 0 : index
    %345 = vector.load %arg9[%c2_394, %c0_395, %c0_396] : memref<5x14x16xbf16, #tpu.memory_space<vmem>>, vector<1x12x16xbf16>
    %346 = vector.shape_cast %345 : vector<1x12x16xbf16> to vector<12x16xbf16>
    %c0_397 = arith.constant 0 : index
    %c0_398 = arith.constant 0 : index
    %c0_399 = arith.constant 0 : index
    %347 = vector.load %arg4[%c0_397, %c0_398, %c0_399] : memref<9x16x16xbf16, #tpu.memory_space<vmem>>, vector<1x16x16xbf16>
    %348 = vector.shape_cast %347 : vector<1x16x16xbf16> to vector<16x16xbf16>
    %cst_400 = arith.constant dense<0.000000e+00> : vector<12x16xf32>
    %349 = tpu.matmul %346, %348, %cst_400 {dimension_numbers = #tpu.dot_dimension_numbers<[1], [0], [0], [1], [0, 0, 1, 1], [], []>} : vector<12x16xbf16>, vector<16x16xbf16>, vector<12x16xf32> -> vector<12x16xf32>
    %350 = arith.addf %344, %349 : vector<12x16xf32>
    %c3_401 = arith.constant 3 : index
    %c0_402 = arith.constant 0 : index
    %c0_403 = arith.constant 0 : index
    %351 = vector.load %arg9[%c3_401, %c0_402, %c0_403] : memref<5x14x16xbf16, #tpu.memory_space<vmem>>, vector<1x12x16xbf16>
    %352 = vector.shape_cast %351 : vector<1x12x16xbf16> to vector<12x16xbf16>
    %c1_404 = arith.constant 1 : index
    %c0_405 = arith.constant 0 : index
    %c0_406 = arith.constant 0 : index
    %353 = vector.load %arg4[%c1_404, %c0_405, %c0_406] : memref<9x16x16xbf16, #tpu.memory_space<vmem>>, vector<1x16x16xbf16>
    %354 = vector.shape_cast %353 : vector<1x16x16xbf16> to vector<16x16xbf16>
    %cst_407 = arith.constant dense<0.000000e+00> : vector<12x16xf32>
    %355 = tpu.matmul %352, %354, %cst_407 {dimension_numbers = #tpu.dot_dimension_numbers<[1], [0], [0], [1], [0, 0, 1, 1], [], []>} : vector<12x16xbf16>, vector<16x16xbf16>, vector<12x16xf32> -> vector<12x16xf32>
    %356 = arith.addf %350, %355 : vector<12x16xf32>
    %c4_408 = arith.constant 4 : index
    %c0_409 = arith.constant 0 : index
    %c0_410 = arith.constant 0 : index
    %357 = vector.load %arg9[%c4_408, %c0_409, %c0_410] : memref<5x14x16xbf16, #tpu.memory_space<vmem>>, vector<1x12x16xbf16>
    %358 = vector.shape_cast %357 : vector<1x12x16xbf16> to vector<12x16xbf16>
    %c2_411 = arith.constant 2 : index
    %c0_412 = arith.constant 0 : index
    %c0_413 = arith.constant 0 : index
    %359 = vector.load %arg4[%c2_411, %c0_412, %c0_413] : memref<9x16x16xbf16, #tpu.memory_space<vmem>>, vector<1x16x16xbf16>
    %360 = vector.shape_cast %359 : vector<1x16x16xbf16> to vector<16x16xbf16>
    %cst_414 = arith.constant dense<0.000000e+00> : vector<12x16xf32>
    %361 = tpu.matmul %358, %360, %cst_414 {dimension_numbers = #tpu.dot_dimension_numbers<[1], [0], [0], [1], [0, 0, 1, 1], [], []>} : vector<12x16xbf16>, vector<16x16xbf16>, vector<12x16xf32> -> vector<12x16xf32>
    %362 = arith.addf %356, %361 : vector<12x16xf32>
    %c2_415 = arith.constant 2 : index
    %c1_416 = arith.constant 1 : index
    %c0_417 = arith.constant 0 : index
    %363 = vector.load %arg9[%c2_415, %c1_416, %c0_417] : memref<5x14x16xbf16, #tpu.memory_space<vmem>>, vector<1x12x16xbf16>
    %364 = vector.shape_cast %363 : vector<1x12x16xbf16> to vector<12x16xbf16>
    %c3_418 = arith.constant 3 : index
    %c0_419 = arith.constant 0 : index
    %c0_420 = arith.constant 0 : index
    %365 = vector.load %arg4[%c3_418, %c0_419, %c0_420] : memref<9x16x16xbf16, #tpu.memory_space<vmem>>, vector<1x16x16xbf16>
    %366 = vector.shape_cast %365 : vector<1x16x16xbf16> to vector<16x16xbf16>
    %cst_421 = arith.constant dense<0.000000e+00> : vector<12x16xf32>
    %367 = tpu.matmul %364, %366, %cst_421 {dimension_numbers = #tpu.dot_dimension_numbers<[1], [0], [0], [1], [0, 0, 1, 1], [], []>} : vector<12x16xbf16>, vector<16x16xbf16>, vector<12x16xf32> -> vector<12x16xf32>
    %368 = arith.addf %362, %367 : vector<12x16xf32>
    %c3_422 = arith.constant 3 : index
    %c1_423 = arith.constant 1 : index
    %c0_424 = arith.constant 0 : index
    %369 = vector.load %arg9[%c3_422, %c1_423, %c0_424] : memref<5x14x16xbf16, #tpu.memory_space<vmem>>, vector<1x12x16xbf16>
    %370 = vector.shape_cast %369 : vector<1x12x16xbf16> to vector<12x16xbf16>
    %c4_425 = arith.constant 4 : index
    %c0_426 = arith.constant 0 : index
    %c0_427 = arith.constant 0 : index
    %371 = vector.load %arg4[%c4_425, %c0_426, %c0_427] : memref<9x16x16xbf16, #tpu.memory_space<vmem>>, vector<1x16x16xbf16>
    %372 = vector.shape_cast %371 : vector<1x16x16xbf16> to vector<16x16xbf16>
    %cst_428 = arith.constant dense<0.000000e+00> : vector<12x16xf32>
    %373 = tpu.matmul %370, %372, %cst_428 {dimension_numbers = #tpu.dot_dimension_numbers<[1], [0], [0], [1], [0, 0, 1, 1], [], []>} : vector<12x16xbf16>, vector<16x16xbf16>, vector<12x16xf32> -> vector<12x16xf32>
    %374 = arith.addf %368, %373 : vector<12x16xf32>
    %c4_429 = arith.constant 4 : index
    %c1_430 = arith.constant 1 : index
    %c0_431 = arith.constant 0 : index
    %375 = vector.load %arg9[%c4_429, %c1_430, %c0_431] : memref<5x14x16xbf16, #tpu.memory_space<vmem>>, vector<1x12x16xbf16>
    %376 = vector.shape_cast %375 : vector<1x12x16xbf16> to vector<12x16xbf16>
    %c5_432 = arith.constant 5 : index
    %c0_433 = arith.constant 0 : index
    %c0_434 = arith.constant 0 : index
    %377 = vector.load %arg4[%c5_432, %c0_433, %c0_434] : memref<9x16x16xbf16, #tpu.memory_space<vmem>>, vector<1x16x16xbf16>
    %378 = vector.shape_cast %377 : vector<1x16x16xbf16> to vector<16x16xbf16>
    %cst_435 = arith.constant dense<0.000000e+00> : vector<12x16xf32>
    %379 = tpu.matmul %376, %378, %cst_435 {dimension_numbers = #tpu.dot_dimension_numbers<[1], [0], [0], [1], [0, 0, 1, 1], [], []>} : vector<12x16xbf16>, vector<16x16xbf16>, vector<12x16xf32> -> vector<12x16xf32>
    %380 = arith.addf %374, %379 : vector<12x16xf32>
    %c2_436 = arith.constant 2 : index
    %c2_437 = arith.constant 2 : index
    %c0_438 = arith.constant 0 : index
    %381 = vector.load %arg9[%c2_436, %c2_437, %c0_438] : memref<5x14x16xbf16, #tpu.memory_space<vmem>>, vector<1x12x16xbf16>
    %382 = vector.shape_cast %381 : vector<1x12x16xbf16> to vector<12x16xbf16>
    %c6_439 = arith.constant 6 : index
    %c0_440 = arith.constant 0 : index
    %c0_441 = arith.constant 0 : index
    %383 = vector.load %arg4[%c6_439, %c0_440, %c0_441] : memref<9x16x16xbf16, #tpu.memory_space<vmem>>, vector<1x16x16xbf16>
    %384 = vector.shape_cast %383 : vector<1x16x16xbf16> to vector<16x16xbf16>
    %cst_442 = arith.constant dense<0.000000e+00> : vector<12x16xf32>
    %385 = tpu.matmul %382, %384, %cst_442 {dimension_numbers = #tpu.dot_dimension_numbers<[1], [0], [0], [1], [0, 0, 1, 1], [], []>} : vector<12x16xbf16>, vector<16x16xbf16>, vector<12x16xf32> -> vector<12x16xf32>
    %386 = arith.addf %380, %385 : vector<12x16xf32>
    %c3_443 = arith.constant 3 : index
    %c2_444 = arith.constant 2 : index
    %c0_445 = arith.constant 0 : index
    %387 = vector.load %arg9[%c3_443, %c2_444, %c0_445] : memref<5x14x16xbf16, #tpu.memory_space<vmem>>, vector<1x12x16xbf16>
    %388 = vector.shape_cast %387 : vector<1x12x16xbf16> to vector<12x16xbf16>
    %c7_446 = arith.constant 7 : index
    %c0_447 = arith.constant 0 : index
    %c0_448 = arith.constant 0 : index
    %389 = vector.load %arg4[%c7_446, %c0_447, %c0_448] : memref<9x16x16xbf16, #tpu.memory_space<vmem>>, vector<1x16x16xbf16>
    %390 = vector.shape_cast %389 : vector<1x16x16xbf16> to vector<16x16xbf16>
    %cst_449 = arith.constant dense<0.000000e+00> : vector<12x16xf32>
    %391 = tpu.matmul %388, %390, %cst_449 {dimension_numbers = #tpu.dot_dimension_numbers<[1], [0], [0], [1], [0, 0, 1, 1], [], []>} : vector<12x16xbf16>, vector<16x16xbf16>, vector<12x16xf32> -> vector<12x16xf32>
    %392 = arith.addf %386, %391 : vector<12x16xf32>
    %c4_450 = arith.constant 4 : index
    %c2_451 = arith.constant 2 : index
    %c0_452 = arith.constant 0 : index
    %393 = vector.load %arg9[%c4_450, %c2_451, %c0_452] : memref<5x14x16xbf16, #tpu.memory_space<vmem>>, vector<1x12x16xbf16>
    %394 = vector.shape_cast %393 : vector<1x12x16xbf16> to vector<12x16xbf16>
    %c8_453 = arith.constant 8 : index
    %c0_454 = arith.constant 0 : index
    %c0_455 = arith.constant 0 : index
    %395 = vector.load %arg4[%c8_453, %c0_454, %c0_455] : memref<9x16x16xbf16, #tpu.memory_space<vmem>>, vector<1x16x16xbf16>
    %396 = vector.shape_cast %395 : vector<1x16x16xbf16> to vector<16x16xbf16>
    %cst_456 = arith.constant dense<0.000000e+00> : vector<12x16xf32>
    %397 = tpu.matmul %394, %396, %cst_456 {dimension_numbers = #tpu.dot_dimension_numbers<[1], [0], [0], [1], [0, 0, 1, 1], [], []>} : vector<12x16xbf16>, vector<16x16xbf16>, vector<12x16xf32> -> vector<12x16xf32>
    %398 = arith.addf %392, %397 : vector<12x16xf32>
    %c0_457 = arith.constant 0 : index
    %c3_458 = arith.constant 3 : index
    %c1_459 = arith.constant 1 : index
    %c0_460 = arith.constant 0 : index
    %399 = vector.load %arg1[%c0_457, %c3_458, %c1_459, %c0_460] : memref<1x5x14x16xbf16, #tpu.memory_space<vmem>>, vector<1x1x12x16xbf16>
    %400 = vector.shape_cast %399 : vector<1x1x12x16xbf16> to vector<12x16xbf16>
    %401 = arith.extf %400 : vector<12x16xbf16> to vector<12x16xf32>
    %c0_461 = arith.constant 0 : index
    %c0_462 = arith.constant 0 : index
    %402 = vector.load %arg5[%c0_461, %c0_462] : memref<1x16xf32, #tpu.memory_space<vmem>>, vector<1x16xf32>
    %403 = vector.broadcast %402 : vector<1x16xf32> to vector<12x16xf32>
    %404 = arith.addf %398, %403 : vector<12x16xf32>
    %405 = arith.addf %404, %401 : vector<12x16xf32>
    %cst_463 = arith.constant 0.000000e+00 : f32
    %406 = vector.broadcast %cst_463 : f32 to vector<12x16xf32>
    %407 = arith.maximumf %405, %406 : vector<12x16xf32>
    %408 = arith.truncf %407 : vector<12x16xf32> to vector<12x16xbf16>
    %c0_464 = arith.constant 0 : index
    %c0_465 = arith.constant 0 : index
    %409 = vector.load %arg6[%c0_464, %c0_465] : memref<16x16xbf16, #tpu.memory_space<vmem>>, vector<16x16xbf16>
    %cst_466 = arith.constant dense<0.000000e+00> : vector<12x16xf32>
    %410 = tpu.matmul %408, %409, %cst_466 {dimension_numbers = #tpu.dot_dimension_numbers<[1], [0], [0], [1], [0, 0, 1, 1], [], []>} : vector<12x16xbf16>, vector<16x16xbf16>, vector<12x16xf32> -> vector<12x16xf32>
    %c0_467 = arith.constant 0 : index
    %c0_468 = arith.constant 0 : index
    %411 = vector.load %arg7[%c0_467, %c0_468] : memref<1x16xf32, #tpu.memory_space<vmem>>, vector<1x16xf32>
    %412 = vector.broadcast %411 : vector<1x16xf32> to vector<12x16xf32>
    %413 = arith.addf %410, %412 : vector<12x16xf32>
    %cst_469 = arith.constant 0.000000e+00 : f32
    %414 = vector.broadcast %cst_469 : f32 to vector<12x16xf32>
    %415 = arith.maximumf %413, %414 : vector<12x16xf32>
    %c0_470 = arith.constant 0 : index
    %c2_471 = arith.constant 2 : index
    %c0_472 = arith.constant 0 : index
    %c0_473 = arith.constant 0 : index
    %416 = vector.load %arg8[%c0_470, %c2_471, %c0_472, %c0_473] : memref<1x3x12x16xf32, #tpu.memory_space<vmem>>, vector<1x1x12x16xf32>
    %417 = vector.shape_cast %416 : vector<1x1x12x16xf32> to vector<12x16xf32>
    %418 = vector.shape_cast %415 : vector<12x16xf32> to vector<1x1x12x16xf32>
    tpu.vector_store %arg8[%c0_470, %c2_471, %c0_472, %c0_473], %418 {strides = array<i32>} : memref<1x3x12x16xf32, #tpu.memory_space<vmem>>, vector<1x1x12x16xf32>,
    return
  }
  func.func @transform_0(%arg0: i32) -> (i32, i32, i32, i32) {
    %c0_i32 = arith.constant 0 : i32
    %c0_i32_0 = arith.constant 0 : i32
    %c0_i32_1 = arith.constant 0 : i32
    %c0_i32_2 = arith.constant 0 : i32
    return %arg0, %c0_i32, %c0_i32_0, %c0_i32_1 : i32, i32, i32, i32
  }
  func.func @transform_1(%arg0: i32) -> (i32, i32, i32) {
    %c0_i32 = arith.constant 0 : i32
    %c0_i32_0 = arith.constant 0 : i32
    %c0_i32_1 = arith.constant 0 : i32
    %c0_i32_2 = arith.constant 0 : i32
    return %c0_i32, %c0_i32_0, %c0_i32_1 : i32, i32, i32
  }
  func.func @transform_2(%arg0: i32) -> (i32, i32) {
    %c0_i32 = arith.constant 0 : i32
    %c0_i32_0 = arith.constant 0 : i32
    %c0_i32_1 = arith.constant 0 : i32
    return %c0_i32, %c0_i32_0 : i32, i32
  }
  func.func @transform_3(%arg0: i32) -> (i32, i32, i32) {
    %c0_i32 = arith.constant 0 : i32
    %c0_i32_0 = arith.constant 0 : i32
    %c0_i32_1 = arith.constant 0 : i32
    %c0_i32_2 = arith.constant 0 : i32
    return %c0_i32, %c0_i32_0, %c0_i32_1 : i32, i32, i32
  }
  func.func @transform_4(%arg0: i32) -> (i32, i32) {
    %c0_i32 = arith.constant 0 : i32
    %c0_i32_0 = arith.constant 0 : i32
    %c0_i32_1 = arith.constant 0 : i32
    return %c0_i32, %c0_i32_0 : i32, i32
  }
  func.func @transform_5(%arg0: i32) -> (i32, i32) {
    %c0_i32 = arith.constant 0 : i32
    %c0_i32_0 = arith.constant 0 : i32
    %c0_i32_1 = arith.constant 0 : i32
    return %c0_i32, %c0_i32_0 : i32, i32
  }
  func.func @transform_6(%arg0: i32) -> (i32, i32) {
    %c0_i32 = arith.constant 0 : i32
    %c0_i32_0 = arith.constant 0 : i32
    %c0_i32_1 = arith.constant 0 : i32
    return %c0_i32, %c0_i32_0 : i32, i32
  }
  func.func @transform_7(%arg0: i32) -> (i32, i32, i32, i32) {
    %c0_i32 = arith.constant 0 : i32
    %c0_i32_0 = arith.constant 0 : i32
    %c0_i32_1 = arith.constant 0 : i32
    %c0_i32_2 = arith.constant 0 : i32
    return %arg0, %c0_i32, %c0_i32_0, %c0_i32_1 : i32, i32, i32, i32
  }
}

</mosaic_0001>

<llo_original>
// kernel: doa_resnet_trunk_forward.4
$region0: #{doa_resnet_trunk_forward.4}
  #allocation0 [shape = 'u32[]', space=smem, size = 0x4, offset = 0x4, fixed_abs, tag = 'smem constant byte address 0x4 - core index']
  #allocation1 [shape = 'u32[144,128]{1,0:T(1,128)}', space=vmem, size = 0x12000, scoped, tag = 'internal scratch']
  %s0 = inlined_call_operand.vmem [shape: bf16[196,36], index: 0, kind: input, shape index: {}]
  %s1 = inlined_call_operand.vmem [shape: bf16[36,8], index: 1, kind: input, shape index: {}]
  %s2 = inlined_call_operand.vmem [shape: f32[1,8], index: 2, kind: input, shape index: {}]
  %s3 = inlined_call_operand.vmem [shape: bf16[196,8], index: 3, kind: output, shape index: {}]
  %s4 = sld [smem:[#allocation0]]
  $region22: #{doa_resnet_trunk_forward.4} parent=0
    _
  %s6 = ssub.s32 1, %s4
  %s7 = scalar_select 0, %s6, %s4
  // Predicated region
  $region2: #{doa_resnet_trunk_forward.4} parent=0 // pred_check
    _
  $region3: #{doa_resnet_trunk_forward.4} parent=0 // pred_check_branch
    %9 = sbr.rel (0) target = $region5
  $region4: #{doa_resnet_trunk_forward.4} parent=0 // pred_region
    _
  $region5: #{doa_resnet_trunk_forward.4} parent=0 // pred_fallthru
    _
  // Predicated region
  $region6: #{doa_resnet_trunk_forward.4} parent=0 // pred_check
    _
  $region7: #{doa_resnet_trunk_forward.4} parent=0 // pred_check_branch
    %11 = sbr.rel (0) target = $region9
  $region8: #{doa_resnet_trunk_forward.4} parent=0 // pred_region
    _
  $region9: #{doa_resnet_trunk_forward.4} parent=0 // pred_fallthru
    _
  // Predicated region
  $region10: #{doa_resnet_trunk_forward.4} parent=0 // pred_check
    _
  $region11: #{doa_resnet_trunk_forward.4} parent=0 // pred_check_branch
    %13 = sbr.rel (0) target = $region13
  $region12: #{doa_resnet_trunk_forward.4} parent=0 // pred_region
    _
  $region13: #{doa_resnet_trunk_forward.4} parent=0 // pred_fallthru
    _
  %v15 = vld [vmem:[%s0] sm:$0xf]
  %v16 = vld [vmem:[%s0 + $0x4] sm:$0xf]
  %v17 = vld [vmem:[%s0 + $0x8] sm:$0xf]
  %v18 = vld [vmem:[%s0 + $0xc] sm:$0xf]
  %v19 = vld [vmem:[%s0 + $0x10] sm:$0xf]
  %v20 = vld [vmem:[%s0 + $0x14] sm:$0xf]
  %v21 = vld [vmem:[%s0 + $0x18] sm:$0xf]
  %v22 = vld [vmem:[%s0 + $0x1c] sm:$0xf]
  %v23 = vld [vmem:[%s0 + $0x20] sm:$0xf]
  %v24 = vld [vmem:[%s0 + $0x24] sm:$0xf]
  %v25 = vld [vmem:[%s0 + $0x28] sm:$0xf]
  %v26 = vld [vmem:[%s0 + $0x2c] sm:$0xf]
  %v27 = vld [vmem:[%s0 + $0x30] sm:$0xf]
  %v28 = vld [vmem:[%s0 + $0x34] sm:$0xf]
  %v29 = vld [vmem:[%s0 + $0x38] sm:$0xf]
  %v30 = vld [vmem:[%s0 + $0x3c] sm:$0xf]
  %v31 = vld [vmem:[%s0 + $0x40] sm:$0xf]
  %v32 = vld [vmem:[%s0 + $0x44] sm:$0xf]
  %v33 = vld [vmem:[%s0 + $0x48] sm:$0xf]
  %v34 = vld [vmem:[%s0 + $0x4c] sm:$0xf]
  %v35 = vld [vmem:[%s0 + $0x50] sm:$0xf]
  %v36 = vld [vmem:[%s0 + $0x54] sm:$0xf]
  %v37 = vld [vmem:[%s0 + $0x58] sm:$0xf]
  %v38 = vld [vmem:[%s0 + $0x5c] sm:$0xf]
  %v39 = vld [vmem:[%s0 + $0x60] sm:$0x3]
  %v40 = vld [vmem:[%s1] sm:$0xf]
  %v41 = vld [vmem:[%s1 + $0x4] sm:$0xf]
  %v42 = vld [vmem:[%s1 + $0x8] sm:$0xf]
  %v43 = vld [vmem:[%s1 + $0xc] sm:$0xf]
  %v44 = vld [vmem:[%s1 + $0x10] sm:$0x3]
  %v45 = vld [vmem:[%s2] sm:$0x1]
  %v47 = vlaneseq
  %v48 = vshrl.u32 %v47, 7
  %v49 = vsub.s32 0, %v48
  %v50 = vrot.slane %v45, %v49
  %v77 = vunpack.c.l.b16 %v15
  %v78 = vunpack.c.l.b16 %v16
  %v79 = vunpack.c.l.b16 %v17
  %v80 = vunpack.c.l.b16 %v18
  %v81 = vunpack.c.l.b16 %v19
  %v82 = vunpack.c.l.b16 %v20
  %v83 = vunpack.c.l.b16 %v21
  %v84 = vunpack.c.l.b16 %v22
  %v85 = vunpack.c.l.b16 %v23
  %v86 = vunpack.c.l.b16 %v24
  %v87 = vunpack.c.l.b16 %v25
  %v88 = vunpack.c.l.b16 %v26
  %v89 = vunpack.c.l.b16 %v27
  %v90 = vunpack.c.l.b16 %v28
  %v91 = vunpack.c.l.b16 %v29
  %v92 = vunpack.c.l.b16 %v30
  %v93 = vunpack.c.l.b16 %v31
  %v94 = vunpack.c.l.b16 %v32
  %v95 = vunpack.c.l.b16 %v33
  %v96 = vunpack.c.l.b16 %v34
  %v97 = vunpack.c.l.b16 %v35
  %v98 = vunpack.c.l.b16 %v36
  %v99 = vunpack.c.l.b16 %v37
  %v100 = vunpack.c.l.b16 %v38
  %v101 = vunpack.c.l.b16 %v39
  %v102 = vpack.c.b16 %v78, %v77
  %v103 = vpack.c.b16 %v80, %v79
  %v104 = vpack.c.b16 %v82, %v81
  %v105 = vpack.c.b16 %v84, %v83
  %v106 = vpack.c.b16 %v86, %v85
  %v107 = vpack.c.b16 %v88, %v87
  %v108 = vpack.c.b16 %v90, %v89
  %v109 = vpack.c.b16 %v92, %v91
  %v110 = vpack.c.b16 %v94, %v93
  %v111 = vpack.c.b16 %v96, %v95
  %v112 = vpack.c.b16 %v98, %v97
  %v113 = vpack.c.b16 %v100, %v99
  %v114 = vpack.c.b16 %v101, %v101
  %v120 = vunpack.c.l.b16 %v40
  %v121 = vunpack.c.l.b16 %v41
  %v122 = vunpack.c.l.b16 %v42
  %v123 = vunpack.c.l.b16 %v43
  %v124 = vunpack.c.l.b16 %v44
  %v125 = vpack.c.b16 %v121, %v120
  %v126 = vpack.c.b16 %v123, %v122
  %v127 = vpack.c.b16 %v124, %v124
  %vm130 = vcmask 293888
  %v132 = vsel %vm130, %v102, 0
  %v135 = vsel %vm130, %v103, 0
  %v138 = vsel %vm130, %v104, 0
  %v141 = vsel %vm130, %v105, 0
  %v144 = vsel %vm130, %v106, 0
  %v147 = vsel %vm130, %v107, 0
  %v150 = vsel %vm130, %v108, 0
  %v153 = vsel %vm130, %v109, 0
  %v156 = vsel %vm130, %v110, 0
  %v159 = vsel %vm130, %v111, 0
  %v162 = vsel %vm130, %v112, 0
  %v165 = vsel %vm130, %v113, 0
  %v168 = vsel %vm130, %v114, 0
  %vm170 = vcmask 1041408
  %v172 = vsel %vm170, %v127, 0
  %174 = vmatprep.subr.bf16.mxu0 0
  %175 = vmatpush1.bf16.msra.mxu0 %v125
  %176 = vmatprep.subr.bf16.mxu0 0
  %177 = vmatpush1.bf16.msra.mxu0 %v126
  %178 = vmatprep.subr.bf16.mxu0 0
  %179 = vmatpush1.bf16.msra.mxu0 %v172
  %180 = vmatprep.subr.bf16.mxu0 0
  %181 = vmatpush1.bf16.msra.mxu0 0
  %182 = vmatprep.subr.bf16.mxu0 0
  %183 = vmatpush1.bf16.msra.mxu0 0
  %184 = vmatprep.subr.bf16.mxu0 0
  %185 = vmatpush1.bf16.msra.mxu0 0
  %186 = vmatprep.subr.bf16.mxu0 0
  %187 = vmatpush1.bf16.msra.mxu0 0
  %188 = vmatprep.subr.bf16.mxu0 0
  %189 = vmatpush1.bf16.msra.mxu0 0
  %190 = vmatprep.subr.bf16.mxu0 0
  %191 = vmatpush1.bf16.msra.mxu0 0
  %192 = vmatprep.subr.bf16.mxu0 0
  %193 = vmatpush1.bf16.msra.mxu0 0
  %194 = vmatprep.subr.bf16.mxu0 0
  %195 = vmatpush1.bf16.msra.mxu0 0
  %196 = vmatprep.subr.bf16.mxu0 0
  %197 = vmatpush1.bf16.msra.mxu0 0
  %198 = vmatprep.subr.bf16.mxu0 0
  %199 = vmatpush1.bf16.msra.mxu0 0
  %200 = vmatprep.subr.bf16.mxu0 0
  %201 = vmatpush1.bf16.msra.mxu0 0
  %202 = vmatprep.subr.bf16.mxu0 0
  %203 = vmatpush1.bf16.msra.mxu0 0
  %204 = vmatprep.subr.bf16.mxu0 0
  %205 = vmatpush1.bf16.msra.mxu0 0
  %206 = vmatprep.mubr.bf16.mxu0 0
  %207 = vmatmul.mubr.bf16.gmra.mrb[0].mxu0 %v132
  %v208 = vpop.f32.mrb[0].mxu0
  %v209 = vadd.f32 %v50, %v208
  %v210 = vpop.f32.mrb[0].mxu0
  %v211 = vpop.f32.mrb[0].mxu0
  %v212 = vadd.f32 %v50, %v211
  %v213 = vpop.f32.mrb[0].mxu0
  %214 = vmatprep.mubr.bf16.mxu0 0
  %215 = vmatmul.mubr.bf16.gmra.mrb[0].mxu0 %v135
  %v216 = vpop.f32.mrb[0].mxu0
  %v217 = vadd.f32 %v50, %v216
  %v218 = vpop.f32.mrb[0].mxu0
  %v219 = vpop.f32.mrb[0].mxu0
  %v220 = vadd.f32 %v50, %v219
  %v221 = vpop.f32.mrb[0].mxu0
  %222 = vmatprep.mubr.bf16.mxu0 0
  %223 = vmatmul.mubr.bf16.gmra.mrb[0].mxu0 %v138
  %v224 = vpop.f32.mrb[0].mxu0
  %v225 = vadd.f32 %v50, %v224
  %v226 = vpop.f32.mrb[0].mxu0
  %v227 = vpop.f32.mrb[0].mxu0
  %v228 = vadd.f32 %v50, %v227
  %v229 = vpop.f32.mrb[0].mxu0
  %230 = vmatprep.mubr.bf16.mxu0 0
  %231 = vmatmul.mubr.bf16.gmra.mrb[0].mxu0 %v141
  %v232 = vpop.f32.mrb[0].mxu0
  %v233 = vadd.f32 %v50, %v232
  %v234 = vpop.f32.mrb[0].mxu0
  %v235 = vpop.f32.mrb[0].mxu0
  %v236 = vadd.f32 %v50, %v235
  %v237 = vpop.f32.mrb[0].mxu0
  %238 = vmatprep.mubr.bf16.mxu0 0
  %239 = vmatmul.mubr.bf16.gmra.mrb[0].mxu0 %v144
  %v240 = vpop.f32.mrb[0].mxu0
  %v241 = vadd.f32 %v50, %v240
  %v242 = vpop.f32.mrb[0].mxu0
  %v243 = vpop.f32.mrb[0].mxu0
  %v244 = vadd.f32 %v50, %v243
  %v245 = vpop.f32.mrb[0].mxu0
  %246 = vmatprep.mubr.bf16.mxu0 0
  %247 = vmatmul.mubr.bf16.gmra.mrb[0].mxu0 %v147
  %v248 = vpop.f32.mrb[0].mxu0
  %v249 = vadd.f32 %v50, %v248
  %v250 = vpop.f32.mrb[0].mxu0
  %v251 = vpop.f32.mrb[0].mxu0
  %v252 = vadd.f32 %v50, %v251
  %v253 = vpop.f32.mrb[0].mxu0
  %254 = vmatprep.mubr.bf16.mxu0 0
  %255 = vmatmul.mubr.bf16.gmra.mrb[0].mxu0 %v150
  %v256 = vpop.f32.mrb[0].mxu0
  %v257 = vadd.f32 %v50, %v256
  %v258 = vpop.f32.mrb[0].mxu0
  %v259 = vpop.f32.mrb[0].mxu0
  %v260 = vadd.f32 %v50, %v259
  %v261 = vpop.f32.mrb[0].mxu0
  %262 = vmatprep.mubr.bf16.mxu0 0
  %263 = vmatmul.mubr.bf16.gmra.mrb[0].mxu0 %v153
  %v264 = vpop.f32.mrb[0].mxu0
  %v265 = vadd.f32 %v50, %v264
  %v266 = vpop.f32.mrb[0].mxu0
  %v267 = vpop.f32.mrb[0].mxu0
  %v268 = vadd.f32 %v50, %v267
  %v269 = vpop.f32.mrb[0].mxu0
  %270 = vmatprep.mubr.bf16.mxu0 0
  %271 = vmatmul.mubr.bf16.gmra.mrb[0].mxu0 %v156
  %v272 = vpop.f32.mrb[0].mxu0
  %v273 = vadd.f32 %v50, %v272
  %v274 = vpop.f32.mrb[0].mxu0
  %v275 = vpop.f32.mrb[0].mxu0
  %v276 = vadd.f32 %v50, %v275
  %v277 = vpop.f32.mrb[0].mxu0
  %278 = vmatprep.mubr.bf16.mxu0 0
  %279 = vmatmul.mubr.bf16.gmra.mrb[0].mxu0 %v159
  %v280 = vpop.f32.mrb[0].mxu0
  %v281 = vadd.f32 %v50, %v280
  %v282 = vpop.f32.mrb[0].mxu0
  %v283 = vpop.f32.mrb[0].mxu0
  %v284 = vadd.f32 %v50, %v283
  %v285 = vpop.f32.mrb[0].mxu0
  %286 = vmatprep.mubr.bf16.mxu0 0
  %287 = vmatmul.mubr.bf16.gmra.mrb[0].mxu0 %v162
  %v288 = vpop.f32.mrb[0].mxu0
  %v289 = vadd.f32 %v50, %v288
  %v290 = vpop.f32.mrb[0].mxu0
  %v291 = vpop.f32.mrb[0].mxu0
  %v292 = vadd.f32 %v50, %v291
  %v293 = vpop.f32.mrb[0].mxu0
  %294 = vmatprep.mubr.bf16.mxu0 0
  %295 = vmatmul.mubr.bf16.gmra.mrb[0].mxu0 %v165
  %v296 = vpop.f32.mrb[0].mxu0
  %v297 = vadd.f32 %v50, %v296
  %v298 = vpop.f32.mrb[0].mxu0
  %v299 = vpop.f32.mrb[0].mxu0
  %v300 = vadd.f32 %v50, %v299
  %v301 = vpop.f32.mrb[0].mxu0
  %302 = vmatprep.mubr.bf16.mxu0 0
  %303 = vmatmul.mubr.bf16.gmra.mrb[0].mxu0 %v168
  %v304 = vpop.f32.mrb[0].mxu0
  %v305 = vadd.f32 %v50, %v304
  %v306 = vpop.f32.mrb[0].mxu0
  %v307 = vpop.f32.mrb[0].mxu0
  %v308 = vpop.f32.mrb[0].mxu0
  %309 = vdwg.mxu0
  %v310 = vmax.f32 %v209, 0.0
  %v311 = vmax.f32 %v212, 0.0
  %v312 = vmax.f32 %v217, 0.0
  %v313 = vmax.f32 %v220, 0.0
  %v314 = vmax.f32 %v225, 0.0
  %v315 = vmax.f32 %v228, 0.0
  %v316 = vmax.f32 %v233, 0.0
  %v317 = vmax.f32 %v236, 0.0
  %v318 = vmax.f32 %v241, 0.0
  %v319 = vmax.f32 %v244, 0.0
  %v320 = vmax.f32 %v249, 0.0
  %v321 = vmax.f32 %v252, 0.0
  %v322 = vmax.f32 %v257, 0.0
  %v323 = vmax.f32 %v260, 0.0
  %v324 = vmax.f32 %v265, 0.0
  %v325 = vmax.f32 %v268, 0.0
  %v326 = vmax.f32 %v273, 0.0
  %v327 = vmax.f32 %v276, 0.0
  %v328 = vmax.f32 %v281, 0.0
  %v329 = vmax.f32 %v284, 0.0
  %v330 = vmax.f32 %v289, 0.0
  %v331 = vmax.f32 %v292, 0.0
  %v332 = vmax.f32 %v297, 0.0
  %v333 = vmax.f32 %v300, 0.0
  %v334 = vmax.f32 %v305, 0.0
  %v335 = vpack.c.bf16 %v311, %v310
  %v336 = vpack.c.bf16 %v313, %v312
  %v337 = vpack.c.bf16 %v315, %v314
  %v338 = vpack.c.bf16 %v317, %v316
  %v339 = vpack.c.bf16 %v319, %v318
  %v340 = vpack.c.bf16 %v321, %v320
  %v341 = vpack.c.bf16 %v323, %v322
  %v342 = vpack.c.bf16 %v325, %v324
  %v343 = vpack.c.bf16 %v327, %v326
  %v344 = vpack.c.bf16 %v329, %v328
  %v345 = vpack.c.bf16 %v331, %v330
  %v346 = vpack.c.bf16 %v333, %v332
  %v347 = vpack.c.bf16 %v334, %v334
  %v361 = vunpack.c.l.b16 %v335
  %v362 = vunpack.c.h.b16 %v335
  %v363 = vunpack.c.l.b16 %v336
  %v364 = vunpack.c.h.b16 %v336
  %v365 = vunpack.c.l.b16 %v337
  %v366 = vunpack.c.h.b16 %v337
  %v367 = vunpack.c.l.b16 %v338
  %v368 = vunpack.c.h.b16 %v338
  %v369 = vunpack.c.l.b16 %v339
  %v370 = vunpack.c.h.b16 %v339
  %v371 = vunpack.c.l.b16 %v340
  %v372 = vunpack.c.h.b16 %v340
  %v373 = vunpack.c.l.b16 %v341
  %v374 = vunpack.c.h.b16 %v341
  %v375 = vunpack.c.l.b16 %v342
  %v376 = vunpack.c.h.b16 %v342
  %v377 = vunpack.c.l.b16 %v343
  %v378 = vunpack.c.h.b16 %v343
  %v379 = vunpack.c.l.b16 %v344
  %v380 = vunpack.c.h.b16 %v344
  %v381 = vunpack.c.l.b16 %v345
  %v382 = vunpack.c.h.b16 %v345
  %v383 = vunpack.c.l.b16 %v346
  %v384 = vunpack.c.h.b16 %v346
  %v385 = vunpack.c.l.b16 %v347
  %v386 = vpack.c.b16 %v361, %v361
  %v387 = vpack.c.b16 %v362, %v362
  %v388 = vpack.c.b16 %v363, %v363
  %v389 = vpack.c.b16 %v364, %v364
  %v390 = vpack.c.b16 %v365, %v365
  %v391 = vpack.c.b16 %v366, %v366
  %v392 = vpack.c.b16 %v367, %v367
  %v393 = vpack.c.b16 %v368, %v368
  %v394 = vpack.c.b16 %v369, %v369
  %v395 = vpack.c.b16 %v370, %v370
  %v396 = vpack.c.b16 %v371, %v371
  %v397 = vpack.c.b16 %v372, %v372
  %v398 = vpack.c.b16 %v373, %v373
  %v399 = vpack.c.b16 %v374, %v374
  %v400 = vpack.c.b16 %v375, %v375
  %v401 = vpack.c.b16 %v376, %v376
  %v402 = vpack.c.b16 %v377, %v377
  %v403 = vpack.c.b16 %v378, %v378
  %v404 = vpack.c.b16 %v379, %v379
  %v405 = vpack.c.b16 %v380, %v380
  %v406 = vpack.c.b16 %v381, %v381
  %v407 = vpack.c.b16 %v382, %v382
  %v408 = vpack.c.b16 %v383, %v383
  %v409 = vpack.c.b16 %v384, %v384
  %v410 = vpack.c.b16 %v385, %v385
  %vm436 = vcmask 60416
  %437 = vst.msk [vmem:[%s3] sm:$0xf] %vm436, %v386
  %438 = vst.msk [vmem:[%s3 + $0x4] sm:$0xf] %vm436, %v387
  %439 = vst.msk [vmem:[%s3 + $0x8] sm:$0xf] %vm436, %v388
  %440 = vst.msk [vmem:[%s3 + $0xc] sm:$0xf] %vm436, %v389
  %441 = vst.msk [vmem:[%s3 + $0x10] sm:$0xf] %vm436, %v390
  %442 = vst.msk [vmem:[%s3 + $0x14] sm:$0xf] %vm436, %v391
  %443 = vst.msk [vmem:[%s3 + $0x18] sm:$0xf] %vm436, %v392
  %444 = vst.msk [vmem:[%s3 + $0x1c] sm:$0xf] %vm436, %v393
  %445 = vst.msk [vmem:[%s3 + $0x20] sm:$0xf] %vm436, %v394
  %446 = vst.msk [vmem:[%s3 + $0x24] sm:$0xf] %vm436, %v395
  %447 = vst.msk [vmem:[%s3 + $0x28] sm:$0xf] %vm436, %v396
  %448 = vst.msk [vmem:[%s3 + $0x2c] sm:$0xf] %vm436, %v397
  %449 = vst.msk [vmem:[%s3 + $0x30] sm:$0xf] %vm436, %v398
  %450 = vst.msk [vmem:[%s3 + $0x34] sm:$0xf] %vm436, %v399
  %451 = vst.msk [vmem:[%s3 + $0x38] sm:$0xf] %vm436, %v400
  %452 = vst.msk [vmem:[%s3 + $0x3c] sm:$0xf] %vm436, %v401
  %453 = vst.msk [vmem:[%s3 + $0x40] sm:$0xf] %vm436, %v402
  %454 = vst.msk [vmem:[%s3 + $0x44] sm:$0xf] %vm436, %v403
  %455 = vst.msk [vmem:[%s3 + $0x48] sm:$0xf] %vm436, %v404
  %456 = vst.msk [vmem:[%s3 + $0x4c] sm:$0xf] %vm436, %v405
  %457 = vst.msk [vmem:[%s3 + $0x50] sm:$0xf] %vm436, %v406
  %458 = vst.msk [vmem:[%s3 + $0x54] sm:$0xf] %vm436, %v407
  %459 = vst.msk [vmem:[%s3 + $0x58] sm:$0xf] %vm436, %v408
  %460 = vst.msk [vmem:[%s3 + $0x5c] sm:$0xf] %vm436, %v409
  %vm461 = vcmask 58368
  %462 = vst.msk [vmem:[%s3 + $0x60] sm:$0x3] %vm461, %v410
  // Predicated region
  $region14: #{doa_resnet_trunk_forward.4} parent=0 // pred_check
    _
  $region15: #{doa_resnet_trunk_forward.4} parent=0 // pred_check_branch
    %464 = sbr.rel (0) target = $region17
  $region16: #{doa_resnet_trunk_forward.4} parent=0 // pred_region
    _
  $region17: #{doa_resnet_trunk_forward.4} parent=0 // pred_fallthru
    _
  // Predicated region
  $region18: #{doa_resnet_trunk_forward.4} parent=0 // pred_check
    _
  $region19: #{doa_resnet_trunk_forward.4} parent=0 // pred_check_branch
    %466 = sbr.rel (0) target = $region21
  $region20: #{doa_resnet_trunk_forward.4} parent=0 // pred_region
    _
  $region21: #{doa_resnet_trunk_forward.4} parent=0 // pred_fallthru
    _

// kernel: doa_resnet_trunk_forward.5
$region0: #{doa_resnet_trunk_forward.5}
  #allocation0 [shape = 'u32[]', space=smem, size = 0x4, offset = 0x4, fixed_abs, tag = 'smem constant byte address 0x4 - core index']
  #allocation1 [shape = 'u32[144,128]{1,0:T(1,128)}', space=vmem, size = 0x12000, scoped, tag = 'internal scratch']
  %s0 = inlined_call_operand.vmem [shape: bf16[72,72], index: 0, kind: input, shape index: {}]
  %s1 = inlined_call_operand.vmem [shape: bf16[72,16], index: 1, kind: input, shape index: {}]
  %s2 = inlined_call_operand.vmem [shape: f32[1,16], index: 2, kind: input, shape index: {}]
  %s3 = inlined_call_operand.vmem [shape: bf16[72,16], index: 3, kind: output, shape index: {}]
  %s4 = sld [smem:[#allocation0]]
  $region22: #{doa_resnet_trunk_forward.5} parent=0
    _
  %s6 = ssub.s32 1, %s4
  %s7 = scalar_select 0, %s6, %s4
  // Predicated region
  $region2: #{doa_resnet_trunk_forward.5} parent=0 // pred_check
    _
  $region3: #{doa_resnet_trunk_forward.5} parent=0 // pred_check_branch
    %9 = sbr.rel (0) target = $region5
  $region4: #{doa_resnet_trunk_forward.5} parent=0 // pred_region
    _
  $region5: #{doa_resnet_trunk_forward.5} parent=0 // pred_fallthru
    _
  // Predicated region
  $region6: #{doa_resnet_trunk_forward.5} parent=0 // pred_check
    _
  $region7: #{doa_resnet_trunk_forward.5} parent=0 // pred_check_branch
    %11 = sbr.rel (0) target = $region9
  $region8: #{doa_resnet_trunk_forward.5} parent=0 // pred_region
    _
  $region9: #{doa_resnet_trunk_forward.5} parent=0 // pred_fallthru
    _
  // Predicated region
  $region10: #{doa_resnet_trunk_forward.5} parent=0 // pred_check
    _
  $region11: #{doa_resnet_trunk_forward.5} parent=0 // pred_check_branch
    %13 = sbr.rel (0) target = $region13
  $region12: #{doa_resnet_trunk_forward.5} parent=0 // pred_region
    _
  $region13: #{doa_resnet_trunk_forward.5} parent=0 // pred_fallthru
    _
  %v15 = vld [vmem:[%s0] sm:$0xf]
  %v16 = vld [vmem:[%s0 + $0x4] sm:$0xf]
  %v17 = vld [vmem:[%s0 + $0x8] sm:$0xf]
  %v18 = vld [vmem:[%s0 + $0xc] sm:$0xf]
  %v19 = vld [vmem:[%s0 + $0x10] sm:$0xf]
  %v20 = vld [vmem:[%s0 + $0x14] sm:$0xf]
  %v21 = vld [vmem:[%s0 + $0x18] sm:$0xf]
  %v22 = vld [vmem:[%s0 + $0x1c] sm:$0xf]
  %v23 = vld [vmem:[%s0 + $0x20] sm:$0xf]
  %v24 = vld [vmem:[%s1] sm:$0xf]
  %v25 = vld [vmem:[%s1 + $0x4] sm:$0xf]
  %v26 = vld [vmem:[%s1 + $0x8] sm:$0xf]
  %v27 = vld [vmem:[%s1 + $0xc] sm:$0xf]
  %v28 = vld [vmem:[%s1 + $0x10] sm:$0xf]
  %v29 = vld [vmem:[%s1 + $0x14] sm:$0xf]
  %v30 = vld [vmem:[%s1 + $0x18] sm:$0xf]
  %v31 = vld [vmem:[%s1 + $0x1c] sm:$0xf]
  %v32 = vld [vmem:[%s1 + $0x20] sm:$0xf]
  %v33 = vld [vmem:[%s2] sm:$0x1]
  %v35 = vlaneseq
  %v36 = vshrl.u32 %v35, 7
  %v37 = vsub.s32 0, %v36
  %v38 = vrot.slane %v33, %v37
  %v49 = vunpack.c.l.b16 %v15
  %v50 = vunpack.c.l.b16 %v16
  %v51 = vunpack.c.l.b16 %v17
  %v52 = vunpack.c.l.b16 %v18
  %v53 = vunpack.c.l.b16 %v19
  %v54 = vunpack.c.l.b16 %v20
  %v55 = vunpack.c.l.b16 %v21
  %v56 = vunpack.c.l.b16 %v22
  %v57 = vunpack.c.l.b16 %v23
  %v58 = vpack.c.b16 %v50, %v49
  %v59 = vpack.c.b16 %v52, %v51
  %v60 = vpack.c.b16 %v54, %v53
  %v61 = vpack.c.b16 %v56, %v55
  %v62 = vpack.c.b16 %v57, %v57
  %v72 = vunpack.c.l.b16 %v24
  %v73 = vunpack.c.l.b16 %v25
  %v74 = vunpack.c.l.b16 %v26
  %v75 = vunpack.c.l.b16 %v27
  %v76 = vunpack.c.l.b16 %v28
  %v77 = vunpack.c.l.b16 %v29
  %v78 = vunpack.c.l.b16 %v30
  %v79 = vunpack.c.l.b16 %v31
  %v80 = vunpack.c.l.b16 %v32
  %v81 = vpack.c.b16 %v73, %v72
  %v82 = vpack.c.b16 %v75, %v74
  %v83 = vpack.c.b16 %v77, %v76
  %v84 = vpack.c.b16 %v79, %v78
  %v85 = vpack.c.b16 %v80, %v80
  %vm90 = vcmask 588800
  %v92 = vsel %vm90, %v58, 0
  %v95 = vsel %vm90, %v59, 0
  %v98 = vsel %vm90, %v60, 0
  %v101 = vsel %vm90, %v61, 0
  %v104 = vsel %vm90, %v62, 0
  %vm106 = vcmask 1043456
  %v108 = vsel %vm106, %v85, 0
  %110 = vmatprep.subr.bf16.mxu0 0
  %111 = vmatpush1.bf16.msra.mxu0 %v81
  %112 = vmatprep.subr.bf16.mxu0 0
  %113 = vmatpush1.bf16.msra.mxu0 %v82
  %114 = vmatprep.subr.bf16.mxu0 0
  %115 = vmatpush1.bf16.msra.mxu0 %v83
  %116 = vmatprep.subr.bf16.mxu0 0
  %117 = vmatpush1.bf16.msra.mxu0 %v84
  %118 = vmatprep.subr.bf16.mxu0 0
  %119 = vmatpush1.bf16.msra.mxu0 %v108
  %120 = vmatprep.subr.bf16.mxu0 0
  %121 = vmatpush1.bf16.msra.mxu0 0
  %122 = vmatprep.subr.bf16.mxu0 0
  %123 = vmatpush1.bf16.msra.mxu0 0
  %124 = vmatprep.subr.bf16.mxu0 0
  %125 = vmatpush1.bf16.msra.mxu0 0
  %126 = vmatprep.subr.bf16.mxu0 0
  %127 = vmatpush1.bf16.msra.mxu0 0
  %128 = vmatprep.subr.bf16.mxu0 0
  %129 = vmatpush1.bf16.msra.mxu0 0
  %130 = vmatprep.subr.bf16.mxu0 0
  %131 = vmatpush1.bf16.msra.mxu0 0
  %132 = vmatprep.subr.bf16.mxu0 0
  %133 = vmatpush1.bf16.msra.mxu0 0
  %134 = vmatprep.subr.bf16.mxu0 0
  %135 = vmatpush1.bf16.msra.mxu0 0
  %136 = vmatprep.subr.bf16.mxu0 0
  %137 = vmatpush1.bf16.msra.mxu0 0
  %138 = vmatprep.subr.bf16.mxu0 0
  %139 = vmatpush1.bf16.msra.mxu0 0
  %140 = vmatprep.subr.bf16.mxu0 0
  %141 = vmatpush1.bf16.msra.mxu0 0
  %142 = vmatprep.mubr.bf16.mxu0 0
  %143 = vmatmul.mubr.bf16.gmra.mrb[0].mxu0 %v92
  %v144 = vpop.f32.mrb[0].mxu0
  %v145 = vadd.f32 %v38, %v144
  %v146 = vpop.f32.mrb[0].mxu0
  %v147 = vpop.f32.mrb[0].mxu0
  %v148 = vadd.f32 %v38, %v147
  %v149 = vpop.f32.mrb[0].mxu0
  %150 = vmatprep.mubr.bf16.mxu0 0
  %151 = vmatmul.mubr.bf16.gmra.mrb[0].mxu0 %v95
  %v152 = vpop.f32.mrb[0].mxu0
  %v153 = vadd.f32 %v38, %v152
  %v154 = vpop.f32.mrb[0].mxu0
  %v155 = vpop.f32.mrb[0].mxu0
  %v156 = vadd.f32 %v38, %v155
  %v157 = vpop.f32.mrb[0].mxu0
  %158 = vmatprep.mubr.bf16.mxu0 0
  %159 = vmatmul.mubr.bf16.gmra.mrb[0].mxu0 %v98
  %v160 = vpop.f32.mrb[0].mxu0
  %v161 = vadd.f32 %v38, %v160
  %v162 = vpop.f32.mrb[0].mxu0
  %v163 = vpop.f32.mrb[0].mxu0
  %v164 = vadd.f32 %v38, %v163
  %v165 = vpop.f32.mrb[0].mxu0
  %166 = vmatprep.mubr.bf16.mxu0 0
  %167 = vmatmul.mubr.bf16.gmra.mrb[0].mxu0 %v101
  %v168 = vpop.f32.mrb[0].mxu0
  %v169 = vadd.f32 %v38, %v168
  %v170 = vpop.f32.mrb[0].mxu0
  %v171 = vpop.f32.mrb[0].mxu0
  %v172 = vadd.f32 %v38, %v171
  %v173 = vpop.f32.mrb[0].mxu0
  %174 = vmatprep.mubr.bf16.mxu0 0
  %175 = vmatmul.mubr.bf16.gmra.mrb[0].mxu0 %v104
  %v176 = vpop.f32.mrb[0].mxu0
  %v177 = vadd.f32 %v38, %v176
  %v178 = vpop.f32.mrb[0].mxu0
  %v179 = vpop.f32.mrb[0].mxu0
  %v180 = vpop.f32.mrb[0].mxu0
  %181 = vdwg.mxu0
  %v182 = vmax.f32 %v145, 0.0
  %v183 = vmax.f32 %v148, 0.0
  %v184 = vmax.f32 %v153, 0.0
  %v185 = vmax.f32 %v156, 0.0
  %v186 = vmax.f32 %v161, 0.0
  %v187 = vmax.f32 %v164, 0.0
  %v188 = vmax.f32 %v169, 0.0
  %v189 = vmax.f32 %v172, 0.0
  %v190 = vmax.f32 %v177, 0.0
  %v191 = vpack.c.bf16 %v183, %v182
  %v192 = vpack.c.bf16 %v185, %v184
  %v193 = vpack.c.bf16 %v187, %v186
  %v194 = vpack.c.bf16 %v189, %v188
  %v195 = vpack.c.bf16 %v190, %v190
  %v201 = vunpack.c.l.b16 %v191
  %v202 = vunpack.c.h.b16 %v191
  %v203 = vunpack.c.l.b16 %v192
  %v204 = vunpack.c.h.b16 %v192
  %v205 = vunpack.c.l.b16 %v193
  %v206 = vunpack.c.h.b16 %v193
  %v207 = vunpack.c.l.b16 %v194
  %v208 = vunpack.c.h.b16 %v194
  %v209 = vunpack.c.l.b16 %v195
  %v210 = vpack.c.b16 %v201, %v201
  %v211 = vpack.c.b16 %v202, %v202
  %v212 = vpack.c.b16 %v203, %v203
  %v213 = vpack.c.b16 %v204, %v204
  %v214 = vpack.c.b16 %v205, %v205
  %v215 = vpack.c.b16 %v206, %v206
  %v216 = vpack.c.b16 %v207, %v207
  %v217 = vpack.c.b16 %v208, %v208
  %v218 = vpack.c.b16 %v209, %v209
  %vm228 = vcmask 125952
  %229 = vst.msk [vmem:[%s3] sm:$0xf] %vm228, %v210
  %230 = vst.msk [vmem:[%s3 + $0x4] sm:$0xf] %vm228, %v211
  %231 = vst.msk [vmem:[%s3 + $0x8] sm:$0xf] %vm228, %v212
  %232 = vst.msk [vmem:[%s3 + $0xc] sm:$0xf] %vm228, %v213
  %233 = vst.msk [vmem:[%s3 + $0x10] sm:$0xf] %vm228, %v214
  %234 = vst.msk [vmem:[%s3 + $0x14] sm:$0xf] %vm228, %v215
  %235 = vst.msk [vmem:[%s3 + $0x18] sm:$0xf] %vm228, %v216
  %236 = vst.msk [vmem:[%s3 + $0x1c] sm:$0xf] %vm228, %v217
  %237 = vst.msk [vmem:[%s3 + $0x20] sm:$0xf] %vm228, %v218
  // Predicated region
  $region14: #{doa_resnet_trunk_forward.5} parent=0 // pred_check
    _
  $region15: #{doa_resnet_trunk_forward.5} parent=0 // pred_check_branch
    %239 = sbr.rel (0) target = $region17
  $region16: #{doa_resnet_trunk_forward.5} parent=0 // pred_region
    _
  $region17: #{doa_resnet_trunk_forward.5} parent=0 // pred_fallthru
    _
  // Predicated region
  $region18: #{doa_resnet_trunk_forward.5} parent=0 // pred_check
    _
  $region19: #{doa_resnet_trunk_forward.5} parent=0 // pred_check_branch
    %241 = sbr.rel (0) target = $region21
  $region20: #{doa_resnet_trunk_forward.5} parent=0 // pred_region
    _
  $region21: #{doa_resnet_trunk_forward.5} parent=0 // pred_fallthru
    _

// kernel: doa_resnet_trunk_forward.6
$region0: #{doa_resnet_trunk_forward.6}
  #allocation0 [shape = 'u32[]', space=smem, size = 0x4, offset = 0x4, fixed_abs, tag = 'smem constant byte address 0x4 - core index']
  #allocation1 [shape = 'u32[144,128]{1,0:T(1,128)}', space=vmem, size = 0x12000, scoped, tag = 'internal scratch']
  #allocation2 [shape = 'bf16[5,14,16]{2,1,0:T(8,128)(2,1)}', space=vmem, size = 0x5000, scoped, tag = 'scratch operand']
  %s0 = inlined_call_operand.vmem [shape: bf16[2,5,14,16], index: 0, kind: input, shape index: {}]
  %s1 = inlined_call_operand.vmem [shape: bf16[9,16,16], index: 1, kind: input, shape index: {}]
  %s2 = inlined_call_operand.vmem [shape: f32[1,16], index: 2, kind: input, shape index: {}]
  %s3 = inlined_call_operand.vmem [shape: bf16[9,16,16], index: 3, kind: input, shape index: {}]
  %s4 = inlined_call_operand.vmem [shape: f32[1,16], index: 4, kind: input, shape index: {}]
  %s5 = inlined_call_operand.vmem [shape: bf16[2,5,14,16], index: 5, kind: output, shape index: {}]
  %s6 = sld [smem:[#allocation0]]
  $region53: #{doa_resnet_trunk_forward.6} parent=0
    _
  %s8 = ssub.s32 1, %s6
  %s9 = scalar_select 0, %s8, %s6
  loop: start=0, step=1, limit=4
  $region2: #{doa_resnet_trunk_forward.6} parent=0 // loop_pre_header
    _
  $region3: #{doa_resnet_trunk_forward.6} parent=0 // loop_header
    %s11 = sphi 0, %s15
    %p12 = scmp.ge.s32.totalorder %s11, 4
    %s21 = sphi 0, %s23
    %s24 = sphi 0, %s21
    %s25 = sphi 0, %s24
    %s41 = sphi 0, %s25
    %s45 = sphi 0, %s45
    %s47 = sphi 0, %s45
    %s48 = sphi 0, %s47
    %s62 = sphi 0, %s48
    %s66 = sphi 0, %s66
    %s68 = sphi 0, %s66
    %s69 = sphi 0, %s68
    %s83 = sphi 0, %s69
    %s87 = sphi 0, %s87
    %s89 = sphi 0, %s87
    %s90 = sphi 0, %s89
    %s104 = sphi 0, %s90
    %s108 = sphi 0, %s108
    %s110 = sphi 0, %s108
    %s111 = sphi 0, %s110
    %s125 = sphi 0, %s111
    %s131 = sphi 0, %s133
    %s134 = sphi 0, %s131
    %s135 = sphi 0, %s134
    %s151 = sphi 0, %s135
  $region4: #{doa_resnet_trunk_forward.6} parent=0 // loop_header_branch
    %14 = sbr.rel (%p12) target = $region8
  $region5: #{doa_resnet_trunk_forward.6} parent=0 // loop_body
    %s16 = ssub.s32 %s11, 1
    %s17 = ssub.s32 %s11, 2
    %s18 = sadd.s32 %s11, 1
    %s19 = ssub.s32 %s11, %s18
    %p20 = scmp.eq.s32.totalorder %s19, 0
    %s22 = sadd.s32 %s21, 1
    %s23 = scalar_select %p20, %s21, %s22
    %p26 = pneg %p20
    %p27 = scmp.eq.s32.totalorder %s11, 1
    %p28 = por %p26, %p27
    %p29 = scmp.ne.s32.totalorder %s21, %s24
    %p30 = scmp.eq.s32.totalorder %s11, 0
    %p31 = por %p29, %p30
    %p32 = scmp.ne.s32.totalorder %s21, %s24
    %p33 = scmp.eq.s32.totalorder %s16, 1
    %p34 = por %p32, %p33
    %p35 = scmp.ne.s32.totalorder %s24, %s25
    %p36 = scmp.eq.s32.totalorder %s16, 0
    %p37 = por %p35, %p36
    %p38 = scmp.ne.s32.totalorder %s24, %s25
    %p39 = scmp.eq.s32.totalorder %s17, 1
    %p40 = por %p38, %p39
    %p42 = scmp.ne.s32.totalorder %s25, %s41
    %p43 = scmp.eq.s32.totalorder %s17, 0
    %p44 = por %p42, %p43
    %s46 = sadd.s32 %s45, 1
    %p49 = scmp.eq.s32.totalorder %s11, 1
    %p50 = scmp.ne.s32.totalorder %s45, %s47
    %p51 = scmp.eq.s32.totalorder %s11, 0
    %p52 = por %p50, %p51
    %p53 = scmp.ne.s32.totalorder %s45, %s47
    %p54 = scmp.eq.s32.totalorder %s16, 1
    %p55 = por %p53, %p54
    %p56 = scmp.ne.s32.totalorder %s47, %s48
    %p57 = scmp.eq.s32.totalorder %s16, 0
    %p58 = por %p56, %p57
    %p59 = scmp.ne.s32.totalorder %s47, %s48
    %p60 = scmp.eq.s32.totalorder %s17, 1
    %p61 = por %p59, %p60
    %p63 = scmp.ne.s32.totalorder %s48, %s62
    %p64 = scmp.eq.s32.totalorder %s17, 0
    %p65 = por %p63, %p64
    %s67 = sadd.s32 %s66, 1
    %p70 = scmp.eq.s32.totalorder %s11, 1
    %p71 = scmp.ne.s32.totalorder %s66, %s68
    %p72 = scmp.eq.s32.totalorder %s11, 0
    %p73 = por %p71, %p72
    %p74 = scmp.ne.s32.totalorder %s66, %s68
    %p75 = scmp.eq.s32.totalorder %s16, 1
    %p76 = por %p74, %p75
    %p77 = scmp.ne.s32.totalorder %s68, %s69
    %p78 = scmp.eq.s32.totalorder %s16, 0
    %p79 = por %p77, %p78
    %p80 = scmp.ne.s32.totalorder %s68, %s69
    %p81 = scmp.eq.s32.totalorder %s17, 1
    %p82 = por %p80, %p81
    %p84 = scmp.ne.s32.totalorder %s69, %s83
    %p85 = scmp.eq.s32.totalorder %s17, 0
    %p86 = por %p84, %p85
    %s88 = sadd.s32 %s87, 1
    %p91 = scmp.eq.s32.totalorder %s11, 1
    %p92 = scmp.ne.s32.totalorder %s87, %s89
    %p93 = scmp.eq.s32.totalorder %s11, 0
    %p94 = por %p92, %p93
    %p95 = scmp.ne.s32.totalorder %s87, %s89
    %p96 = scmp.eq.s32.totalorder %s16, 1
    %p97 = por %p95, %p96
    %p98 = scmp.ne.s32.totalorder %s89, %s90
    %p99 = scmp.eq.s32.totalorder %s16, 0
    %p100 = por %p98, %p99
    %p101 = scmp.ne.s32.totalorder %s89, %s90
    %p102 = scmp.eq.s32.totalorder %s17, 1
    %p103 = por %p101, %p102
    %p105 = scmp.ne.s32.totalorder %s90, %s104
    %p106 = scmp.eq.s32.totalorder %s17, 0
    %p107 = por %p105, %p106
    %s109 = sadd.s32 %s108, 1
    %p112 = scmp.eq.s32.totalorder %s11, 1
    %p113 = scmp.ne.s32.totalorder %s108, %s110
    %p114 = scmp.eq.s32.totalorder %s11, 0
    %p115 = por %p113, %p114
    %p116 = scmp.ne.s32.totalorder %s108, %s110
    %p117 = scmp.eq.s32.totalorder %s16, 1
    %p118 = por %p116, %p117
    %p119 = scmp.ne.s32.totalorder %s110, %s111
    %p120 = scmp.eq.s32.totalorder %s16, 0
    %p121 = por %p119, %p120
    %p122 = scmp.ne.s32.totalorder %s110, %s111
    %p123 = scmp.eq.s32.totalorder %s17, 1
    %p124 = por %p122, %p123
    %p126 = scmp.ne.s32.totalorder %s111, %s125
    %p127 = scmp.eq.s32.totalorder %s17, 0
    %p128 = por %p126, %p127
    %s129 = ssub.s32 %s11, %s18
    %p130 = scmp.eq.s32.totalorder %s129, 0
    %s132 = sadd.s32 %s131, 1
    %s133 = scalar_select %p130, %s131, %s132
    %p136 = pneg %p130
    %p137 = scmp.eq.s32.totalorder %s11, 1
    %p138 = por %p136, %p137
    %p139 = scmp.ne.s32.totalorder %s131, %s134
    %p140 = scmp.eq.s32.totalorder %s11, 0
    %p141 = por %p139, %p140
    %p142 = scmp.ne.s32.totalorder %s131, %s134
    %p143 = scmp.eq.s32.totalorder %s16, 1
    %p144 = por %p142, %p143
    %p145 = scmp.ne.s32.totalorder %s134, %s135
    %p146 = scmp.eq.s32.totalorder %s16, 0
    %p147 = por %p145, %p146
    %p148 = scmp.ne.s32.totalorder %s134, %s135
    %p149 = scmp.eq.s32.totalorder %s17, 1
    %p150 = por %p148, %p149
    %p152 = scmp.ne.s32.totalorder %s135, %s151
    %p153 = scmp.eq.s32.totalorder %s17, 0
    %p154 = por %p152, %p153
    %p155 = scmp.le.s32.totalorder 1, %s11
    %p156 = scmp.lt.s32.totalorder %s11, 3
    %p157 = pnand %p155, %p156
    %p158 = pneg %p157
    // Predicated region
    $region9: #{doa_resnet_trunk_forward.6} parent=5 // pred_check
      _
    $region10: #{doa_resnet_trunk_forward.6} parent=5 // pred_check_branch
      %160 = sbr.rel (%p157) target = $region12
    $region11: #{doa_resnet_trunk_forward.6} parent=5 // pred_region
      %s161 = ssub.s32 %s11, 1
      // Predicated region
      $region13: #{doa_resnet_trunk_forward.6} parent=11 // pred_check
        %p162 = pneg %p58
      $region14: #{doa_resnet_trunk_forward.6} parent=11 // pred_check_branch
        %164 = sbr.rel (%p162) target = $region16
      $region15: #{doa_resnet_trunk_forward.6} parent=11 // pred_region
        _
      $region16: #{doa_resnet_trunk_forward.6} parent=11 // pred_fallthru
        _
      // Predicated region
      $region17: #{doa_resnet_trunk_forward.6} parent=11 // pred_check
        %p165 = pneg %p79
      $region18: #{doa_resnet_trunk_forward.6} parent=11 // pred_check_branch
        %167 = sbr.rel (%p165) target = $region20
      $region19: #{doa_resnet_trunk_forward.6} parent=11 // pred_region
        _
      $region20: #{doa_resnet_trunk_forward.6} parent=11 // pred_fallthru
        _
      // Predicated region
      $region21: #{doa_resnet_trunk_forward.6} parent=11 // pred_check
        %p168 = pneg %p100
      $region22: #{doa_resnet_trunk_forward.6} parent=11 // pred_check_branch
        %170 = sbr.rel (%p168) target = $region24
      $region23: #{doa_resnet_trunk_forward.6} parent=11 // pred_region
        _
      $region24: #{doa_resnet_trunk_forward.6} parent=11 // pred_fallthru
        _
      // Predicated region
      $region25: #{doa_resnet_trunk_forward.6} parent=11 // pred_check
        %p171 = pneg %p121
      $region26: #{doa_resnet_trunk_forward.6} parent=11 // pred_check_branch
        %173 = sbr.rel (%p171) target = $region28
      $region27: #{doa_resnet_trunk_forward.6} parent=11 // pred_region
        _
      $region28: #{doa_resnet_trunk_forward.6} parent=11 // pred_fallthru
        _
    $region12: #{doa_resnet_trunk_forward.6} parent=5 // pred_fallthru
      _
    %p174 = scmp.lt.s32.totalorder %s11, 2
    // Predicated region
    $region29: #{doa_resnet_trunk_forward.6} parent=5 // pred_check
      %p175 = pneg %p174
    $region30: #{doa_resnet_trunk_forward.6} parent=5 // pred_check_branch
      %177 = sbr.rel (%p175) target = $region32
    $region31: #{doa_resnet_trunk_forward.6} parent=5 // pred_region
      // Predicated region
      $region33: #{doa_resnet_trunk_forward.6} parent=31 // pred_check
        %p178 = pneg %p31
      $region34: #{doa_resnet_trunk_forward.6} parent=31 // pred_check_branch
        %180 = sbr.rel (%p178) target = $region36
      $region35: #{doa_resnet_trunk_forward.6} parent=31 // pred_region
        %p181 = scmp.lt.s32.totalorder %s11, 1
        %s182 = scalar_select %p181, %s11, 1
        %s183 = smul.addr %s182, 10
        %s184 = smul.addr %s183, 4
        %s185 = scalar_lea.vmem %s0, %s184
      $region36: #{doa_resnet_trunk_forward.6} parent=31 // pred_fallthru
        _
    $region32: #{doa_resnet_trunk_forward.6} parent=5 // pred_fallthru
      _
    %p186 = scmp.le.s32.totalorder 1, %s11
    %p187 = scmp.lt.s32.totalorder %s11, 3
    %p188 = pnand %p186, %p187
    %p189 = pneg %p188
    // Predicated region
    $region37: #{doa_resnet_trunk_forward.6} parent=5 // pred_check
      _
    $region38: #{doa_resnet_trunk_forward.6} parent=5 // pred_check_branch
      %191 = sbr.rel (%p188) target = $region40
    $region39: #{doa_resnet_trunk_forward.6} parent=5 // pred_region
      %s192 = ssub.s32 %s11, 1
      %p193 = scmp.lt.s32.totalorder %s16, 1
      %s194 = scalar_select %p193, %s16, 1
      %s195 = smul.addr %s194, 10
      %s196 = smul.addr %s195, 4
      %s197 = scalar_lea.vmem %s0, %s196
      %p198 = pneg %p37
      %p199 = pneg %p34
      %p200 = pneg %p58
      %p201 = pneg %p55
      %p202 = pneg %p79
      %p203 = pneg %p76
      %p204 = pneg %p100
      %p205 = pneg %p97
      %p206 = pneg %p121
      %p207 = pneg %p118
      %p208 = pneg %p147
      %p209 = pneg %p144
      %p210 = scmp.lt.s32.totalorder %s16, 1
      %s211 = scalar_select %p210, %s16, 1
      %s212 = smul.addr %s211, 10
      %s213 = smul.addr %s212, 4
      %s214 = scalar_lea.vmem %s5, %s213
      %p215 = scmp.lt.s32.totalorder %s16, 1
      %s216 = scalar_select %p215, %s16, 1
      %s217 = smul.addr %s216, 10
      %s218 = smul.addr %s217, 4
      %s219 = scalar_lea.vmem %s0, %s218
      %p220 = scmp.lt.s32.totalorder %s16, 1
      %s221 = scalar_select %p220, %s16, 1
      %s222 = smul.addr %s221, 10
      %s223 = smul.addr %s222, 4
      %s224 = scalar_lea.vmem %s5, %s223
      %vm226 = vcmask 125952
      %227 = vst.msk [vmem:[#allocation2] sm:$0xf] %vm226, 0
      %vm228 = vcmask 124928
      %229 = vst.msk [vmem:[#allocation2 + $0x4] sm:$0x7] %vm228, 0
      %230 = vst.msk [vmem:[#allocation2 + $0x8] sm:$0xf] %vm226, 0
      %231 = vst.msk [vmem:[#allocation2 + $0xc] sm:$0x7] %vm228, 0
      %232 = vst.msk [vmem:[#allocation2 + $0x10] sm:$0xf] %vm226, 0
      %233 = vst.msk [vmem:[#allocation2 + $0x14] sm:$0x7] %vm228, 0
      %234 = vst.msk [vmem:[#allocation2 + $0x18] sm:$0xf] %vm226, 0
      %235 = vst.msk [vmem:[#allocation2 + $0x1c] sm:$0x7] %vm228, 0
      %236 = vst.msk [vmem:[#allocation2 + $0x20] sm:$0xf] %vm226, 0
      %237 = vst.msk [vmem:[#allocation2 + $0x24] sm:$0x7] %vm228, 0
      %v238 = vld [vmem:[%s219] sm:$0xf]
      %v239 = vld [vmem:[%s219 + $0x4] sm:$0x3]
      %v240 = vld [vmem:[%s1] sm:$0xf]
      %v241 = vld [vmem:[%s1 + $0x4] sm:$0xf]
      %s242 = scalar_lea.vmem %s219, 8
      %v243 = vld [vmem:[%s242] sm:$0xf]
      %v244 = vld [vmem:[%s242 + $0x4] sm:$0x3]
      %s245 = scalar_lea.vmem %s1, 8
      %v246 = vld [vmem:[%s245] sm:$0xf]
      %v247 = vld [vmem:[%s245 + $0x4] sm:$0xf]
      %v250 = vunpack.c.l.b16 %v243
      %v251 = vunpack.c.l.b16 %v244
      %v252 = vpack.c.b16 %v251, %v250
      %v255 = vunpack.c.l.b16 %v246
      %v256 = vunpack.c.l.b16 %v247
      %v257 = vpack.c.b16 %v256, %v255
      %vm259 = vcmask 130048
      %v261 = vsel %vm259, %v252, 0
      %263 = vmatprep.subr.bf16.mxu0 0
      %264 = vmatpush1.bf16.msra.mxu0 %v257
      %265 = vmatprep.subr.bf16.mxu0 0
      %266 = vmatpush1.bf16.msra.mxu0 0
      %267 = vmatprep.subr.bf16.mxu0 0
      %268 = vmatpush1.bf16.msra.mxu0 0
      %269 = vmatprep.subr.bf16.mxu0 0
      %270 = vmatpush1.bf16.msra.mxu0 0
      %271 = vmatprep.subr.bf16.mxu0 0
      %272 = vmatpush1.bf16.msra.mxu0 0
      %273 = vmatprep.subr.bf16.mxu0 0
      %274 = vmatpush1.bf16.msra.mxu0 0
      %275 = vmatprep.subr.bf16.mxu0 0
      %276 = vmatpush1.bf16.msra.mxu0 0
      %277 = vmatprep.subr.bf16.mxu0 0
      %278 = vmatpush1.bf16.msra.mxu0 0
      %279 = vmatprep.subr.bf16.mxu0 0
      %280 = vmatpush1.bf16.msra.mxu0 0
      %281 = vmatprep.subr.bf16.mxu0 0
      %282 = vmatpush1.bf16.msra.mxu0 0
      %283 = vmatprep.subr.bf16.mxu0 0
      %284 = vmatpush1.bf16.msra.mxu0 0
      %285 = vmatprep.subr.bf16.mxu0 0
      %286 = vmatpush1.bf16.msra.mxu0 0
      %287 = vmatprep.subr.bf16.mxu0 0
      %288 = vmatpush1.bf16.msra.mxu0 0
      %289 = vmatprep.subr.bf16.mxu0 0
      %290 = vmatpush1.bf16.msra.mxu0 0
      %291 = vmatprep.subr.bf16.mxu0 0
      %292 = vmatpush1.bf16.msra.mxu0 0
      %293 = vmatprep.subr.bf16.mxu0 0
      %294 = vmatpush1.bf16.msra.mxu0 0
      %295 = vmatprep.mubr.bf16.mxu0 0
      %296 = vmatmul.mubr.bf16.gmra.mrb[0].mxu0 %v261
      %v297 = vpop.f32.mrb[0].mxu0
      %v298 = vadd.f32 0.0, %v297
      %v299 = vpop.f32.mrb[0].mxu0
      %v300 = vpop.f32.mrb[0].mxu0
      %v301 = vadd.f32 0.0, %v300
      %v302 = vpop.f32.mrb[0].mxu0
      %303 = vdwg.mxu0
      %v306 = vunpack.c.l.b16 %v238
      %v307 = vunpack.c.l.b16 %v239
      %v308 = vpack.c.b16 %v307, %v306
      %v311 = vunpack.c.l.b16 %v240
      %v312 = vunpack.c.l.b16 %v241
      %v313 = vpack.c.b16 %v312, %v311
      %v316 = vsel %vm259, %v308, 0
      %318 = vmatprep.subr.bf16.mxu0 0
      %319 = vmatpush1.bf16.msra.mxu0 %v313
      %320 = vmatprep.subr.bf16.mxu0 0
      %321 = vmatpush1.bf16.msra.mxu0 0
      %322 = vmatprep.subr.bf16.mxu0 0
      %323 = vmatpush1.bf16.msra.mxu0 0
      %324 = vmatprep.subr.bf16.mxu0 0
      %325 = vmatpush1.bf16.msra.mxu0 0
      %326 = vmatprep.subr.bf16.mxu0 0
      %327 = vmatpush1.bf16.msra.mxu0 0
      %328 = vmatprep.subr.bf16.mxu0 0
      %329 = vmatpush1.bf16.msra.mxu0 0
      %330 = vmatprep.subr.bf16.mxu0 0
      %331 = vmatpush1.bf16.msra.mxu0 0
      %332 = vmatprep.subr.bf16.mxu0 0
      %333 = vmatpush1.bf16.msra.mxu0 0
      %334 = vmatprep.subr.bf16.mxu0 0
      %335 = vmatpush1.bf16.msra.mxu0 0
      %336 = vmatprep.subr.bf16.mxu0 0
      %337 = vmatpush1.bf16.msra.mxu0 0
      %338 = vmatprep.subr.bf16.mxu0 0
      %339 = vmatpush1.bf16.msra.mxu0 0
      %340 = vmatprep.subr.bf16.mxu0 0
      %341 = vmatpush1.bf16.msra.mxu0 0
      %342 = vmatprep.subr.bf16.mxu0 0
      %343 = vmatpush1.bf16.msra.mxu0 0
      %344 = vmatprep.subr.bf16.mxu0 0
      %345 = vmatpush1.bf16.msra.mxu0 0
      %346 = vmatprep.subr.bf16.mxu0 0
      %347 = vmatpush1.bf16.msra.mxu0 0
      %348 = vmatprep.subr.bf16.mxu0 0
      %349 = vmatpush1.bf16.msra.mxu0 0
      %350 = vmatprep.mubr.bf16.mxu0 0
      %351 = vmatmul.mubr.bf16.gmra.mrb[0].mxu0 %v316
      %v352 = vpop.f32.mrb[0].mxu0
      %v353 = vadd.f32 %v298, %v352
      %v354 = vpop.f32.mrb[0].mxu0
      %v355 = vpop.f32.mrb[0].mxu0
      %v356 = vadd.f32 %v301, %v355
      %v357 = vpop.f32.mrb[0].mxu0
      %358 = vdwg.mxu0
      %s359 = scalar_lea.vmem %s219, 16
      %v360 = vld [vmem:[%s359] sm:$0xf]
      %v361 = vld [vmem:[%s359 + $0x4] sm:$0x3]
      %s362 = scalar_lea.vmem %s1, 16
      %v363 = vld [vmem:[%s362] sm:$0xf]
      %v364 = vld [vmem:[%s362 + $0x4] sm:$0xf]
      %v367 = vunpack.c.l.b16 %v360
      %v368 = vunpack.c.l.b16 %v361
      %v369 = vpack.c.b16 %v368, %v367
      %v372 = vunpack.c.l.b16 %v363
      %v373 = vunpack.c.l.b16 %v364
      %v374 = vpack.c.b16 %v373, %v372
      %v377 = vsel %vm259, %v369, 0
      %379 = vmatprep.subr.bf16.mxu0 0
      %380 = vmatpush1.bf16.msra.mxu0 %v374
      %381 = vmatprep.subr.bf16.mxu0 0
      %382 = vmatpush1.bf16.msra.mxu0 0
      %383 = vmatprep.subr.bf16.mxu0 0
      %384 = vmatpush1.bf16.msra.mxu0 0
      %385 = vmatprep.subr.bf16.mxu0 0
      %386 = vmatpush1.bf16.msra.mxu0 0
      %387 = vmatprep.subr.bf16.mxu0 0
      %388 = vmatpush1.bf16.msra.mxu0 0
      %389 = vmatprep.subr.bf16.mxu0 0
      %390 = vmatpush1.bf16.msra.mxu0 0
      %391 = vmatprep.subr.bf16.mxu0 0
      %392 = vmatpush1.bf16.msra.mxu0 0
      %393 = vmatprep.subr.bf16.mxu0 0
      %394 = vmatpush1.bf16.msra.mxu0 0
      %395 = vmatprep.subr.bf16.mxu0 0
      %396 = vmatpush1.bf16.msra.mxu0 0
      %397 = vmatprep.subr.bf16.mxu0 0
      %398 = vmatpush1.bf16.msra.mxu0 0
      %399 = vmatprep.subr.bf16.mxu0 0
      %400 = vmatpush1.bf16.msra.mxu0 0
      %401 = vmatprep.subr.bf16.mxu0 0
      %402 = vmatpush1.bf16.msra.mxu0 0
      %403 = vmatprep.subr.bf16.mxu0 0
      %404 = vmatpush1.bf16.msra.mxu0 0
      %405 = vmatprep.subr.bf16.mxu0 0
      %406 = vmatpush1.bf16.msra.mxu0 0
      %407 = vmatprep.subr.bf16.mxu0 0
      %408 = vmatpush1.bf16.msra.mxu0 0
      %409 = vmatprep.subr.bf16.mxu0 0
      %410 = vmatpush1.bf16.msra.mxu0 0
      %411 = vmatprep.mubr.bf16.mxu0 0
      %412 = vmatmul.mubr.bf16.gmra.mrb[0].mxu0 %v377
      %v413 = vpop.f32.mrb[0].mxu0
      %v414 = vadd.f32 0.0, %v413
      %v415 = vpop.f32.mrb[0].mxu0
      %v416 = vpop.f32.mrb[0].mxu0
      %v417 = vadd.f32 0.0, %v416
      %v418 = vpop.f32.mrb[0].mxu0
      %419 = vdwg.mxu0
      %v420 = vadd.f32 %v353, %v414
      %v421 = vadd.f32 %v356, %v417
      %v422 = vld [vmem:[%s219 + $0x4] sm:$0x7]
      %s423 = scalar_lea.vmem %s1, 24
      %v424 = vld [vmem:[%s423] sm:$0xf]
      %v425 = vld [vmem:[%s423 + $0x4] sm:$0xf]
      %v427 = vunpack.c.l.b16 %v422
      %v428 = vpack.c.b16 %v427, %v306
      %v430 = vshrl.u32 %v428, 16
      %v432 = vshll.u32 %v428, 16
      %v434 = vrot.slane %v432, 1
      %v435 = vor.u32 %v430, %v434
      %v438 = vunpack.c.l.b16 %v424
      %v439 = vunpack.c.l.b16 %v425
      %v440 = vpack.c.b16 %v439, %v438
      %v443 = vsel %vm259, %v435, 0
      %445 = vmatprep.subr.bf16.mxu0 0
      %446 = vmatpush1.bf16.msra.mxu0 %v440
      %447 = vmatprep.subr.bf16.mxu0 0
      %448 = vmatpush1.bf16.msra.mxu0 0
      %449 = vmatprep.subr.bf16.mxu0 0
      %450 = vmatpush1.bf16.msra.mxu0 0
      %451 = vmatprep.subr.bf16.mxu0 0
      %452 = vmatpush1.bf16.msra.mxu0 0
      %453 = vmatprep.subr.bf16.mxu0 0
      %454 = vmatpush1.bf16.msra.mxu0 0
      %455 = vmatprep.subr.bf16.mxu0 0
      %456 = vmatpush1.bf16.msra.mxu0 0
      %457 = vmatprep.subr.bf16.mxu0 0
      %458 = vmatpush1.bf16.msra.mxu0 0
      %459 = vmatprep.subr.bf16.mxu0 0
      %460 = vmatpush1.bf16.msra.mxu0 0
      %461 = vmatprep.subr.bf16.mxu0 0
      %462 = vmatpush1.bf16.msra.mxu0 0
      %463 = vmatprep.subr.bf16.mxu0 0
      %464 = vmatpush1.bf16.msra.mxu0 0
      %465 = vmatprep.subr.bf16.mxu0 0
      %466 = vmatpush1.bf16.msra.mxu0 0
      %467 = vmatprep.subr.bf16.mxu0 0
      %468 = vmatpush1.bf16.msra.mxu0 0
      %469 = vmatprep.subr.bf16.mxu0 0
      %470 = vmatpush1.bf16.msra.mxu0 0
      %471 = vmatprep.subr.bf16.mxu0 0
      %472 = vmatpush1.bf16.msra.mxu0 0
      %473 = vmatprep.subr.bf16.mxu0 0
      %474 = vmatpush1.bf16.msra.mxu0 0
      %475 = vmatprep.subr.bf16.mxu0 0
      %476 = vmatpush1.bf16.msra.mxu0 0
      %477 = vmatprep.mubr.bf16.mxu0 0
      %478 = vmatmul.mubr.bf16.gmra.mrb[0].mxu0 %v443
      %v479 = vpop.f32.mrb[0].mxu0
      %v480 = vadd.f32 0.0, %v479
      %v481 = vpop.f32.mrb[0].mxu0
      %v482 = vpop.f32.mrb[0].mxu0
      %v483 = vadd.f32 0.0, %v482
      %v484 = vpop.f32.mrb[0].mxu0
      %485 = vdwg.mxu0
      %v486 = vadd.f32 %v420, %v480
      %v487 = vadd.f32 %v421, %v483
      %v488 = vld [vmem:[%s242 + $0x4] sm:$0x7]
      %s489 = scalar_lea.vmem %s1, 32
      %v490 = vld [vmem:[%s489] sm:$0xf]
      %v491 = vld [vmem:[%s489 + $0x4] sm:$0xf]
      %v493 = vunpack.c.l.b16 %v488
      %v494 = vpack.c.b16 %v493, %v250
      %v496 = vshrl.u32 %v494, 16
      %v498 = vshll.u32 %v494, 16
      %v500 = vrot.slane %v498, 1
      %v501 = vor.u32 %v496, %v500
      %v504 = vunpack.c.l.b16 %v490
      %v505 = vunpack.c.l.b16 %v491
      %v506 = vpack.c.b16 %v505, %v504
      %v509 = vsel %vm259, %v501, 0
      %511 = vmatprep.subr.bf16.mxu0 0
      %512 = vmatpush1.bf16.msra.mxu0 %v506
      %513 = vmatprep.subr.bf16.mxu0 0
      %514 = vmatpush1.bf16.msra.mxu0 0
      %515 = vmatprep.subr.bf16.mxu0 0
      %516 = vmatpush1.bf16.msra.mxu0 0
      %517 = vmatprep.subr.bf16.mxu0 0
      %518 = vmatpush1.bf16.msra.mxu0 0
      %519 = vmatprep.subr.bf16.mxu0 0
      %520 = vmatpush1.bf16.msra.mxu0 0
      %521 = vmatprep.subr.bf16.mxu0 0
      %522 = vmatpush1.bf16.msra.mxu0 0
      %523 = vmatprep.subr.bf16.mxu0 0
      %524 = vmatpush1.bf16.msra.mxu0 0
      %525 = vmatprep.subr.bf16.mxu0 0
      %526 = vmatpush1.bf16.msra.mxu0 0
      %527 = vmatprep.subr.bf16.mxu0 0
      %528 = vmatpush1.bf16.msra.mxu0 0
      %529 = vmatprep.subr.bf16.mxu0 0
      %530 = vmatpush1.bf16.msra.mxu0 0
      %531 = vmatprep.subr.bf16.mxu0 0
      %532 = vmatpush1.bf16.msra.mxu0 0
      %533 = vmatprep.subr.bf16.mxu0 0
      %534 = vmatpush1.bf16.msra.mxu0 0
      %535 = vmatprep.subr.bf16.mxu0 0
      %536 = vmatpush1.bf16.msra.mxu0 0
      %537 = vmatprep.subr.bf16.mxu0 0
      %538 = vmatpush1.bf16.msra.mxu0 0
      %539 = vmatprep.subr.bf16.mxu0 0
      %540 = vmatpush1.bf16.msra.mxu0 0
      %541 = vmatprep.subr.bf16.mxu0 0
      %542 = vmatpush1.bf16.msra.mxu0 0
      %543 = vmatprep.mubr.bf16.mxu0 0
      %544 = vmatmul.mubr.bf16.gmra.mrb[0].mxu0 %v509
      %v545 = vpop.f32.mrb[0].mxu0
      %v546 = vadd.f32 0.0, %v545
      %v547 = vpop.f32.mrb[0].mxu0
      %v548 = vpop.f32.mrb[0].mxu0
      %v549 = vadd.f32 0.0, %v548
      %v550 = vpop.f32.mrb[0].mxu0
      %551 = vdwg.mxu0
      %v552 = vadd.f32 %v486, %v546
      %v553 = vadd.f32 %v487, %v549
      %v554 = vld [vmem:[%s359 + $0x4] sm:$0x7]
      %s555 = scalar_lea.vmem %s1, 40
      %v556 = vld [vmem:[%s555] sm:$0xf]
      %v557 = vld [vmem:[%s555 + $0x4] sm:$0xf]
      %v559 = vunpack.c.l.b16 %v554
      %v560 = vpack.c.b16 %v559, %v367
      %v562 = vshrl.u32 %v560, 16
      %v564 = vshll.u32 %v560, 16
      %v566 = vrot.slane %v564, 1
      %v567 = vor.u32 %v562, %v566
      %v570 = vunpack.c.l.b16 %v556
      %v571 = vunpack.c.l.b16 %v557
      %v572 = vpack.c.b16 %v571, %v570
      %v575 = vsel %vm259, %v567, 0
      %577 = vmatprep.subr.bf16.mxu0 0
      %578 = vmatpush1.bf16.msra.mxu0 %v572
      %579 = vmatprep.subr.bf16.mxu0 0
      %580 = vmatpush1.bf16.msra.mxu0 0
      %581 = vmatprep.subr.bf16.mxu0 0
      %582 = vmatpush1.bf16.msra.mxu0 0
      %583 = vmatprep.subr.bf16.mxu0 0
      %584 = vmatpush1.bf16.msra.mxu0 0
      %585 = vmatprep.subr.bf16.mxu0 0
      %586 = vmatpush1.bf16.msra.mxu0 0
      %587 = vmatprep.subr.bf16.mxu0 0
      %588 = vmatpush1.bf16.msra.mxu0 0
      %589 = vmatprep.subr.bf16.mxu0 0
      %590 = vmatpush1.bf16.msra.mxu0 0
      %591 = vmatprep.subr.bf16.mxu0 0
      %592 = vmatpush1.bf16.msra.mxu0 0
      %593 = vmatprep.subr.bf16.mxu0 0
      %594 = vmatpush1.bf16.msra.mxu0 0
      %595 = vmatprep.subr.bf16.mxu0 0
      %596 = vmatpush1.bf16.msra.mxu0 0
      %597 = vmatprep.subr.bf16.mxu0 0
      %598 = vmatpush1.bf16.msra.mxu0 0
      %599 = vmatprep.subr.bf16.mxu0 0
      %600 = vmatpush1.bf16.msra.mxu0 0
      %601 = vmatprep.subr.bf16.mxu0 0
      %602 = vmatpush1.bf16.msra.mxu0 0
      %603 = vmatprep.subr.bf16.mxu0 0
      %604 = vmatpush1.bf16.msra.mxu0 0
      %605 = vmatprep.subr.bf16.mxu0 0
      %606 = vmatpush1.bf16.msra.mxu0 0
      %607 = vmatprep.subr.bf16.mxu0 0
      %608 = vmatpush1.bf16.msra.mxu0 0
      %609 = vmatprep.mubr.bf16.mxu0 0
      %610 = vmatmul.mubr.bf16.gmra.mrb[0].mxu0 %v575
      %v611 = vpop.f32.mrb[0].mxu0
      %v612 = vadd.f32 0.0, %v611
      %v613 = vpop.f32.mrb[0].mxu0
      %v614 = vpop.f32.mrb[0].mxu0
      %v615 = vadd.f32 0.0, %v614
      %v616 = vpop.f32.mrb[0].mxu0
      %617 = vdwg.mxu0
      %v618 = vadd.f32 %v552, %v612
      %v619 = vadd.f32 %v553, %v615
      %v620 = vld [vmem:[%s219] sm:$0xe]
      %s621 = scalar_lea.vmem %s1, 48
      %v622 = vld [vmem:[%s621] sm:$0xf]
      %v623 = vld [vmem:[%s621 + $0x4] sm:$0xf]
      %v625 = vunpack.c.l.b16 %v620
      %v626 = vpack.c.b16 %v427, %v625
      %v627 = vrot.slane %v626, 1
      %v630 = vunpack.c.l.b16 %v622
      %v631 = vunpack.c.l.b16 %v623
      %v632 = vpack.c.b16 %v631, %v630
      %v635 = vsel %vm259, %v627, 0
      %637 = vmatprep.subr.bf16.mxu0 0
      %638 = vmatpush1.bf16.msra.mxu0 %v632
      %639 = vmatprep.subr.bf16.mxu0 0
      %640 = vmatpush1.bf16.msra.mxu0 0
      %641 = vmatprep.subr.bf16.mxu0 0
      %642 = vmatpush1.bf16.msra.mxu0 0
      %643 = vmatprep.subr.bf16.mxu0 0
      %644 = vmatpush1.bf16.msra.mxu0 0
      %645 = vmatprep.subr.bf16.mxu0 0
      %646 = vmatpush1.bf16.msra.mxu0 0
      %647 = vmatprep.subr.bf16.mxu0 0
      %648 = vmatpush1.bf16.msra.mxu0 0
      %649 = vmatprep.subr.bf16.mxu0 0
      %650 = vmatpush1.bf16.msra.mxu0 0
      %651 = vmatprep.subr.bf16.mxu0 0
      %652 = vmatpush1.bf16.msra.mxu0 0
      %653 = vmatprep.subr.bf16.mxu0 0
      %654 = vmatpush1.bf16.msra.mxu0 0
      %655 = vmatprep.subr.bf16.mxu0 0
      %656 = vmatpush1.bf16.msra.mxu0 0
      %657 = vmatprep.subr.bf16.mxu0 0
      %658 = vmatpush1.bf16.msra.mxu0 0
      %659 = vmatprep.subr.bf16.mxu0 0
      %660 = vmatpush1.bf16.msra.mxu0 0
      %661 = vmatprep.subr.bf16.mxu0 0
      %662 = vmatpush1.bf16.msra.mxu0 0
      %663 = vmatprep.subr.bf16.mxu0 0
      %664 = vmatpush1.bf16.msra.mxu0 0
      %665 = vmatprep.subr.bf16.mxu0 0
      %666 = vmatpush1.bf16.msra.mxu0 0
      %667 = vmatprep.subr.bf16.mxu0 0
      %668 = vmatpush1.bf16.msra.mxu0 0
      %669 = vmatprep.mubr.bf16.mxu0 0
      %670 = vmatmul.mubr.bf16.gmra.mrb[0].mxu0 %v635
      %v671 = vpop.f32.mrb[0].mxu0
      %v672 = vadd.f32 0.0, %v671
      %v673 = vpop.f32.mrb[0].mxu0
      %v674 = vpop.f32.mrb[0].mxu0
      %v675 = vadd.f32 0.0, %v674
      %v676 = vpop.f32.mrb[0].mxu0
      %677 = vdwg.mxu0
      %v678 = vadd.f32 %v618, %v672
      %v679 = vadd.f32 %v619, %v675
      %v680 = vld [vmem:[%s242] sm:$0xe]
      %s681 = scalar_lea.vmem %s1, 56
      %v682 = vld [vmem:[%s681] sm:$0xf]
      %v683 = vld [vmem:[%s681 + $0x4] sm:$0xf]
      %v685 = vunpack.c.l.b16 %v680
      %v686 = vpack.c.b16 %v493, %v685
      %v687 = vrot.slane %v686, 1
      %v690 = vunpack.c.l.b16 %v682
      %v691 = vunpack.c.l.b16 %v683
      %v692 = vpack.c.b16 %v691, %v690
      %v695 = vsel %vm259, %v687, 0
      %697 = vmatprep.subr.bf16.mxu0 0
      %698 = vmatpush1.bf16.msra.mxu0 %v692
      %699 = vmatprep.subr.bf16.mxu0 0
      %700 = vmatpush1.bf16.msra.mxu0 0
      %701 = vmatprep.subr.bf16.mxu0 0
      %702 = vmatpush1.bf16.msra.mxu0 0
      %703 = vmatprep.subr.bf16.mxu0 0
      %704 = vmatpush1.bf16.msra.mxu0 0
      %705 = vmatprep.subr.bf16.mxu0 0
      %706 = vmatpush1.bf16.msra.mxu0 0
      %707 = vmatprep.subr.bf16.mxu0 0
      %708 = vmatpush1.bf16.msra.mxu0 0
      %709 = vmatprep.subr.bf16.mxu0 0
      %710 = vmatpush1.bf16.msra.mxu0 0
      %711 = vmatprep.subr.bf16.mxu0 0
      %712 = vmatpush1.bf16.msra.mxu0 0
      %713 = vmatprep.subr.bf16.mxu0 0
      %714 = vmatpush1.bf16.msra.mxu0 0
      %715 = vmatprep.subr.bf16.mxu0 0
      %716 = vmatpush1.bf16.msra.mxu0 0
      %717 = vmatprep.subr.bf16.mxu0 0
      %718 = vmatpush1.bf16.msra.mxu0 0
      %719 = vmatprep.subr.bf16.mxu0 0
      %720 = vmatpush1.bf16.msra.mxu0 0
      %721 = vmatprep.subr.bf16.mxu0 0
      %722 = vmatpush1.bf16.msra.mxu0 0
      %723 = vmatprep.subr.bf16.mxu0 0
      %724 = vmatpush1.bf16.msra.mxu0 0
      %725 = vmatprep.subr.bf16.mxu0 0
      %726 = vmatpush1.bf16.msra.mxu0 0
      %727 = vmatprep.subr.bf16.mxu0 0
      %728 = vmatpush1.bf16.msra.mxu0 0
      %729 = vmatprep.mubr.bf16.mxu0 0
      %730 = vmatmul.mubr.bf16.gmra.mrb[0].mxu0 %v695
      %v731 = vpop.f32.mrb[0].mxu0
      %v732 = vadd.f32 0.0, %v731
      %v733 = vpop.f32.mrb[0].mxu0
      %v734 = vpop.f32.mrb[0].mxu0
      %v735 = vadd.f32 0.0, %v734
      %v736 = vpop.f32.mrb[0].mxu0
      %737 = vdwg.mxu0
      %v738 = vadd.f32 %v678, %v732
      %v739 = vadd.f32 %v679, %v735
      %v740 = vld [vmem:[%s359] sm:$0xe]
      %s741 = scalar_lea.vmem %s1, 64
      %v742 = vld [vmem:[%s741] sm:$0xf]
      %v743 = vld [vmem:[%s741 + $0x4] sm:$0xf]
      %v745 = vunpack.c.l.b16 %v740
      %v746 = vpack.c.b16 %v559, %v745
      %v747 = vrot.slane %v746, 1
      %v750 = vunpack.c.l.b16 %v742
      %v751 = vunpack.c.l.b16 %v743
      %v752 = vpack.c.b16 %v751, %v750
      %v755 = vsel %vm259, %v747, 0
      %757 = vmatprep.subr.bf16.mxu0 0
      %758 = vmatpush1.bf16.msra.mxu0 %v752
      %759 = vmatprep.subr.bf16.mxu0 0
      %760 = vmatpush1.bf16.msra.mxu0 0
      %761 = vmatprep.subr.bf16.mxu0 0
      %762 = vmatpush1.bf16.msra.mxu0 0
      %763 = vmatprep.subr.bf16.mxu0 0
      %764 = vmatpush1.bf16.msra.mxu0 0
      %765 = vmatprep.subr.bf16.mxu0 0
      %766 = vmatpush1.bf16.msra.mxu0 0
      %767 = vmatprep.subr.bf16.mxu0 0
      %768 = vmatpush1.bf16.msra.mxu0 0
      %769 = vmatprep.subr.bf16.mxu0 0
      %770 = vmatpush1.bf16.msra.mxu0 0
      %771 = vmatprep.subr.bf16.mxu0 0
      %772 = vmatpush1.bf16.msra.mxu0 0
      %773 = vmatprep.subr.bf16.mxu0 0
      %774 = vmatpush1.bf16.msra.mxu0 0
      %775 = vmatprep.subr.bf16.mxu0 0
      %776 = vmatpush1.bf16.msra.mxu0 0
      %777 = vmatprep.subr.bf16.mxu0 0
      %778 = vmatpush1.bf16.msra.mxu0 0
      %779 = vmatprep.subr.bf16.mxu0 0
      %780 = vmatpush1.bf16.msra.mxu0 0
      %781 = vmatprep.subr.bf16.mxu0 0
      %782 = vmatpush1.bf16.msra.mxu0 0
      %783 = vmatprep.subr.bf16.mxu0 0
      %784 = vmatpush1.bf16.msra.mxu0 0
      %785 = vmatprep.subr.bf16.mxu0 0
      %786 = vmatpush1.bf16.msra.mxu0 0
      %787 = vmatprep.subr.bf16.mxu0 0
      %788 = vmatpush1.bf16.msra.mxu0 0
      %789 = vmatprep.mubr.bf16.mxu0 0
      %790 = vmatmul.mubr.bf16.gmra.mrb[0].mxu0 %v755
      %v791 = vpop.f32.mrb[0].mxu0
      %v792 = vadd.f32 0.0, %v791
      %v793 = vpop.f32.mrb[0].mxu0
      %v794 = vpop.f32.mrb[0].mxu0
      %v795 = vadd.f32 0.0, %v794
      %v796 = vpop.f32.mrb[0].mxu0
      %797 = vdwg.mxu0
      %v798 = vadd.f32 %v738, %v792
      %v799 = vadd.f32 %v739, %v795
      %v800 = vld [vmem:[%s2] sm:$0x1]
      %v802 = vlaneseq
      %v803 = vshrl.u32 %v802, 7
      %v804 = vsub.s32 0, %v803
      %v805 = vrot.slane %v800, %v804
      %v807 = vadd.f32 %v798, %v805
      %v808 = vadd.f32 %v799, %v805
      %v809 = vmax.f32 %v807, 0.0
      %v810 = vmax.f32 %v808, 0.0
      %v811 = vpack.c.bf16 %v810, %v809
      %v813 = vunpack.c.l.b16 %v811
      %v814 = vunpack.c.h.b16 %v811
      %v815 = vpack.c.b16 %v813, %v813
      %v816 = vpack.c.b16 %v814, %v814
      %vm817 = vsmask.f32 256
      %vm818 = vsmask.f32 4368
      %vm819 = vmor %vm817, %vm818
      %v821 = vshrl.u32 %v815, 16
      %v823 = vrot.slane %v821, 7
      %v824 = vshll.u32 %v815, 16
      %v826 = vor.u32 %v823, %v824
      %v827 = vrot.slane %v823, 4
      %v829 = vshrl.u32 %v816, 16
      %v831 = vrot.slane %v829, 7
      %v832 = vshll.u32 %v816, 16
      %v834 = vor.u32 %v831, %v832
      %v835 = vsel %vm819, %v827, %v834
      %s838 = scalar_lea.vmem [#allocation2], 8
      %vm839 = vcmask 125952
      %vm840 = vsmask.f32 7938
      %vm841 = vmand %vm839, %vm840
      %v842 = vld [vmem:[%s838] sm:$0xf]
      %v843 = vsel %vm841, %v826, %v842
      %844 = vst [vmem:[%s838] sm:$0xf] %v843
      %vm845 = vcmask 124928
      %vm846 = vsmask.f32 2304
      %vm847 = vmand %vm845, %vm846
      %v848 = vld [vmem:[%s838 + $0x4] sm:$0x7]
      %v849 = vsel %vm847, %v835, %v848
      %850 = vst [vmem:[%s838 + $0x4] sm:$0x7] %v849
      %v851 = vld [vmem:[%s242] sm:$0xf]
      %v852 = vld [vmem:[%s242 + $0x4] sm:$0x3]
      %v853 = vld [vmem:[%s1] sm:$0xf]
      %v854 = vld [vmem:[%s1 + $0x4] sm:$0xf]
      %v855 = vld [vmem:[%s359] sm:$0xf]
      %v856 = vld [vmem:[%s359 + $0x4] sm:$0x3]
      %v857 = vld [vmem:[%s245] sm:$0xf]
      %v858 = vld [vmem:[%s245 + $0x4] sm:$0xf]
      %v861 = vunpack.c.l.b16 %v855
      %v862 = vunpack.c.l.b16 %v856
      %v863 = vpack.c.b16 %v862, %v861
      %v866 = vunpack.c.l.b16 %v857
      %v867 = vunpack.c.l.b16 %v858
      %v868 = vpack.c.b16 %v867, %v866
      %v871 = vsel %vm259, %v863, 0
      %873 = vmatprep.subr.bf16.mxu0 0
      %874 = vmatpush1.bf16.msra.mxu0 %v868
      %875 = vmatprep.subr.bf16.mxu0 0
      %876 = vmatpush1.bf16.msra.mxu0 0
      %877 = vmatprep.subr.bf16.mxu0 0
      %878 = vmatpush1.bf16.msra.mxu0 0
      %879 = vmatprep.subr.bf16.mxu0 0
      %880 = vmatpush1.bf16.msra.mxu0 0
      %881 = vmatprep.subr.bf16.mxu0 0
      %882 = vmatpush1.bf16.msra.mxu0 0
      %883 = vmatprep.subr.bf16.mxu0 0
      %884 = vmatpush1.bf16.msra.mxu0 0
      %885 = vmatprep.subr.bf16.mxu0 0
      %886 = vmatpush1.bf16.msra.mxu0 0
      %887 = vmatprep.subr.bf16.mxu0 0
      %888 = vmatpush1.bf16.msra.mxu0 0
      %889 = vmatprep.subr.bf16.mxu0 0
      %890 = vmatpush1.bf16.msra.mxu0 0
      %891 = vmatprep.subr.bf16.mxu0 0
      %892 = vmatpush1.bf16.msra.mxu0 0
      %893 = vmatprep.subr.bf16.mxu0 0
      %894 = vmatpush1.bf16.msra.mxu0 0
      %895 = vmatprep.subr.bf16.mxu0 0
      %896 = vmatpush1.bf16.msra.mxu0 0
      %897 = vmatprep.subr.bf16.mxu0 0
      %898 = vmatpush1.bf16.msra.mxu0 0
      %899 = vmatprep.subr.bf16.mxu0 0
      %900 = vmatpush1.bf16.msra.mxu0 0
      %901 = vmatprep.subr.bf16.mxu0 0
      %902 = vmatpush1.bf16.msra.mxu0 0
      %903 = vmatprep.subr.bf16.mxu0 0
      %904 = vmatpush1.bf16.msra.mxu0 0
      %905 = vmatprep.mubr.bf16.mxu0 0
      %906 = vmatmul.mubr.bf16.gmra.mrb[0].mxu0 %v871
      %v907 = vpop.f32.mrb[0].mxu0
      %v908 = vadd.f32 0.0, %v907
      %v909 = vpop.f32.mrb[0].mxu0
      %v910 = vpop.f32.mrb[0].mxu0
      %v911 = vadd.f32 0.0, %v910
      %v912 = vpop.f32.mrb[0].mxu0
      %913 = vdwg.mxu0
      %v916 = vunpack.c.l.b16 %v851
      %v917 = vunpack.c.l.b16 %v852
      %v918 = vpack.c.b16 %v917, %v916
      %v921 = vunpack.c.l.b16 %v853
      %v922 = vunpack.c.l.b16 %v854
      %v923 = vpack.c.b16 %v922, %v921
      %v926 = vsel %vm259, %v918, 0
      %928 = vmatprep.subr.bf16.mxu0 0
      %929 = vmatpush1.bf16.msra.mxu0 %v923
      %930 = vmatprep.subr.bf16.mxu0 0
      %931 = vmatpush1.bf16.msra.mxu0 0
      %932 = vmatprep.subr.bf16.mxu0 0
      %933 = vmatpush1.bf16.msra.mxu0 0
      %934 = vmatprep.subr.bf16.mxu0 0
      %935 = vmatpush1.bf16.msra.mxu0 0
      %936 = vmatprep.subr.bf16.mxu0 0
      %937 = vmatpush1.bf16.msra.mxu0 0
      %938 = vmatprep.subr.bf16.mxu0 0
      %939 = vmatpush1.bf16.msra.mxu0 0
      %940 = vmatprep.subr.bf16.mxu0 0
      %941 = vmatpush1.bf16.msra.mxu0 0
      %942 = vmatprep.subr.bf16.mxu0 0
      %943 = vmatpush1.bf16.msra.mxu0 0
      %944 = vmatprep.subr.bf16.mxu0 0
      %945 = vmatpush1.bf16.msra.mxu0 0
      %946 = vmatprep.subr.bf16.mxu0 0
      %947 = vmatpush1.bf16.msra.mxu0 0
      %948 = vmatprep.subr.bf16.mxu0 0
      %949 = vmatpush1.bf16.msra.mxu0 0
      %950 = vmatprep.subr.bf16.mxu0 0
      %951 = vmatpush1.bf16.msra.mxu0 0
      %952 = vmatprep.subr.bf16.mxu0 0
      %953 = vmatpush1.bf16.msra.mxu0 0
      %954 = vmatprep.subr.bf16.mxu0 0
      %955 = vmatpush1.bf16.msra.mxu0 0
      %956 = vmatprep.subr.bf16.mxu0 0
      %957 = vmatpush1.bf16.msra.mxu0 0
      %958 = vmatprep.subr.bf16.mxu0 0
      %959 = vmatpush1.bf16.msra.mxu0 0
      %960 = vmatprep.mubr.bf16.mxu0 0
      %961 = vmatmul.mubr.bf16.gmra.mrb[0].mxu0 %v926
      %v962 = vpop.f32.mrb[0].mxu0
      %v963 = vadd.f32 %v908, %v962
      %v964 = vpop.f32.mrb[0].mxu0
      %v965 = vpop.f32.mrb[0].mxu0
      %v966 = vadd.f32 %v911, %v965
      %v967 = vpop.f32.mrb[0].mxu0
      %968 = vdwg.mxu0
      %s969 = scalar_lea.vmem %s219, 24
      %v970 = vld [vmem:[%s969] sm:$0xf]
      %v971 = vld [vmem:[%s969 + $0x4] sm:$0x3]
      %v972 = vld [vmem:[%s362] sm:$0xf]
      %v973 = vld [vmem:[%s362 + $0x4] sm:$0xf]
      %v976 = vunpack.c.l.b16 %v970
      %v977 = vunpack.c.l.b16 %v971
      %v978 = vpack.c.b16 %v977, %v976
      %v981 = vunpack.c.l.b16 %v972
      %v982 = vunpack.c.l.b16 %v973
      %v983 = vpack.c.b16 %v982, %v981
      %v986 = vsel %vm259, %v978, 0
      %988 = vmatprep.subr.bf16.mxu0 0
      %989 = vmatpush1.bf16.msra.mxu0 %v983
      %990 = vmatprep.subr.bf16.mxu0 0
      %991 = vmatpush1.bf16.msra.mxu0 0
      %992 = vmatprep.subr.bf16.mxu0 0
      %993 = vmatpush1.bf16.msra.mxu0 0
      %994 = vmatprep.subr.bf16.mxu0 0
      %995 = vmatpush1.bf16.msra.mxu0 0
      %996 = vmatprep.subr.bf16.mxu0 0
      %997 = vmatpush1.bf16.msra.mxu0 0
      %998 = vmatprep.subr.bf16.mxu0 0
      %999 = vmatpush1.bf16.msra.mxu0 0
      %1000 = vmatprep.subr.bf16.mxu0 0
      %1001 = vmatpush1.bf16.msra.mxu0 0
      %1002 = vmatprep.subr.bf16.mxu0 0
      %1003 = vmatpush1.bf16.msra.mxu0 0
      %1004 = vmatprep.subr.bf16.mxu0 0
      %1005 = vmatpush1.bf16.msra.mxu0 0
      %1006 = vmatprep.subr.bf16.mxu0 0
      %1007 = vmatpush1.bf16.msra.mxu0 0
      %1008 = vmatprep.subr.bf16.mxu0 0
      %1009 = vmatpush1.bf16.msra.mxu0 0
      %1010 = vmatprep.subr.bf16.mxu0 0
      %1011 = vmatpush1.bf16.msra.mxu0 0
      %1012 = vmatprep.subr.bf16.mxu0 0
      %1013 = vmatpush1.bf16.msra.mxu0 0
      %1014 = vmatprep.subr.bf16.mxu0 0
      %1015 = vmatpush1.bf16.msra.mxu0 0
      %1016 = vmatprep.subr.bf16.mxu0 0
      %1017 = vmatpush1.bf16.msra.mxu0 0
      %1018 = vmatprep.subr.bf16.mxu0 0
      %1019 = vmatpush1.bf16.msra.mxu0 0
      %1020 = vmatprep.mubr.bf16.mxu0 0
      %1021 = vmatmul.mubr.bf16.gmra.mrb[0].mxu0 %v986
      %v1022 = vpop.f32.mrb[0].mxu0
      %v1023 = vadd.f32 0.0, %v1022
      %v1024 = vpop.f32.mrb[0].mxu0
      %v1025 = vpop.f32.mrb[0].mxu0
      %v1026 = vadd.f32 0.0, %v1025
      %v1027 = vpop.f32.mrb[0].mxu0
      %1028 = vdwg.mxu0
      %v1029 = vadd.f32 %v963, %v1023
      %v1030 = vadd.f32 %v966, %v1026
      %v1031 = vld [vmem:[%s242 + $0x4] sm:$0x7]
      %v1032 = vld [vmem:[%s423] sm:$0xf]
      %v1033 = vld [vmem:[%s423 + $0x4] sm:$0xf]
      %v1035 = vunpack.c.l.b16 %v1031
      %v1036 = vpack.c.b16 %v1035, %v916
      %v1038 = vshrl.u32 %v1036, 16
      %v1040 = vshll.u32 %v1036, 16
      %v1042 = vrot.slane %v1040, 1
      %v1043 = vor.u32 %v1038, %v1042
      %v1046 = vunpack.c.l.b16 %v1032
      %v1047 = vunpack.c.l.b16 %v1033
      %v1048 = vpack.c.b16 %v1047, %v1046
      %v1051 = vsel %vm259, %v1043, 0
      %1053 = vmatprep.subr.bf16.mxu0 0
      %1054 = vmatpush1.bf16.msra.mxu0 %v1048
      %1055 = vmatprep.subr.bf16.mxu0 0
      %1056 = vmatpush1.bf16.msra.mxu0 0
      %1057 = vmatprep.subr.bf16.mxu0 0
      %1058 = vmatpush1.bf16.msra.mxu0 0
      %1059 = vmatprep.subr.bf16.mxu0 0
      %1060 = vmatpush1.bf16.msra.mxu0 0
      %1061 = vmatprep.subr.bf16.mxu0 0
      %1062 = vmatpush1.bf16.msra.mxu0 0
      %1063 = vmatprep.subr.bf16.mxu0 0
      %1064 = vmatpush1.bf16.msra.mxu0 0
      %1065 = vmatprep.subr.bf16.mxu0 0
      %1066 = vmatpush1.bf16.msra.mxu0 0
      %1067 = vmatprep.subr.bf16.mxu0 0
      %1068 = vmatpush1.bf16.msra.mxu0 0
      %1069 = vmatprep.subr.bf16.mxu0 0
      %1070 = vmatpush1.bf16.msra.mxu0 0
      %1071 = vmatprep.subr.bf16.mxu0 0
      %1072 = vmatpush1.bf16.msra.mxu0 0
      %1073 = vmatprep.subr.bf16.mxu0 0
      %1074 = vmatpush1.bf16.msra.mxu0 0
      %1075 = vmatprep.subr.bf16.mxu0 0
      %1076 = vmatpush1.bf16.msra.mxu0 0
      %1077 = vmatprep.subr.bf16.mxu0 0
      %1078 = vmatpush1.bf16.msra.mxu0 0
      %1079 = vmatprep.subr.bf16.mxu0 0
      %1080 = vmatpush1.bf16.msra.mxu0 0
      %1081 = vmatprep.subr.bf16.mxu0 0
      %1082 = vmatpush1.bf16.msra.mxu0 0
      %1083 = vmatprep.subr.bf16.mxu0 0
      %1084 = vmatpush1.bf16.msra.mxu0 0
      %1085 = vmatprep.mubr.bf16.mxu0 0
      %1086 = vmatmul.mubr.bf16.gmra.mrb[0].mxu0 %v1051
      %v1087 = vpop.f32.mrb[0].mxu0
      %v1088 = vadd.f32 0.0, %v1087
      %v1089 = vpop.f32.mrb[0].mxu0
      %v1090 = vpop.f32.mrb[0].mxu0
      %v1091 = vadd.f32 0.0, %v1090
      %v1092 = vpop.f32.mrb[0].mxu0
      %1093 = vdwg.mxu0
      %v1094 = vadd.f32 %v1029, %v1088
      %v1095 = vadd.f32 %v1030, %v1091
      %v1096 = vld [vmem:[%s359 + $0x4] sm:$0x7]
      %v1097 = vld [vmem:[%s489] sm:$0xf]
      %v1098 = vld [vmem:[%s489 + $0x4] sm:$0xf]
      %v1100 = vunpack.c.l.b16 %v1096
      %v1101 = vpack.c.b16 %v1100, %v861
      %v1103 = vshrl.u32 %v1101, 16
      %v1105 = vshll.u32 %v1101, 16
      %v1107 = vrot.slane %v1105, 1
      %v1108 = vor.u32 %v1103, %v1107
      %v1111 = vunpack.c.l.b16 %v1097
      %v1112 = vunpack.c.l.b16 %v1098
      %v1113 = vpack.c.b16 %v1112, %v1111
      %v1116 = vsel %vm259, %v1108, 0
      %1118 = vmatprep.subr.bf16.mxu0 0
      %1119 = vmatpush1.bf16.msra.mxu0 %v1113
      %1120 = vmatprep.subr.bf16.mxu0 0
      %1121 = vmatpush1.bf16.msra.mxu0 0
      %1122 = vmatprep.subr.bf16.mxu0 0
      %1123 = vmatpush1.bf16.msra.mxu0 0
      %1124 = vmatprep.subr.bf16.mxu0 0
      %1125 = vmatpush1.bf16.msra.mxu0 0
      %1126 = vmatprep.subr.bf16.mxu0 0
      %1127 = vmatpush1.bf16.msra.mxu0 0
      %1128 = vmatprep.subr.bf16.mxu0 0
      %1129 = vmatpush1.bf16.msra.mxu0 0
      %1130 = vmatprep.subr.bf16.mxu0 0
      %1131 = vmatpush1.bf16.msra.mxu0 0
      %1132 = vmatprep.subr.bf16.mxu0 0
      %1133 = vmatpush1.bf16.msra.mxu0 0
      %1134 = vmatprep.subr.bf16.mxu0 0
      %1135 = vmatpush1.bf16.msra.mxu0 0
      %1136 = vmatprep.subr.bf16.mxu0 0
      %1137 = vmatpush1.bf16.msra.mxu0 0
      %1138 = vmatprep.subr.bf16.mxu0 0
      %1139 = vmatpush1.bf16.msra.mxu0 0
      %1140 = vmatprep.subr.bf16.mxu0 0
      %1141 = vmatpush1.bf16.msra.mxu0 0
      %1142 = vmatprep.subr.bf16.mxu0 0
      %1143 = vmatpush1.bf16.msra.mxu0 0
      %1144 = vmatprep.subr.bf16.mxu0 0
      %1145 = vmatpush1.bf16.msra.mxu0 0
      %1146 = vmatprep.subr.bf16.mxu0 0
      %1147 = vmatpush1.bf16.msra.mxu0 0
      %1148 = vmatprep.subr.bf16.mxu0 0
      %1149 = vmatpush1.bf16.msra.mxu0 0
      %1150 = vmatprep.mubr.bf16.mxu0 0
      %1151 = vmatmul.mubr.bf16.gmra.mrb[0].mxu0 %v1116
      %v1152 = vpop.f32.mrb[0].mxu0
      %v1153 = vadd.f32 0.0, %v1152
      %v1154 = vpop.f32.mrb[0].mxu0
      %v1155 = vpop.f32.mrb[0].mxu0
      %v1156 = vadd.f32 0.0, %v1155
      %v1157 = vpop.f32.mrb[0].mxu0
      %1158 = vdwg.mxu0
      %v1159 = vadd.f32 %v1094, %v1153
      %v1160 = vadd.f32 %v1095, %v1156
      %v1161 = vld [vmem:[%s969 + $0x4] sm:$0x7]
      %v1162 = vld [vmem:[%s555] sm:$0xf]
      %v1163 = vld [vmem:[%s555 + $0x4] sm:$0xf]
      %v1165 = vunpack.c.l.b16 %v1161
      %v1166 = vpack.c.b16 %v1165, %v976
      %v1168 = vshrl.u32 %v1166, 16
      %v1170 = vshll.u32 %v1166, 16
      %v1172 = vrot.slane %v1170, 1
      %v1173 = vor.u32 %v1168, %v1172
      %v1176 = vunpack.c.l.b16 %v1162
      %v1177 = vunpack.c.l.b16 %v1163
      %v1178 = vpack.c.b16 %v1177, %v1176
      %v1181 = vsel %vm259, %v1173, 0
      %1183 = vmatprep.subr.bf16.mxu0 0
      %1184 = vmatpush1.bf16.msra.mxu0 %v1178
      %1185 = vmatprep.subr.bf16.mxu0 0
      %1186 = vmatpush1.bf16.msra.mxu0 0
      %1187 = vmatprep.subr.bf16.mxu0 0
      %1188 = vmatpush1.bf16.msra.mxu0 0
      %1189 = vmatprep.subr.bf16.mxu0 0
      %1190 = vmatpush1.bf16.msra.mxu0 0
      %1191 = vmatprep.subr.bf16.mxu0 0
      %1192 = vmatpush1.bf16.msra.mxu0 0
      %1193 = vmatprep.subr.bf16.mxu0 0
      %1194 = vmatpush1.bf16.msra.mxu0 0
      %1195 = vmatprep.subr.bf16.mxu0 0
      %1196 = vmatpush1.bf16.msra.mxu0 0
      %1197 = vmatprep.subr.bf16.mxu0 0
      %1198 = vmatpush1.bf16.msra.mxu0 0
      %1199 = vmatprep.subr.bf16.mxu0 0
      %1200 = vmatpush1.bf16.msra.mxu0 0
      %1201 = vmatprep.subr.bf16.mxu0 0
      %1202 = vmatpush1.bf16.msra.mxu0 0
      %1203 = vmatprep.subr.bf16.mxu0 0
      %1204 = vmatpush1.bf16.msra.mxu0 0
      %1205 = vmatprep.subr.bf16.mxu0 0
      %1206 = vmatpush1.bf16.msra.mxu0 0
      %1207 = vmatprep.subr.bf16.mxu0 0
      %1208 = vmatpush1.bf16.msra.mxu0 0
      %1209 = vmatprep.subr.bf16.mxu0 0
      %1210 = vmatpush1.bf16.msra.mxu0 0
      %1211 = vmatprep.subr.bf16.mxu0 0
      %1212 = vmatpush1.bf16.msra.mxu0 0
      %1213 = vmatprep.subr.bf16.mxu0 0
      %1214 = vmatpush1.bf16.msra.mxu0 0
      %1215 = vmatprep.mubr.bf16.mxu0 0
      %1216 = vmatmul.mubr.bf16.gmra.mrb[0].mxu0 %v1181
      %v1217 = vpop.f32.mrb[0].mxu0
      %v1218 = vadd.f32 0.0, %v1217
      %v1219 = vpop.f32.mrb[0].mxu0
      %v1220 = vpop.f32.mrb[0].mxu0
      %v1221 = vadd.f32 0.0, %v1220
      %v1222 = vpop.f32.mrb[0].mxu0
      %1223 = vdwg.mxu0
      %v1224 = vadd.f32 %v1159, %v1218
      %v1225 = vadd.f32 %v1160, %v1221
      %v1226 = vld [vmem:[%s242] sm:$0xe]
      %v1227 = vld [vmem:[%s621] sm:$0xf]
      %v1228 = vld [vmem:[%s621 + $0x4] sm:$0xf]
      %v1230 = vunpack.c.l.b16 %v1226
      %v1231 = vpack.c.b16 %v1035, %v1230
      %v1232 = vrot.slane %v1231, 1
      %v1235 = vunpack.c.l.b16 %v1227
      %v1236 = vunpack.c.l.b16 %v1228
      %v1237 = vpack.c.b16 %v1236, %v1235
      %v1240 = vsel %vm259, %v1232, 0
      %1242 = vmatprep.subr.bf16.mxu0 0
      %1243 = vmatpush1.bf16.msra.mxu0 %v1237
      %1244 = vmatprep.subr.bf16.mxu0 0
      %1245 = vmatpush1.bf16.msra.mxu0 0
      %1246 = vmatprep.subr.bf16.mxu0 0
      %1247 = vmatpush1.bf16.msra.mxu0 0
      %1248 = vmatprep.subr.bf16.mxu0 0
      %1249 = vmatpush1.bf16.msra.mxu0 0
      %1250 = vmatprep.subr.bf16.mxu0 0
      %1251 = vmatpush1.bf16.msra.mxu0 0
      %1252 = vmatprep.subr.bf16.mxu0 0
      %1253 = vmatpush1.bf16.msra.mxu0 0
      %1254 = vmatprep.subr.bf16.mxu0 0
      %1255 = vmatpush1.bf16.msra.mxu0 0
      %1256 = vmatprep.subr.bf16.mxu0 0
      %1257 = vmatpush1.bf16.msra.mxu0 0
      %1258 = vmatprep.subr.bf16.mxu0 0
      %1259 = vmatpush1.bf16.msra.mxu0 0
      %1260 = vmatprep.subr.bf16.mxu0 0
      %1261 = vmatpush1.bf16.msra.mxu0 0
      %1262 = vmatprep.subr.bf16.mxu0 0
      %1263 = vmatpush1.bf16.msra.mxu0 0
      %1264 = vmatprep.subr.bf16.mxu0 0
      %1265 = vmatpush1.bf16.msra.mxu0 0
      %1266 = vmatprep.subr.bf16.mxu0 0
      %1267 = vmatpush1.bf16.msra.mxu0 0
      %1268 = vmatprep.subr.bf16.mxu0 0
      %1269 = vmatpush1.bf16.msra.mxu0 0
      %1270 = vmatprep.subr.bf16.mxu0 0
      %1271 = vmatpush1.bf16.msra.mxu0 0
      %1272 = vmatprep.subr.bf16.mxu0 0
      %1273 = vmatpush1.bf16.msra.mxu0 0
      %1274 = vmatprep.mubr.bf16.mxu0 0
      %1275 = vmatmul.mubr.bf16.gmra.mrb[0].mxu0 %v1240
      %v1276 = vpop.f32.mrb[0].mxu0
      %v1277 = vadd.f32 0.0, %v1276
      %v1278 = vpop.f32.mrb[0].mxu0
      %v1279 = vpop.f32.mrb[0].mxu0
      %v1280 = vadd.f32 0.0, %v1279
      %v1281 = vpop.f32.mrb[0].mxu0
      %1282 = vdwg.mxu0
      %v1283 = vadd.f32 %v1224, %v1277
      %v1284 = vadd.f32 %v1225, %v1280
      %v1285 = vld [vmem:[%s359] sm:$0xe]
      %v1286 = vld [vmem:[%s681] sm:$0xf]
      %v1287 = vld [vmem:[%s681 + $0x4] sm:$0xf]
      %v1289 = vunpack.c.l.b16 %v1285
      %v1290 = vpack.c.b16 %v1100, %v1289
      %v1291 = vrot.slane %v1290, 1
      %v1294 = vunpack.c.l.b16 %v1286
      %v1295 = vunpack.c.l.b16 %v1287
      %v1296 = vpack.c.b16 %v1295, %v1294
      %v1299 = vsel %vm259, %v1291, 0
      %1301 = vmatprep.subr.bf16.mxu0 0
      %1302 = vmatpush1.bf16.msra.mxu0 %v1296
      %1303 = vmatprep.subr.bf16.mxu0 0
      %1304 = vmatpush1.bf16.msra.mxu0 0
      %1305 = vmatprep.subr.bf16.mxu0 0
      %1306 = vmatpush1.bf16.msra.mxu0 0
      %1307 = vmatprep.subr.bf16.mxu0 0
      %1308 = vmatpush1.bf16.msra.mxu0 0
      %1309 = vmatprep.subr.bf16.mxu0 0
      %1310 = vmatpush1.bf16.msra.mxu0 0
      %1311 = vmatprep.subr.bf16.mxu0 0
      %1312 = vmatpush1.bf16.msra.mxu0 0
      %1313 = vmatprep.subr.bf16.mxu0 0
      %1314 = vmatpush1.bf16.msra.mxu0 0
      %1315 = vmatprep.subr.bf16.mxu0 0
      %1316 = vmatpush1.bf16.msra.mxu0 0
      %1317 = vmatprep.subr.bf16.mxu0 0
      %1318 = vmatpush1.bf16.msra.mxu0 0
      %1319 = vmatprep.subr.bf16.mxu0 0
      %1320 = vmatpush1.bf16.msra.mxu0 0
      %1321 = vmatprep.subr.bf16.mxu0 0
      %1322 = vmatpush1.bf16.msra.mxu0 0
      %1323 = vmatprep.subr.bf16.mxu0 0
      %1324 = vmatpush1.bf16.msra.mxu0 0
      %1325 = vmatprep.subr.bf16.mxu0 0
      %1326 = vmatpush1.bf16.msra.mxu0 0
      %1327 = vmatprep.subr.bf16.mxu0 0
      %1328 = vmatpush1.bf16.msra.mxu0 0
      %1329 = vmatprep.subr.bf16.mxu0 0
      %1330 = vmatpush1.bf16.msra.mxu0 0
      %1331 = vmatprep.subr.bf16.mxu0 0
      %1332 = vmatpush1.bf16.msra.mxu0 0
      %1333 = vmatprep.mubr.bf16.mxu0 0
      %1334 = vmatmul.mubr.bf16.gmra.mrb[0].mxu0 %v1299
      %v1335 = vpop.f32.mrb[0].mxu0
      %v1336 = vadd.f32 0.0, %v1335
      %v1337 = vpop.f32.mrb[0].mxu0
      %v1338 = vpop.f32.mrb[0].mxu0
      %v1339 = vadd.f32 0.0, %v1338
      %v1340 = vpop.f32.mrb[0].mxu0
      %1341 = vdwg.mxu0
      %v1342 = vadd.f32 %v1283, %v1336
      %v1343 = vadd.f32 %v1284, %v1339
      %v1344 = vld [vmem:[%s969] sm:$0xe]
      %v1345 = vld [vmem:[%s741] sm:$0xf]
      %v1346 = vld [vmem:[%s741 + $0x4] sm:$0xf]
      %v1348 = vunpack.c.l.b16 %v1344
      %v1349 = vpack.c.b16 %v1165, %v1348
      %v1350 = vrot.slane %v1349, 1
      %v1353 = vunpack.c.l.b16 %v1345
      %v1354 = vunpack.c.l.b16 %v1346
      %v1355 = vpack.c.b16 %v1354, %v1353
      %v1358 = vsel %vm259, %v1350, 0
      %1360 = vmatprep.subr.bf16.mxu0 0
      %1361 = vmatpush1.bf16.msra.mxu0 %v1355
      %1362 = vmatprep.subr.bf16.mxu0 0
      %1363 = vmatpush1.bf16.msra.mxu0 0
      %1364 = vmatprep.subr.bf16.mxu0 0
      %1365 = vmatpush1.bf16.msra.mxu0 0
      %1366 = vmatprep.subr.bf16.mxu0 0
      %1367 = vmatpush1.bf16.msra.mxu0 0
      %1368 = vmatprep.subr.bf16.mxu0 0
      %1369 = vmatpush1.bf16.msra.mxu0 0
      %1370 = vmatprep.subr.bf16.mxu0 0
      %1371 = vmatpush1.bf16.msra.mxu0 0
      %1372 = vmatprep.subr.bf16.mxu0 0
      %1373 = vmatpush1.bf16.msra.mxu0 0
      %1374 = vmatprep.subr.bf16.mxu0 0
      %1375 = vmatpush1.bf16.msra.mxu0 0
      %1376 = vmatprep.subr.bf16.mxu0 0
      %1377 = vmatpush1.bf16.msra.mxu0 0
      %1378 = vmatprep.subr.bf16.mxu0 0
      %1379 = vmatpush1.bf16.msra.mxu0 0
      %1380 = vmatprep.subr.bf16.mxu0 0
      %1381 = vmatpush1.bf16.msra.mxu0 0
      %1382 = vmatprep.subr.bf16.mxu0 0
      %1383 = vmatpush1.bf16.msra.mxu0 0
      %1384 = vmatprep.subr.bf16.mxu0 0
      %1385 = vmatpush1.bf16.msra.mxu0 0
      %1386 = vmatprep.subr.bf16.mxu0 0
      %1387 = vmatpush1.bf16.msra.mxu0 0
      %1388 = vmatprep.subr.bf16.mxu0 0
      %1389 = vmatpush1.bf16.msra.mxu0 0
      %1390 = vmatprep.subr.bf16.mxu0 0
      %1391 = vmatpush1.bf16.msra.mxu0 0
      %1392 = vmatprep.mubr.bf16.mxu0 0
      %1393 = vmatmul.mubr.bf16.gmra.mrb[0].mxu0 %v1358
      %v1394 = vpop.f32.mrb[0].mxu0
      %v1395 = vadd.f32 0.0, %v1394
      %v1396 = vpop.f32.mrb[0].mxu0
      %v1397 = vpop.f32.mrb[0].mxu0
      %v1398 = vadd.f32 0.0, %v1397
      %v1399 = vpop.f32.mrb[0].mxu0
      %1400 = vdwg.mxu0
      %v1401 = vadd.f32 %v1342, %v1395
      %v1402 = vadd.f32 %v1343, %v1398
      %v1403 = vld [vmem:[%s2] sm:$0x1]
      %v1405 = vlaneseq
      %v1406 = vshrl.u32 %v1405, 7
      %v1407 = vsub.s32 0, %v1406
      %v1408 = vrot.slane %v1403, %v1407
      %v1410 = vadd.f32 %v1401, %v1408
      %v1411 = vadd.f32 %v1402, %v1408
      %v1412 = vmax.f32 %v1410, 0.0
      %v1413 = vmax.f32 %v1411, 0.0
      %v1414 = vpack.c.bf16 %v1413, %v1412
      %v1416 = vunpack.c.l.b16 %v1414
      %v1417 = vunpack.c.h.b16 %v1414
      %v1418 = vpack.c.b16 %v1416, %v1416
      %v1419 = vpack.c.b16 %v1417, %v1417
      %v1421 = vshrl.u32 %v1418, 16
      %v1423 = vrot.slane %v1421, 7
      %v1424 = vshll.u32 %v1418, 16
      %v1426 = vor.u32 %v1423, %v1424
      %v1427 = vrot.slane %v1423, 4
      %v1429 = vshrl.u32 %v1419, 16
      %v1431 = vrot.slane %v1429, 7
      %v1432 = vshll.u32 %v1419, 16
      %v1434 = vor.u32 %v1431, %v1432
      %v1435 = vsel %vm819, %v1427, %v1434
      %s1438 = scalar_lea.vmem [#allocation2], 16
      %v1439 = vld [vmem:[%s1438] sm:$0xf]
      %v1440 = vsel %vm841, %v1426, %v1439
      %1441 = vst [vmem:[%s1438] sm:$0xf] %v1440
      %v1442 = vld [vmem:[%s1438 + $0x4] sm:$0x7]
      %v1443 = vsel %vm847, %v1435, %v1442
      %1444 = vst [vmem:[%s1438 + $0x4] sm:$0x7] %v1443
      %v1445 = vld [vmem:[%s359] sm:$0xf]
      %v1446 = vld [vmem:[%s359 + $0x4] sm:$0x3]
      %v1447 = vld [vmem:[%s1] sm:$0xf]
      %v1448 = vld [vmem:[%s1 + $0x4] sm:$0xf]
      %v1449 = vld [vmem:[%s969] sm:$0xf]
      %v1450 = vld [vmem:[%s969 + $0x4] sm:$0x3]
      %v1451 = vld [vmem:[%s245] sm:$0xf]
      %v1452 = vld [vmem:[%s245 + $0x4] sm:$0xf]
      %v1455 = vunpack.c.l.b16 %v1449
      %v1456 = vunpack.c.l.b16 %v1450
      %v1457 = vpack.c.b16 %v1456, %v1455
      %v1460 = vunpack.c.l.b16 %v1451
      %v1461 = vunpack.c.l.b16 %v1452
      %v1462 = vpack.c.b16 %v1461, %v1460
      %v1465 = vsel %vm259, %v1457, 0
      %1467 = vmatprep.subr.bf16.mxu0 0
      %1468 = vmatpush1.bf16.msra.mxu0 %v1462
      %1469 = vmatprep.subr.bf16.mxu0 0
      %1470 = vmatpush1.bf16.msra.mxu0 0
      %1471 = vmatprep.subr.bf16.mxu0 0
      %1472 = vmatpush1.bf16.msra.mxu0 0
      %1473 = vmatprep.subr.bf16.mxu0 0
      %1474 = vmatpush1.bf16.msra.mxu0 0
      %1475 = vmatprep.subr.bf16.mxu0 0
      %1476 = vmatpush1.bf16.msra.mxu0 0
      %1477 = vmatprep.subr.bf16.mxu0 0
      %1478 = vmatpush1.bf16.msra.mxu0 0
      %1479 = vmatprep.subr.bf16.mxu0 0
      %1480 = vmatpush1.bf16.msra.mxu0 0
      %1481 = vmatprep.subr.bf16.mxu0 0
      %1482 = vmatpush1.bf16.msra.mxu0 0
      %1483 = vmatprep.subr.bf16.mxu0 0
      %1484 = vmatpush1.bf16.msra.mxu0 0
      %1485 = vmatprep.subr.bf16.mxu0 0
      %1486 = vmatpush1.bf16.msra.mxu0 0
      %1487 = vmatprep.subr.bf16.mxu0 0
      %1488 = vmatpush1.bf16.msra.mxu0 0
      %1489 = vmatprep.subr.bf16.mxu0 0
      %1490 = vmatpush1.bf16.msra.mxu0 0
      %1491 = vmatprep.subr.bf16.mxu0 0
      %1492 = vmatpush1.bf16.msra.mxu0 0
      %1493 = vmatprep.subr.bf16.mxu0 0
      %1494 = vmatpush1.bf16.msra.mxu0 0
      %1495 = vmatprep.subr.bf16.mxu0 0
      %1496 = vmatpush1.bf16.msra.mxu0 0
      %1497 = vmatprep.subr.bf16.mxu0 0
      %1498 = vmatpush1.bf16.msra.mxu0 0
      %1499 = vmatprep.mubr.bf16.mxu0 0
      %1500 = vmatmul.mubr.bf16.gmra.mrb[0].mxu0 %v1465
      %v1501 = vpop.f32.mrb[0].mxu0
      %v1502 = vadd.f32 0.0, %v1501
      %v1503 = vpop.f32.mrb[0].mxu0
      %v1504 = vpop.f32.mrb[0].mxu0
      %v1505 = vadd.f32 0.0, %v1504
      %v1506 = vpop.f32.mrb[0].mxu0
      %1507 = vdwg.mxu0
      %v1510 = vunpack.c.l.b16 %v1445
      %v1511 = vunpack.c.l.b16 %v1446
      %v1512 = vpack.c.b16 %v1511, %v1510
      %v1515 = vunpack.c.l.b16 %v1447
      %v1516 = vunpack.c.l.b16 %v1448
      %v1517 = vpack.c.b16 %v1516, %v1515
      %v1520 = vsel %vm259, %v1512, 0
      %1522 = vmatprep.subr.bf16.mxu0 0
      %1523 = vmatpush1.bf16.msra.mxu0 %v1517
      %1524 = vmatprep.subr.bf16.mxu0 0
      %1525 = vmatpush1.bf16.msra.mxu0 0
      %1526 = vmatprep.subr.bf16.mxu0 0
      %1527 = vmatpush1.bf16.msra.mxu0 0
      %1528 = vmatprep.subr.bf16.mxu0 0
      %1529 = vmatpush1.bf16.msra.mxu0 0
      %1530 = vmatprep.subr.bf16.mxu0 0
      %1531 = vmatpush1.bf16.msra.mxu0 0
      %1532 = vmatprep.subr.bf16.mxu0 0
      %1533 = vmatpush1.bf16.msra.mxu0 0
      %1534 = vmatprep.subr.bf16.mxu0 0
      %1535 = vmatpush1.bf16.msra.mxu0 0
      %1536 = vmatprep.subr.bf16.mxu0 0
      %1537 = vmatpush1.bf16.msra.mxu0 0
      %1538 = vmatprep.subr.bf16.mxu0 0
      %1539 = vmatpush1.bf16.msra.mxu0 0
      %1540 = vmatprep.subr.bf16.mxu0 0
      %1541 = vmatpush1.bf16.msra.mxu0 0
      %1542 = vmatprep.subr.bf16.mxu0 0
      %1543 = vmatpush1.bf16.msra.mxu0 0
      %1544 = vmatprep.subr.bf16.mxu0 0
      %1545 = vmatpush1.bf16.msra.mxu0 0
      %1546 = vmatprep.subr.bf16.mxu0 0
      %1547 = vmatpush1.bf16.msra.mxu0 0
      %1548 = vmatprep.subr.bf16.mxu0 0
      %1549 = vmatpush1.bf16.msra.mxu0 0
      %1550 = vmatprep.subr.bf16.mxu0 0
      %1551 = vmatpush1.bf16.msra.mxu0 0
      %1552 = vmatprep.subr.bf16.mxu0 0
      %1553 = vmatpush1.bf16.msra.mxu0 0
      %1554 = vmatprep.mubr.bf16.mxu0 0
      %1555 = vmatmul.mubr.bf16.gmra.mrb[0].mxu0 %v1520
      %v1556 = vpop.f32.mrb[0].mxu0
      %v1557 = vadd.f32 %v1502, %v1556
      %v1558 = vpop.f32.mrb[0].mxu0
      %v1559 = vpop.f32.mrb[0].mxu0
      %v1560 = vadd.f32 %v1505, %v1559
      %v1561 = vpop.f32.mrb[0].mxu0
      %1562 = vdwg.mxu0
      %s1563 = scalar_lea.vmem %s219, 32
      %v1564 = vld [vmem:[%s1563] sm:$0xf]
      %v1565 = vld [vmem:[%s1563 + $0x4] sm:$0x3]
      %v1566 = vld [vmem:[%s362] sm:$0xf]
      %v1567 = vld [vmem:[%s362 + $0x4] sm:$0xf]
      %v1570 = vunpack.c.l.b16 %v1564
      %v1571 = vunpack.c.l.b16 %v1565
      %v1572 = vpack.c.b16 %v1571, %v1570
      %v1575 = vunpack.c.l.b16 %v1566
      %v1576 = vunpack.c.l.b16 %v1567
      %v1577 = vpack.c.b16 %v1576, %v1575
      %v1580 = vsel %vm259, %v1572, 0
      %1582 = vmatprep.subr.bf16.mxu0 0
      %1583 = vmatpush1.bf16.msra.mxu0 %v1577
      %1584 = vmatprep.subr.bf16.mxu0 0
      %1585 = vmatpush1.bf16.msra.mxu0 0
      %1586 = vmatprep.subr.bf16.mxu0 0
      %1587 = vmatpush1.bf16.msra.mxu0 0
      %1588 = vmatprep.subr.bf16.mxu0 0
      %1589 = vmatpush1.bf16.msra.mxu0 0
      %1590 = vmatprep.subr.bf16.mxu0 0
      %1591 = vmatpush1.bf16.msra.mxu0 0
      %1592 = vmatprep.subr.bf16.mxu0 0
      %1593 = vmatpush1.bf16.msra.mxu0 0
      %1594 = vmatprep.subr.bf16.mxu0 0
      %1595 = vmatpush1.bf16.msra.mxu0 0
      %1596 = vmatprep.subr.bf16.mxu0 0
      %1597 = vmatpush1.bf16.msra.mxu0 0
      %1598 = vmatprep.subr.bf16.mxu0 0
      %1599 = vmatpush1.bf16.msra.mxu0 0
      %1600 = vmatprep.subr.bf16.mxu0 0
      %1601 = vmatpush1.bf16.msra.mxu0 0
      %1602 = vmatprep.subr.bf16.mxu0 0
      %1603 = vmatpush1.bf16.msra.mxu0 0
      %1604 = vmatprep.subr.bf16.mxu0 0
      %1605 = vmatpush1.bf16.msra.mxu0 0
      %1606 = vmatprep.subr.bf16.mxu0 0
      %1607 = vmatpush1.bf16.msra.mxu0 0
      %1608 = vmatprep.subr.bf16.mxu0 0
      %1609 = vmatpush1.bf16.msra.mxu0 0
      %1610 = vmatprep.subr.bf16.mxu0 0
      %1611 = vmatpush1.bf16.msra.mxu0 0
      %1612 = vmatprep.subr.bf16.mxu0 0
      %1613 = vmatpush1.bf16.msra.mxu0 0
      %1614 = vmatprep.mubr.bf16.mxu0 0
      %1615 = vmatmul.mubr.bf16.gmra.mrb[0].mxu0 %v1580
      %v1616 = vpop.f32.mrb[0].mxu0
      %v1617 = vadd.f32 0.0, %v1616
      %v1618 = vpop.f32.mrb[0].mxu0
      %v1619 = vpop.f32.mrb[0].mxu0
      %v1620 = vadd.f32 0.0, %v1619
      %v1621 = vpop.f32.mrb[0].mxu0
      %1622 = vdwg.mxu0
      %v1623 = vadd.f32 %v1557, %v1617
      %v1624 = vadd.f32 %v1560, %v1620
      %v1625 = vld [vmem:[%s359 + $0x4] sm:$0x7]
      %v1626 = vld [vmem:[%s423] sm:$0xf]
      %v1627 = vld [vmem:[%s423 + $0x4] sm:$0xf]
      %v1629 = vunpack.c.l.b16 %v1625
      %v1630 = vpack.c.b16 %v1629, %v1510
      %v1632 = vshrl.u32 %v1630, 16
      %v1634 = vshll.u32 %v1630, 16
      %v1636 = vrot.slane %v1634, 1
      %v1637 = vor.u32 %v1632, %v1636
      %v1640 = vunpack.c.l.b16 %v1626
      %v1641 = vunpack.c.l.b16 %v1627
      %v1642 = vpack.c.b16 %v1641, %v1640
      %v1645 = vsel %vm259, %v1637, 0
      %1647 = vmatprep.subr.bf16.mxu0 0
      %1648 = vmatpush1.bf16.msra.mxu0 %v1642
      %1649 = vmatprep.subr.bf16.mxu0 0
      %1650 = vmatpush1.bf16.msra.mxu0 0
      %1651 = vmatprep.subr.bf16.mxu0 0
      %1652 = vmatpush1.bf16.msra.mxu0 0
      %1653 = vmatprep.subr.bf16.mxu0 0
      %1654 = vmatpush1.bf16.msra.mxu0 0
      %1655 = vmatprep.subr.bf16.mxu0 0
      %1656 = vmatpush1.bf16.msra.mxu0 0
      %1657 = vmatprep.subr.bf16.mxu0 0
      %1658 = vmatpush1.bf16.msra.mxu0 0
      %1659 = vmatprep.subr.bf16.mxu0 0
      %1660 = vmatpush1.bf16.msra.mxu0 0
      %1661 = vmatprep.subr.bf16.mxu0 0
      %1662 = vmatpush1.bf16.msra.mxu0 0
      %1663 = vmatprep.subr.bf16.mxu0 0
      %1664 = vmatpush1.bf16.msra.mxu0 0
      %1665 = vmatprep.subr.bf16.mxu0 0
      %1666 = vmatpush1.bf16.msra.mxu0 0
      %1667 = vmatprep.subr.bf16.mxu0 0
      %1668 = vmatpush1.bf16.msra.mxu0 0
      %1669 = vmatprep.subr.bf16.mxu0 0
      %1670 = vmatpush1.bf16.msra.mxu0 0
      %1671 = vmatprep.subr.bf16.mxu0 0
      %1672 = vmatpush1.bf16.msra.mxu0 0
      %1673 = vmatprep.subr.bf16.mxu0 0
      %1674 = vmatpush1.bf16.msra.mxu0 0
      %1675 = vmatprep.subr.bf16.mxu0 0
      %1676 = vmatpush1.bf16.msra.mxu0 0
      %1677 = vmatprep.subr.bf16.mxu0 0
      %1678 = vmatpush1.bf16.msra.mxu0 0
      %1679 = vmatprep.mubr.bf16.mxu0 0
      %1680 = vmatmul.mubr.bf16.gmra.mrb[0].mxu0 %v1645
      %v1681 = vpop.f32.mrb[0].mxu0
      %v1682 = vadd.f32 0.0, %v1681
      %v1683 = vpop.f32.mrb[0].mxu0
      %v1684 = vpop.f32.mrb[0].mxu0
      %v1685 = vadd.f32 0.0, %v1684
      %v1686 = vpop.f32.mrb[0].mxu0
      %1687 = vdwg.mxu0
      %v1688 = vadd.f32 %v1623, %v1682
      %v1689 = vadd.f32 %v1624, %v1685
      %v1690 = vld [vmem:[%s969 + $0x4] sm:$0x7]
      %v1691 = vld [vmem:[%s489] sm:$0xf]
      %v1692 = vld [vmem:[%s489 + $0x4] sm:$0xf]
      %v1694 = vunpack.c.l.b16 %v1690
      %v1695 = vpack.c.b16 %v1694, %v1455
      %v1697 = vshrl.u32 %v1695, 16
      %v1699 = vshll.u32 %v1695, 16
      %v1701 = vrot.slane %v1699, 1
      %v1702 = vor.u32 %v1697, %v1701
      %v1705 = vunpack.c.l.b16 %v1691
      %v1706 = vunpack.c.l.b16 %v1692
      %v1707 = vpack.c.b16 %v1706, %v1705
      %v1710 = vsel %vm259, %v1702, 0
      %1712 = vmatprep.subr.bf16.mxu0 0
      %1713 = vmatpush1.bf16.msra.mxu0 %v1707
      %1714 = vmatprep.subr.bf16.mxu0 0
      %1715 = vmatpush1.bf16.msra.mxu0 0
      %1716 = vmatprep.subr.bf16.mxu0 0
      %1717 = vmatpush1.bf16.msra.mxu0 0
      %1718 = vmatprep.subr.bf16.mxu0 0
      %1719 = vmatpush1.bf16.msra.mxu0 0
      %1720 = vmatprep.subr.bf16.mxu0 0
      %1721 = vmatpush1.bf16.msra.mxu0 0
      %1722 = vmatprep.subr.bf16.mxu0 0
      %1723 = vmatpush1.bf16.msra.mxu0 0
      %1724 = vmatprep.subr.bf16.mxu0 0
      %1725 = vmatpush1.bf16.msra.mxu0 0
      %1726 = vmatprep.subr.bf16.mxu0 0
      %1727 = vmatpush1.bf16.msra.mxu0 0
      %1728 = vmatprep.subr.bf16.mxu0 0
      %1729 = vmatpush1.bf16.msra.mxu0 0
      %1730 = vmatprep.subr.bf16.mxu0 0
      %1731 = vmatpush1.bf16.msra.mxu0 0
      %1732 = vmatprep.subr.bf16.mxu0 0
      %1733 = vmatpush1.bf16.msra.mxu0 0
      %1734 = vmatprep.subr.bf16.mxu0 0
      %1735 = vmatpush1.bf16.msra.mxu0 0
      %1736 = vmatprep.subr.bf16.mxu0 0
      %1737 = vmatpush1.bf16.msra.mxu0 0
      %1738 = vmatprep.subr.bf16.mxu0 0
      %1739 = vmatpush1.bf16.msra.mxu0 0
      %1740 = vmatprep.subr.bf16.mxu0 0
      %1741 = vmatpush1.bf16.msra.mxu0 0
      %1742 = vmatprep.subr.bf16.mxu0 0
      %1743 = vmatpush1.bf16.msra.mxu0 0
      %1744 = vmatprep.mubr.bf16.mxu0 0
      %1745 = vmatmul.mubr.bf16.gmra.mrb[0].mxu0 %v1710
      %v1746 = vpop.f32.mrb[0].mxu0
      %v1747 = vadd.f32 0.0, %v1746
      %v1748 = vpop.f32.mrb[0].mxu0
      %v1749 = vpop.f32.mrb[0].mxu0
      %v1750 = vadd.f32 0.0, %v1749
      %v1751 = vpop.f32.mrb[0].mxu0
      %1752 = vdwg.mxu0
      %v1753 = vadd.f32 %v1688, %v1747
      %v1754 = vadd.f32 %v1689, %v1750
      %v1755 = vld [vmem:[%s1563 + $0x4] sm:$0x7]
      %v1756 = vld [vmem:[%s555] sm:$0xf]
      %v1757 = vld [vmem:[%s555 + $0x4] sm:$0xf]
      %v1759 = vunpack.c.l.b16 %v1755
      %v1760 = vpack.c.b16 %v1759, %v1570
      %v1762 = vshrl.u32 %v1760, 16
      %v1764 = vshll.u32 %v1760, 16
      %v1766 = vrot.slane %v1764, 1
      %v1767 = vor.u32 %v1762, %v1766
      %v1770 = vunpack.c.l.b16 %v1756
      %v1771 = vunpack.c.l.b16 %v1757
      %v1772 = vpack.c.b16 %v1771, %v1770
      %v1775 = vsel %vm259, %v1767, 0
      %1777 = vmatprep.subr.bf16.mxu0 0
      %1778 = vmatpush1.bf16.msra.mxu0 %v1772
      %1779 = vmatprep.subr.bf16.mxu0 0
      %1780 = vmatpush1.bf16.msra.mxu0 0
      %1781 = vmatprep.subr.bf16.mxu0 0
      %1782 = vmatpush1.bf16.msra.mxu0 0
      %1783 = vmatprep.subr.bf16.mxu0 0
      %1784 = vmatpush1.bf16.msra.mxu0 0
      %1785 = vmatprep.subr.bf16.mxu0 0
      %1786 = vmatpush1.bf16.msra.mxu0 0
      %1787 = vmatprep.subr.bf16.mxu0 0
      %1788 = vmatpush1.bf16.msra.mxu0 0
      %1789 = vmatprep.subr.bf16.mxu0 0
      %1790 = vmatpush1.bf16.msra.mxu0 0
      %1791 = vmatprep.subr.bf16.mxu0 0
      %1792 = vmatpush1.bf16.msra.mxu0 0
      %1793 = vmatprep.subr.bf16.mxu0 0
      %1794 = vmatpush1.bf16.msra.mxu0 0
      %1795 = vmatprep.subr.bf16.mxu0 0
      %1796 = vmatpush1.bf16.msra.mxu0 0
      %1797 = vmatprep.subr.bf16.mxu0 0
      %1798 = vmatpush1.bf16.msra.mxu0 0
      %1799 = vmatprep.subr.bf16.mxu0 0
      %1800 = vmatpush1.bf16.msra.mxu0 0
      %1801 = vmatprep.subr.bf16.mxu0 0
      %1802 = vmatpush1.bf16.msra.mxu0 0
      %1803 = vmatprep.subr.bf16.mxu0 0
      %1804 = vmatpush1.bf16.msra.mxu0 0
      %1805 = vmatprep.subr.bf16.mxu0 0
      %1806 = vmatpush1.bf16.msra.mxu0 0
      %1807 = vmatprep.subr.bf16.mxu0 0
      %1808 = vmatpush1.bf16.msra.mxu0 0
      %1809 = vmatprep.mubr.bf16.mxu0 0
      %1810 = vmatmul.mubr.bf16.gmra.mrb[0].mxu0 %v1775
      %v1811 = vpop.f32.mrb[0].mxu0
      %v1812 = vadd.f32 0.0, %v1811
      %v1813 = vpop.f32.mrb[0].mxu0
      %v1814 = vpop.f32.mrb[0].mxu0
      %v1815 = vadd.f32 0.0, %v1814
      %v1816 = vpop.f32.mrb[0].mxu0
      %1817 = vdwg.mxu0
      %v1818 = vadd.f32 %v1753, %v1812
      %v1819 = vadd.f32 %v1754, %v1815
      %v1820 = vld [vmem:[%s359] sm:$0xe]
      %v1821 = vld [vmem:[%s621] sm:$0xf]
      %v1822 = vld [vmem:[%s621 + $0x4] sm:$0xf]
      %v1824 = vunpack.c.l.b16 %v1820
      %v1825 = vpack.c.b16 %v1629, %v1824
      %v1826 = vrot.slane %v1825, 1
      %v1829 = vunpack.c.l.b16 %v1821
      %v1830 = vunpack.c.l.b16 %v1822
      %v1831 = vpack.c.b16 %v1830, %v1829
      %v1834 = vsel %vm259, %v1826, 0
      %1836 = vmatprep.subr.bf16.mxu0 0
      %1837 = vmatpush1.bf16.msra.mxu0 %v1831
      %1838 = vmatprep.subr.bf16.mxu0 0
      %1839 = vmatpush1.bf16.msra.mxu0 0
      %1840 = vmatprep.subr.bf16.mxu0 0
      %1841 = vmatpush1.bf16.msra.mxu0 0
      %1842 = vmatprep.subr.bf16.mxu0 0
      %1843 = vmatpush1.bf16.msra.mxu0 0
      %1844 = vmatprep.subr.bf16.mxu0 0
      %1845 = vmatpush1.bf16.msra.mxu0 0
      %1846 = vmatprep.subr.bf16.mxu0 0
      %1847 = vmatpush1.bf16.msra.mxu0 0
      %1848 = vmatprep.subr.bf16.mxu0 0
      %1849 = vmatpush1.bf16.msra.mxu0 0
      %1850 = vmatprep.subr.bf16.mxu0 0
      %1851 = vmatpush1.bf16.msra.mxu0 0
      %1852 = vmatprep.subr.bf16.mxu0 0
      %1853 = vmatpush1.bf16.msra.mxu0 0
      %1854 = vmatprep.subr.bf16.mxu0 0
      %1855 = vmatpush1.bf16.msra.mxu0 0
      %1856 = vmatprep.subr.bf16.mxu0 0
      %1857 = vmatpush1.bf16.msra.mxu0 0
      %1858 = vmatprep.subr.bf16.mxu0 0
      %1859 = vmatpush1.bf16.msra.mxu0 0
      %1860 = vmatprep.subr.bf16.mxu0 0
      %1861 = vmatpush1.bf16.msra.mxu0 0
      %1862 = vmatprep.subr.bf16.mxu0 0
      %1863 = vmatpush1.bf16.msra.mxu0 0
      %1864 = vmatprep.subr.bf16.mxu0 0
      %1865 = vmatpush1.bf16.msra.mxu0 0
      %1866 = vmatprep.subr.bf16.mxu0 0
      %1867 = vmatpush1.bf16.msra.mxu0 0
      %1868 = vmatprep.mubr.bf16.mxu0 0
      %1869 = vmatmul.mubr.bf16.gmra.mrb[0].mxu0 %v1834
      %v1870 = vpop.f32.mrb[0].mxu0
      %v1871 = vadd.f32 0.0, %v1870
      %v1872 = vpop.f32.mrb[0].mxu0
      %v1873 = vpop.f32.mrb[0].mxu0
      %v1874 = vadd.f32 0.0, %v1873
      %v1875 = vpop.f32.mrb[0].mxu0
      %1876 = vdwg.mxu0
      %v1877 = vadd.f32 %v1818, %v1871
      %v1878 = vadd.f32 %v1819, %v1874
      %v1879 = vld [vmem:[%s969] sm:$0xe]
      %v1880 = vld [vmem:[%s681] sm:$0xf]
      %v1881 = vld [vmem:[%s681 + $0x4] sm:$0xf]
      %v1883 = vunpack.c.l.b16 %v1879
      %v1884 = vpack.c.b16 %v1694, %v1883
      %v1885 = vrot.slane %v1884, 1
      %v1888 = vunpack.c.l.b16 %v1880
      %v1889 = vunpack.c.l.b16 %v1881
      %v1890 = vpack.c.b16 %v1889, %v1888
      %v1893 = vsel %vm259, %v1885, 0
      %1895 = vmatprep.subr.bf16.mxu0 0
      %1896 = vmatpush1.bf16.msra.mxu0 %v1890
      %1897 = vmatprep.subr.bf16.mxu0 0
      %1898 = vmatpush1.bf16.msra.mxu0 0
      %1899 = vmatprep.subr.bf16.mxu0 0
      %1900 = vmatpush1.bf16.msra.mxu0 0
      %1901 = vmatprep.subr.bf16.mxu0 0
      %1902 = vmatpush1.bf16.msra.mxu0 0
      %1903 = vmatprep.subr.bf16.mxu0 0
      %1904 = vmatpush1.bf16.msra.mxu0 0
      %1905 = vmatprep.subr.bf16.mxu0 0
      %1906 = vmatpush1.bf16.msra.mxu0 0
      %1907 = vmatprep.subr.bf16.mxu0 0
      %1908 = vmatpush1.bf16.msra.mxu0 0
      %1909 = vmatprep.subr.bf16.mxu0 0
      %1910 = vmatpush1.bf16.msra.mxu0 0
      %1911 = vmatprep.subr.bf16.mxu0 0
      %1912 = vmatpush1.bf16.msra.mxu0 0
      %1913 = vmatprep.subr.bf16.mxu0 0
      %1914 = vmatpush1.bf16.msra.mxu0 0
      %1915 = vmatprep.subr.bf16.mxu0 0
      %1916 = vmatpush1.bf16.msra.mxu0 0
      %1917 = vmatprep.subr.bf16.mxu0 0
      %1918 = vmatpush1.bf16.msra.mxu0 0
      %1919 = vmatprep.subr.bf16.mxu0 0
      %1920 = vmatpush1.bf16.msra.mxu0 0
      %1921 = vmatprep.subr.bf16.mxu0 0
      %1922 = vmatpush1.bf16.msra.mxu0 0
      %1923 = vmatprep.subr.bf16.mxu0 0
      %1924 = vmatpush1.bf16.msra.mxu0 0
      %1925 = vmatprep.subr.bf16.mxu0 0
      %1926 = vmatpush1.bf16.msra.mxu0 0
      %1927 = vmatprep.mubr.bf16.mxu0 0
      %1928 = vmatmul.mubr.bf16.gmra.mrb[0].mxu0 %v1893
      %v1929 = vpop.f32.mrb[0].mxu0
      %v1930 = vadd.f32 0.0, %v1929
      %v1931 = vpop.f32.mrb[0].mxu0
      %v1932 = vpop.f32.mrb[0].mxu0
      %v1933 = vadd.f32 0.0, %v1932
      %v1934 = vpop.f32.mrb[0].mxu0
      %1935 = vdwg.mxu0
      %v1936 = vadd.f32 %v1877, %v1930
      %v1937 = vadd.f32 %v1878, %v1933
      %v1938 = vld [vmem:[%s1563] sm:$0xe]
      %v1939 = vld [vmem:[%s741] sm:$0xf]
      %v1940 = vld [vmem:[%s741 + $0x4] sm:$0xf]
      %v1942 = vunpack.c.l.b16 %v1938
      %v1943 = vpack.c.b16 %v1759, %v1942
      %v1944 = vrot.slane %v1943, 1
      %v1947 = vunpack.c.l.b16 %v1939
      %v1948 = vunpack.c.l.b16 %v1940
      %v1949 = vpack.c.b16 %v1948, %v1947
      %v1952 = vsel %vm259, %v1944, 0
      %1954 = vmatprep.subr.bf16.mxu0 0
      %1955 = vmatpush1.bf16.msra.mxu0 %v1949
      %1956 = vmatprep.subr.bf16.mxu0 0
      %1957 = vmatpush1.bf16.msra.mxu0 0
      %1958 = vmatprep.subr.bf16.mxu0 0
      %1959 = vmatpush1.bf16.msra.mxu0 0
      %1960 = vmatprep.subr.bf16.mxu0 0
      %1961 = vmatpush1.bf16.msra.mxu0 0
      %1962 = vmatprep.subr.bf16.mxu0 0
      %1963 = vmatpush1.bf16.msra.mxu0 0
      %1964 = vmatprep.subr.bf16.mxu0 0
      %1965 = vmatpush1.bf16.msra.mxu0 0
      %1966 = vmatprep.subr.bf16.mxu0 0
      %1967 = vmatpush1.bf16.msra.mxu0 0
      %1968 = vmatprep.subr.bf16.mxu0 0
      %1969 = vmatpush1.bf16.msra.mxu0 0
      %1970 = vmatprep.subr.bf16.mxu0 0
      %1971 = vmatpush1.bf16.msra.mxu0 0
      %1972 = vmatprep.subr.bf16.mxu0 0
      %1973 = vmatpush1.bf16.msra.mxu0 0
      %1974 = vmatprep.subr.bf16.mxu0 0
      %1975 = vmatpush1.bf16.msra.mxu0 0
      %1976 = vmatprep.subr.bf16.mxu0 0
      %1977 = vmatpush1.bf16.msra.mxu0 0
      %1978 = vmatprep.subr.bf16.mxu0 0
      %1979 = vmatpush1.bf16.msra.mxu0 0
      %1980 = vmatprep.subr.bf16.mxu0 0
      %1981 = vmatpush1.bf16.msra.mxu0 0
      %1982 = vmatprep.subr.bf16.mxu0 0
      %1983 = vmatpush1.bf16.msra.mxu0 0
      %1984 = vmatprep.subr.bf16.mxu0 0
      %1985 = vmatpush1.bf16.msra.mxu0 0
      %1986 = vmatprep.mubr.bf16.mxu0 0
      %1987 = vmatmul.mubr.bf16.gmra.mrb[0].mxu0 %v1952
      %v1988 = vpop.f32.mrb[0].mxu0
      %v1989 = vadd.f32 0.0, %v1988
      %v1990 = vpop.f32.mrb[0].mxu0
      %v1991 = vpop.f32.mrb[0].mxu0
      %v1992 = vadd.f32 0.0, %v1991
      %v1993 = vpop.f32.mrb[0].mxu0
      %1994 = vdwg.mxu0
      %v1995 = vadd.f32 %v1936, %v1989
      %v1996 = vadd.f32 %v1937, %v1992
      %v1997 = vld [vmem:[%s2] sm:$0x1]
      %v1999 = vlaneseq
      %v2000 = vshrl.u32 %v1999, 7
      %v2001 = vsub.s32 0, %v2000
      %v2002 = vrot.slane %v1997, %v2001
      %v2004 = vadd.f32 %v1995, %v2002
      %v2005 = vadd.f32 %v1996, %v2002
      %v2006 = vmax.f32 %v2004, 0.0
      %v2007 = vmax.f32 %v2005, 0.0
      %v2008 = vpack.c.bf16 %v2007, %v2006
      %v2010 = vunpack.c.l.b16 %v2008
      %v2011 = vunpack.c.h.b16 %v2008
      %v2012 = vpack.c.b16 %v2010, %v2010
      %v2013 = vpack.c.b16 %v2011, %v2011
      %v2015 = vshrl.u32 %v2012, 16
      %v2017 = vrot.slane %v2015, 7
      %v2018 = vshll.u32 %v2012, 16
      %v2020 = vor.u32 %v2017, %v2018
      %v2021 = vrot.slane %v2017, 4
      %v2023 = vshrl.u32 %v2013, 16
      %v2025 = vrot.slane %v2023, 7
      %v2026 = vshll.u32 %v2013, 16
      %v2028 = vor.u32 %v2025, %v2026
      %v2029 = vsel %vm819, %v2021, %v2028
      %s2032 = scalar_lea.vmem [#allocation2], 24
      %v2033 = vld [vmem:[%s2032] sm:$0xf]
      %v2034 = vsel %vm841, %v2020, %v2033
      %2035 = vst [vmem:[%s2032] sm:$0xf] %v2034
      %v2036 = vld [vmem:[%s2032 + $0x4] sm:$0x7]
      %v2037 = vsel %vm847, %v2029, %v2036
      %2038 = vst [vmem:[%s2032 + $0x4] sm:$0x7] %v2037
      %2039 = vst.msk [vmem:[%s224] sm:$0xf] %vm226, 0
      %2040 = vst.msk [vmem:[%s224 + $0x4] sm:$0x7] %vm228, 0
      %2041 = vst.msk [vmem:[%s224 + $0x8] sm:$0xf] %vm226, 0
      %2042 = vst.msk [vmem:[%s224 + $0xc] sm:$0x7] %vm228, 0
      %2043 = vst.msk [vmem:[%s224 + $0x10] sm:$0xf] %vm226, 0
      %2044 = vst.msk [vmem:[%s224 + $0x14] sm:$0x7] %vm228, 0
      %2045 = vst.msk [vmem:[%s224 + $0x18] sm:$0xf] %vm226, 0
      %2046 = vst.msk [vmem:[%s224 + $0x1c] sm:$0x7] %vm228, 0
      %2047 = vst.msk [vmem:[%s224 + $0x20] sm:$0xf] %vm226, 0
      %2048 = vst.msk [vmem:[%s224 + $0x24] sm:$0x7] %vm228, 0
      %v2049 = vld [vmem:[#allocation2] sm:$0xf]
      %v2050 = vld [vmem:[#allocation2 + $0x4] sm:$0x3]
      %v2051 = vld [vmem:[%s3] sm:$0xf]
      %v2052 = vld [vmem:[%s3 + $0x4] sm:$0xf]
      %v2053 = vld [vmem:[%s838] sm:$0xf]
      %v2054 = vld [vmem:[%s838 + $0x4] sm:$0x3]
      %s2055 = scalar_lea.vmem %s3, 8
      %v2056 = vld [vmem:[%s2055] sm:$0xf]
      %v2057 = vld [vmem:[%s2055 + $0x4] sm:$0xf]
      %v2060 = vunpack.c.l.b16 %v2053
      %v2061 = vunpack.c.l.b16 %v2054
      %v2062 = vpack.c.b16 %v2061, %v2060
      %v2065 = vunpack.c.l.b16 %v2056
      %v2066 = vunpack.c.l.b16 %v2057
      %v2067 = vpack.c.b16 %v2066, %v2065
      %v2070 = vsel %vm259, %v2062, 0
      %2072 = vmatprep.subr.bf16.mxu0 0
      %2073 = vmatpush1.bf16.msra.mxu0 %v2067
      %2074 = vmatprep.subr.bf16.mxu0 0
      %2075 = vmatpush1.bf16.msra.mxu0 0
      %2076 = vmatprep.subr.bf16.mxu0 0
      %2077 = vmatpush1.bf16.msra.mxu0 0
      %2078 = vmatprep.subr.bf16.mxu0 0
      %2079 = vmatpush1.bf16.msra.mxu0 0
      %2080 = vmatprep.subr.bf16.mxu0 0
      %2081 = vmatpush1.bf16.msra.mxu0 0
      %2082 = vmatprep.subr.bf16.mxu0 0
      %2083 = vmatpush1.bf16.msra.mxu0 0
      %2084 = vmatprep.subr.bf16.mxu0 0
      %2085 = vmatpush1.bf16.msra.mxu0 0
      %2086 = vmatprep.subr.bf16.mxu0 0
      %2087 = vmatpush1.bf16.msra.mxu0 0
      %2088 = vmatprep.subr.bf16.mxu0 0
      %2089 = vmatpush1.bf16.msra.mxu0 0
      %2090 = vmatprep.subr.bf16.mxu0 0
      %2091 = vmatpush1.bf16.msra.mxu0 0
      %2092 = vmatprep.subr.bf16.mxu0 0
      %2093 = vmatpush1.bf16.msra.mxu0 0
      %2094 = vmatprep.subr.bf16.mxu0 0
      %2095 = vmatpush1.bf16.msra.mxu0 0
      %2096 = vmatprep.subr.bf16.mxu0 0
      %2097 = vmatpush1.bf16.msra.mxu0 0
      %2098 = vmatprep.subr.bf16.mxu0 0
      %2099 = vmatpush1.bf16.msra.mxu0 0
      %2100 = vmatprep.subr.bf16.mxu0 0
      %2101 = vmatpush1.bf16.msra.mxu0 0
      %2102 = vmatprep.subr.bf16.mxu0 0
      %2103 = vmatpush1.bf16.msra.mxu0 0
      %2104 = vmatprep.mubr.bf16.mxu0 0
      %2105 = vmatmul.mubr.bf16.gmra.mrb[0].mxu0 %v2070
      %v2106 = vpop.f32.mrb[0].mxu0
      %v2107 = vadd.f32 0.0, %v2106
      %v2108 = vpop.f32.mrb[0].mxu0
      %v2109 = vpop.f32.mrb[0].mxu0
      %v2110 = vadd.f32 0.0, %v2109
      %v2111 = vpop.f32.mrb[0].mxu0
      %2112 = vdwg.mxu0
      %v2115 = vunpack.c.l.b16 %v2049
      %v2116 = vunpack.c.l.b16 %v2050
      %v2117 = vpack.c.b16 %v2116, %v2115
      %v2120 = vunpack.c.l.b16 %v2051
      %v2121 = vunpack.c.l.b16 %v2052
      %v2122 = vpack.c.b16 %v2121, %v2120
      %v2125 = vsel %vm259, %v2117, 0
      %2127 = vmatprep.subr.bf16.mxu0 0
      %2128 = vmatpush1.bf16.msra.mxu0 %v2122
      %2129 = vmatprep.subr.bf16.mxu0 0
      %2130 = vmatpush1.bf16.msra.mxu0 0
      %2131 = vmatprep.subr.bf16.mxu0 0
      %2132 = vmatpush1.bf16.msra.mxu0 0
      %2133 = vmatprep.subr.bf16.mxu0 0
      %2134 = vmatpush1.bf16.msra.mxu0 0
      %2135 = vmatprep.subr.bf16.mxu0 0
      %2136 = vmatpush1.bf16.msra.mxu0 0
      %2137 = vmatprep.subr.bf16.mxu0 0
      %2138 = vmatpush1.bf16.msra.mxu0 0
      %2139 = vmatprep.subr.bf16.mxu0 0
      %2140 = vmatpush1.bf16.msra.mxu0 0
      %2141 = vmatprep.subr.bf16.mxu0 0
      %2142 = vmatpush1.bf16.msra.mxu0 0
      %2143 = vmatprep.subr.bf16.mxu0 0
      %2144 = vmatpush1.bf16.msra.mxu0 0
      %2145 = vmatprep.subr.bf16.mxu0 0
      %2146 = vmatpush1.bf16.msra.mxu0 0
      %2147 = vmatprep.subr.bf16.mxu0 0
      %2148 = vmatpush1.bf16.msra.mxu0 0
      %2149 = vmatprep.subr.bf16.mxu0 0
      %2150 = vmatpush1.bf16.msra.mxu0 0
      %2151 = vmatprep.subr.bf16.mxu0 0
      %2152 = vmatpush1.bf16.msra.mxu0 0
      %2153 = vmatprep.subr.bf16.mxu0 0
      %2154 = vmatpush1.bf16.msra.mxu0 0
      %2155 = vmatprep.subr.bf16.mxu0 0
      %2156 = vmatpush1.bf16.msra.mxu0 0
      %2157 = vmatprep.subr.bf16.mxu0 0
      %2158 = vmatpush1.bf16.msra.mxu0 0
      %2159 = vmatprep.mubr.bf16.mxu0 0
      %2160 = vmatmul.mubr.bf16.gmra.mrb[0].mxu0 %v2125
      %v2161 = vpop.f32.mrb[0].mxu0
      %v2162 = vadd.f32 %v2107, %v2161
      %v2163 = vpop.f32.mrb[0].mxu0
      %v2164 = vpop.f32.mrb[0].mxu0
      %v2165 = vadd.f32 %v2110, %v2164
      %v2166 = vpop.f32.mrb[0].mxu0
      %2167 = vdwg.mxu0
      %v2168 = vld [vmem:[%s1438] sm:$0xf]
      %v2169 = vld [vmem:[%s1438 + $0x4] sm:$0x3]
      %s2170 = scalar_lea.vmem %s3, 16
      %v2171 = vld [vmem:[%s2170] sm:$0xf]
      %v2172 = vld [vmem:[%s2170 + $0x4] sm:$0xf]
      %v2175 = vunpack.c.l.b16 %v2168
      %v2176 = vunpack.c.l.b16 %v2169
      %v2177 = vpack.c.b16 %v2176, %v2175
      %v2180 = vunpack.c.l.b16 %v2171
      %v2181 = vunpack.c.l.b16 %v2172
      %v2182 = vpack.c.b16 %v2181, %v2180
      %v2185 = vsel %vm259, %v2177, 0
      %2187 = vmatprep.subr.bf16.mxu0 0
      %2188 = vmatpush1.bf16.msra.mxu0 %v2182
      %2189 = vmatprep.subr.bf16.mxu0 0
      %2190 = vmatpush1.bf16.msra.mxu0 0
      %2191 = vmatprep.subr.bf16.mxu0 0
      %2192 = vmatpush1.bf16.msra.mxu0 0
      %2193 = vmatprep.subr.bf16.mxu0 0
      %2194 = vmatpush1.bf16.msra.mxu0 0
      %2195 = vmatprep.subr.bf16.mxu0 0
      %2196 = vmatpush1.bf16.msra.mxu0 0
      %2197 = vmatprep.subr.bf16.mxu0 0
      %2198 = vmatpush1.bf16.msra.mxu0 0
      %2199 = vmatprep.subr.bf16.mxu0 0
      %2200 = vmatpush1.bf16.msra.mxu0 0
      %2201 = vmatprep.subr.bf16.mxu0 0
      %2202 = vmatpush1.bf16.msra.mxu0 0
      %2203 = vmatprep.subr.bf16.mxu0 0
      %2204 = vmatpush1.bf16.msra.mxu0 0
      %2205 = vmatprep.subr.bf16.mxu0 0
      %2206 = vmatpush1.bf16.msra.mxu0 0
      %2207 = vmatprep.subr.bf16.mxu0 0
      %2208 = vmatpush1.bf16.msra.mxu0 0
      %2209 = vmatprep.subr.bf16.mxu0 0
      %2210 = vmatpush1.bf16.msra.mxu0 0
      %2211 = vmatprep.subr.bf16.mxu0 0
      %2212 = vmatpush1.bf16.msra.mxu0 0
      %2213 = vmatprep.subr.bf16.mxu0 0
      %2214 = vmatpush1.bf16.msra.mxu0 0
      %2215 = vmatprep.subr.bf16.mxu0 0
      %2216 = vmatpush1.bf16.msra.mxu0 0
      %2217 = vmatprep.subr.bf16.mxu0 0
      %2218 = vmatpush1.bf16.msra.mxu0 0
      %2219 = vmatprep.mubr.bf16.mxu0 0
      %2220 = vmatmul.mubr.bf16.gmra.mrb[0].mxu0 %v2185
      %v2221 = vpop.f32.mrb[0].mxu0
      %v2222 = vadd.f32 0.0, %v2221
      %v2223 = vpop.f32.mrb[0].mxu0
      %v2224 = vpop.f32.mrb[0].mxu0
      %v2225 = vadd.f32 0.0, %v2224
      %v2226 = vpop.f32.mrb[0].mxu0
      %2227 = vdwg.mxu0
      %v2228 = vadd.f32 %v2162, %v2222
      %v2229 = vadd.f32 %v2165, %v2225
      %v2230 = vld [vmem:[#allocation2 + $0x4] sm:$0x7]
      %s2231 = scalar_lea.vmem %s3, 24
      %v2232 = vld [vmem:[%s2231] sm:$0xf]
      %v2233 = vld [vmem:[%s2231 + $0x4] sm:$0xf]
      %v2235 = vunpack.c.l.b16 %v2230
      %v2236 = vpack.c.b16 %v2235, %v2115
      %v2238 = vshrl.u32 %v2236, 16
      %v2240 = vshll.u32 %v2236, 16
      %v2242 = vrot.slane %v2240, 1
      %v2243 = vor.u32 %v2238, %v2242
      %v2246 = vunpack.c.l.b16 %v2232
      %v2247 = vunpack.c.l.b16 %v2233
      %v2248 = vpack.c.b16 %v2247, %v2246
      %v2251 = vsel %vm259, %v2243, 0
      %2253 = vmatprep.subr.bf16.mxu0 0
      %2254 = vmatpush1.bf16.msra.mxu0 %v2248
      %2255 = vmatprep.subr.bf16.mxu0 0
      %2256 = vmatpush1.bf16.msra.mxu0 0
      %2257 = vmatprep.subr.bf16.mxu0 0
      %2258 = vmatpush1.bf16.msra.mxu0 0
      %2259 = vmatprep.subr.bf16.mxu0 0
      %2260 = vmatpush1.bf16.msra.mxu0 0
      %2261 = vmatprep.subr.bf16.mxu0 0
      %2262 = vmatpush1.bf16.msra.mxu0 0
      %2263 = vmatprep.subr.bf16.mxu0 0
      %2264 = vmatpush1.bf16.msra.mxu0 0
      %2265 = vmatprep.subr.bf16.mxu0 0
      %2266 = vmatpush1.bf16.msra.mxu0 0
      %2267 = vmatprep.subr.bf16.mxu0 0
      %2268 = vmatpush1.bf16.msra.mxu0 0
      %2269 = vmatprep.subr.bf16.mxu0 0
      %2270 = vmatpush1.bf16.msra.mxu0 0
      %2271 = vmatprep.subr.bf16.mxu0 0
      %2272 = vmatpush1.bf16.msra.mxu0 0
      %2273 = vmatprep.subr.bf16.mxu0 0
      %2274 = vmatpush1.bf16.msra.mxu0 0
      %2275 = vmatprep.subr.bf16.mxu0 0
      %2276 = vmatpush1.bf16.msra.mxu0 0
      %2277 = vmatprep.subr.bf16.mxu0 0
      %2278 = vmatpush1.bf16.msra.mxu0 0
      %2279 = vmatprep.subr.bf16.mxu0 0
      %2280 = vmatpush1.bf16.msra.mxu0 0
      %2281 = vmatprep.subr.bf16.mxu0 0
      %2282 = vmatpush1.bf16.msra.mxu0 0
      %2283 = vmatprep.subr.bf16.mxu0 0
      %2284 = vmatpush1.bf16.msra.mxu0 0
      %2285 = vmatprep.mubr.bf16.mxu0 0
      %2286 = vmatmul.mubr.bf16.gmra.mrb[0].mxu0 %v2251
      %v2287 = vpop.f32.mrb[0].mxu0
      %v2288 = vadd.f32 0.0, %v2287
      %v2289 = vpop.f32.mrb[0].mxu0
      %v2290 = vpop.f32.mrb[0].mxu0
      %v2291 = vadd.f32 0.0, %v2290
      %v2292 = vpop.f32.mrb[0].mxu0
      %2293 = vdwg.mxu0
      %v2294 = vadd.f32 %v2228, %v2288
      %v2295 = vadd.f32 %v2229, %v2291
      %v2296 = vld [vmem:[%s838 + $0x4] sm:$0x7]
      %s2297 = scalar_lea.vmem %s3, 32
      %v2298 = vld [vmem:[%s2297] sm:$0xf]
      %v2299 = vld [vmem:[%s2297 + $0x4] sm:$0xf]
      %v2301 = vunpack.c.l.b16 %v2296
      %v2302 = vpack.c.b16 %v2301, %v2060
      %v2304 = vshrl.u32 %v2302, 16
      %v2306 = vshll.u32 %v2302, 16
      %v2308 = vrot.slane %v2306, 1
      %v2309 = vor.u32 %v2304, %v2308
      %v2312 = vunpack.c.l.b16 %v2298
      %v2313 = vunpack.c.l.b16 %v2299
      %v2314 = vpack.c.b16 %v2313, %v2312
      %v2317 = vsel %vm259, %v2309, 0
      %2319 = vmatprep.subr.bf16.mxu0 0
      %2320 = vmatpush1.bf16.msra.mxu0 %v2314
      %2321 = vmatprep.subr.bf16.mxu0 0
      %2322 = vmatpush1.bf16.msra.mxu0 0
      %2323 = vmatprep.subr.bf16.mxu0 0
      %2324 = vmatpush1.bf16.msra.mxu0 0
      %2325 = vmatprep.subr.bf16.mxu0 0
      %2326 = vmatpush1.bf16.msra.mxu0 0
      %2327 = vmatprep.subr.bf16.mxu0 0
      %2328 = vmatpush1.bf16.msra.mxu0 0
      %2329 = vmatprep.subr.bf16.mxu0 0
      %2330 = vmatpush1.bf16.msra.mxu0 0
      %2331 = vmatprep.subr.bf16.mxu0 0
      %2332 = vmatpush1.bf16.msra.mxu0 0
      %2333 = vmatprep.subr.bf16.mxu0 0
      %2334 = vmatpush1.bf16.msra.mxu0 0
      %2335 = vmatprep.subr.bf16.mxu0 0
      %2336 = vmatpush1.bf16.msra.mxu0 0
      %2337 = vmatprep.subr.bf16.mxu0 0
      %2338 = vmatpush1.bf16.msra.mxu0 0
      %2339 = vmatprep.subr.bf16.mxu0 0
      %2340 = vmatpush1.bf16.msra.mxu0 0
      %2341 = vmatprep.subr.bf16.mxu0 0
      %2342 = vmatpush1.bf16.msra.mxu0 0
      %2343 = vmatprep.subr.bf16.mxu0 0
      %2344 = vmatpush1.bf16.msra.mxu0 0
      %2345 = vmatprep.subr.bf16.mxu0 0
      %2346 = vmatpush1.bf16.msra.mxu0 0
      %2347 = vmatprep.subr.bf16.mxu0 0
      %2348 = vmatpush1.bf16.msra.mxu0 0
      %2349 = vmatprep.subr.bf16.mxu0 0
      %2350 = vmatpush1.bf16.msra.mxu0 0
      %2351 = vmatprep.mubr.bf16.mxu0 0
      %2352 = vmatmul.mubr.bf16.gmra.mrb[0].mxu0 %v2317
      %v2353 = vpop.f32.mrb[0].mxu0
      %v2354 = vadd.f32 0.0, %v2353
      %v2355 = vpop.f32.mrb[0].mxu0
      %v2356 = vpop.f32.mrb[0].mxu0
      %v2357 = vadd.f32 0.0, %v2356
      %v2358 = vpop.f32.mrb[0].mxu0
      %2359 = vdwg.mxu0
      %v2360 = vadd.f32 %v2294, %v2354
      %v2361 = vadd.f32 %v2295, %v2357
      %v2362 = vld [vmem:[%s1438 + $0x4] sm:$0x7]
      %s2363 = scalar_lea.vmem %s3, 40
      %v2364 = vld [vmem:[%s2363] sm:$0xf]
      %v2365 = vld [vmem:[%s2363 + $0x4] sm:$0xf]
      %v2367 = vunpack.c.l.b16 %v2362
      %v2368 = vpack.c.b16 %v2367, %v2175
      %v2370 = vshrl.u32 %v2368, 16
      %v2372 = vshll.u32 %v2368, 16
      %v2374 = vrot.slane %v2372, 1
      %v2375 = vor.u32 %v2370, %v2374
      %v2378 = vunpack.c.l.b16 %v2364
      %v2379 = vunpack.c.l.b16 %v2365
      %v2380 = vpack.c.b16 %v2379, %v2378
      %v2383 = vsel %vm259, %v2375, 0
      %2385 = vmatprep.subr.bf16.mxu0 0
      %2386 = vmatpush1.bf16.msra.mxu0 %v2380
      %2387 = vmatprep.subr.bf16.mxu0 0
      %2388 = vmatpush1.bf16.msra.mxu0 0
      %2389 = vmatprep.subr.bf16.mxu0 0
      %2390 = vmatpush1.bf16.msra.mxu0 0
      %2391 = vmatprep.subr.bf16.mxu0 0
      %2392 = vmatpush1.bf16.msra.mxu0 0
      %2393 = vmatprep.subr.bf16.mxu0 0
      %2394 = vmatpush1.bf16.msra.mxu0 0
      %2395 = vmatprep.subr.bf16.mxu0 0
      %2396 = vmatpush1.bf16.msra.mxu0 0
      %2397 = vmatprep.subr.bf16.mxu0 0
      %2398 = vmatpush1.bf16.msra.mxu0 0
      %2399 = vmatprep.subr.bf16.mxu0 0
      %2400 = vmatpush1.bf16.msra.mxu0 0
      %2401 = vmatprep.subr.bf16.mxu0 0
      %2402 = vmatpush1.bf16.msra.mxu0 0
      %2403 = vmatprep.subr.bf16.mxu0 0
      %2404 = vmatpush1.bf16.msra.mxu0 0
      %2405 = vmatprep.subr.bf16.mxu0 0
      %2406 = vmatpush1.bf16.msra.mxu0 0
      %2407 = vmatprep.subr.bf16.mxu0 0
      %2408 = vmatpush1.bf16.msra.mxu0 0
      %2409 = vmatprep.subr.bf16.mxu0 0
      %2410 = vmatpush1.bf16.msra.mxu0 0
      %2411 = vmatprep.subr.bf16.mxu0 0
      %2412 = vmatpush1.bf16.msra.mxu0 0
      %2413 = vmatprep.subr.bf16.mxu0 0
      %2414 = vmatpush1.bf16.msra.mxu0 0
      %2415 = vmatprep.subr.bf16.mxu0 0
      %2416 = vmatpush1.bf16.msra.mxu0 0
      %2417 = vmatprep.mubr.bf16.mxu0 0
      %2418 = vmatmul.mubr.bf16.gmra.mrb[0].mxu0 %v2383
      %v2419 = vpop.f32.mrb[0].mxu0
      %v2420 = vadd.f32 0.0, %v2419
      %v2421 = vpop.f32.mrb[0].mxu0
      %v2422 = vpop.f32.mrb[0].mxu0
      %v2423 = vadd.f32 0.0, %v2422
      %v2424 = vpop.f32.mrb[0].mxu0
      %2425 = vdwg.mxu0
      %v2426 = vadd.f32 %v2360, %v2420
      %v2427 = vadd.f32 %v2361, %v2423
      %v2428 = vld [vmem:[#allocation2] sm:$0xe]
      %s2429 = scalar_lea.vmem %s3, 48
      %v2430 = vld [vmem:[%s2429] sm:$0xf]
      %v2431 = vld [vmem:[%s2429 + $0x4] sm:$0xf]
      %v2433 = vunpack.c.l.b16 %v2428
      %v2434 = vpack.c.b16 %v2235, %v2433
      %v2435 = vrot.slane %v2434, 1
      %v2438 = vunpack.c.l.b16 %v2430
      %v2439 = vunpack.c.l.b16 %v2431
      %v2440 = vpack.c.b16 %v2439, %v2438
      %v2443 = vsel %vm259, %v2435, 0
      %2445 = vmatprep.subr.bf16.mxu0 0
      %2446 = vmatpush1.bf16.msra.mxu0 %v2440
      %2447 = vmatprep.subr.bf16.mxu0 0
      %2448 = vmatpush1.bf16.msra.mxu0 0
      %2449 = vmatprep.subr.bf16.mxu0 0
      %2450 = vmatpush1.bf16.msra.mxu0 0
      %2451 = vmatprep.subr.bf16.mxu0 0
      %2452 = vmatpush1.bf16.msra.mxu0 0
      %2453 = vmatprep.subr.bf16.mxu0 0
      %2454 = vmatpush1.bf16.msra.mxu0 0
      %2455 = vmatprep.subr.bf16.mxu0 0
      %2456 = vmatpush1.bf16.msra.mxu0 0
      %2457 = vmatprep.subr.bf16.mxu0 0
      %2458 = vmatpush1.bf16.msra.mxu0 0
      %2459 = vmatprep.subr.bf16.mxu0 0
      %2460 = vmatpush1.bf16.msra.mxu0 0
      %2461 = vmatprep.subr.bf16.mxu0 0
      %2462 = vmatpush1.bf16.msra.mxu0 0
      %2463 = vmatprep.subr.bf16.mxu0 0
      %2464 = vmatpush1.bf16.msra.mxu0 0
      %2465 = vmatprep.subr.bf16.mxu0 0
      %2466 = vmatpush1.bf16.msra.mxu0 0
      %2467 = vmatprep.subr.bf16.mxu0 0
      %2468 = vmatpush1.bf16.msra.mxu0 0
      %2469 = vmatprep.subr.bf16.mxu0 0
      %2470 = vmatpush1.bf16.msra.mxu0 0
      %2471 = vmatprep.subr.bf16.mxu0 0
      %2472 = vmatpush1.bf16.msra.mxu0 0
      %2473 = vmatprep.subr.bf16.mxu0 0
      %2474 = vmatpush1.bf16.msra.mxu0 0
      %2475 = vmatprep.subr.bf16.mxu0 0
      %2476 = vmatpush1.bf16.msra.mxu0 0
      %2477 = vmatprep.mubr.bf16.mxu0 0
      %2478 = vmatmul.mubr.bf16.gmra.mrb[0].mxu0 %v2443
      %v2479 = vpop.f32.mrb[0].mxu0
      %v2480 = vadd.f32 0.0, %v2479
      %v2481 = vpop.f32.mrb[0].mxu0
      %v2482 = vpop.f32.mrb[0].mxu0
      %v2483 = vadd.f32 0.0, %v2482
      %v2484 = vpop.f32.mrb[0].mxu0
      %2485 = vdwg.mxu0
      %v2486 = vadd.f32 %v2426, %v2480
      %v2487 = vadd.f32 %v2427, %v2483
      %v2488 = vld [vmem:[%s838] sm:$0xe]
      %s2489 = scalar_lea.vmem %s3, 56
      %v2490 = vld [vmem:[%s2489] sm:$0xf]
      %v2491 = vld [vmem:[%s2489 + $0x4] sm:$0xf]
      %v2493 = vunpack.c.l.b16 %v2488
      %v2494 = vpack.c.b16 %v2301, %v2493
      %v2495 = vrot.slane %v2494, 1
      %v2498 = vunpack.c.l.b16 %v2490
      %v2499 = vunpack.c.l.b16 %v2491
      %v2500 = vpack.c.b16 %v2499, %v2498
      %v2503 = vsel %vm259, %v2495, 0
      %2505 = vmatprep.subr.bf16.mxu0 0
      %2506 = vmatpush1.bf16.msra.mxu0 %v2500
      %2507 = vmatprep.subr.bf16.mxu0 0
      %2508 = vmatpush1.bf16.msra.mxu0 0
      %2509 = vmatprep.subr.bf16.mxu0 0
      %2510 = vmatpush1.bf16.msra.mxu0 0
      %2511 = vmatprep.subr.bf16.mxu0 0
      %2512 = vmatpush1.bf16.msra.mxu0 0
      %2513 = vmatprep.subr.bf16.mxu0 0
      %2514 = vmatpush1.bf16.msra.mxu0 0
      %2515 = vmatprep.subr.bf16.mxu0 0
      %2516 = vmatpush1.bf16.msra.mxu0 0
      %2517 = vmatprep.subr.bf16.mxu0 0
      %2518 = vmatpush1.bf16.msra.mxu0 0
      %2519 = vmatprep.subr.bf16.mxu0 0
      %2520 = vmatpush1.bf16.msra.mxu0 0
      %2521 = vmatprep.subr.bf16.mxu0 0
      %2522 = vmatpush1.bf16.msra.mxu0 0
      %2523 = vmatprep.subr.bf16.mxu0 0
      %2524 = vmatpush1.bf16.msra.mxu0 0
      %2525 = vmatprep.subr.bf16.mxu0 0
      %2526 = vmatpush1.bf16.msra.mxu0 0
      %2527 = vmatprep.subr.bf16.mxu0 0
      %2528 = vmatpush1.bf16.msra.mxu0 0
      %2529 = vmatprep.subr.bf16.mxu0 0
      %2530 = vmatpush1.bf16.msra.mxu0 0
      %2531 = vmatprep.subr.bf16.mxu0 0
      %2532 = vmatpush1.bf16.msra.mxu0 0
      %2533 = vmatprep.subr.bf16.mxu0 0
      %2534 = vmatpush1.bf16.msra.mxu0 0
      %2535 = vmatprep.subr.bf16.mxu0 0
      %2536 = vmatpush1.bf16.msra.mxu0 0
      %2537 = vmatprep.mubr.bf16.mxu0 0
      %2538 = vmatmul.mubr.bf16.gmra.mrb[0].mxu0 %v2503
      %v2539 = vpop.f32.mrb[0].mxu0
      %v2540 = vadd.f32 0.0, %v2539
      %v2541 = vpop.f32.mrb[0].mxu0
      %v2542 = vpop.f32.mrb[0].mxu0
      %v2543 = vadd.f32 0.0, %v2542
      %v2544 = vpop.f32.mrb[0].mxu0
      %2545 = vdwg.mxu0
      %v2546 = vadd.f32 %v2486, %v2540
      %v2547 = vadd.f32 %v2487, %v2543
      %v2548 = vld [vmem:[%s1438] sm:$0xe]
      %s2549 = scalar_lea.vmem %s3, 64
      %v2550 = vld [vmem:[%s2549] sm:$0xf]
      %v2551 = vld [vmem:[%s2549 + $0x4] sm:$0xf]
      %v2553 = vunpack.c.l.b16 %v2548
      %v2554 = vpack.c.b16 %v2367, %v2553
      %v2555 = vrot.slane %v2554, 1
      %v2558 = vunpack.c.l.b16 %v2550
      %v2559 = vunpack.c.l.b16 %v2551
      %v2560 = vpack.c.b16 %v2559, %v2558
      %v2563 = vsel %vm259, %v2555, 0
      %2565 = vmatprep.subr.bf16.mxu0 0
      %2566 = vmatpush1.bf16.msra.mxu0 %v2560
      %2567 = vmatprep.subr.bf16.mxu0 0
      %2568 = vmatpush1.bf16.msra.mxu0 0
      %2569 = vmatprep.subr.bf16.mxu0 0
      %2570 = vmatpush1.bf16.msra.mxu0 0
      %2571 = vmatprep.subr.bf16.mxu0 0
      %2572 = vmatpush1.bf16.msra.mxu0 0
      %2573 = vmatprep.subr.bf16.mxu0 0
      %2574 = vmatpush1.bf16.msra.mxu0 0
      %2575 = vmatprep.subr.bf16.mxu0 0
      %2576 = vmatpush1.bf16.msra.mxu0 0
      %2577 = vmatprep.subr.bf16.mxu0 0
      %2578 = vmatpush1.bf16.msra.mxu0 0
      %2579 = vmatprep.subr.bf16.mxu0 0
      %2580 = vmatpush1.bf16.msra.mxu0 0
      %2581 = vmatprep.subr.bf16.mxu0 0
      %2582 = vmatpush1.bf16.msra.mxu0 0
      %2583 = vmatprep.subr.bf16.mxu0 0
      %2584 = vmatpush1.bf16.msra.mxu0 0
      %2585 = vmatprep.subr.bf16.mxu0 0
      %2586 = vmatpush1.bf16.msra.mxu0 0
      %2587 = vmatprep.subr.bf16.mxu0 0
      %2588 = vmatpush1.bf16.msra.mxu0 0
      %2589 = vmatprep.subr.bf16.mxu0 0
      %2590 = vmatpush1.bf16.msra.mxu0 0
      %2591 = vmatprep.subr.bf16.mxu0 0
      %2592 = vmatpush1.bf16.msra.mxu0 0
      %2593 = vmatprep.subr.bf16.mxu0 0
      %2594 = vmatpush1.bf16.msra.mxu0 0
      %2595 = vmatprep.subr.bf16.mxu0 0
      %2596 = vmatpush1.bf16.msra.mxu0 0
      %2597 = vmatprep.mubr.bf16.mxu0 0
      %2598 = vmatmul.mubr.bf16.gmra.mrb[0].mxu0 %v2563
      %v2599 = vpop.f32.mrb[0].mxu0
      %v2600 = vadd.f32 0.0, %v2599
      %v2601 = vpop.f32.mrb[0].mxu0
      %v2602 = vpop.f32.mrb[0].mxu0
      %v2603 = vadd.f32 0.0, %v2602
      %v2604 = vpop.f32.mrb[0].mxu0
      %2605 = vdwg.mxu0
      %v2606 = vadd.f32 %v2546, %v2600
      %v2607 = vadd.f32 %v2547, %v2603
      %v2608 = vld [vmem:[%s242] sm:$0xf]
      %v2609 = vld [vmem:[%s242 + $0x4] sm:$0x7]
      %v2610 = vunpack.c.l.bf16 %v2608
      %v2611 = vunpack.c.l.bf16 %v2609
      %v2612 = vld [vmem:[%s4] sm:$0x1]
      %v2614 = vlaneseq
      %v2615 = vshrl.u32 %v2614, 7
      %v2616 = vsub.s32 0, %v2615
      %v2617 = vrot.slane %v2612, %v2616
      %v2619 = vadd.f32 %v2606, %v2617
      %v2620 = vadd.f32 %v2607, %v2617
      %vm2623 = vcmask 1046528
      %v2624 = vrot.slane %v2610, 1
      %v2625 = vrot.slane %v2611, 1
      %v2626 = vsel %vm2623, %v2624, %v2625
      %v2629 = vadd.f32 %v2619, %v2626
      %v2630 = vadd.f32 %v2620, %v2625
      %v2631 = vmax.f32 %v2629, 0.0
      %v2632 = vmax.f32 %v2630, 0.0
      %v2633 = vpack.c.bf16 %v2632, %v2631
      %v2635 = vunpack.c.l.b16 %v2633
      %v2636 = vunpack.c.h.b16 %v2633
      %v2637 = vpack.c.b16 %v2635, %v2635
      %v2638 = vpack.c.b16 %v2636, %v2636
      %v2640 = vshrl.u32 %v2637, 16
      %v2642 = vrot.slane %v2640, 7
      %v2643 = vshll.u32 %v2637, 16
      %v2645 = vor.u32 %v2642, %v2643
      %v2646 = vrot.slane %v2642, 4
      %v2648 = vshrl.u32 %v2638, 16
      %v2650 = vrot.slane %v2648, 7
      %v2651 = vshll.u32 %v2638, 16
      %v2653 = vor.u32 %v2650, %v2651
      %v2654 = vsel %vm819, %v2646, %v2653
      %s2657 = scalar_lea.vmem %s224, 8
      %v2658 = vld [vmem:[%s2657] sm:$0xf]
      %v2659 = vsel %vm841, %v2645, %v2658
      %2660 = vst [vmem:[%s2657] sm:$0xf] %v2659
      %v2661 = vld [vmem:[%s2657 + $0x4] sm:$0x7]
      %v2662 = vsel %vm847, %v2654, %v2661
      %2663 = vst [vmem:[%s2657 + $0x4] sm:$0x7] %v2662
      %v2664 = vld [vmem:[%s838] sm:$0xf]
      %v2665 = vld [vmem:[%s838 + $0x4] sm:$0x3]
      %v2666 = vld [vmem:[%s3] sm:$0xf]
      %v2667 = vld [vmem:[%s3 + $0x4] sm:$0xf]
      %v2668 = vld [vmem:[%s1438] sm:$0xf]
      %v2669 = vld [vmem:[%s1438 + $0x4] sm:$0x3]
      %v2670 = vld [vmem:[%s2055] sm:$0xf]
      %v2671 = vld [vmem:[%s2055 + $0x4] sm:$0xf]
      %v2674 = vunpack.c.l.b16 %v2668
      %v2675 = vunpack.c.l.b16 %v2669
      %v2676 = vpack.c.b16 %v2675, %v2674
      %v2679 = vunpack.c.l.b16 %v2670
      %v2680 = vunpack.c.l.b16 %v2671
      %v2681 = vpack.c.b16 %v2680, %v2679
      %v2684 = vsel %vm259, %v2676, 0
      %2686 = vmatprep.subr.bf16.mxu0 0
      %2687 = vmatpush1.bf16.msra.mxu0 %v2681
      %2688 = vmatprep.subr.bf16.mxu0 0
      %2689 = vmatpush1.bf16.msra.mxu0 0
      %2690 = vmatprep.subr.bf16.mxu0 0
      %2691 = vmatpush1.bf16.msra.mxu0 0
      %2692 = vmatprep.subr.bf16.mxu0 0
      %2693 = vmatpush1.bf16.msra.mxu0 0
      %2694 = vmatprep.subr.bf16.mxu0 0
      %2695 = vmatpush1.bf16.msra.mxu0 0
      %2696 = vmatprep.subr.bf16.mxu0 0
      %2697 = vmatpush1.bf16.msra.mxu0 0
      %2698 = vmatprep.subr.bf16.mxu0 0
      %2699 = vmatpush1.bf16.msra.mxu0 0
      %2700 = vmatprep.subr.bf16.mxu0 0
      %2701 = vmatpush1.bf16.msra.mxu0 0
      %2702 = vmatprep.subr.bf16.mxu0 0
      %2703 = vmatpush1.bf16.msra.mxu0 0
      %2704 = vmatprep.subr.bf16.mxu0 0
      %2705 = vmatpush1.bf16.msra.mxu0 0
      %2706 = vmatprep.subr.bf16.mxu0 0
      %2707 = vmatpush1.bf16.msra.mxu0 0
      %2708 = vmatprep.subr.bf16.mxu0 0
      %2709 = vmatpush1.bf16.msra.mxu0 0
      %2710 = vmatprep.subr.bf16.mxu0 0
      %2711 = vmatpush1.bf16.msra.mxu0 0
      %2712 = vmatprep.subr.bf16.mxu0 0
      %2713 = vmatpush1.bf16.msra.mxu0 0
      %2714 = vmatprep.subr.bf16.mxu0 0
      %2715 = vmatpush1.bf16.msra.mxu0 0
      %2716 = vmatprep.subr.bf16.mxu0 0
      %2717 = vmatpush1.bf16.msra.mxu0 0
      %2718 = vmatprep.mubr.bf16.mxu0 0
      %2719 = vmatmul.mubr.bf16.gmra.mrb[0].mxu0 %v2684
      %v2720 = vpop.f32.mrb[0].mxu0
      %v2721 = vadd.f32 0.0, %v2720
      %v2722 = vpop.f32.mrb[0].mxu0
      %v2723 = vpop.f32.mrb[0].mxu0
      %v2724 = vadd.f32 0.0, %v2723
      %v2725 = vpop.f32.mrb[0].mxu0
      %2726 = vdwg.mxu0
      %v2729 = vunpack.c.l.b16 %v2664
      %v2730 = vunpack.c.l.b16 %v2665
      %v2731 = vpack.c.b16 %v2730, %v2729
      %v2734 = vunpack.c.l.b16 %v2666
      %v2735 = vunpack.c.l.b16 %v2667
      %v2736 = vpack.c.b16 %v2735, %v2734
      %v2739 = vsel %vm259, %v2731, 0
      %2741 = vmatprep.subr.bf16.mxu0 0
      %2742 = vmatpush1.bf16.msra.mxu0 %v2736
      %2743 = vmatprep.subr.bf16.mxu0 0
      %2744 = vmatpush1.bf16.msra.mxu0 0
      %2745 = vmatprep.subr.bf16.mxu0 0
      %2746 = vmatpush1.bf16.msra.mxu0 0
      %2747 = vmatprep.subr.bf16.mxu0 0
      %2748 = vmatpush1.bf16.msra.mxu0 0
      %2749 = vmatprep.subr.bf16.mxu0 0
      %2750 = vmatpush1.bf16.msra.mxu0 0
      %2751 = vmatprep.subr.bf16.mxu0 0
      %2752 = vmatpush1.bf16.msra.mxu0 0
      %2753 = vmatprep.subr.bf16.mxu0 0
      %2754 = vmatpush1.bf16.msra.mxu0 0
      %2755 = vmatprep.subr.bf16.mxu0 0
      %2756 = vmatpush1.bf16.msra.mxu0 0
      %2757 = vmatprep.subr.bf16.mxu0 0
      %2758 = vmatpush1.bf16.msra.mxu0 0
      %2759 = vmatprep.subr.bf16.mxu0 0
      %2760 = vmatpush1.bf16.msra.mxu0 0
      %2761 = vmatprep.subr.bf16.mxu0 0
      %2762 = vmatpush1.bf16.msra.mxu0 0
      %2763 = vmatprep.subr.bf16.mxu0 0
      %2764 = vmatpush1.bf16.msra.mxu0 0
      %2765 = vmatprep.subr.bf16.mxu0 0
      %2766 = vmatpush1.bf16.msra.mxu0 0
      %2767 = vmatprep.subr.bf16.mxu0 0
      %2768 = vmatpush1.bf16.msra.mxu0 0
      %2769 = vmatprep.subr.bf16.mxu0 0
      %2770 = vmatpush1.bf16.msra.mxu0 0
      %2771 = vmatprep.subr.bf16.mxu0 0
      %2772 = vmatpush1.bf16.msra.mxu0 0
      %2773 = vmatprep.mubr.bf16.mxu0 0
      %2774 = vmatmul.mubr.bf16.gmra.mrb[0].mxu0 %v2739
      %v2775 = vpop.f32.mrb[0].mxu0
      %v2776 = vadd.f32 %v2721, %v2775
      %v2777 = vpop.f32.mrb[0].mxu0
      %v2778 = vpop.f32.mrb[0].mxu0
      %v2779 = vadd.f32 %v2724, %v2778
      %v2780 = vpop.f32.mrb[0].mxu0
      %2781 = vdwg.mxu0
      %v2782 = vld [vmem:[%s2032] sm:$0xf]
      %v2783 = vld [vmem:[%s2032 + $0x4] sm:$0x3]
      %v2784 = vld [vmem:[%s2170] sm:$0xf]
      %v2785 = vld [vmem:[%s2170 + $0x4] sm:$0xf]
      %v2788 = vunpack.c.l.b16 %v2782
      %v2789 = vunpack.c.l.b16 %v2783
      %v2790 = vpack.c.b16 %v2789, %v2788
      %v2793 = vunpack.c.l.b16 %v2784
      %v2794 = vunpack.c.l.b16 %v2785
      %v2795 = vpack.c.b16 %v2794, %v2793
      %v2798 = vsel %vm259, %v2790, 0
      %2800 = vmatprep.subr.bf16.mxu0 0
      %2801 = vmatpush1.bf16.msra.mxu0 %v2795
      %2802 = vmatprep.subr.bf16.mxu0 0
      %2803 = vmatpush1.bf16.msra.mxu0 0
      %2804 = vmatprep.subr.bf16.mxu0 0
      %2805 = vmatpush1.bf16.msra.mxu0 0
      %2806 = vmatprep.subr.bf16.mxu0 0
      %2807 = vmatpush1.bf16.msra.mxu0 0
      %2808 = vmatprep.subr.bf16.mxu0 0
      %2809 = vmatpush1.bf16.msra.mxu0 0
      %2810 = vmatprep.subr.bf16.mxu0 0
      %2811 = vmatpush1.bf16.msra.mxu0 0
      %2812 = vmatprep.subr.bf16.mxu0 0
      %2813 = vmatpush1.bf16.msra.mxu0 0
      %2814 = vmatprep.subr.bf16.mxu0 0
      %2815 = vmatpush1.bf16.msra.mxu0 0
      %2816 = vmatprep.subr.bf16.mxu0 0
      %2817 = vmatpush1.bf16.msra.mxu0 0
      %2818 = vmatprep.subr.bf16.mxu0 0
      %2819 = vmatpush1.bf16.msra.mxu0 0
      %2820 = vmatprep.subr.bf16.mxu0 0
      %2821 = vmatpush1.bf16.msra.mxu0 0
      %2822 = vmatprep.subr.bf16.mxu0 0
      %2823 = vmatpush1.bf16.msra.mxu0 0
      %2824 = vmatprep.subr.bf16.mxu0 0
      %2825 = vmatpush1.bf16.msra.mxu0 0
      %2826 = vmatprep.subr.bf16.mxu0 0
      %2827 = vmatpush1.bf16.msra.mxu0 0
      %2828 = vmatprep.subr.bf16.mxu0 0
      %2829 = vmatpush1.bf16.msra.mxu0 0
      %2830 = vmatprep.subr.bf16.mxu0 0
      %2831 = vmatpush1.bf16.msra.mxu0 0
      %2832 = vmatprep.mubr.bf16.mxu0 0
      %2833 = vmatmul.mubr.bf16.gmra.mrb[0].mxu0 %v2798
      %v2834 = vpop.f32.mrb[0].mxu0
      %v2835 = vadd.f32 0.0, %v2834
      %v2836 = vpop.f32.mrb[0].mxu0
      %v2837 = vpop.f32.mrb[0].mxu0
      %v2838 = vadd.f32 0.0, %v2837
      %v2839 = vpop.f32.mrb[0].mxu0
      %2840 = vdwg.mxu0
      %v2841 = vadd.f32 %v2776, %v2835
      %v2842 = vadd.f32 %v2779, %v2838
      %v2843 = vld [vmem:[%s838 + $0x4] sm:$0x7]
      %v2844 = vld [vmem:[%s2231] sm:$0xf]
      %v2845 = vld [vmem:[%s2231 + $0x4] sm:$0xf]
      %v2847 = vunpack.c.l.b16 %v2843
      %v2848 = vpack.c.b16 %v2847, %v2729
      %v2850 = vshrl.u32 %v2848, 16
      %v2852 = vshll.u32 %v2848, 16
      %v2854 = vrot.slane %v2852, 1
      %v2855 = vor.u32 %v2850, %v2854
      %v2858 = vunpack.c.l.b16 %v2844
      %v2859 = vunpack.c.l.b16 %v2845
      %v2860 = vpack.c.b16 %v2859, %v2858
      %v2863 = vsel %vm259, %v2855, 0
      %2865 = vmatprep.subr.bf16.mxu0 0
      %2866 = vmatpush1.bf16.msra.mxu0 %v2860
      %2867 = vmatprep.subr.bf16.mxu0 0
      %2868 = vmatpush1.bf16.msra.mxu0 0
      %2869 = vmatprep.subr.bf16.mxu0 0
      %2870 = vmatpush1.bf16.msra.mxu0 0
      %2871 = vmatprep.subr.bf16.mxu0 0
      %2872 = vmatpush1.bf16.msra.mxu0 0
      %2873 = vmatprep.subr.bf16.mxu0 0
      %2874 = vmatpush1.bf16.msra.mxu0 0
      %2875 = vmatprep.subr.bf16.mxu0 0
      %2876 = vmatpush1.bf16.msra.mxu0 0
      %2877 = vmatprep.subr.bf16.mxu0 0
      %2878 = vmatpush1.bf16.msra.mxu0 0
      %2879 = vmatprep.subr.bf16.mxu0 0
      %2880 = vmatpush1.bf16.msra.mxu0 0
      %2881 = vmatprep.subr.bf16.mxu0 0
      %2882 = vmatpush1.bf16.msra.mxu0 0
      %2883 = vmatprep.subr.bf16.mxu0 0
      %2884 = vmatpush1.bf16.msra.mxu0 0
      %2885 = vmatprep.subr.bf16.mxu0 0
      %2886 = vmatpush1.bf16.msra.mxu0 0
      %2887 = vmatprep.subr.bf16.mxu0 0
      %2888 = vmatpush1.bf16.msra.mxu0 0
      %2889 = vmatprep.subr.bf16.mxu0 0
      %2890 = vmatpush1.bf16.msra.mxu0 0
      %2891 = vmatprep.subr.bf16.mxu0 0
      %2892 = vmatpush1.bf16.msra.mxu0 0
      %2893 = vmatprep.subr.bf16.mxu0 0
      %2894 = vmatpush1.bf16.msra.mxu0 0
      %2895 = vmatprep.subr.bf16.mxu0 0
      %2896 = vmatpush1.bf16.msra.mxu0 0
      %2897 = vmatprep.mubr.bf16.mxu0 0
      %2898 = vmatmul.mubr.bf16.gmra.mrb[0].mxu0 %v2863
      %v2899 = vpop.f32.mrb[0].mxu0
      %v2900 = vadd.f32 0.0, %v2899
      %v2901 = vpop.f32.mrb[0].mxu0
      %v2902 = vpop.f32.mrb[0].mxu0
      %v2903 = vadd.f32 0.0, %v2902
      %v2904 = vpop.f32.mrb[0].mxu0
      %2905 = vdwg.mxu0
      %v2906 = vadd.f32 %v2841, %v2900
      %v2907 = vadd.f32 %v2842, %v2903
      %v2908 = vld [vmem:[%s1438 + $0x4] sm:$0x7]
      %v2909 = vld [vmem:[%s2297] sm:$0xf]
      %v2910 = vld [vmem:[%s2297 + $0x4] sm:$0xf]
      %v2912 = vunpack.c.l.b16 %v2908
      %v2913 = vpack.c.b16 %v2912, %v2674
      %v2915 = vshrl.u32 %v2913, 16
      %v2917 = vshll.u32 %v2913, 16
      %v2919 = vrot.slane %v2917, 1
      %v2920 = vor.u32 %v2915, %v2919
      %v2923 = vunpack.c.l.b16 %v2909
      %v2924 = vunpack.c.l.b16 %v2910
      %v2925 = vpack.c.b16 %v2924, %v2923
      %v2928 = vsel %vm259, %v2920, 0
      %2930 = vmatprep.subr.bf16.mxu0 0
      %2931 = vmatpush1.bf16.msra.mxu0 %v2925
      %2932 = vmatprep.subr.bf16.mxu0 0
      %2933 = vmatpush1.bf16.msra.mxu0 0
      %2934 = vmatprep.subr.bf16.mxu0 0
      %2935 = vmatpush1.bf16.msra.mxu0 0
      %2936 = vmatprep.subr.bf16.mxu0 0
      %2937 = vmatpush1.bf16.msra.mxu0 0
      %2938 = vmatprep.subr.bf16.mxu0 0
      %2939 = vmatpush1.bf16.msra.mxu0 0
      %2940 = vmatprep.subr.bf16.mxu0 0
      %2941 = vmatpush1.bf16.msra.mxu0 0
      %2942 = vmatprep.subr.bf16.mxu0 0
      %2943 = vmatpush1.bf16.msra.mxu0 0
      %2944 = vmatprep.subr.bf16.mxu0 0
      %2945 = vmatpush1.bf16.msra.mxu0 0
      %2946 = vmatprep.subr.bf16.mxu0 0
      %2947 = vmatpush1.bf16.msra.mxu0 0
      %2948 = vmatprep.subr.bf16.mxu0 0
      %2949 = vmatpush1.bf16.msra.mxu0 0
      %2950 = vmatprep.subr.bf16.mxu0 0
      %2951 = vmatpush1.bf16.msra.mxu0 0
      %2952 = vmatprep.subr.bf16.mxu0 0
      %2953 = vmatpush1.bf16.msra.mxu0 0
      %2954 = vmatprep.subr.bf16.mxu0 0
      %2955 = vmatpush1.bf16.msra.mxu0 0
      %2956 = vmatprep.subr.bf16.mxu0 0
      %2957 = vmatpush1.bf16.msra.mxu0 0
      %2958 = vmatprep.subr.bf16.mxu0 0
      %2959 = vmatpush1.bf16.msra.mxu0 0
      %2960 = vmatprep.subr.bf16.mxu0 0
      %2961 = vmatpush1.bf16.msra.mxu0 0
      %2962 = vmatprep.mubr.bf16.mxu0 0
      %2963 = vmatmul.mubr.bf16.gmra.mrb[0].mxu0 %v2928
      %v2964 = vpop.f32.mrb[0].mxu0
      %v2965 = vadd.f32 0.0, %v2964
      %v2966 = vpop.f32.mrb[0].mxu0
      %v2967 = vpop.f32.mrb[0].mxu0
      %v2968 = vadd.f32 0.0, %v2967
      %v2969 = vpop.f32.mrb[0].mxu0
      %2970 = vdwg.mxu0
      %v2971 = vadd.f32 %v2906, %v2965
      %v2972 = vadd.f32 %v2907, %v2968
      %v2973 = vld [vmem:[%s2032 + $0x4] sm:$0x7]
      %v2974 = vld [vmem:[%s2363] sm:$0xf]
      %v2975 = vld [vmem:[%s2363 + $0x4] sm:$0xf]
      %v2977 = vunpack.c.l.b16 %v2973
      %v2978 = vpack.c.b16 %v2977, %v2788
      %v2980 = vshrl.u32 %v2978, 16
      %v2982 = vshll.u32 %v2978, 16
      %v2984 = vrot.slane %v2982, 1
      %v2985 = vor.u32 %v2980, %v2984
      %v2988 = vunpack.c.l.b16 %v2974
      %v2989 = vunpack.c.l.b16 %v2975
      %v2990 = vpack.c.b16 %v2989, %v2988
      %v2993 = vsel %vm259, %v2985, 0
      %2995 = vmatprep.subr.bf16.mxu0 0
      %2996 = vmatpush1.bf16.msra.mxu0 %v2990
      %2997 = vmatprep.subr.bf16.mxu0 0
      %2998 = vmatpush1.bf16.msra.mxu0 0
      %2999 = vmatprep.subr.bf16.mxu0 0
      %3000 = vmatpush1.bf16.msra.mxu0 0
      %3001 = vmatprep.subr.bf16.mxu0 0
      %3002 = vmatpush1.bf16.msra.mxu0 0
      %3003 = vmatprep.subr.bf16.mxu0 0
      %3004 = vmatpush1.bf16.msra.mxu0 0
      %3005 = vmatprep.subr.bf16.mxu0 0
      %3006 = vmatpush1.bf16.msra.mxu0 0
      %3007 = vmatprep.subr.bf16.mxu0 0
      %3008 = vmatpush1.bf16.msra.mxu0 0
      %3009 = vmatprep.subr.bf16.mxu0 0
      %3010 = vmatpush1.bf16.msra.mxu0 0
      %3011 = vmatprep.subr.bf16.mxu0 0
      %3012 = vmatpush1.bf16.msra.mxu0 0
      %3013 = vmatprep.subr.bf16.mxu0 0
      %3014 = vmatpush1.bf16.msra.mxu0 0
      %3015 = vmatprep.subr.bf16.mxu0 0
      %3016 = vmatpush1.bf16.msra.mxu0 0
      %3017 = vmatprep.subr.bf16.mxu0 0
      %3018 = vmatpush1.bf16.msra.mxu0 0
      %3019 = vmatprep.subr.bf16.mxu0 0
      %3020 = vmatpush1.bf16.msra.mxu0 0
      %3021 = vmatprep.subr.bf16.mxu0 0
      %3022 = vmatpush1.bf16.msra.mxu0 0
      %3023 = vmatprep.subr.bf16.mxu0 0
      %3024 = vmatpush1.bf16.msra.mxu0 0
      %3025 = vmatprep.subr.bf16.mxu0 0
      %3026 = vmatpush1.bf16.msra.mxu0 0
      %3027 = vmatprep.mubr.bf16.mxu0 0
      %3028 = vmatmul.mubr.bf16.gmra.mrb[0].mxu0 %v2993
      %v3029 = vpop.f32.mrb[0].mxu0
      %v3030 = vadd.f32 0.0, %v3029
      %v3031 = vpop.f32.mrb[0].mxu0
      %v3032 = vpop.f32.mrb[0].mxu0
      %v3033 = vadd.f32 0.0, %v3032
      %v3034 = vpop.f32.mrb[0].mxu0
      %3035 = vdwg.mxu0
      %v3036 = vadd.f32 %v2971, %v3030
      %v3037 = vadd.f32 %v2972, %v3033
      %v3038 = vld [vmem:[%s838] sm:$0xe]
      %v3039 = vld [vmem:[%s2429] sm:$0xf]
      %v3040 = vld [vmem:[%s2429 + $0x4] sm:$0xf]
      %v3042 = vunpack.c.l.b16 %v3038
      %v3043 = vpack.c.b16 %v2847, %v3042
      %v3044 = vrot.slane %v3043, 1
      %v3047 = vunpack.c.l.b16 %v3039
      %v3048 = vunpack.c.l.b16 %v3040
      %v3049 = vpack.c.b16 %v3048, %v3047
      %v3052 = vsel %vm259, %v3044, 0
      %3054 = vmatprep.subr.bf16.mxu0 0
      %3055 = vmatpush1.bf16.msra.mxu0 %v3049
      %3056 = vmatprep.subr.bf16.mxu0 0
      %3057 = vmatpush1.bf16.msra.mxu0 0
      %3058 = vmatprep.subr.bf16.mxu0 0
      %3059 = vmatpush1.bf16.msra.mxu0 0
      %3060 = vmatprep.subr.bf16.mxu0 0
      %3061 = vmatpush1.bf16.msra.mxu0 0
      %3062 = vmatprep.subr.bf16.mxu0 0
      %3063 = vmatpush1.bf16.msra.mxu0 0
      %3064 = vmatprep.subr.bf16.mxu0 0
      %3065 = vmatpush1.bf16.msra.mxu0 0
      %3066 = vmatprep.subr.bf16.mxu0 0
      %3067 = vmatpush1.bf16.msra.mxu0 0
      %3068 = vmatprep.subr.bf16.mxu0 0
      %3069 = vmatpush1.bf16.msra.mxu0 0
      %3070 = vmatprep.subr.bf16.mxu0 0
      %3071 = vmatpush1.bf16.msra.mxu0 0
      %3072 = vmatprep.subr.bf16.mxu0 0
      %3073 = vmatpush1.bf16.msra.mxu0 0
      %3074 = vmatprep.subr.bf16.mxu0 0
      %3075 = vmatpush1.bf16.msra.mxu0 0
      %3076 = vmatprep.subr.bf16.mxu0 0
      %3077 = vmatpush1.bf16.msra.mxu0 0
      %3078 = vmatprep.subr.bf16.mxu0 0
      %3079 = vmatpush1.bf16.msra.mxu0 0
      %3080 = vmatprep.subr.bf16.mxu0 0
      %3081 = vmatpush1.bf16.msra.mxu0 0
      %3082 = vmatprep.subr.bf16.mxu0 0
      %3083 = vmatpush1.bf16.msra.mxu0 0
      %3084 = vmatprep.subr.bf16.mxu0 0
      %3085 = vmatpush1.bf16.msra.mxu0 0
      %3086 = vmatprep.mubr.bf16.mxu0 0
      %3087 = vmatmul.mubr.bf16.gmra.mrb[0].mxu0 %v3052
      %v3088 = vpop.f32.mrb[0].mxu0
      %v3089 = vadd.f32 0.0, %v3088
      %v3090 = vpop.f32.mrb[0].mxu0
      %v3091 = vpop.f32.mrb[0].mxu0
      %v3092 = vadd.f32 0.0, %v3091
      %v3093 = vpop.f32.mrb[0].mxu0
      %3094 = vdwg.mxu0
      %v3095 = vadd.f32 %v3036, %v3089
      %v3096 = vadd.f32 %v3037, %v3092
      %v3097 = vld [vmem:[%s1438] sm:$0xe]
      %v3098 = vld [vmem:[%s2489] sm:$0xf]
      %v3099 = vld [vmem:[%s2489 + $0x4] sm:$0xf]
      %v3101 = vunpack.c.l.b16 %v3097
      %v3102 = vpack.c.b16 %v2912, %v3101
      %v3103 = vrot.slane %v3102, 1
      %v3106 = vunpack.c.l.b16 %v3098
      %v3107 = vunpack.c.l.b16 %v3099
      %v3108 = vpack.c.b16 %v3107, %v3106
      %v3111 = vsel %vm259, %v3103, 0
      %3113 = vmatprep.subr.bf16.mxu0 0
      %3114 = vmatpush1.bf16.msra.mxu0 %v3108
      %3115 = vmatprep.subr.bf16.mxu0 0
      %3116 = vmatpush1.bf16.msra.mxu0 0
      %3117 = vmatprep.subr.bf16.mxu0 0
      %3118 = vmatpush1.bf16.msra.mxu0 0
      %3119 = vmatprep.subr.bf16.mxu0 0
      %3120 = vmatpush1.bf16.msra.mxu0 0
      %3121 = vmatprep.subr.bf16.mxu0 0
      %3122 = vmatpush1.bf16.msra.mxu0 0
      %3123 = vmatprep.subr.bf16.mxu0 0
      %3124 = vmatpush1.bf16.msra.mxu0 0
      %3125 = vmatprep.subr.bf16.mxu0 0
      %3126 = vmatpush1.bf16.msra.mxu0 0
      %3127 = vmatprep.subr.bf16.mxu0 0
      %3128 = vmatpush1.bf16.msra.mxu0 0
      %3129 = vmatprep.subr.bf16.mxu0 0
      %3130 = vmatpush1.bf16.msra.mxu0 0
      %3131 = vmatprep.subr.bf16.mxu0 0
      %3132 = vmatpush1.bf16.msra.mxu0 0
      %3133 = vmatprep.subr.bf16.mxu0 0
      %3134 = vmatpush1.bf16.msra.mxu0 0
      %3135 = vmatprep.subr.bf16.mxu0 0
      %3136 = vmatpush1.bf16.msra.mxu0 0
      %3137 = vmatprep.subr.bf16.mxu0 0
      %3138 = vmatpush1.bf16.msra.mxu0 0
      %3139 = vmatprep.subr.bf16.mxu0 0
      %3140 = vmatpush1.bf16.msra.mxu0 0
      %3141 = vmatprep.subr.bf16.mxu0 0
      %3142 = vmatpush1.bf16.msra.mxu0 0
      %3143 = vmatprep.subr.bf16.mxu0 0
      %3144 = vmatpush1.bf16.msra.mxu0 0
      %3145 = vmatprep.mubr.bf16.mxu0 0
      %3146 = vmatmul.mubr.bf16.gmra.mrb[0].mxu0 %v3111
      %v3147 = vpop.f32.mrb[0].mxu0
      %v3148 = vadd.f32 0.0, %v3147
      %v3149 = vpop.f32.mrb[0].mxu0
      %v3150 = vpop.f32.mrb[0].mxu0
      %v3151 = vadd.f32 0.0, %v3150
      %v3152 = vpop.f32.mrb[0].mxu0
      %3153 = vdwg.mxu0
      %v3154 = vadd.f32 %v3095, %v3148
      %v3155 = vadd.f32 %v3096, %v3151
      %v3156 = vld [vmem:[%s2032] sm:$0xe]
      %v3157 = vld [vmem:[%s2549] sm:$0xf]
      %v3158 = vld [vmem:[%s2549 + $0x4] sm:$0xf]
      %v3160 = vunpack.c.l.b16 %v3156
      %v3161 = vpack.c.b16 %v2977, %v3160
      %v3162 = vrot.slane %v3161, 1
      %v3165 = vunpack.c.l.b16 %v3157
      %v3166 = vunpack.c.l.b16 %v3158
      %v3167 = vpack.c.b16 %v3166, %v3165
      %v3170 = vsel %vm259, %v3162, 0
      %3172 = vmatprep.subr.bf16.mxu0 0
      %3173 = vmatpush1.bf16.msra.mxu0 %v3167
      %3174 = vmatprep.subr.bf16.mxu0 0
      %3175 = vmatpush1.bf16.msra.mxu0 0
      %3176 = vmatprep.subr.bf16.mxu0 0
      %3177 = vmatpush1.bf16.msra.mxu0 0
      %3178 = vmatprep.subr.bf16.mxu0 0
      %3179 = vmatpush1.bf16.msra.mxu0 0
      %3180 = vmatprep.subr.bf16.mxu0 0
      %3181 = vmatpush1.bf16.msra.mxu0 0
      %3182 = vmatprep.subr.bf16.mxu0 0
      %3183 = vmatpush1.bf16.msra.mxu0 0
      %3184 = vmatprep.subr.bf16.mxu0 0
      %3185 = vmatpush1.bf16.msra.mxu0 0
      %3186 = vmatprep.subr.bf16.mxu0 0
      %3187 = vmatpush1.bf16.msra.mxu0 0
      %3188 = vmatprep.subr.bf16.mxu0 0
      %3189 = vmatpush1.bf16.msra.mxu0 0
      %3190 = vmatprep.subr.bf16.mxu0 0
      %3191 = vmatpush1.bf16.msra.mxu0 0
      %3192 = vmatprep.subr.bf16.mxu0 0
      %3193 = vmatpush1.bf16.msra.mxu0 0
      %3194 = vmatprep.subr.bf16.mxu0 0
      %3195 = vmatpush1.bf16.msra.mxu0 0
      %3196 = vmatprep.subr.bf16.mxu0 0
      %3197 = vmatpush1.bf16.msra.mxu0 0
      %3198 = vmatprep.subr.bf16.mxu0 0
      %3199 = vmatpush1.bf16.msra.mxu0 0
      %3200 = vmatprep.subr.bf16.mxu0 0
      %3201 = vmatpush1.bf16.msra.mxu0 0
      %3202 = vmatprep.subr.bf16.mxu0 0
      %3203 = vmatpush1.bf16.msra.mxu0 0
      %3204 = vmatprep.mubr.bf16.mxu0 0
      %3205 = vmatmul.mubr.bf16.gmra.mrb[0].mxu0 %v3170
      %v3206 = vpop.f32.mrb[0].mxu0
      %v3207 = vadd.f32 0.0, %v3206
      %v3208 = vpop.f32.mrb[0].mxu0
      %v3209 = vpop.f32.mrb[0].mxu0
      %v3210 = vadd.f32 0.0, %v3209
      %v3211 = vpop.f32.mrb[0].mxu0
      %3212 = vdwg.mxu0
      %v3213 = vadd.f32 %v3154, %v3207
      %v3214 = vadd.f32 %v3155, %v3210
      %v3215 = vld [vmem:[%s359] sm:$0xf]
      %v3216 = vld [vmem:[%s359 + $0x4] sm:$0x7]
      %v3217 = vunpack.c.l.bf16 %v3215
      %v3218 = vunpack.c.l.bf16 %v3216
      %v3219 = vld [vmem:[%s4] sm:$0x1]
      %v3221 = vlaneseq
      %v3222 = vshrl.u32 %v3221, 7
      %v3223 = vsub.s32 0, %v3222
      %v3224 = vrot.slane %v3219, %v3223
      %v3226 = vadd.f32 %v3213, %v3224
      %v3227 = vadd.f32 %v3214, %v3224
      %v3230 = vrot.slane %v3217, 1
      %v3231 = vrot.slane %v3218, 1
      %v3232 = vsel %vm2623, %v3230, %v3231
      %v3235 = vadd.f32 %v3226, %v3232
      %v3236 = vadd.f32 %v3227, %v3231
      %v3237 = vmax.f32 %v3235, 0.0
      %v3238 = vmax.f32 %v3236, 0.0
      %v3239 = vpack.c.bf16 %v3238, %v3237
      %v3241 = vunpack.c.l.b16 %v3239
      %v3242 = vunpack.c.h.b16 %v3239
      %v3243 = vpack.c.b16 %v3241, %v3241
      %v3244 = vpack.c.b16 %v3242, %v3242
      %v3246 = vshrl.u32 %v3243, 16
      %v3248 = vrot.slane %v3246, 7
      %v3249 = vshll.u32 %v3243, 16
      %v3251 = vor.u32 %v3248, %v3249
      %v3252 = vrot.slane %v3248, 4
      %v3254 = vshrl.u32 %v3244, 16
      %v3256 = vrot.slane %v3254, 7
      %v3257 = vshll.u32 %v3244, 16
      %v3259 = vor.u32 %v3256, %v3257
      %v3260 = vsel %vm819, %v3252, %v3259
      %s3263 = scalar_lea.vmem %s224, 16
      %v3264 = vld [vmem:[%s3263] sm:$0xf]
      %v3265 = vsel %vm841, %v3251, %v3264
      %3266 = vst [vmem:[%s3263] sm:$0xf] %v3265
      %v3267 = vld [vmem:[%s3263 + $0x4] sm:$0x7]
      %v3268 = vsel %vm847, %v3260, %v3267
      %3269 = vst [vmem:[%s3263 + $0x4] sm:$0x7] %v3268
      %v3270 = vld [vmem:[%s1438] sm:$0xf]
      %v3271 = vld [vmem:[%s1438 + $0x4] sm:$0x3]
      %v3272 = vld [vmem:[%s3] sm:$0xf]
      %v3273 = vld [vmem:[%s3 + $0x4] sm:$0xf]
      %v3274 = vld [vmem:[%s2032] sm:$0xf]
      %v3275 = vld [vmem:[%s2032 + $0x4] sm:$0x3]
      %v3276 = vld [vmem:[%s2055] sm:$0xf]
      %v3277 = vld [vmem:[%s2055 + $0x4] sm:$0xf]
      %v3280 = vunpack.c.l.b16 %v3274
      %v3281 = vunpack.c.l.b16 %v3275
      %v3282 = vpack.c.b16 %v3281, %v3280
      %v3285 = vunpack.c.l.b16 %v3276
      %v3286 = vunpack.c.l.b16 %v3277
      %v3287 = vpack.c.b16 %v3286, %v3285
      %v3290 = vsel %vm259, %v3282, 0
      %3292 = vmatprep.subr.bf16.mxu0 0
      %3293 = vmatpush1.bf16.msra.mxu0 %v3287
      %3294 = vmatprep.subr.bf16.mxu0 0
      %3295 = vmatpush1.bf16.msra.mxu0 0
      %3296 = vmatprep.subr.bf16.mxu0 0
      %3297 = vmatpush1.bf16.msra.mxu0 0
      %3298 = vmatprep.subr.bf16.mxu0 0
      %3299 = vmatpush1.bf16.msra.mxu0 0
      %3300 = vmatprep.subr.bf16.mxu0 0
      %3301 = vmatpush1.bf16.msra.mxu0 0
      %3302 = vmatprep.subr.bf16.mxu0 0
      %3303 = vmatpush1.bf16.msra.mxu0 0
      %3304 = vmatprep.subr.bf16.mxu0 0
      %3305 = vmatpush1.bf16.msra.mxu0 0
      %3306 = vmatprep.subr.bf16.mxu0 0
      %3307 = vmatpush1.bf16.msra.mxu0 0
      %3308 = vmatprep.subr.bf16.mxu0 0
      %3309 = vmatpush1.bf16.msra.mxu0 0
      %3310 = vmatprep.subr.bf16.mxu0 0
      %3311 = vmatpush1.bf16.msra.mxu0 0
      %3312 = vmatprep.subr.bf16.mxu0 0
      %3313 = vmatpush1.bf16.msra.mxu0 0
      %3314 = vmatprep.subr.bf16.mxu0 0
      %3315 = vmatpush1.bf16.msra.mxu0 0
      %3316 = vmatprep.subr.bf16.mxu0 0
      %3317 = vmatpush1.bf16.msra.mxu0 0
      %3318 = vmatprep.subr.bf16.mxu0 0
      %3319 = vmatpush1.bf16.msra.mxu0 0
      %3320 = vmatprep.subr.bf16.mxu0 0
      %3321 = vmatpush1.bf16.msra.mxu0 0
      %3322 = vmatprep.subr.bf16.mxu0 0
      %3323 = vmatpush1.bf16.msra.mxu0 0
      %3324 = vmatprep.mubr.bf16.mxu0 0
      %3325 = vmatmul.mubr.bf16.gmra.mrb[0].mxu0 %v3290
      %v3326 = vpop.f32.mrb[0].mxu0
      %v3327 = vadd.f32 0.0, %v3326
      %v3328 = vpop.f32.mrb[0].mxu0
      %v3329 = vpop.f32.mrb[0].mxu0
      %v3330 = vadd.f32 0.0, %v3329
      %v3331 = vpop.f32.mrb[0].mxu0
      %3332 = vdwg.mxu0
      %v3335 = vunpack.c.l.b16 %v3270
      %v3336 = vunpack.c.l.b16 %v3271
      %v3337 = vpack.c.b16 %v3336, %v3335
      %v3340 = vunpack.c.l.b16 %v3272
      %v3341 = vunpack.c.l.b16 %v3273
      %v3342 = vpack.c.b16 %v3341, %v3340
      %v3345 = vsel %vm259, %v3337, 0
      %3347 = vmatprep.subr.bf16.mxu0 0
      %3348 = vmatpush1.bf16.msra.mxu0 %v3342
      %3349 = vmatprep.subr.bf16.mxu0 0
      %3350 = vmatpush1.bf16.msra.mxu0 0
      %3351 = vmatprep.subr.bf16.mxu0 0
      %3352 = vmatpush1.bf16.msra.mxu0 0
      %3353 = vmatprep.subr.bf16.mxu0 0
      %3354 = vmatpush1.bf16.msra.mxu0 0
      %3355 = vmatprep.subr.bf16.mxu0 0
      %3356 = vmatpush1.bf16.msra.mxu0 0
      %3357 = vmatprep.subr.bf16.mxu0 0
      %3358 = vmatpush1.bf16.msra.mxu0 0
      %3359 = vmatprep.subr.bf16.mxu0 0
      %3360 = vmatpush1.bf16.msra.mxu0 0
      %3361 = vmatprep.subr.bf16.mxu0 0
      %3362 = vmatpush1.bf16.msra.mxu0 0
      %3363 = vmatprep.subr.bf16.mxu0 0
      %3364 = vmatpush1.bf16.msra.mxu0 0
      %3365 = vmatprep.subr.bf16.mxu0 0
      %3366 = vmatpush1.bf16.msra.mxu0 0
      %3367 = vmatprep.subr.bf16.mxu0 0
      %3368 = vmatpush1.bf16.msra.mxu0 0
      %3369 = vmatprep.subr.bf16.mxu0 0
      %3370 = vmatpush1.bf16.msra.mxu0 0
      %3371 = vmatprep.subr.bf16.mxu0 0
      %3372 = vmatpush1.bf16.msra.mxu0 0
      %3373 = vmatprep.subr.bf16.mxu0 0
      %3374 = vmatpush1.bf16.msra.mxu0 0
      %3375 = vmatprep.subr.bf16.mxu0 0
      %3376 = vmatpush1.bf16.msra.mxu0 0
      %3377 = vmatprep.subr.bf16.mxu0 0
      %3378 = vmatpush1.bf16.msra.mxu0 0
      %3379 = vmatprep.mubr.bf16.mxu0 0
      %3380 = vmatmul.mubr.bf16.gmra.mrb[0].mxu0 %v3345
      %v3381 = vpop.f32.mrb[0].mxu0
      %v3382 = vadd.f32 %v3327, %v3381
      %v3383 = vpop.f32.mrb[0].mxu0
      %v3384 = vpop.f32.mrb[0].mxu0
      %v3385 = vadd.f32 %v3330, %v3384
      %v3386 = vpop.f32.mrb[0].mxu0
      %3387 = vdwg.mxu0
      %s3388 = scalar_lea.vmem [#allocation2], 32
      %v3389 = vld [vmem:[%s3388] sm:$0xf]
      %v3390 = vld [vmem:[%s3388 + $0x4] sm:$0x3]
      %v3391 = vld [vmem:[%s2170] sm:$0xf]
      %v3392 = vld [vmem:[%s2170 + $0x4] sm:$0xf]
      %v3395 = vunpack.c.l.b16 %v3389
      %v3396 = vunpack.c.l.b16 %v3390
      %v3397 = vpack.c.b16 %v3396, %v3395
      %v3400 = vunpack.c.l.b16 %v3391
      %v3401 = vunpack.c.l.b16 %v3392
      %v3402 = vpack.c.b16 %v3401, %v3400
      %v3405 = vsel %vm259, %v3397, 0
      %3407 = vmatprep.subr.bf16.mxu0 0
      %3408 = vmatpush1.bf16.msra.mxu0 %v3402
      %3409 = vmatprep.subr.bf16.mxu0 0
      %3410 = vmatpush1.bf16.msra.mxu0 0
      %3411 = vmatprep.subr.bf16.mxu0 0
      %3412 = vmatpush1.bf16.msra.mxu0 0
      %3413 = vmatprep.subr.bf16.mxu0 0
      %3414 = vmatpush1.bf16.msra.mxu0 0
      %3415 = vmatprep.subr.bf16.mxu0 0
      %3416 = vmatpush1.bf16.msra.mxu0 0
      %3417 = vmatprep.subr.bf16.mxu0 0
      %3418 = vmatpush1.bf16.msra.mxu0 0
      %3419 = vmatprep.subr.bf16.mxu0 0
      %3420 = vmatpush1.bf16.msra.mxu0 0
      %3421 = vmatprep.subr.bf16.mxu0 0
      %3422 = vmatpush1.bf16.msra.mxu0 0
      %3423 = vmatprep.subr.bf16.mxu0 0
      %3424 = vmatpush1.bf16.msra.mxu0 0
      %3425 = vmatprep.subr.bf16.mxu0 0
      %3426 = vmatpush1.bf16.msra.mxu0 0
      %3427 = vmatprep.subr.bf16.mxu0 0
      %3428 = vmatpush1.bf16.msra.mxu0 0
      %3429 = vmatprep.subr.bf16.mxu0 0
      %3430 = vmatpush1.bf16.msra.mxu0 0
      %3431 = vmatprep.subr.bf16.mxu0 0
      %3432 = vmatpush1.bf16.msra.mxu0 0
      %3433 = vmatprep.subr.bf16.mxu0 0
      %3434 = vmatpush1.bf16.msra.mxu0 0
      %3435 = vmatprep.subr.bf16.mxu0 0
      %3436 = vmatpush1.bf16.msra.mxu0 0
      %3437 = vmatprep.subr.bf16.mxu0 0
      %3438 = vmatpush1.bf16.msra.mxu0 0
      %3439 = vmatprep.mubr.bf16.mxu0 0
      %3440 = vmatmul.mubr.bf16.gmra.mrb[0].mxu0 %v3405
      %v3441 = vpop.f32.mrb[0].mxu0
      %v3442 = vadd.f32 0.0, %v3441
      %v3443 = vpop.f32.mrb[0].mxu0
      %v3444 = vpop.f32.mrb[0].mxu0
      %v3445 = vadd.f32 0.0, %v3444
      %v3446 = vpop.f32.mrb[0].mxu0
      %3447 = vdwg.mxu0
      %v3448 = vadd.f32 %v3382, %v3442
      %v3449 = vadd.f32 %v3385, %v3445
      %v3450 = vld [vmem:[%s1438 + $0x4] sm:$0x7]
      %v3451 = vld [vmem:[%s2231] sm:$0xf]
      %v3452 = vld [vmem:[%s2231 + $0x4] sm:$0xf]
      %v3454 = vunpack.c.l.b16 %v3450
      %v3455 = vpack.c.b16 %v3454, %v3335
      %v3457 = vshrl.u32 %v3455, 16
      %v3459 = vshll.u32 %v3455, 16
      %v3461 = vrot.slane %v3459, 1
      %v3462 = vor.u32 %v3457, %v3461
      %v3465 = vunpack.c.l.b16 %v3451
      %v3466 = vunpack.c.l.b16 %v3452
      %v3467 = vpack.c.b16 %v3466, %v3465
      %v3470 = vsel %vm259, %v3462, 0
      %3472 = vmatprep.subr.bf16.mxu0 0
      %3473 = vmatpush1.bf16.msra.mxu0 %v3467
      %3474 = vmatprep.subr.bf16.mxu0 0
      %3475 = vmatpush1.bf16.msra.mxu0 0
      %3476 = vmatprep.subr.bf16.mxu0 0
      %3477 = vmatpush1.bf16.msra.mxu0 0
      %3478 = vmatprep.subr.bf16.mxu0 0
      %3479 = vmatpush1.bf16.msra.mxu0 0
      %3480 = vmatprep.subr.bf16.mxu0 0
      %3481 = vmatpush1.bf16.msra.mxu0 0
      %3482 = vmatprep.subr.bf16.mxu0 0
      %3483 = vmatpush1.bf16.msra.mxu0 0
      %3484 = vmatprep.subr.bf16.mxu0 0
      %3485 = vmatpush1.bf16.msra.mxu0 0
      %3486 = vmatprep.subr.bf16.mxu0 0
      %3487 = vmatpush1.bf16.msra.mxu0 0
      %3488 = vmatprep.subr.bf16.mxu0 0
      %3489 = vmatpush1.bf16.msra.mxu0 0
      %3490 = vmatprep.subr.bf16.mxu0 0
      %3491 = vmatpush1.bf16.msra.mxu0 0
      %3492 = vmatprep.subr.bf16.mxu0 0
      %3493 = vmatpush1.bf16.msra.mxu0 0
      %3494 = vmatprep.subr.bf16.mxu0 0
      %3495 = vmatpush1.bf16.msra.mxu0 0
      %3496 = vmatprep.subr.bf16.mxu0 0
      %3497 = vmatpush1.bf16.msra.mxu0 0
      %3498 = vmatprep.subr.bf16.mxu0 0
      %3499 = vmatpush1.bf16.msra.mxu0 0
      %3500 = vmatprep.subr.bf16.mxu0 0
      %3501 = vmatpush1.bf16.msra.mxu0 0
      %3502 = vmatprep.subr.bf16.mxu0 0
      %3503 = vmatpush1.bf16.msra.mxu0 0
      %3504 = vmatprep.mubr.bf16.mxu0 0
      %3505 = vmatmul.mubr.bf16.gmra.mrb[0].mxu0 %v3470
      %v3506 = vpop.f32.mrb[0].mxu0
      %v3507 = vadd.f32 0.0, %v3506
      %v3508 = vpop.f32.mrb[0].mxu0
      %v3509 = vpop.f32.mrb[0].mxu0
      %v3510 = vadd.f32 0.0, %v3509
      %v3511 = vpop.f32.mrb[0].mxu0
      %3512 = vdwg.mxu0
      %v3513 = vadd.f32 %v3448, %v3507
      %v3514 = vadd.f32 %v3449, %v3510
      %v3515 = vld [vmem:[%s2032 + $0x4] sm:$0x7]
      %v3516 = vld [vmem:[%s2297] sm:$0xf]
      %v3517 = vld [vmem:[%s2297 + $0x4] sm:$0xf]
      %v3519 = vunpack.c.l.b16 %v3515
      %v3520 = vpack.c.b16 %v3519, %v3280
      %v3522 = vshrl.u32 %v3520, 16
      %v3524 = vshll.u32 %v3520, 16
      %v3526 = vrot.slane %v3524, 1
      %v3527 = vor.u32 %v3522, %v3526
      %v3530 = vunpack.c.l.b16 %v3516
      %v3531 = vunpack.c.l.b16 %v3517
      %v3532 = vpack.c.b16 %v3531, %v3530
      %v3535 = vsel %vm259, %v3527, 0
      %3537 = vmatprep.subr.bf16.mxu0 0
      %3538 = vmatpush1.bf16.msra.mxu0 %v3532
      %3539 = vmatprep.subr.bf16.mxu0 0
      %3540 = vmatpush1.bf16.msra.mxu0 0
      %3541 = vmatprep.subr.bf16.mxu0 0
      %3542 = vmatpush1.bf16.msra.mxu0 0
      %3543 = vmatprep.subr.bf16.mxu0 0
      %3544 = vmatpush1.bf16.msra.mxu0 0
      %3545 = vmatprep.subr.bf16.mxu0 0
      %3546 = vmatpush1.bf16.msra.mxu0 0
      %3547 = vmatprep.subr.bf16.mxu0 0
      %3548 = vmatpush1.bf16.msra.mxu0 0
      %3549 = vmatprep.subr.bf16.mxu0 0
      %3550 = vmatpush1.bf16.msra.mxu0 0
      %3551 = vmatprep.subr.bf16.mxu0 0
      %3552 = vmatpush1.bf16.msra.mxu0 0
      %3553 = vmatprep.subr.bf16.mxu0 0
      %3554 = vmatpush1.bf16.msra.mxu0 0
      %3555 = vmatprep.subr.bf16.mxu0 0
      %3556 = vmatpush1.bf16.msra.mxu0 0
      %3557 = vmatprep.subr.bf16.mxu0 0
      %3558 = vmatpush1.bf16.msra.mxu0 0
      %3559 = vmatprep.subr.bf16.mxu0 0
      %3560 = vmatpush1.bf16.msra.mxu0 0
      %3561 = vmatprep.subr.bf16.mxu0 0
      %3562 = vmatpush1.bf16.msra.mxu0 0
      %3563 = vmatprep.subr.bf16.mxu0 0
      %3564 = vmatpush1.bf16.msra.mxu0 0
      %3565 = vmatprep.subr.bf16.mxu0 0
      %3566 = vmatpush1.bf16.msra.mxu0 0
      %3567 = vmatprep.subr.bf16.mxu0 0
      %3568 = vmatpush1.bf16.msra.mxu0 0
      %3569 = vmatprep.mubr.bf16.mxu0 0
      %3570 = vmatmul.mubr.bf16.gmra.mrb[0].mxu0 %v3535
      %v3571 = vpop.f32.mrb[0].mxu0
      %v3572 = vadd.f32 0.0, %v3571
      %v3573 = vpop.f32.mrb[0].mxu0
      %v3574 = vpop.f32.mrb[0].mxu0
      %v3575 = vadd.f32 0.0, %v3574
      %v3576 = vpop.f32.mrb[0].mxu0
      %3577 = vdwg.mxu0
      %v3578 = vadd.f32 %v3513, %v3572
      %v3579 = vadd.f32 %v3514, %v3575
      %v3580 = vld [vmem:[%s3388 + $0x4] sm:$0x7]
      %v3581 = vld [vmem:[%s2363] sm:$0xf]
      %v3582 = vld [vmem:[%s2363 + $0x4] sm:$0xf]
      %v3584 = vunpack.c.l.b16 %v3580
      %v3585 = vpack.c.b16 %v3584, %v3395
      %v3587 = vshrl.u32 %v3585, 16
      %v3589 = vshll.u32 %v3585, 16
      %v3591 = vrot.slane %v3589, 1
      %v3592 = vor.u32 %v3587, %v3591
      %v3595 = vunpack.c.l.b16 %v3581
      %v3596 = vunpack.c.l.b16 %v3582
      %v3597 = vpack.c.b16 %v3596, %v3595
      %v3600 = vsel %vm259, %v3592, 0
      %3602 = vmatprep.subr.bf16.mxu0 0
      %3603 = vmatpush1.bf16.msra.mxu0 %v3597
      %3604 = vmatprep.subr.bf16.mxu0 0
      %3605 = vmatpush1.bf16.msra.mxu0 0
      %3606 = vmatprep.subr.bf16.mxu0 0
      %3607 = vmatpush1.bf16.msra.mxu0 0
      %3608 = vmatprep.subr.bf16.mxu0 0
      %3609 = vmatpush1.bf16.msra.mxu0 0
      %3610 = vmatprep.subr.bf16.mxu0 0
      %3611 = vmatpush1.bf16.msra.mxu0 0
      %3612 = vmatprep.subr.bf16.mxu0 0
      %3613 = vmatpush1.bf16.msra.mxu0 0
      %3614 = vmatprep.subr.bf16.mxu0 0
      %3615 = vmatpush1.bf16.msra.mxu0 0
      %3616 = vmatprep.subr.bf16.mxu0 0
      %3617 = vmatpush1.bf16.msra.mxu0 0
      %3618 = vmatprep.subr.bf16.mxu0 0
      %3619 = vmatpush1.bf16.msra.mxu0 0
      %3620 = vmatprep.subr.bf16.mxu0 0
      %3621 = vmatpush1.bf16.msra.mxu0 0
      %3622 = vmatprep.subr.bf16.mxu0 0
      %3623 = vmatpush1.bf16.msra.mxu0 0
      %3624 = vmatprep.subr.bf16.mxu0 0
      %3625 = vmatpush1.bf16.msra.mxu0 0
      %3626 = vmatprep.subr.bf16.mxu0 0
      %3627 = vmatpush1.bf16.msra.mxu0 0
      %3628 = vmatprep.subr.bf16.mxu0 0
      %3629 = vmatpush1.bf16.msra.mxu0 0
      %3630 = vmatprep.subr.bf16.mxu0 0
      %3631 = vmatpush1.bf16.msra.mxu0 0
      %3632 = vmatprep.subr.bf16.mxu0 0
      %3633 = vmatpush1.bf16.msra.mxu0 0
      %3634 = vmatprep.mubr.bf16.mxu0 0
      %3635 = vmatmul.mubr.bf16.gmra.mrb[0].mxu0 %v3600
      %v3636 = vpop.f32.mrb[0].mxu0
      %v3637 = vadd.f32 0.0, %v3636
      %v3638 = vpop.f32.mrb[0].mxu0
      %v3639 = vpop.f32.mrb[0].mxu0
      %v3640 = vadd.f32 0.0, %v3639
      %v3641 = vpop.f32.mrb[0].mxu0
      %3642 = vdwg.mxu0
      %v3643 = vadd.f32 %v3578, %v3637
      %v3644 = vadd.f32 %v3579, %v3640
      %v3645 = vld [vmem:[%s1438] sm:$0xe]
      %v3646 = vld [vmem:[%s2429] sm:$0xf]
      %v3647 = vld [vmem:[%s2429 + $0x4] sm:$0xf]
      %v3649 = vunpack.c.l.b16 %v3645
      %v3650 = vpack.c.b16 %v3454, %v3649
      %v3651 = vrot.slane %v3650, 1
      %v3654 = vunpack.c.l.b16 %v3646
      %v3655 = vunpack.c.l.b16 %v3647
      %v3656 = vpack.c.b16 %v3655, %v3654
      %v3659 = vsel %vm259, %v3651, 0
      %3661 = vmatprep.subr.bf16.mxu0 0
      %3662 = vmatpush1.bf16.msra.mxu0 %v3656
      %3663 = vmatprep.subr.bf16.mxu0 0
      %3664 = vmatpush1.bf16.msra.mxu0 0
      %3665 = vmatprep.subr.bf16.mxu0 0
      %3666 = vmatpush1.bf16.msra.mxu0 0
      %3667 = vmatprep.subr.bf16.mxu0 0
      %3668 = vmatpush1.bf16.msra.mxu0 0
      %3669 = vmatprep.subr.bf16.mxu0 0
      %3670 = vmatpush1.bf16.msra.mxu0 0
      %3671 = vmatprep.subr.bf16.mxu0 0
      %3672 = vmatpush1.bf16.msra.mxu0 0
      %3673 = vmatprep.subr.bf16.mxu0 0
      %3674 = vmatpush1.bf16.msra.mxu0 0
      %3675 = vmatprep.subr.bf16.mxu0 0
      %3676 = vmatpush1.bf16.msra.mxu0 0
      %3677 = vmatprep.subr.bf16.mxu0 0
      %3678 = vmatpush1.bf16.msra.mxu0 0
      %3679 = vmatprep.subr.bf16.mxu0 0
      %3680 = vmatpush1.bf16.msra.mxu0 0
      %3681 = vmatprep.subr.bf16.mxu0 0
      %3682 = vmatpush1.bf16.msra.mxu0 0
      %3683 = vmatprep.subr.bf16.mxu0 0
      %3684 = vmatpush1.bf16.msra.mxu0 0
      %3685 = vmatprep.subr.bf16.mxu0 0
      %3686 = vmatpush1.bf16.msra.mxu0 0
      %3687 = vmatprep.subr.bf16.mxu0 0
      %3688 = vmatpush1.bf16.msra.mxu0 0
      %3689 = vmatprep.subr.bf16.mxu0 0
      %3690 = vmatpush1.bf16.msra.mxu0 0
      %3691 = vmatprep.subr.bf16.mxu0 0
      %3692 = vmatpush1.bf16.msra.mxu0 0
      %3693 = vmatprep.mubr.bf16.mxu0 0
      %3694 = vmatmul.mubr.bf16.gmra.mrb[0].mxu0 %v3659
      %v3695 = vpop.f32.mrb[0].mxu0
      %v3696 = vadd.f32 0.0, %v3695
      %v3697 = vpop.f32.mrb[0].mxu0
      %v3698 = vpop.f32.mrb[0].mxu0
      %v3699 = vadd.f32 0.0, %v3698
      %v3700 = vpop.f32.mrb[0].mxu0
      %3701 = vdwg.mxu0
      %v3702 = vadd.f32 %v3643, %v3696
      %v3703 = vadd.f32 %v3644, %v3699
      %v3704 = vld [vmem:[%s2032] sm:$0xe]
      %v3705 = vld [vmem:[%s2489] sm:$0xf]
      %v3706 = vld [vmem:[%s2489 + $0x4] sm:$0xf]
      %v3708 = vunpack.c.l.b16 %v3704
      %v3709 = vpack.c.b16 %v3519, %v3708
      %v3710 = vrot.slane %v3709, 1
      %v3713 = vunpack.c.l.b16 %v3705
      %v3714 = vunpack.c.l.b16 %v3706
      %v3715 = vpack.c.b16 %v3714, %v3713
      %v3718 = vsel %vm259, %v3710, 0
      %3720 = vmatprep.subr.bf16.mxu0 0
      %3721 = vmatpush1.bf16.msra.mxu0 %v3715
      %3722 = vmatprep.subr.bf16.mxu0 0
      %3723 = vmatpush1.bf16.msra.mxu0 0
      %3724 = vmatprep.subr.bf16.mxu0 0
      %3725 = vmatpush1.bf16.msra.mxu0 0
      %3726 = vmatprep.subr.bf16.mxu0 0
      %3727 = vmatpush1.bf16.msra.mxu0 0
      %3728 = vmatprep.subr.bf16.mxu0 0
      %3729 = vmatpush1.bf16.msra.mxu0 0
      %3730 = vmatprep.subr.bf16.mxu0 0
      %3731 = vmatpush1.bf16.msra.mxu0 0
      %3732 = vmatprep.subr.bf16.mxu0 0
      %3733 = vmatpush1.bf16.msra.mxu0 0
      %3734 = vmatprep.subr.bf16.mxu0 0
      %3735 = vmatpush1.bf16.msra.mxu0 0
      %3736 = vmatprep.subr.bf16.mxu0 0
      %3737 = vmatpush1.bf16.msra.mxu0 0
      %3738 = vmatprep.subr.bf16.mxu0 0
      %3739 = vmatpush1.bf16.msra.mxu0 0
      %3740 = vmatprep.subr.bf16.mxu0 0
      %3741 = vmatpush1.bf16.msra.mxu0 0
      %3742 = vmatprep.subr.bf16.mxu0 0
      %3743 = vmatpush1.bf16.msra.mxu0 0
      %3744 = vmatprep.subr.bf16.mxu0 0
      %3745 = vmatpush1.bf16.msra.mxu0 0
      %3746 = vmatprep.subr.bf16.mxu0 0
      %3747 = vmatpush1.bf16.msra.mxu0 0
      %3748 = vmatprep.subr.bf16.mxu0 0
      %3749 = vmatpush1.bf16.msra.mxu0 0
      %3750 = vmatprep.subr.bf16.mxu0 0
      %3751 = vmatpush1.bf16.msra.mxu0 0
      %3752 = vmatprep.mubr.bf16.mxu0 0
      %3753 = vmatmul.mubr.bf16.gmra.mrb[0].mxu0 %v3718
      %v3754 = vpop.f32.mrb[0].mxu0
      %v3755 = vadd.f32 0.0, %v3754
      %v3756 = vpop.f32.mrb[0].mxu0
      %v3757 = vpop.f32.mrb[0].mxu0
      %v3758 = vadd.f32 0.0, %v3757
      %v3759 = vpop.f32.mrb[0].mxu0
      %3760 = vdwg.mxu0
      %v3761 = vadd.f32 %v3702, %v3755
      %v3762 = vadd.f32 %v3703, %v3758
      %v3763 = vld [vmem:[%s3388] sm:$0xe]
      %v3764 = vld [vmem:[%s2549] sm:$0xf]
      %v3765 = vld [vmem:[%s2549 + $0x4] sm:$0xf]
      %v3767 = vunpack.c.l.b16 %v3763
      %v3768 = vpack.c.b16 %v3584, %v3767
      %v3769 = vrot.slane %v3768, 1
      %v3772 = vunpack.c.l.b16 %v3764
      %v3773 = vunpack.c.l.b16 %v3765
      %v3774 = vpack.c.b16 %v3773, %v3772
      %v3777 = vsel %vm259, %v3769, 0
      %3779 = vmatprep.subr.bf16.mxu0 0
      %3780 = vmatpush1.bf16.msra.mxu0 %v3774
      %3781 = vmatprep.subr.bf16.mxu0 0
      %3782 = vmatpush1.bf16.msra.mxu0 0
      %3783 = vmatprep.subr.bf16.mxu0 0
      %3784 = vmatpush1.bf16.msra.mxu0 0
      %3785 = vmatprep.subr.bf16.mxu0 0
      %3786 = vmatpush1.bf16.msra.mxu0 0
      %3787 = vmatprep.subr.bf16.mxu0 0
      %3788 = vmatpush1.bf16.msra.mxu0 0
      %3789 = vmatprep.subr.bf16.mxu0 0
      %3790 = vmatpush1.bf16.msra.mxu0 0
      %3791 = vmatprep.subr.bf16.mxu0 0
      %3792 = vmatpush1.bf16.msra.mxu0 0
      %3793 = vmatprep.subr.bf16.mxu0 0
      %3794 = vmatpush1.bf16.msra.mxu0 0
      %3795 = vmatprep.subr.bf16.mxu0 0
      %3796 = vmatpush1.bf16.msra.mxu0 0
      %3797 = vmatprep.subr.bf16.mxu0 0
      %3798 = vmatpush1.bf16.msra.mxu0 0
      %3799 = vmatprep.subr.bf16.mxu0 0
      %3800 = vmatpush1.bf16.msra.mxu0 0
      %3801 = vmatprep.subr.bf16.mxu0 0
      %3802 = vmatpush1.bf16.msra.mxu0 0
      %3803 = vmatprep.subr.bf16.mxu0 0
      %3804 = vmatpush1.bf16.msra.mxu0 0
      %3805 = vmatprep.subr.bf16.mxu0 0
      %3806 = vmatpush1.bf16.msra.mxu0 0
      %3807 = vmatprep.subr.bf16.mxu0 0
      %3808 = vmatpush1.bf16.msra.mxu0 0
      %3809 = vmatprep.subr.bf16.mxu0 0
      %3810 = vmatpush1.bf16.msra.mxu0 0
      %3811 = vmatprep.mubr.bf16.mxu0 0
      %3812 = vmatmul.mubr.bf16.gmra.mrb[0].mxu0 %v3777
      %v3813 = vpop.f32.mrb[0].mxu0
      %v3814 = vadd.f32 0.0, %v3813
      %v3815 = vpop.f32.mrb[0].mxu0
      %v3816 = vpop.f32.mrb[0].mxu0
      %v3817 = vadd.f32 0.0, %v3816
      %v3818 = vpop.f32.mrb[0].mxu0
      %3819 = vdwg.mxu0
      %v3820 = vadd.f32 %v3761, %v3814
      %v3821 = vadd.f32 %v3762, %v3817
      %v3822 = vld [vmem:[%s969] sm:$0xf]
      %v3823 = vld [vmem:[%s969 + $0x4] sm:$0x7]
      %v3824 = vunpack.c.l.bf16 %v3822
      %v3825 = vunpack.c.l.bf16 %v3823
      %v3826 = vld [vmem:[%s4] sm:$0x1]
      %v3828 = vlaneseq
      %v3829 = vshrl.u32 %v3828, 7
      %v3830 = vsub.s32 0, %v3829
      %v3831 = vrot.slane %v3826, %v3830
      %v3833 = vadd.f32 %v3820, %v3831
      %v3834 = vadd.f32 %v3821, %v3831
      %v3837 = vrot.slane %v3824, 1
      %v3838 = vrot.slane %v3825, 1
      %v3839 = vsel %vm2623, %v3837, %v3838
      %v3842 = vadd.f32 %v3833, %v3839
      %v3843 = vadd.f32 %v3834, %v3838
      %v3844 = vmax.f32 %v3842, 0.0
      %v3845 = vmax.f32 %v3843, 0.0
      %v3846 = vpack.c.bf16 %v3845, %v3844
      %v3848 = vunpack.c.l.b16 %v3846
      %v3849 = vunpack.c.h.b16 %v3846
      %v3850 = vpack.c.b16 %v3848, %v3848
      %v3851 = vpack.c.b16 %v3849, %v3849
      %v3853 = vshrl.u32 %v3850, 16
      %v3855 = vrot.slane %v3853, 7
      %v3856 = vshll.u32 %v3850, 16
      %v3858 = vor.u32 %v3855, %v3856
      %v3859 = vrot.slane %v3855, 4
      %v3861 = vshrl.u32 %v3851, 16
      %v3863 = vrot.slane %v3861, 7
      %v3864 = vshll.u32 %v3851, 16
      %v3866 = vor.u32 %v3863, %v3864
      %v3867 = vsel %vm819, %v3859, %v3866
      %s3870 = scalar_lea.vmem %s224, 24
      %v3871 = vld [vmem:[%s3870] sm:$0xf]
      %v3872 = vsel %vm841, %v3858, %v3871
      %3873 = vst [vmem:[%s3870] sm:$0xf] %v3872
      %v3874 = vld [vmem:[%s3870 + $0x4] sm:$0x7]
      %v3875 = vsel %vm847, %v3867, %v3874
      %3876 = vst [vmem:[%s3870 + $0x4] sm:$0x7] %v3875
      %p3877 = scmp.lt.s32.totalorder %s16, 1
      %s3878 = scalar_select %p3877, %s16, 1
      %s3879 = smul.addr %s3878, 10
      %s3880 = smul.addr %s3879, 4
      %s3881 = scalar_lea.vmem %s5, %s3880
      // Predicated region
      $region41: #{doa_resnet_trunk_forward.6} parent=39 // pred_check
        %p3882 = pneg %p144
      $region42: #{doa_resnet_trunk_forward.6} parent=39 // pred_check_branch
        %3884 = sbr.rel (%p3882) target = $region44
      $region43: #{doa_resnet_trunk_forward.6} parent=39 // pred_region
        _
      $region44: #{doa_resnet_trunk_forward.6} parent=39 // pred_fallthru
        _
    $region40: #{doa_resnet_trunk_forward.6} parent=5 // pred_fallthru
      _
    %p3885 = scmp.le.s32.totalorder 2, %s11
    // Predicated region
    $region45: #{doa_resnet_trunk_forward.6} parent=5 // pred_check
      %p3886 = pneg %p3885
    $region46: #{doa_resnet_trunk_forward.6} parent=5 // pred_check_branch
      %3888 = sbr.rel (%p3886) target = $region48
    $region47: #{doa_resnet_trunk_forward.6} parent=5 // pred_region
      %s3889 = ssub.s32 %s11, 2
      // Predicated region
      $region49: #{doa_resnet_trunk_forward.6} parent=47 // pred_check
        %p3890 = pneg %p150
      $region50: #{doa_resnet_trunk_forward.6} parent=47 // pred_check_branch
        %3892 = sbr.rel (%p3890) target = $region52
      $region51: #{doa_resnet_trunk_forward.6} parent=47 // pred_region
        %p3893 = scmp.lt.s32.totalorder %s17, 1
        %s3894 = scalar_select %p3893, %s17, 1
        %s3895 = smul.addr %s3894, 10
        %s3896 = smul.addr %s3895, 4
        %s3897 = scalar_lea.vmem %s5, %s3896
      $region52: #{doa_resnet_trunk_forward.6} parent=47 // pred_fallthru
        _
    $region48: #{doa_resnet_trunk_forward.6} parent=5 // pred_fallthru
      _
  $region6: #{doa_resnet_trunk_forward.6} parent=0 // loop_footer
    %s15 = sadd.s32 1, %s11
  $region7: #{doa_resnet_trunk_forward.6} parent=0 // loop_footer_branch
    %10 = sbr.rel target = $region3
  $region8: #{doa_resnet_trunk_forward.6} parent=0 // loop_exit
    _

// kernel: doa_resnet_trunk_forward.7
$region0: #{doa_resnet_trunk_forward.7}
  #allocation0 [shape = 'u32[]', space=smem, size = 0x4, offset = 0x4, fixed_abs, tag = 'smem constant byte address 0x4 - core index']
  #allocation1 [shape = 'u32[144,128]{1,0:T(1,128)}', space=vmem, size = 0x12000, scoped, tag = 'internal scratch']
  #allocation2 [shape = 'bf16[5,14,16]{2,1,0:T(8,128)(2,1)}', space=vmem, size = 0x5000, scoped, tag = 'scratch operand']
  %s0 = inlined_call_operand.vmem [shape: bf16[2,5,14,16], index: 0, kind: input, shape index: {}]
  %s1 = inlined_call_operand.vmem [shape: bf16[9,16,16], index: 1, kind: input, shape index: {}]
  %s2 = inlined_call_operand.vmem [shape: f32[1,16], index: 2, kind: input, shape index: {}]
  %s3 = inlined_call_operand.vmem [shape: bf16[9,16,16], index: 3, kind: input, shape index: {}]
  %s4 = inlined_call_operand.vmem [shape: f32[1,16], index: 4, kind: input, shape index: {}]
  %s5 = inlined_call_operand.vmem [shape: bf16[16,16], index: 5, kind: input, shape index: {}]
  %s6 = inlined_call_operand.vmem [shape: f32[1,16], index: 6, kind: input, shape index: {}]
  %s7 = inlined_call_operand.vmem [shape: f32[2,3,12,16], index: 7, kind: output, shape index: {}]
  %s8 = sld [smem:[#allocation0]]
  $region61: #{doa_resnet_trunk_forward.7} parent=0
    _
  %s10 = ssub.s32 1, %s8
  %s11 = scalar_select 0, %s10, %s8
  loop: start=0, step=1, limit=4
  $region2: #{doa_resnet_trunk_forward.7} parent=0 // loop_pre_header
    _
  $region3: #{doa_resnet_trunk_forward.7} parent=0 // loop_header
    %s13 = sphi 0, %s17
    %p14 = scmp.ge.s32.totalorder %s13, 4
    %s23 = sphi 0, %s25
    %s26 = sphi 0, %s23
    %s27 = sphi 0, %s26
    %s43 = sphi 0, %s27
    %s47 = sphi 0, %s47
    %s49 = sphi 0, %s47
    %s50 = sphi 0, %s49
    %s64 = sphi 0, %s50
    %s68 = sphi 0, %s68
    %s70 = sphi 0, %s68
    %s71 = sphi 0, %s70
    %s85 = sphi 0, %s71
    %s89 = sphi 0, %s89
    %s91 = sphi 0, %s89
    %s92 = sphi 0, %s91
    %s106 = sphi 0, %s92
    %s110 = sphi 0, %s110
    %s112 = sphi 0, %s110
    %s113 = sphi 0, %s112
    %s127 = sphi 0, %s113
    %s131 = sphi 0, %s131
    %s133 = sphi 0, %s131
    %s134 = sphi 0, %s133
    %s148 = sphi 0, %s134
    %s152 = sphi 0, %s152
    %s154 = sphi 0, %s152
    %s155 = sphi 0, %s154
    %s169 = sphi 0, %s155
    %s175 = sphi 0, %s177
    %s178 = sphi 0, %s175
    %s179 = sphi 0, %s178
    %s195 = sphi 0, %s179
  $region4: #{doa_resnet_trunk_forward.7} parent=0 // loop_header_branch
    %16 = sbr.rel (%p14) target = $region8
  $region5: #{doa_resnet_trunk_forward.7} parent=0 // loop_body
    %s18 = ssub.s32 %s13, 1
    %s19 = ssub.s32 %s13, 2
    %s20 = sadd.s32 %s13, 1
    %s21 = ssub.s32 %s13, %s20
    %p22 = scmp.eq.s32.totalorder %s21, 0
    %s24 = sadd.s32 %s23, 1
    %s25 = scalar_select %p22, %s23, %s24
    %p28 = pneg %p22
    %p29 = scmp.eq.s32.totalorder %s13, 1
    %p30 = por %p28, %p29
    %p31 = scmp.ne.s32.totalorder %s23, %s26
    %p32 = scmp.eq.s32.totalorder %s13, 0
    %p33 = por %p31, %p32
    %p34 = scmp.ne.s32.totalorder %s23, %s26
    %p35 = scmp.eq.s32.totalorder %s18, 1
    %p36 = por %p34, %p35
    %p37 = scmp.ne.s32.totalorder %s26, %s27
    %p38 = scmp.eq.s32.totalorder %s18, 0
    %p39 = por %p37, %p38
    %p40 = scmp.ne.s32.totalorder %s26, %s27
    %p41 = scmp.eq.s32.totalorder %s19, 1
    %p42 = por %p40, %p41
    %p44 = scmp.ne.s32.totalorder %s27, %s43
    %p45 = scmp.eq.s32.totalorder %s19, 0
    %p46 = por %p44, %p45
    %s48 = sadd.s32 %s47, 1
    %p51 = scmp.eq.s32.totalorder %s13, 1
    %p52 = scmp.ne.s32.totalorder %s47, %s49
    %p53 = scmp.eq.s32.totalorder %s13, 0
    %p54 = por %p52, %p53
    %p55 = scmp.ne.s32.totalorder %s47, %s49
    %p56 = scmp.eq.s32.totalorder %s18, 1
    %p57 = por %p55, %p56
    %p58 = scmp.ne.s32.totalorder %s49, %s50
    %p59 = scmp.eq.s32.totalorder %s18, 0
    %p60 = por %p58, %p59
    %p61 = scmp.ne.s32.totalorder %s49, %s50
    %p62 = scmp.eq.s32.totalorder %s19, 1
    %p63 = por %p61, %p62
    %p65 = scmp.ne.s32.totalorder %s50, %s64
    %p66 = scmp.eq.s32.totalorder %s19, 0
    %p67 = por %p65, %p66
    %s69 = sadd.s32 %s68, 1
    %p72 = scmp.eq.s32.totalorder %s13, 1
    %p73 = scmp.ne.s32.totalorder %s68, %s70
    %p74 = scmp.eq.s32.totalorder %s13, 0
    %p75 = por %p73, %p74
    %p76 = scmp.ne.s32.totalorder %s68, %s70
    %p77 = scmp.eq.s32.totalorder %s18, 1
    %p78 = por %p76, %p77
    %p79 = scmp.ne.s32.totalorder %s70, %s71
    %p80 = scmp.eq.s32.totalorder %s18, 0
    %p81 = por %p79, %p80
    %p82 = scmp.ne.s32.totalorder %s70, %s71
    %p83 = scmp.eq.s32.totalorder %s19, 1
    %p84 = por %p82, %p83
    %p86 = scmp.ne.s32.totalorder %s71, %s85
    %p87 = scmp.eq.s32.totalorder %s19, 0
    %p88 = por %p86, %p87
    %s90 = sadd.s32 %s89, 1
    %p93 = scmp.eq.s32.totalorder %s13, 1
    %p94 = scmp.ne.s32.totalorder %s89, %s91
    %p95 = scmp.eq.s32.totalorder %s13, 0
    %p96 = por %p94, %p95
    %p97 = scmp.ne.s32.totalorder %s89, %s91
    %p98 = scmp.eq.s32.totalorder %s18, 1
    %p99 = por %p97, %p98
    %p100 = scmp.ne.s32.totalorder %s91, %s92
    %p101 = scmp.eq.s32.totalorder %s18, 0
    %p102 = por %p100, %p101
    %p103 = scmp.ne.s32.totalorder %s91, %s92
    %p104 = scmp.eq.s32.totalorder %s19, 1
    %p105 = por %p103, %p104
    %p107 = scmp.ne.s32.totalorder %s92, %s106
    %p108 = scmp.eq.s32.totalorder %s19, 0
    %p109 = por %p107, %p108
    %s111 = sadd.s32 %s110, 1
    %p114 = scmp.eq.s32.totalorder %s13, 1
    %p115 = scmp.ne.s32.totalorder %s110, %s112
    %p116 = scmp.eq.s32.totalorder %s13, 0
    %p117 = por %p115, %p116
    %p118 = scmp.ne.s32.totalorder %s110, %s112
    %p119 = scmp.eq.s32.totalorder %s18, 1
    %p120 = por %p118, %p119
    %p121 = scmp.ne.s32.totalorder %s112, %s113
    %p122 = scmp.eq.s32.totalorder %s18, 0
    %p123 = por %p121, %p122
    %p124 = scmp.ne.s32.totalorder %s112, %s113
    %p125 = scmp.eq.s32.totalorder %s19, 1
    %p126 = por %p124, %p125
    %p128 = scmp.ne.s32.totalorder %s113, %s127
    %p129 = scmp.eq.s32.totalorder %s19, 0
    %p130 = por %p128, %p129
    %s132 = sadd.s32 %s131, 1
    %p135 = scmp.eq.s32.totalorder %s13, 1
    %p136 = scmp.ne.s32.totalorder %s131, %s133
    %p137 = scmp.eq.s32.totalorder %s13, 0
    %p138 = por %p136, %p137
    %p139 = scmp.ne.s32.totalorder %s131, %s133
    %p140 = scmp.eq.s32.totalorder %s18, 1
    %p141 = por %p139, %p140
    %p142 = scmp.ne.s32.totalorder %s133, %s134
    %p143 = scmp.eq.s32.totalorder %s18, 0
    %p144 = por %p142, %p143
    %p145 = scmp.ne.s32.totalorder %s133, %s134
    %p146 = scmp.eq.s32.totalorder %s19, 1
    %p147 = por %p145, %p146
    %p149 = scmp.ne.s32.totalorder %s134, %s148
    %p150 = scmp.eq.s32.totalorder %s19, 0
    %p151 = por %p149, %p150
    %s153 = sadd.s32 %s152, 1
    %p156 = scmp.eq.s32.totalorder %s13, 1
    %p157 = scmp.ne.s32.totalorder %s152, %s154
    %p158 = scmp.eq.s32.totalorder %s13, 0
    %p159 = por %p157, %p158
    %p160 = scmp.ne.s32.totalorder %s152, %s154
    %p161 = scmp.eq.s32.totalorder %s18, 1
    %p162 = por %p160, %p161
    %p163 = scmp.ne.s32.totalorder %s154, %s155
    %p164 = scmp.eq.s32.totalorder %s18, 0
    %p165 = por %p163, %p164
    %p166 = scmp.ne.s32.totalorder %s154, %s155
    %p167 = scmp.eq.s32.totalorder %s19, 1
    %p168 = por %p166, %p167
    %p170 = scmp.ne.s32.totalorder %s155, %s169
    %p171 = scmp.eq.s32.totalorder %s19, 0
    %p172 = por %p170, %p171
    %s173 = ssub.s32 %s13, %s20
    %p174 = scmp.eq.s32.totalorder %s173, 0
    %s176 = sadd.s32 %s175, 1
    %s177 = scalar_select %p174, %s175, %s176
    %p180 = pneg %p174
    %p181 = scmp.eq.s32.totalorder %s13, 1
    %p182 = por %p180, %p181
    %p183 = scmp.ne.s32.totalorder %s175, %s178
    %p184 = scmp.eq.s32.totalorder %s13, 0
    %p185 = por %p183, %p184
    %p186 = scmp.ne.s32.totalorder %s175, %s178
    %p187 = scmp.eq.s32.totalorder %s18, 1
    %p188 = por %p186, %p187
    %p189 = scmp.ne.s32.totalorder %s178, %s179
    %p190 = scmp.eq.s32.totalorder %s18, 0
    %p191 = por %p189, %p190
    %p192 = scmp.ne.s32.totalorder %s178, %s179
    %p193 = scmp.eq.s32.totalorder %s19, 1
    %p194 = por %p192, %p193
    %p196 = scmp.ne.s32.totalorder %s179, %s195
    %p197 = scmp.eq.s32.totalorder %s19, 0
    %p198 = por %p196, %p197
    %p199 = scmp.le.s32.totalorder 1, %s13
    %p200 = scmp.lt.s32.totalorder %s13, 3
    %p201 = pnand %p199, %p200
    %p202 = pneg %p201
    // Predicated region
    $region9: #{doa_resnet_trunk_forward.7} parent=5 // pred_check
      _
    $region10: #{doa_resnet_trunk_forward.7} parent=5 // pred_check_branch
      %204 = sbr.rel (%p201) target = $region12
    $region11: #{doa_resnet_trunk_forward.7} parent=5 // pred_region
      %s205 = ssub.s32 %s13, 1
      // Predicated region
      $region13: #{doa_resnet_trunk_forward.7} parent=11 // pred_check
        %p206 = pneg %p60
      $region14: #{doa_resnet_trunk_forward.7} parent=11 // pred_check_branch
        %208 = sbr.rel (%p206) target = $region16
      $region15: #{doa_resnet_trunk_forward.7} parent=11 // pred_region
        _
      $region16: #{doa_resnet_trunk_forward.7} parent=11 // pred_fallthru
        _
      // Predicated region
      $region17: #{doa_resnet_trunk_forward.7} parent=11 // pred_check
        %p209 = pneg %p81
      $region18: #{doa_resnet_trunk_forward.7} parent=11 // pred_check_branch
        %211 = sbr.rel (%p209) target = $region20
      $region19: #{doa_resnet_trunk_forward.7} parent=11 // pred_region
        _
      $region20: #{doa_resnet_trunk_forward.7} parent=11 // pred_fallthru
        _
      // Predicated region
      $region21: #{doa_resnet_trunk_forward.7} parent=11 // pred_check
        %p212 = pneg %p102
      $region22: #{doa_resnet_trunk_forward.7} parent=11 // pred_check_branch
        %214 = sbr.rel (%p212) target = $region24
      $region23: #{doa_resnet_trunk_forward.7} parent=11 // pred_region
        _
      $region24: #{doa_resnet_trunk_forward.7} parent=11 // pred_fallthru
        _
      // Predicated region
      $region25: #{doa_resnet_trunk_forward.7} parent=11 // pred_check
        %p215 = pneg %p123
      $region26: #{doa_resnet_trunk_forward.7} parent=11 // pred_check_branch
        %217 = sbr.rel (%p215) target = $region28
      $region27: #{doa_resnet_trunk_forward.7} parent=11 // pred_region
        _
      $region28: #{doa_resnet_trunk_forward.7} parent=11 // pred_fallthru
        _
      // Predicated region
      $region29: #{doa_resnet_trunk_forward.7} parent=11 // pred_check
        %p218 = pneg %p144
      $region30: #{doa_resnet_trunk_forward.7} parent=11 // pred_check_branch
        %220 = sbr.rel (%p218) target = $region32
      $region31: #{doa_resnet_trunk_forward.7} parent=11 // pred_region
        _
      $region32: #{doa_resnet_trunk_forward.7} parent=11 // pred_fallthru
        _
      // Predicated region
      $region33: #{doa_resnet_trunk_forward.7} parent=11 // pred_check
        %p221 = pneg %p165
      $region34: #{doa_resnet_trunk_forward.7} parent=11 // pred_check_branch
        %223 = sbr.rel (%p221) target = $region36
      $region35: #{doa_resnet_trunk_forward.7} parent=11 // pred_region
        _
      $region36: #{doa_resnet_trunk_forward.7} parent=11 // pred_fallthru
        _
    $region12: #{doa_resnet_trunk_forward.7} parent=5 // pred_fallthru
      _
    %p224 = scmp.lt.s32.totalorder %s13, 2
    // Predicated region
    $region37: #{doa_resnet_trunk_forward.7} parent=5 // pred_check
      %p225 = pneg %p224
    $region38: #{doa_resnet_trunk_forward.7} parent=5 // pred_check_branch
      %227 = sbr.rel (%p225) target = $region40
    $region39: #{doa_resnet_trunk_forward.7} parent=5 // pred_region
      // Predicated region
      $region41: #{doa_resnet_trunk_forward.7} parent=39 // pred_check
        %p228 = pneg %p33
      $region42: #{doa_resnet_trunk_forward.7} parent=39 // pred_check_branch
        %230 = sbr.rel (%p228) target = $region44
      $region43: #{doa_resnet_trunk_forward.7} parent=39 // pred_region
        %p231 = scmp.lt.s32.totalorder %s13, 1
        %s232 = scalar_select %p231, %s13, 1
        %s233 = smul.addr %s232, 10
        %s234 = smul.addr %s233, 4
        %s235 = scalar_lea.vmem %s0, %s234
      $region44: #{doa_resnet_trunk_forward.7} parent=39 // pred_fallthru
        _
    $region40: #{doa_resnet_trunk_forward.7} parent=5 // pred_fallthru
      _
    %p236 = scmp.le.s32.totalorder 1, %s13
    %p237 = scmp.lt.s32.totalorder %s13, 3
    %p238 = pnand %p236, %p237
    %p239 = pneg %p238
    // Predicated region
    $region45: #{doa_resnet_trunk_forward.7} parent=5 // pred_check
      _
    $region46: #{doa_resnet_trunk_forward.7} parent=5 // pred_check_branch
      %241 = sbr.rel (%p238) target = $region48
    $region47: #{doa_resnet_trunk_forward.7} parent=5 // pred_region
      %s242 = ssub.s32 %s13, 1
      %p243 = scmp.lt.s32.totalorder %s18, 1
      %s244 = scalar_select %p243, %s18, 1
      %s245 = smul.addr %s244, 10
      %s246 = smul.addr %s245, 4
      %s247 = scalar_lea.vmem %s0, %s246
      %p248 = pneg %p39
      %p249 = pneg %p36
      %p250 = pneg %p60
      %p251 = pneg %p57
      %p252 = pneg %p81
      %p253 = pneg %p78
      %p254 = pneg %p102
      %p255 = pneg %p99
      %p256 = pneg %p123
      %p257 = pneg %p120
      %p258 = pneg %p144
      %p259 = pneg %p141
      %p260 = pneg %p165
      %p261 = pneg %p162
      %p262 = pneg %p191
      %p263 = pneg %p188
      %p264 = scmp.lt.s32.totalorder %s18, 1
      %s265 = scalar_select %p264, %s18, 1
      %s266 = smul.addr %s265, 6
      %s267 = smul.addr %s266, 8
      %s268 = scalar_lea.vmem %s7, %s267
      %p269 = scmp.lt.s32.totalorder %s18, 1
      %s270 = scalar_select %p269, %s18, 1
      %s271 = smul.addr %s270, 10
      %s272 = smul.addr %s271, 4
      %s273 = scalar_lea.vmem %s0, %s272
      %p274 = scmp.lt.s32.totalorder %s18, 1
      %s275 = scalar_select %p274, %s18, 1
      %s276 = smul.addr %s275, 6
      %s277 = smul.addr %s276, 8
      %s278 = scalar_lea.vmem %s7, %s277
      %vm280 = vcmask 125952
      %281 = vst.msk [vmem:[#allocation2] sm:$0xf] %vm280, 0
      %vm282 = vcmask 124928
      %283 = vst.msk [vmem:[#allocation2 + $0x4] sm:$0x7] %vm282, 0
      %284 = vst.msk [vmem:[#allocation2 + $0x8] sm:$0xf] %vm280, 0
      %285 = vst.msk [vmem:[#allocation2 + $0xc] sm:$0x7] %vm282, 0
      %286 = vst.msk [vmem:[#allocation2 + $0x10] sm:$0xf] %vm280, 0
      %287 = vst.msk [vmem:[#allocation2 + $0x14] sm:$0x7] %vm282, 0
      %288 = vst.msk [vmem:[#allocation2 + $0x18] sm:$0xf] %vm280, 0
      %289 = vst.msk [vmem:[#allocation2 + $0x1c] sm:$0x7] %vm282, 0
      %290 = vst.msk [vmem:[#allocation2 + $0x20] sm:$0xf] %vm280, 0
      %291 = vst.msk [vmem:[#allocation2 + $0x24] sm:$0x7] %vm282, 0
      %v292 = vld [vmem:[%s273] sm:$0xf]
      %v293 = vld [vmem:[%s273 + $0x4] sm:$0x3]
      %v294 = vld [vmem:[%s1] sm:$0xf]
      %v295 = vld [vmem:[%s1 + $0x4] sm:$0xf]
      %s296 = scalar_lea.vmem %s273, 8
      %v297 = vld [vmem:[%s296] sm:$0xf]
      %v298 = vld [vmem:[%s296 + $0x4] sm:$0x3]
      %s299 = scalar_lea.vmem %s1, 8
      %v300 = vld [vmem:[%s299] sm:$0xf]
      %v301 = vld [vmem:[%s299 + $0x4] sm:$0xf]
      %v304 = vunpack.c.l.b16 %v297
      %v305 = vunpack.c.l.b16 %v298
      %v306 = vpack.c.b16 %v305, %v304
      %v309 = vunpack.c.l.b16 %v300
      %v310 = vunpack.c.l.b16 %v301
      %v311 = vpack.c.b16 %v310, %v309
      %vm313 = vcmask 130048
      %v315 = vsel %vm313, %v306, 0
      %317 = vmatprep.subr.bf16.mxu0 0
      %318 = vmatpush1.bf16.msra.mxu0 %v311
      %319 = vmatprep.subr.bf16.mxu0 0
      %320 = vmatpush1.bf16.msra.mxu0 0
      %321 = vmatprep.subr.bf16.mxu0 0
      %322 = vmatpush1.bf16.msra.mxu0 0
      %323 = vmatprep.subr.bf16.mxu0 0
      %324 = vmatpush1.bf16.msra.mxu0 0
      %325 = vmatprep.subr.bf16.mxu0 0
      %326 = vmatpush1.bf16.msra.mxu0 0
      %327 = vmatprep.subr.bf16.mxu0 0
      %328 = vmatpush1.bf16.msra.mxu0 0
      %329 = vmatprep.subr.bf16.mxu0 0
      %330 = vmatpush1.bf16.msra.mxu0 0
      %331 = vmatprep.subr.bf16.mxu0 0
      %332 = vmatpush1.bf16.msra.mxu0 0
      %333 = vmatprep.subr.bf16.mxu0 0
      %334 = vmatpush1.bf16.msra.mxu0 0
      %335 = vmatprep.subr.bf16.mxu0 0
      %336 = vmatpush1.bf16.msra.mxu0 0
      %337 = vmatprep.subr.bf16.mxu0 0
      %338 = vmatpush1.bf16.msra.mxu0 0
      %339 = vmatprep.subr.bf16.mxu0 0
      %340 = vmatpush1.bf16.msra.mxu0 0
      %341 = vmatprep.subr.bf16.mxu0 0
      %342 = vmatpush1.bf16.msra.mxu0 0
      %343 = vmatprep.subr.bf16.mxu0 0
      %344 = vmatpush1.bf16.msra.mxu0 0
      %345 = vmatprep.subr.bf16.mxu0 0
      %346 = vmatpush1.bf16.msra.mxu0 0
      %347 = vmatprep.subr.bf16.mxu0 0
      %348 = vmatpush1.bf16.msra.mxu0 0
      %349 = vmatprep.mubr.bf16.mxu0 0
      %350 = vmatmul.mubr.bf16.gmra.mrb[0].mxu0 %v315
      %v351 = vpop.f32.mrb[0].mxu0
      %v352 = vadd.f32 0.0, %v351
      %v353 = vpop.f32.mrb[0].mxu0
      %v354 = vpop.f32.mrb[0].mxu0
      %v355 = vadd.f32 0.0, %v354
      %v356 = vpop.f32.mrb[0].mxu0
      %357 = vdwg.mxu0
      %v360 = vunpack.c.l.b16 %v292
      %v361 = vunpack.c.l.b16 %v293
      %v362 = vpack.c.b16 %v361, %v360
      %v365 = vunpack.c.l.b16 %v294
      %v366 = vunpack.c.l.b16 %v295
      %v367 = vpack.c.b16 %v366, %v365
      %v370 = vsel %vm313, %v362, 0
      %372 = vmatprep.subr.bf16.mxu0 0
      %373 = vmatpush1.bf16.msra.mxu0 %v367
      %374 = vmatprep.subr.bf16.mxu0 0
      %375 = vmatpush1.bf16.msra.mxu0 0
      %376 = vmatprep.subr.bf16.mxu0 0
      %377 = vmatpush1.bf16.msra.mxu0 0
      %378 = vmatprep.subr.bf16.mxu0 0
      %379 = vmatpush1.bf16.msra.mxu0 0
      %380 = vmatprep.subr.bf16.mxu0 0
      %381 = vmatpush1.bf16.msra.mxu0 0
      %382 = vmatprep.subr.bf16.mxu0 0
      %383 = vmatpush1.bf16.msra.mxu0 0
      %384 = vmatprep.subr.bf16.mxu0 0
      %385 = vmatpush1.bf16.msra.mxu0 0
      %386 = vmatprep.subr.bf16.mxu0 0
      %387 = vmatpush1.bf16.msra.mxu0 0
      %388 = vmatprep.subr.bf16.mxu0 0
      %389 = vmatpush1.bf16.msra.mxu0 0
      %390 = vmatprep.subr.bf16.mxu0 0
      %391 = vmatpush1.bf16.msra.mxu0 0
      %392 = vmatprep.subr.bf16.mxu0 0
      %393 = vmatpush1.bf16.msra.mxu0 0
      %394 = vmatprep.subr.bf16.mxu0 0
      %395 = vmatpush1.bf16.msra.mxu0 0
      %396 = vmatprep.subr.bf16.mxu0 0
      %397 = vmatpush1.bf16.msra.mxu0 0
      %398 = vmatprep.subr.bf16.mxu0 0
      %399 = vmatpush1.bf16.msra.mxu0 0
      %400 = vmatprep.subr.bf16.mxu0 0
      %401 = vmatpush1.bf16.msra.mxu0 0
      %402 = vmatprep.subr.bf16.mxu0 0
      %403 = vmatpush1.bf16.msra.mxu0 0
      %404 = vmatprep.mubr.bf16.mxu0 0
      %405 = vmatmul.mubr.bf16.gmra.mrb[0].mxu0 %v370
      %v406 = vpop.f32.mrb[0].mxu0
      %v407 = vadd.f32 %v352, %v406
      %v408 = vpop.f32.mrb[0].mxu0
      %v409 = vpop.f32.mrb[0].mxu0
      %v410 = vadd.f32 %v355, %v409
      %v411 = vpop.f32.mrb[0].mxu0
      %412 = vdwg.mxu0
      %s413 = scalar_lea.vmem %s273, 16
      %v414 = vld [vmem:[%s413] sm:$0xf]
      %v415 = vld [vmem:[%s413 + $0x4] sm:$0x3]
      %s416 = scalar_lea.vmem %s1, 16
      %v417 = vld [vmem:[%s416] sm:$0xf]
      %v418 = vld [vmem:[%s416 + $0x4] sm:$0xf]
      %v421 = vunpack.c.l.b16 %v414
      %v422 = vunpack.c.l.b16 %v415
      %v423 = vpack.c.b16 %v422, %v421
      %v426 = vunpack.c.l.b16 %v417
      %v427 = vunpack.c.l.b16 %v418
      %v428 = vpack.c.b16 %v427, %v426
      %v431 = vsel %vm313, %v423, 0
      %433 = vmatprep.subr.bf16.mxu0 0
      %434 = vmatpush1.bf16.msra.mxu0 %v428
      %435 = vmatprep.subr.bf16.mxu0 0
      %436 = vmatpush1.bf16.msra.mxu0 0
      %437 = vmatprep.subr.bf16.mxu0 0
      %438 = vmatpush1.bf16.msra.mxu0 0
      %439 = vmatprep.subr.bf16.mxu0 0
      %440 = vmatpush1.bf16.msra.mxu0 0
      %441 = vmatprep.subr.bf16.mxu0 0
      %442 = vmatpush1.bf16.msra.mxu0 0
      %443 = vmatprep.subr.bf16.mxu0 0
      %444 = vmatpush1.bf16.msra.mxu0 0
      %445 = vmatprep.subr.bf16.mxu0 0
      %446 = vmatpush1.bf16.msra.mxu0 0
      %447 = vmatprep.subr.bf16.mxu0 0
      %448 = vmatpush1.bf16.msra.mxu0 0
      %449 = vmatprep.subr.bf16.mxu0 0
      %450 = vmatpush1.bf16.msra.mxu0 0
      %451 = vmatprep.subr.bf16.mxu0 0
      %452 = vmatpush1.bf16.msra.mxu0 0
      %453 = vmatprep.subr.bf16.mxu0 0
      %454 = vmatpush1.bf16.msra.mxu0 0
      %455 = vmatprep.subr.bf16.mxu0 0
      %456 = vmatpush1.bf16.msra.mxu0 0
      %457 = vmatprep.subr.bf16.mxu0 0
      %458 = vmatpush1.bf16.msra.mxu0 0
      %459 = vmatprep.subr.bf16.mxu0 0
      %460 = vmatpush1.bf16.msra.mxu0 0
      %461 = vmatprep.subr.bf16.mxu0 0
      %462 = vmatpush1.bf16.msra.mxu0 0
      %463 = vmatprep.subr.bf16.mxu0 0
      %464 = vmatpush1.bf16.msra.mxu0 0
      %465 = vmatprep.mubr.bf16.mxu0 0
      %466 = vmatmul.mubr.bf16.gmra.mrb[0].mxu0 %v431
      %v467 = vpop.f32.mrb[0].mxu0
      %v468 = vadd.f32 0.0, %v467
      %v469 = vpop.f32.mrb[0].mxu0
      %v470 = vpop.f32.mrb[0].mxu0
      %v471 = vadd.f32 0.0, %v470
      %v472 = vpop.f32.mrb[0].mxu0
      %473 = vdwg.mxu0
      %v474 = vadd.f32 %v407, %v468
      %v475 = vadd.f32 %v410, %v471
      %v476 = vld [vmem:[%s273 + $0x4] sm:$0x7]
      %s477 = scalar_lea.vmem %s1, 24
      %v478 = vld [vmem:[%s477] sm:$0xf]
      %v479 = vld [vmem:[%s477 + $0x4] sm:$0xf]
      %v481 = vunpack.c.l.b16 %v476
      %v482 = vpack.c.b16 %v481, %v360
      %v484 = vshrl.u32 %v482, 16
      %v486 = vshll.u32 %v482, 16
      %v488 = vrot.slane %v486, 1
      %v489 = vor.u32 %v484, %v488
      %v492 = vunpack.c.l.b16 %v478
      %v493 = vunpack.c.l.b16 %v479
      %v494 = vpack.c.b16 %v493, %v492
      %v497 = vsel %vm313, %v489, 0
      %499 = vmatprep.subr.bf16.mxu0 0
      %500 = vmatpush1.bf16.msra.mxu0 %v494
      %501 = vmatprep.subr.bf16.mxu0 0
      %502 = vmatpush1.bf16.msra.mxu0 0
      %503 = vmatprep.subr.bf16.mxu0 0
      %504 = vmatpush1.bf16.msra.mxu0 0
      %505 = vmatprep.subr.bf16.mxu0 0
      %506 = vmatpush1.bf16.msra.mxu0 0
      %507 = vmatprep.subr.bf16.mxu0 0
      %508 = vmatpush1.bf16.msra.mxu0 0
      %509 = vmatprep.subr.bf16.mxu0 0
      %510 = vmatpush1.bf16.msra.mxu0 0
      %511 = vmatprep.subr.bf16.mxu0 0
      %512 = vmatpush1.bf16.msra.mxu0 0
      %513 = vmatprep.subr.bf16.mxu0 0
      %514 = vmatpush1.bf16.msra.mxu0 0
      %515 = vmatprep.subr.bf16.mxu0 0
      %516 = vmatpush1.bf16.msra.mxu0 0
      %517 = vmatprep.subr.bf16.mxu0 0
      %518 = vmatpush1.bf16.msra.mxu0 0
      %519 = vmatprep.subr.bf16.mxu0 0
      %520 = vmatpush1.bf16.msra.mxu0 0
      %521 = vmatprep.subr.bf16.mxu0 0
      %522 = vmatpush1.bf16.msra.mxu0 0
      %523 = vmatprep.subr.bf16.mxu0 0
      %524 = vmatpush1.bf16.msra.mxu0 0
      %525 = vmatprep.subr.bf16.mxu0 0
      %526 = vmatpush1.bf16.msra.mxu0 0
      %527 = vmatprep.subr.bf16.mxu0 0
      %528 = vmatpush1.bf16.msra.mxu0 0
      %529 = vmatprep.subr.bf16.mxu0 0
      %530 = vmatpush1.bf16.msra.mxu0 0
      %531 = vmatprep.mubr.bf16.mxu0 0
      %532 = vmatmul.mubr.bf16.gmra.mrb[0].mxu0 %v497
      %v533 = vpop.f32.mrb[0].mxu0
      %v534 = vadd.f32 0.0, %v533
      %v535 = vpop.f32.mrb[0].mxu0
      %v536 = vpop.f32.mrb[0].mxu0
      %v537 = vadd.f32 0.0, %v536
      %v538 = vpop.f32.mrb[0].mxu0
      %539 = vdwg.mxu0
      %v540 = vadd.f32 %v474, %v534
      %v541 = vadd.f32 %v475, %v537
      %v542 = vld [vmem:[%s296 + $0x4] sm:$0x7]
      %s543 = scalar_lea.vmem %s1, 32
      %v544 = vld [vmem:[%s543] sm:$0xf]
      %v545 = vld [vmem:[%s543 + $0x4] sm:$0xf]
      %v547 = vunpack.c.l.b16 %v542
      %v548 = vpack.c.b16 %v547, %v304
      %v550 = vshrl.u32 %v548, 16
      %v552 = vshll.u32 %v548, 16
      %v554 = vrot.slane %v552, 1
      %v555 = vor.u32 %v550, %v554
      %v558 = vunpack.c.l.b16 %v544
      %v559 = vunpack.c.l.b16 %v545
      %v560 = vpack.c.b16 %v559, %v558
      %v563 = vsel %vm313, %v555, 0
      %565 = vmatprep.subr.bf16.mxu0 0
      %566 = vmatpush1.bf16.msra.mxu0 %v560
      %567 = vmatprep.subr.bf16.mxu0 0
      %568 = vmatpush1.bf16.msra.mxu0 0
      %569 = vmatprep.subr.bf16.mxu0 0
      %570 = vmatpush1.bf16.msra.mxu0 0
      %571 = vmatprep.subr.bf16.mxu0 0
      %572 = vmatpush1.bf16.msra.mxu0 0
      %573 = vmatprep.subr.bf16.mxu0 0
      %574 = vmatpush1.bf16.msra.mxu0 0
      %575 = vmatprep.subr.bf16.mxu0 0
      %576 = vmatpush1.bf16.msra.mxu0 0
      %577 = vmatprep.subr.bf16.mxu0 0
      %578 = vmatpush1.bf16.msra.mxu0 0
      %579 = vmatprep.subr.bf16.mxu0 0
      %580 = vmatpush1.bf16.msra.mxu0 0
      %581 = vmatprep.subr.bf16.mxu0 0
      %582 = vmatpush1.bf16.msra.mxu0 0
      %583 = vmatprep.subr.bf16.mxu0 0
      %584 = vmatpush1.bf16.msra.mxu0 0
      %585 = vmatprep.subr.bf16.mxu0 0
      %586 = vmatpush1.bf16.msra.mxu0 0
      %587 = vmatprep.subr.bf16.mxu0 0
      %588 = vmatpush1.bf16.msra.mxu0 0
      %589 = vmatprep.subr.bf16.mxu0 0
      %590 = vmatpush1.bf16.msra.mxu0 0
      %591 = vmatprep.subr.bf16.mxu0 0
      %592 = vmatpush1.bf16.msra.mxu0 0
      %593 = vmatprep.subr.bf16.mxu0 0
      %594 = vmatpush1.bf16.msra.mxu0 0
      %595 = vmatprep.subr.bf16.mxu0 0
      %596 = vmatpush1.bf16.msra.mxu0 0
      %597 = vmatprep.mubr.bf16.mxu0 0
      %598 = vmatmul.mubr.bf16.gmra.mrb[0].mxu0 %v563
      %v599 = vpop.f32.mrb[0].mxu0
      %v600 = vadd.f32 0.0, %v599
      %v601 = vpop.f32.mrb[0].mxu0
      %v602 = vpop.f32.mrb[0].mxu0
      %v603 = vadd.f32 0.0, %v602
      %v604 = vpop.f32.mrb[0].mxu0
      %605 = vdwg.mxu0
      %v606 = vadd.f32 %v540, %v600
      %v607 = vadd.f32 %v541, %v603
      %v608 = vld [vmem:[%s413 + $0x4] sm:$0x7]
      %s609 = scalar_lea.vmem %s1, 40
      %v610 = vld [vmem:[%s609] sm:$0xf]
      %v611 = vld [vmem:[%s609 + $0x4] sm:$0xf]
      %v613 = vunpack.c.l.b16 %v608
      %v614 = vpack.c.b16 %v613, %v421
      %v616 = vshrl.u32 %v614, 16
      %v618 = vshll.u32 %v614, 16
      %v620 = vrot.slane %v618, 1
      %v621 = vor.u32 %v616, %v620
      %v624 = vunpack.c.l.b16 %v610
      %v625 = vunpack.c.l.b16 %v611
      %v626 = vpack.c.b16 %v625, %v624
      %v629 = vsel %vm313, %v621, 0
      %631 = vmatprep.subr.bf16.mxu0 0
      %632 = vmatpush1.bf16.msra.mxu0 %v626
      %633 = vmatprep.subr.bf16.mxu0 0
      %634 = vmatpush1.bf16.msra.mxu0 0
      %635 = vmatprep.subr.bf16.mxu0 0
      %636 = vmatpush1.bf16.msra.mxu0 0
      %637 = vmatprep.subr.bf16.mxu0 0
      %638 = vmatpush1.bf16.msra.mxu0 0
      %639 = vmatprep.subr.bf16.mxu0 0
      %640 = vmatpush1.bf16.msra.mxu0 0
      %641 = vmatprep.subr.bf16.mxu0 0
      %642 = vmatpush1.bf16.msra.mxu0 0
      %643 = vmatprep.subr.bf16.mxu0 0
      %644 = vmatpush1.bf16.msra.mxu0 0
      %645 = vmatprep.subr.bf16.mxu0 0
      %646 = vmatpush1.bf16.msra.mxu0 0
      %647 = vmatprep.subr.bf16.mxu0 0
      %648 = vmatpush1.bf16.msra.mxu0 0
      %649 = vmatprep.subr.bf16.mxu0 0
      %650 = vmatpush1.bf16.msra.mxu0 0
      %651 = vmatprep.subr.bf16.mxu0 0
      %652 = vmatpush1.bf16.msra.mxu0 0
      %653 = vmatprep.subr.bf16.mxu0 0
      %654 = vmatpush1.bf16.msra.mxu0 0
      %655 = vmatprep.subr.bf16.mxu0 0
      %656 = vmatpush1.bf16.msra.mxu0 0
      %657 = vmatprep.subr.bf16.mxu0 0
      %658 = vmatpush1.bf16.msra.mxu0 0
      %659 = vmatprep.subr.bf16.mxu0 0
      %660 = vmatpush1.bf16.msra.mxu0 0
      %661 = vmatprep.subr.bf16.mxu0 0
      %662 = vmatpush1.bf16.msra.mxu0 0
      %663 = vmatprep.mubr.bf16.mxu0 0
      %664 = vmatmul.mubr.bf16.gmra.mrb[0].mxu0 %v629
      %v665 = vpop.f32.mrb[0].mxu0
      %v666 = vadd.f32 0.0, %v665
      %v667 = vpop.f32.mrb[0].mxu0
      %v668 = vpop.f32.mrb[0].mxu0
      %v669 = vadd.f32 0.0, %v668
      %v670 = vpop.f32.mrb[0].mxu0
      %671 = vdwg.mxu0
      %v672 = vadd.f32 %v606, %v666
      %v673 = vadd.f32 %v607, %v669
      %v674 = vld [vmem:[%s273] sm:$0xe]
      %s675 = scalar_lea.vmem %s1, 48
      %v676 = vld [vmem:[%s675] sm:$0xf]
      %v677 = vld [vmem:[%s675 + $0x4] sm:$0xf]
      %v679 = vunpack.c.l.b16 %v674
      %v680 = vpack.c.b16 %v481, %v679
      %v681 = vrot.slane %v680, 1
      %v684 = vunpack.c.l.b16 %v676
      %v685 = vunpack.c.l.b16 %v677
      %v686 = vpack.c.b16 %v685, %v684
      %v689 = vsel %vm313, %v681, 0
      %691 = vmatprep.subr.bf16.mxu0 0
      %692 = vmatpush1.bf16.msra.mxu0 %v686
      %693 = vmatprep.subr.bf16.mxu0 0
      %694 = vmatpush1.bf16.msra.mxu0 0
      %695 = vmatprep.subr.bf16.mxu0 0
      %696 = vmatpush1.bf16.msra.mxu0 0
      %697 = vmatprep.subr.bf16.mxu0 0
      %698 = vmatpush1.bf16.msra.mxu0 0
      %699 = vmatprep.subr.bf16.mxu0 0
      %700 = vmatpush1.bf16.msra.mxu0 0
      %701 = vmatprep.subr.bf16.mxu0 0
      %702 = vmatpush1.bf16.msra.mxu0 0
      %703 = vmatprep.subr.bf16.mxu0 0
      %704 = vmatpush1.bf16.msra.mxu0 0
      %705 = vmatprep.subr.bf16.mxu0 0
      %706 = vmatpush1.bf16.msra.mxu0 0
      %707 = vmatprep.subr.bf16.mxu0 0
      %708 = vmatpush1.bf16.msra.mxu0 0
      %709 = vmatprep.subr.bf16.mxu0 0
      %710 = vmatpush1.bf16.msra.mxu0 0
      %711 = vmatprep.subr.bf16.mxu0 0
      %712 = vmatpush1.bf16.msra.mxu0 0
      %713 = vmatprep.subr.bf16.mxu0 0
      %714 = vmatpush1.bf16.msra.mxu0 0
      %715 = vmatprep.subr.bf16.mxu0 0
      %716 = vmatpush1.bf16.msra.mxu0 0
      %717 = vmatprep.subr.bf16.mxu0 0
      %718 = vmatpush1.bf16.msra.mxu0 0
      %719 = vmatprep.subr.bf16.mxu0 0
      %720 = vmatpush1.bf16.msra.mxu0 0
      %721 = vmatprep.subr.bf16.mxu0 0
      %722 = vmatpush1.bf16.msra.mxu0 0
      %723 = vmatprep.mubr.bf16.mxu0 0
      %724 = vmatmul.mubr.bf16.gmra.mrb[0].mxu0 %v689
      %v725 = vpop.f32.mrb[0].mxu0
      %v726 = vadd.f32 0.0, %v725
      %v727 = vpop.f32.mrb[0].mxu0
      %v728 = vpop.f32.mrb[0].mxu0
      %v729 = vadd.f32 0.0, %v728
      %v730 = vpop.f32.mrb[0].mxu0
      %731 = vdwg.mxu0
      %v732 = vadd.f32 %v672, %v726
      %v733 = vadd.f32 %v673, %v729
      %v734 = vld [vmem:[%s296] sm:$0xe]
      %s735 = scalar_lea.vmem %s1, 56
      %v736 = vld [vmem:[%s735] sm:$0xf]
      %v737 = vld [vmem:[%s735 + $0x4] sm:$0xf]
      %v739 = vunpack.c.l.b16 %v734
      %v740 = vpack.c.b16 %v547, %v739
      %v741 = vrot.slane %v740, 1
      %v744 = vunpack.c.l.b16 %v736
      %v745 = vunpack.c.l.b16 %v737
      %v746 = vpack.c.b16 %v745, %v744
      %v749 = vsel %vm313, %v741, 0
      %751 = vmatprep.subr.bf16.mxu0 0
      %752 = vmatpush1.bf16.msra.mxu0 %v746
      %753 = vmatprep.subr.bf16.mxu0 0
      %754 = vmatpush1.bf16.msra.mxu0 0
      %755 = vmatprep.subr.bf16.mxu0 0
      %756 = vmatpush1.bf16.msra.mxu0 0
      %757 = vmatprep.subr.bf16.mxu0 0
      %758 = vmatpush1.bf16.msra.mxu0 0
      %759 = vmatprep.subr.bf16.mxu0 0
      %760 = vmatpush1.bf16.msra.mxu0 0
      %761 = vmatprep.subr.bf16.mxu0 0
      %762 = vmatpush1.bf16.msra.mxu0 0
      %763 = vmatprep.subr.bf16.mxu0 0
      %764 = vmatpush1.bf16.msra.mxu0 0
      %765 = vmatprep.subr.bf16.mxu0 0
      %766 = vmatpush1.bf16.msra.mxu0 0
      %767 = vmatprep.subr.bf16.mxu0 0
      %768 = vmatpush1.bf16.msra.mxu0 0
      %769 = vmatprep.subr.bf16.mxu0 0
      %770 = vmatpush1.bf16.msra.mxu0 0
      %771 = vmatprep.subr.bf16.mxu0 0
      %772 = vmatpush1.bf16.msra.mxu0 0
      %773 = vmatprep.subr.bf16.mxu0 0
      %774 = vmatpush1.bf16.msra.mxu0 0
      %775 = vmatprep.subr.bf16.mxu0 0
      %776 = vmatpush1.bf16.msra.mxu0 0
      %777 = vmatprep.subr.bf16.mxu0 0
      %778 = vmatpush1.bf16.msra.mxu0 0
      %779 = vmatprep.subr.bf16.mxu0 0
      %780 = vmatpush1.bf16.msra.mxu0 0
      %781 = vmatprep.subr.bf16.mxu0 0
      %782 = vmatpush1.bf16.msra.mxu0 0
      %783 = vmatprep.mubr.bf16.mxu0 0
      %784 = vmatmul.mubr.bf16.gmra.mrb[0].mxu0 %v749
      %v785 = vpop.f32.mrb[0].mxu0
      %v786 = vadd.f32 0.0, %v785
      %v787 = vpop.f32.mrb[0].mxu0
      %v788 = vpop.f32.mrb[0].mxu0
      %v789 = vadd.f32 0.0, %v788
      %v790 = vpop.f32.mrb[0].mxu0
      %791 = vdwg.mxu0
      %v792 = vadd.f32 %v732, %v786
      %v793 = vadd.f32 %v733, %v789
      %v794 = vld [vmem:[%s413] sm:$0xe]
      %s795 = scalar_lea.vmem %s1, 64
      %v796 = vld [vmem:[%s795] sm:$0xf]
      %v797 = vld [vmem:[%s795 + $0x4] sm:$0xf]
      %v799 = vunpack.c.l.b16 %v794
      %v800 = vpack.c.b16 %v613, %v799
      %v801 = vrot.slane %v800, 1
      %v804 = vunpack.c.l.b16 %v796
      %v805 = vunpack.c.l.b16 %v797
      %v806 = vpack.c.b16 %v805, %v804
      %v809 = vsel %vm313, %v801, 0
      %811 = vmatprep.subr.bf16.mxu0 0
      %812 = vmatpush1.bf16.msra.mxu0 %v806
      %813 = vmatprep.subr.bf16.mxu0 0
      %814 = vmatpush1.bf16.msra.mxu0 0
      %815 = vmatprep.subr.bf16.mxu0 0
      %816 = vmatpush1.bf16.msra.mxu0 0
      %817 = vmatprep.subr.bf16.mxu0 0
      %818 = vmatpush1.bf16.msra.mxu0 0
      %819 = vmatprep.subr.bf16.mxu0 0
      %820 = vmatpush1.bf16.msra.mxu0 0
      %821 = vmatprep.subr.bf16.mxu0 0
      %822 = vmatpush1.bf16.msra.mxu0 0
      %823 = vmatprep.subr.bf16.mxu0 0
      %824 = vmatpush1.bf16.msra.mxu0 0
      %825 = vmatprep.subr.bf16.mxu0 0
      %826 = vmatpush1.bf16.msra.mxu0 0
      %827 = vmatprep.subr.bf16.mxu0 0
      %828 = vmatpush1.bf16.msra.mxu0 0
      %829 = vmatprep.subr.bf16.mxu0 0
      %830 = vmatpush1.bf16.msra.mxu0 0
      %831 = vmatprep.subr.bf16.mxu0 0
      %832 = vmatpush1.bf16.msra.mxu0 0
      %833 = vmatprep.subr.bf16.mxu0 0
      %834 = vmatpush1.bf16.msra.mxu0 0
      %835 = vmatprep.subr.bf16.mxu0 0
      %836 = vmatpush1.bf16.msra.mxu0 0
      %837 = vmatprep.subr.bf16.mxu0 0
      %838 = vmatpush1.bf16.msra.mxu0 0
      %839 = vmatprep.subr.bf16.mxu0 0
      %840 = vmatpush1.bf16.msra.mxu0 0
      %841 = vmatprep.subr.bf16.mxu0 0
      %842 = vmatpush1.bf16.msra.mxu0 0
      %843 = vmatprep.mubr.bf16.mxu0 0
      %844 = vmatmul.mubr.bf16.gmra.mrb[0].mxu0 %v809
      %v845 = vpop.f32.mrb[0].mxu0
      %v846 = vadd.f32 0.0, %v845
      %v847 = vpop.f32.mrb[0].mxu0
      %v848 = vpop.f32.mrb[0].mxu0
      %v849 = vadd.f32 0.0, %v848
      %v850 = vpop.f32.mrb[0].mxu0
      %851 = vdwg.mxu0
      %v852 = vadd.f32 %v792, %v846
      %v853 = vadd.f32 %v793, %v849
      %v854 = vld [vmem:[%s2] sm:$0x1]
      %v856 = vlaneseq
      %v857 = vshrl.u32 %v856, 7
      %v858 = vsub.s32 0, %v857
      %v859 = vrot.slane %v854, %v858
      %v861 = vadd.f32 %v852, %v859
      %v862 = vadd.f32 %v853, %v859
      %v863 = vmax.f32 %v861, 0.0
      %v864 = vmax.f32 %v862, 0.0
      %v865 = vpack.c.bf16 %v864, %v863
      %v867 = vunpack.c.l.b16 %v865
      %v868 = vunpack.c.h.b16 %v865
      %v869 = vpack.c.b16 %v867, %v867
      %v870 = vpack.c.b16 %v868, %v868
      %vm871 = vsmask.f32 256
      %vm872 = vsmask.f32 4368
      %vm873 = vmor %vm871, %vm872
      %v875 = vshrl.u32 %v869, 16
      %v877 = vrot.slane %v875, 7
      %v878 = vshll.u32 %v869, 16
      %v880 = vor.u32 %v877, %v878
      %v881 = vrot.slane %v877, 4
      %v883 = vshrl.u32 %v870, 16
      %v885 = vrot.slane %v883, 7
      %v886 = vshll.u32 %v870, 16
      %v888 = vor.u32 %v885, %v886
      %v889 = vsel %vm873, %v881, %v888
      %s892 = scalar_lea.vmem [#allocation2], 8
      %vm893 = vcmask 125952
      %vm894 = vsmask.f32 7938
      %vm895 = vmand %vm893, %vm894
      %v896 = vld [vmem:[%s892] sm:$0xf]
      %v897 = vsel %vm895, %v880, %v896
      %898 = vst [vmem:[%s892] sm:$0xf] %v897
      %vm899 = vcmask 124928
      %vm900 = vsmask.f32 2304
      %vm901 = vmand %vm899, %vm900
      %v902 = vld [vmem:[%s892 + $0x4] sm:$0x7]
      %v903 = vsel %vm901, %v889, %v902
      %904 = vst [vmem:[%s892 + $0x4] sm:$0x7] %v903
      %v905 = vld [vmem:[%s296] sm:$0xf]
      %v906 = vld [vmem:[%s296 + $0x4] sm:$0x3]
      %v907 = vld [vmem:[%s1] sm:$0xf]
      %v908 = vld [vmem:[%s1 + $0x4] sm:$0xf]
      %v909 = vld [vmem:[%s413] sm:$0xf]
      %v910 = vld [vmem:[%s413 + $0x4] sm:$0x3]
      %v911 = vld [vmem:[%s299] sm:$0xf]
      %v912 = vld [vmem:[%s299 + $0x4] sm:$0xf]
      %v915 = vunpack.c.l.b16 %v909
      %v916 = vunpack.c.l.b16 %v910
      %v917 = vpack.c.b16 %v916, %v915
      %v920 = vunpack.c.l.b16 %v911
      %v921 = vunpack.c.l.b16 %v912
      %v922 = vpack.c.b16 %v921, %v920
      %v925 = vsel %vm313, %v917, 0
      %927 = vmatprep.subr.bf16.mxu0 0
      %928 = vmatpush1.bf16.msra.mxu0 %v922
      %929 = vmatprep.subr.bf16.mxu0 0
      %930 = vmatpush1.bf16.msra.mxu0 0
      %931 = vmatprep.subr.bf16.mxu0 0
      %932 = vmatpush1.bf16.msra.mxu0 0
      %933 = vmatprep.subr.bf16.mxu0 0
      %934 = vmatpush1.bf16.msra.mxu0 0
      %935 = vmatprep.subr.bf16.mxu0 0
      %936 = vmatpush1.bf16.msra.mxu0 0
      %937 = vmatprep.subr.bf16.mxu0 0
      %938 = vmatpush1.bf16.msra.mxu0 0
      %939 = vmatprep.subr.bf16.mxu0 0
      %940 = vmatpush1.bf16.msra.mxu0 0
      %941 = vmatprep.subr.bf16.mxu0 0
      %942 = vmatpush1.bf16.msra.mxu0 0
      %943 = vmatprep.subr.bf16.mxu0 0
      %944 = vmatpush1.bf16.msra.mxu0 0
      %945 = vmatprep.subr.bf16.mxu0 0
      %946 = vmatpush1.bf16.msra.mxu0 0
      %947 = vmatprep.subr.bf16.mxu0 0
      %948 = vmatpush1.bf16.msra.mxu0 0
      %949 = vmatprep.subr.bf16.mxu0 0
      %950 = vmatpush1.bf16.msra.mxu0 0
      %951 = vmatprep.subr.bf16.mxu0 0
      %952 = vmatpush1.bf16.msra.mxu0 0
      %953 = vmatprep.subr.bf16.mxu0 0
      %954 = vmatpush1.bf16.msra.mxu0 0
      %955 = vmatprep.subr.bf16.mxu0 0
      %956 = vmatpush1.bf16.msra.mxu0 0
      %957 = vmatprep.subr.bf16.mxu0 0
      %958 = vmatpush1.bf16.msra.mxu0 0
      %959 = vmatprep.mubr.bf16.mxu0 0
      %960 = vmatmul.mubr.bf16.gmra.mrb[0].mxu0 %v925
      %v961 = vpop.f32.mrb[0].mxu0
      %v962 = vadd.f32 0.0, %v961
      %v963 = vpop.f32.mrb[0].mxu0
      %v964 = vpop.f32.mrb[0].mxu0
      %v965 = vadd.f32 0.0, %v964
      %v966 = vpop.f32.mrb[0].mxu0
      %967 = vdwg.mxu0
      %v970 = vunpack.c.l.b16 %v905
      %v971 = vunpack.c.l.b16 %v906
      %v972 = vpack.c.b16 %v971, %v970
      %v975 = vunpack.c.l.b16 %v907
      %v976 = vunpack.c.l.b16 %v908
      %v977 = vpack.c.b16 %v976, %v975
      %v980 = vsel %vm313, %v972, 0
      %982 = vmatprep.subr.bf16.mxu0 0
      %983 = vmatpush1.bf16.msra.mxu0 %v977
      %984 = vmatprep.subr.bf16.mxu0 0
      %985 = vmatpush1.bf16.msra.mxu0 0
      %986 = vmatprep.subr.bf16.mxu0 0
      %987 = vmatpush1.bf16.msra.mxu0 0
      %988 = vmatprep.subr.bf16.mxu0 0
      %989 = vmatpush1.bf16.msra.mxu0 0
      %990 = vmatprep.subr.bf16.mxu0 0
      %991 = vmatpush1.bf16.msra.mxu0 0
      %992 = vmatprep.subr.bf16.mxu0 0
      %993 = vmatpush1.bf16.msra.mxu0 0
      %994 = vmatprep.subr.bf16.mxu0 0
      %995 = vmatpush1.bf16.msra.mxu0 0
      %996 = vmatprep.subr.bf16.mxu0 0
      %997 = vmatpush1.bf16.msra.mxu0 0
      %998 = vmatprep.subr.bf16.mxu0 0
      %999 = vmatpush1.bf16.msra.mxu0 0
      %1000 = vmatprep.subr.bf16.mxu0 0
      %1001 = vmatpush1.bf16.msra.mxu0 0
      %1002 = vmatprep.subr.bf16.mxu0 0
      %1003 = vmatpush1.bf16.msra.mxu0 0
      %1004 = vmatprep.subr.bf16.mxu0 0
      %1005 = vmatpush1.bf16.msra.mxu0 0
      %1006 = vmatprep.subr.bf16.mxu0 0
      %1007 = vmatpush1.bf16.msra.mxu0 0
      %1008 = vmatprep.subr.bf16.mxu0 0
      %1009 = vmatpush1.bf16.msra.mxu0 0
      %1010 = vmatprep.subr.bf16.mxu0 0
      %1011 = vmatpush1.bf16.msra.mxu0 0
      %1012 = vmatprep.subr.bf16.mxu0 0
      %1013 = vmatpush1.bf16.msra.mxu0 0
      %1014 = vmatprep.mubr.bf16.mxu0 0
      %1015 = vmatmul.mubr.bf16.gmra.mrb[0].mxu0 %v980
      %v1016 = vpop.f32.mrb[0].mxu0
      %v1017 = vadd.f32 %v962, %v1016
      %v1018 = vpop.f32.mrb[0].mxu0
      %v1019 = vpop.f32.mrb[0].mxu0
      %v1020 = vadd.f32 %v965, %v1019
      %v1021 = vpop.f32.mrb[0].mxu0
      %1022 = vdwg.mxu0
      %s1023 = scalar_lea.vmem %s273, 24
      %v1024 = vld [vmem:[%s1023] sm:$0xf]
      %v1025 = vld [vmem:[%s1023 + $0x4] sm:$0x3]
      %v1026 = vld [vmem:[%s416] sm:$0xf]
      %v1027 = vld [vmem:[%s416 + $0x4] sm:$0xf]
      %v1030 = vunpack.c.l.b16 %v1024
      %v1031 = vunpack.c.l.b16 %v1025
      %v1032 = vpack.c.b16 %v1031, %v1030
      %v1035 = vunpack.c.l.b16 %v1026
      %v1036 = vunpack.c.l.b16 %v1027
      %v1037 = vpack.c.b16 %v1036, %v1035
      %v1040 = vsel %vm313, %v1032, 0
      %1042 = vmatprep.subr.bf16.mxu0 0
      %1043 = vmatpush1.bf16.msra.mxu0 %v1037
      %1044 = vmatprep.subr.bf16.mxu0 0
      %1045 = vmatpush1.bf16.msra.mxu0 0
      %1046 = vmatprep.subr.bf16.mxu0 0
      %1047 = vmatpush1.bf16.msra.mxu0 0
      %1048 = vmatprep.subr.bf16.mxu0 0
      %1049 = vmatpush1.bf16.msra.mxu0 0
      %1050 = vmatprep.subr.bf16.mxu0 0
      %1051 = vmatpush1.bf16.msra.mxu0 0
      %1052 = vmatprep.subr.bf16.mxu0 0
      %1053 = vmatpush1.bf16.msra.mxu0 0
      %1054 = vmatprep.subr.bf16.mxu0 0
      %1055 = vmatpush1.bf16.msra.mxu0 0
      %1056 = vmatprep.subr.bf16.mxu0 0
      %1057 = vmatpush1.bf16.msra.mxu0 0
      %1058 = vmatprep.subr.bf16.mxu0 0
      %1059 = vmatpush1.bf16.msra.mxu0 0
      %1060 = vmatprep.subr.bf16.mxu0 0
      %1061 = vmatpush1.bf16.msra.mxu0 0
      %1062 = vmatprep.subr.bf16.mxu0 0
      %1063 = vmatpush1.bf16.msra.mxu0 0
      %1064 = vmatprep.subr.bf16.mxu0 0
      %1065 = vmatpush1.bf16.msra.mxu0 0
      %1066 = vmatprep.subr.bf16.mxu0 0
      %1067 = vmatpush1.bf16.msra.mxu0 0
      %1068 = vmatprep.subr.bf16.mxu0 0
      %1069 = vmatpush1.bf16.msra.mxu0 0
      %1070 = vmatprep.subr.bf16.mxu0 0
      %1071 = vmatpush1.bf16.msra.mxu0 0
      %1072 = vmatprep.subr.bf16.mxu0 0
      %1073 = vmatpush1.bf16.msra.mxu0 0
      %1074 = vmatprep.mubr.bf16.mxu0 0
      %1075 = vmatmul.mubr.bf16.gmra.mrb[0].mxu0 %v1040
      %v1076 = vpop.f32.mrb[0].mxu0
      %v1077 = vadd.f32 0.0, %v1076
      %v1078 = vpop.f32.mrb[0].mxu0
      %v1079 = vpop.f32.mrb[0].mxu0
      %v1080 = vadd.f32 0.0, %v1079
      %v1081 = vpop.f32.mrb[0].mxu0
      %1082 = vdwg.mxu0
      %v1083 = vadd.f32 %v1017, %v1077
      %v1084 = vadd.f32 %v1020, %v1080
      %v1085 = vld [vmem:[%s296 + $0x4] sm:$0x7]
      %v1086 = vld [vmem:[%s477] sm:$0xf]
      %v1087 = vld [vmem:[%s477 + $0x4] sm:$0xf]
      %v1089 = vunpack.c.l.b16 %v1085
      %v1090 = vpack.c.b16 %v1089, %v970
      %v1092 = vshrl.u32 %v1090, 16
      %v1094 = vshll.u32 %v1090, 16
      %v1096 = vrot.slane %v1094, 1
      %v1097 = vor.u32 %v1092, %v1096
      %v1100 = vunpack.c.l.b16 %v1086
      %v1101 = vunpack.c.l.b16 %v1087
      %v1102 = vpack.c.b16 %v1101, %v1100
      %v1105 = vsel %vm313, %v1097, 0
      %1107 = vmatprep.subr.bf16.mxu0 0
      %1108 = vmatpush1.bf16.msra.mxu0 %v1102
      %1109 = vmatprep.subr.bf16.mxu0 0
      %1110 = vmatpush1.bf16.msra.mxu0 0
      %1111 = vmatprep.subr.bf16.mxu0 0
      %1112 = vmatpush1.bf16.msra.mxu0 0
      %1113 = vmatprep.subr.bf16.mxu0 0
      %1114 = vmatpush1.bf16.msra.mxu0 0
      %1115 = vmatprep.subr.bf16.mxu0 0
      %1116 = vmatpush1.bf16.msra.mxu0 0
      %1117 = vmatprep.subr.bf16.mxu0 0
      %1118 = vmatpush1.bf16.msra.mxu0 0
      %1119 = vmatprep.subr.bf16.mxu0 0
      %1120 = vmatpush1.bf16.msra.mxu0 0
      %1121 = vmatprep.subr.bf16.mxu0 0
      %1122 = vmatpush1.bf16.msra.mxu0 0
      %1123 = vmatprep.subr.bf16.mxu0 0
      %1124 = vmatpush1.bf16.msra.mxu0 0
      %1125 = vmatprep.subr.bf16.mxu0 0
      %1126 = vmatpush1.bf16.msra.mxu0 0
      %1127 = vmatprep.subr.bf16.mxu0 0
      %1128 = vmatpush1.bf16.msra.mxu0 0
      %1129 = vmatprep.subr.bf16.mxu0 0
      %1130 = vmatpush1.bf16.msra.mxu0 0
      %1131 = vmatprep.subr.bf16.mxu0 0
      %1132 = vmatpush1.bf16.msra.mxu0 0
      %1133 = vmatprep.subr.bf16.mxu0 0
      %1134 = vmatpush1.bf16.msra.mxu0 0
      %1135 = vmatprep.subr.bf16.mxu0 0
      %1136 = vmatpush1.bf16.msra.mxu0 0
      %1137 = vmatprep.subr.bf16.mxu0 0
      %1138 = vmatpush1.bf16.msra.mxu0 0
      %1139 = vmatprep.mubr.bf16.mxu0 0
      %1140 = vmatmul.mubr.bf16.gmra.mrb[0].mxu0 %v1105
      %v1141 = vpop.f32.mrb[0].mxu0
      %v1142 = vadd.f32 0.0, %v1141
      %v1143 = vpop.f32.mrb[0].mxu0
      %v1144 = vpop.f32.mrb[0].mxu0
      %v1145 = vadd.f32 0.0, %v1144
      %v1146 = vpop.f32.mrb[0].mxu0
      %1147 = vdwg.mxu0
      %v1148 = vadd.f32 %v1083, %v1142
      %v1149 = vadd.f32 %v1084, %v1145
      %v1150 = vld [vmem:[%s413 + $0x4] sm:$0x7]
      %v1151 = vld [vmem:[%s543] sm:$0xf]
      %v1152 = vld [vmem:[%s543 + $0x4] sm:$0xf]
      %v1154 = vunpack.c.l.b16 %v1150
      %v1155 = vpack.c.b16 %v1154, %v915
      %v1157 = vshrl.u32 %v1155, 16
      %v1159 = vshll.u32 %v1155, 16
      %v1161 = vrot.slane %v1159, 1
      %v1162 = vor.u32 %v1157, %v1161
      %v1165 = vunpack.c.l.b16 %v1151
      %v1166 = vunpack.c.l.b16 %v1152
      %v1167 = vpack.c.b16 %v1166, %v1165
      %v1170 = vsel %vm313, %v1162, 0
      %1172 = vmatprep.subr.bf16.mxu0 0
      %1173 = vmatpush1.bf16.msra.mxu0 %v1167
      %1174 = vmatprep.subr.bf16.mxu0 0
      %1175 = vmatpush1.bf16.msra.mxu0 0
      %1176 = vmatprep.subr.bf16.mxu0 0
      %1177 = vmatpush1.bf16.msra.mxu0 0
      %1178 = vmatprep.subr.bf16.mxu0 0
      %1179 = vmatpush1.bf16.msra.mxu0 0
      %1180 = vmatprep.subr.bf16.mxu0 0
      %1181 = vmatpush1.bf16.msra.mxu0 0
      %1182 = vmatprep.subr.bf16.mxu0 0
      %1183 = vmatpush1.bf16.msra.mxu0 0
      %1184 = vmatprep.subr.bf16.mxu0 0
      %1185 = vmatpush1.bf16.msra.mxu0 0
      %1186 = vmatprep.subr.bf16.mxu0 0
      %1187 = vmatpush1.bf16.msra.mxu0 0
      %1188 = vmatprep.subr.bf16.mxu0 0
      %1189 = vmatpush1.bf16.msra.mxu0 0
      %1190 = vmatprep.subr.bf16.mxu0 0
      %1191 = vmatpush1.bf16.msra.mxu0 0
      %1192 = vmatprep.subr.bf16.mxu0 0
      %1193 = vmatpush1.bf16.msra.mxu0 0
      %1194 = vmatprep.subr.bf16.mxu0 0
      %1195 = vmatpush1.bf16.msra.mxu0 0
      %1196 = vmatprep.subr.bf16.mxu0 0
      %1197 = vmatpush1.bf16.msra.mxu0 0
      %1198 = vmatprep.subr.bf16.mxu0 0
      %1199 = vmatpush1.bf16.msra.mxu0 0
      %1200 = vmatprep.subr.bf16.mxu0 0
      %1201 = vmatpush1.bf16.msra.mxu0 0
      %1202 = vmatprep.subr.bf16.mxu0 0
      %1203 = vmatpush1.bf16.msra.mxu0 0
      %1204 = vmatprep.mubr.bf16.mxu0 0
      %1205 = vmatmul.mubr.bf16.gmra.mrb[0].mxu0 %v1170
      %v1206 = vpop.f32.mrb[0].mxu0
      %v1207 = vadd.f32 0.0, %v1206
      %v1208 = vpop.f32.mrb[0].mxu0
      %v1209 = vpop.f32.mrb[0].mxu0
      %v1210 = vadd.f32 0.0, %v1209
      %v1211 = vpop.f32.mrb[0].mxu0
      %1212 = vdwg.mxu0
      %v1213 = vadd.f32 %v1148, %v1207
      %v1214 = vadd.f32 %v1149, %v1210
      %v1215 = vld [vmem:[%s1023 + $0x4] sm:$0x7]
      %v1216 = vld [vmem:[%s609] sm:$0xf]
      %v1217 = vld [vmem:[%s609 + $0x4] sm:$0xf]
      %v1219 = vunpack.c.l.b16 %v1215
      %v1220 = vpack.c.b16 %v1219, %v1030
      %v1222 = vshrl.u32 %v1220, 16
      %v1224 = vshll.u32 %v1220, 16
      %v1226 = vrot.slane %v1224, 1
      %v1227 = vor.u32 %v1222, %v1226
      %v1230 = vunpack.c.l.b16 %v1216
      %v1231 = vunpack.c.l.b16 %v1217
      %v1232 = vpack.c.b16 %v1231, %v1230
      %v1235 = vsel %vm313, %v1227, 0
      %1237 = vmatprep.subr.bf16.mxu0 0
      %1238 = vmatpush1.bf16.msra.mxu0 %v1232
      %1239 = vmatprep.subr.bf16.mxu0 0
      %1240 = vmatpush1.bf16.msra.mxu0 0
      %1241 = vmatprep.subr.bf16.mxu0 0
      %1242 = vmatpush1.bf16.msra.mxu0 0
      %1243 = vmatprep.subr.bf16.mxu0 0
      %1244 = vmatpush1.bf16.msra.mxu0 0
      %1245 = vmatprep.subr.bf16.mxu0 0
      %1246 = vmatpush1.bf16.msra.mxu0 0
      %1247 = vmatprep.subr.bf16.mxu0 0
      %1248 = vmatpush1.bf16.msra.mxu0 0
      %1249 = vmatprep.subr.bf16.mxu0 0
      %1250 = vmatpush1.bf16.msra.mxu0 0
      %1251 = vmatprep.subr.bf16.mxu0 0
      %1252 = vmatpush1.bf16.msra.mxu0 0
      %1253 = vmatprep.subr.bf16.mxu0 0
      %1254 = vmatpush1.bf16.msra.mxu0 0
      %1255 = vmatprep.subr.bf16.mxu0 0
      %1256 = vmatpush1.bf16.msra.mxu0 0
      %1257 = vmatprep.subr.bf16.mxu0 0
      %1258 = vmatpush1.bf16.msra.mxu0 0
      %1259 = vmatprep.subr.bf16.mxu0 0
      %1260 = vmatpush1.bf16.msra.mxu0 0
      %1261 = vmatprep.subr.bf16.mxu0 0
      %1262 = vmatpush1.bf16.msra.mxu0 0
      %1263 = vmatprep.subr.bf16.mxu0 0
      %1264 = vmatpush1.bf16.msra.mxu0 0
      %1265 = vmatprep.subr.bf16.mxu0 0
      %1266 = vmatpush1.bf16.msra.mxu0 0
      %1267 = vmatprep.subr.bf16.mxu0 0
      %1268 = vmatpush1.bf16.msra.mxu0 0
      %1269 = vmatprep.mubr.bf16.mxu0 0
      %1270 = vmatmul.mubr.bf16.gmra.mrb[0].mxu0 %v1235
      %v1271 = vpop.f32.mrb[0].mxu0
      %v1272 = vadd.f32 0.0, %v1271
      %v1273 = vpop.f32.mrb[0].mxu0
      %v1274 = vpop.f32.mrb[0].mxu0
      %v1275 = vadd.f32 0.0, %v1274
      %v1276 = vpop.f32.mrb[0].mxu0
      %1277 = vdwg.mxu0
      %v1278 = vadd.f32 %v1213, %v1272
      %v1279 = vadd.f32 %v1214, %v1275
      %v1280 = vld [vmem:[%s296] sm:$0xe]
      %v1281 = vld [vmem:[%s675] sm:$0xf]
      %v1282 = vld [vmem:[%s675 + $0x4] sm:$0xf]
      %v1284 = vunpack.c.l.b16 %v1280
      %v1285 = vpack.c.b16 %v1089, %v1284
      %v1286 = vrot.slane %v1285, 1
      %v1289 = vunpack.c.l.b16 %v1281
      %v1290 = vunpack.c.l.b16 %v1282
      %v1291 = vpack.c.b16 %v1290, %v1289
      %v1294 = vsel %vm313, %v1286, 0
      %1296 = vmatprep.subr.bf16.mxu0 0
      %1297 = vmatpush1.bf16.msra.mxu0 %v1291
      %1298 = vmatprep.subr.bf16.mxu0 0
      %1299 = vmatpush1.bf16.msra.mxu0 0
      %1300 = vmatprep.subr.bf16.mxu0 0
      %1301 = vmatpush1.bf16.msra.mxu0 0
      %1302 = vmatprep.subr.bf16.mxu0 0
      %1303 = vmatpush1.bf16.msra.mxu0 0
      %1304 = vmatprep.subr.bf16.mxu0 0
      %1305 = vmatpush1.bf16.msra.mxu0 0
      %1306 = vmatprep.subr.bf16.mxu0 0
      %1307 = vmatpush1.bf16.msra.mxu0 0
      %1308 = vmatprep.subr.bf16.mxu0 0
      %1309 = vmatpush1.bf16.msra.mxu0 0
      %1310 = vmatprep.subr.bf16.mxu0 0
      %1311 = vmatpush1.bf16.msra.mxu0 0
      %1312 = vmatprep.subr.bf16.mxu0 0
      %1313 = vmatpush1.bf16.msra.mxu0 0
      %1314 = vmatprep.subr.bf16.mxu0 0
      %1315 = vmatpush1.bf16.msra.mxu0 0
      %1316 = vmatprep.subr.bf16.mxu0 0
      %1317 = vmatpush1.bf16.msra.mxu0 0
      %1318 = vmatprep.subr.bf16.mxu0 0
      %1319 = vmatpush1.bf16.msra.mxu0 0
      %1320 = vmatprep.subr.bf16.mxu0 0
      %1321 = vmatpush1.bf16.msra.mxu0 0
      %1322 = vmatprep.subr.bf16.mxu0 0
      %1323 = vmatpush1.bf16.msra.mxu0 0
      %1324 = vmatprep.subr.bf16.mxu0 0
      %1325 = vmatpush1.bf16.msra.mxu0 0
      %1326 = vmatprep.subr.bf16.mxu0 0
      %1327 = vmatpush1.bf16.msra.mxu0 0
      %1328 = vmatprep.mubr.bf16.mxu0 0
      %1329 = vmatmul.mubr.bf16.gmra.mrb[0].mxu0 %v1294
      %v1330 = vpop.f32.mrb[0].mxu0
      %v1331 = vadd.f32 0.0, %v1330
      %v1332 = vpop.f32.mrb[0].mxu0
      %v1333 = vpop.f32.mrb[0].mxu0
      %v1334 = vadd.f32 0.0, %v1333
      %v1335 = vpop.f32.mrb[0].mxu0
      %1336 = vdwg.mxu0
      %v1337 = vadd.f32 %v1278, %v1331
      %v1338 = vadd.f32 %v1279, %v1334
      %v1339 = vld [vmem:[%s413] sm:$0xe]
      %v1340 = vld [vmem:[%s735] sm:$0xf]
      %v1341 = vld [vmem:[%s735 + $0x4] sm:$0xf]
      %v1343 = vunpack.c.l.b16 %v1339
      %v1344 = vpack.c.b16 %v1154, %v1343
      %v1345 = vrot.slane %v1344, 1
      %v1348 = vunpack.c.l.b16 %v1340
      %v1349 = vunpack.c.l.b16 %v1341
      %v1350 = vpack.c.b16 %v1349, %v1348
      %v1353 = vsel %vm313, %v1345, 0
      %1355 = vmatprep.subr.bf16.mxu0 0
      %1356 = vmatpush1.bf16.msra.mxu0 %v1350
      %1357 = vmatprep.subr.bf16.mxu0 0
      %1358 = vmatpush1.bf16.msra.mxu0 0
      %1359 = vmatprep.subr.bf16.mxu0 0
      %1360 = vmatpush1.bf16.msra.mxu0 0
      %1361 = vmatprep.subr.bf16.mxu0 0
      %1362 = vmatpush1.bf16.msra.mxu0 0
      %1363 = vmatprep.subr.bf16.mxu0 0
      %1364 = vmatpush1.bf16.msra.mxu0 0
      %1365 = vmatprep.subr.bf16.mxu0 0
      %1366 = vmatpush1.bf16.msra.mxu0 0
      %1367 = vmatprep.subr.bf16.mxu0 0
      %1368 = vmatpush1.bf16.msra.mxu0 0
      %1369 = vmatprep.subr.bf16.mxu0 0
      %1370 = vmatpush1.bf16.msra.mxu0 0
      %1371 = vmatprep.subr.bf16.mxu0 0
      %1372 = vmatpush1.bf16.msra.mxu0 0
      %1373 = vmatprep.subr.bf16.mxu0 0
      %1374 = vmatpush1.bf16.msra.mxu0 0
      %1375 = vmatprep.subr.bf16.mxu0 0
      %1376 = vmatpush1.bf16.msra.mxu0 0
      %1377 = vmatprep.subr.bf16.mxu0 0
      %1378 = vmatpush1.bf16.msra.mxu0 0
      %1379 = vmatprep.subr.bf16.mxu0 0
      %1380 = vmatpush1.bf16.msra.mxu0 0
      %1381 = vmatprep.subr.bf16.mxu0 0
      %1382 = vmatpush1.bf16.msra.mxu0 0
      %1383 = vmatprep.subr.bf16.mxu0 0
      %1384 = vmatpush1.bf16.msra.mxu0 0
      %1385 = vmatprep.subr.bf16.mxu0 0
      %1386 = vmatpush1.bf16.msra.mxu0 0
      %1387 = vmatprep.mubr.bf16.mxu0 0
      %1388 = vmatmul.mubr.bf16.gmra.mrb[0].mxu0 %v1353
      %v1389 = vpop.f32.mrb[0].mxu0
      %v1390 = vadd.f32 0.0, %v1389
      %v1391 = vpop.f32.mrb[0].mxu0
      %v1392 = vpop.f32.mrb[0].mxu0
      %v1393 = vadd.f32 0.0, %v1392
      %v1394 = vpop.f32.mrb[0].mxu0
      %1395 = vdwg.mxu0
      %v1396 = vadd.f32 %v1337, %v1390
      %v1397 = vadd.f32 %v1338, %v1393
      %v1398 = vld [vmem:[%s1023] sm:$0xe]
      %v1399 = vld [vmem:[%s795] sm:$0xf]
      %v1400 = vld [vmem:[%s795 + $0x4] sm:$0xf]
      %v1402 = vunpack.c.l.b16 %v1398
      %v1403 = vpack.c.b16 %v1219, %v1402
      %v1404 = vrot.slane %v1403, 1
      %v1407 = vunpack.c.l.b16 %v1399
      %v1408 = vunpack.c.l.b16 %v1400
      %v1409 = vpack.c.b16 %v1408, %v1407
      %v1412 = vsel %vm313, %v1404, 0
      %1414 = vmatprep.subr.bf16.mxu0 0
      %1415 = vmatpush1.bf16.msra.mxu0 %v1409
      %1416 = vmatprep.subr.bf16.mxu0 0
      %1417 = vmatpush1.bf16.msra.mxu0 0
      %1418 = vmatprep.subr.bf16.mxu0 0
      %1419 = vmatpush1.bf16.msra.mxu0 0
      %1420 = vmatprep.subr.bf16.mxu0 0
      %1421 = vmatpush1.bf16.msra.mxu0 0
      %1422 = vmatprep.subr.bf16.mxu0 0
      %1423 = vmatpush1.bf16.msra.mxu0 0
      %1424 = vmatprep.subr.bf16.mxu0 0
      %1425 = vmatpush1.bf16.msra.mxu0 0
      %1426 = vmatprep.subr.bf16.mxu0 0
      %1427 = vmatpush1.bf16.msra.mxu0 0
      %1428 = vmatprep.subr.bf16.mxu0 0
      %1429 = vmatpush1.bf16.msra.mxu0 0
      %1430 = vmatprep.subr.bf16.mxu0 0
      %1431 = vmatpush1.bf16.msra.mxu0 0
      %1432 = vmatprep.subr.bf16.mxu0 0
      %1433 = vmatpush1.bf16.msra.mxu0 0
      %1434 = vmatprep.subr.bf16.mxu0 0
      %1435 = vmatpush1.bf16.msra.mxu0 0
      %1436 = vmatprep.subr.bf16.mxu0 0
      %1437 = vmatpush1.bf16.msra.mxu0 0
      %1438 = vmatprep.subr.bf16.mxu0 0
      %1439 = vmatpush1.bf16.msra.mxu0 0
      %1440 = vmatprep.subr.bf16.mxu0 0
      %1441 = vmatpush1.bf16.msra.mxu0 0
      %1442 = vmatprep.subr.bf16.mxu0 0
      %1443 = vmatpush1.bf16.msra.mxu0 0
      %1444 = vmatprep.subr.bf16.mxu0 0
      %1445 = vmatpush1.bf16.msra.mxu0 0
      %1446 = vmatprep.mubr.bf16.mxu0 0
      %1447 = vmatmul.mubr.bf16.gmra.mrb[0].mxu0 %v1412
      %v1448 = vpop.f32.mrb[0].mxu0
      %v1449 = vadd.f32 0.0, %v1448
      %v1450 = vpop.f32.mrb[0].mxu0
      %v1451 = vpop.f32.mrb[0].mxu0
      %v1452 = vadd.f32 0.0, %v1451
      %v1453 = vpop.f32.mrb[0].mxu0
      %1454 = vdwg.mxu0
      %v1455 = vadd.f32 %v1396, %v1449
      %v1456 = vadd.f32 %v1397, %v1452
      %v1457 = vld [vmem:[%s2] sm:$0x1]
      %v1459 = vlaneseq
      %v1460 = vshrl.u32 %v1459, 7
      %v1461 = vsub.s32 0, %v1460
      %v1462 = vrot.slane %v1457, %v1461
      %v1464 = vadd.f32 %v1455, %v1462
      %v1465 = vadd.f32 %v1456, %v1462
      %v1466 = vmax.f32 %v1464, 0.0
      %v1467 = vmax.f32 %v1465, 0.0
      %v1468 = vpack.c.bf16 %v1467, %v1466
      %v1470 = vunpack.c.l.b16 %v1468
      %v1471 = vunpack.c.h.b16 %v1468
      %v1472 = vpack.c.b16 %v1470, %v1470
      %v1473 = vpack.c.b16 %v1471, %v1471
      %v1475 = vshrl.u32 %v1472, 16
      %v1477 = vrot.slane %v1475, 7
      %v1478 = vshll.u32 %v1472, 16
      %v1480 = vor.u32 %v1477, %v1478
      %v1481 = vrot.slane %v1477, 4
      %v1483 = vshrl.u32 %v1473, 16
      %v1485 = vrot.slane %v1483, 7
      %v1486 = vshll.u32 %v1473, 16
      %v1488 = vor.u32 %v1485, %v1486
      %v1489 = vsel %vm873, %v1481, %v1488
      %s1492 = scalar_lea.vmem [#allocation2], 16
      %v1493 = vld [vmem:[%s1492] sm:$0xf]
      %v1494 = vsel %vm895, %v1480, %v1493
      %1495 = vst [vmem:[%s1492] sm:$0xf] %v1494
      %v1496 = vld [vmem:[%s1492 + $0x4] sm:$0x7]
      %v1497 = vsel %vm901, %v1489, %v1496
      %1498 = vst [vmem:[%s1492 + $0x4] sm:$0x7] %v1497
      %v1499 = vld [vmem:[%s413] sm:$0xf]
      %v1500 = vld [vmem:[%s413 + $0x4] sm:$0x3]
      %v1501 = vld [vmem:[%s1] sm:$0xf]
      %v1502 = vld [vmem:[%s1 + $0x4] sm:$0xf]
      %v1503 = vld [vmem:[%s1023] sm:$0xf]
      %v1504 = vld [vmem:[%s1023 + $0x4] sm:$0x3]
      %v1505 = vld [vmem:[%s299] sm:$0xf]
      %v1506 = vld [vmem:[%s299 + $0x4] sm:$0xf]
      %v1509 = vunpack.c.l.b16 %v1503
      %v1510 = vunpack.c.l.b16 %v1504
      %v1511 = vpack.c.b16 %v1510, %v1509
      %v1514 = vunpack.c.l.b16 %v1505
      %v1515 = vunpack.c.l.b16 %v1506
      %v1516 = vpack.c.b16 %v1515, %v1514
      %v1519 = vsel %vm313, %v1511, 0
      %1521 = vmatprep.subr.bf16.mxu0 0
      %1522 = vmatpush1.bf16.msra.mxu0 %v1516
      %1523 = vmatprep.subr.bf16.mxu0 0
      %1524 = vmatpush1.bf16.msra.mxu0 0
      %1525 = vmatprep.subr.bf16.mxu0 0
      %1526 = vmatpush1.bf16.msra.mxu0 0
      %1527 = vmatprep.subr.bf16.mxu0 0
      %1528 = vmatpush1.bf16.msra.mxu0 0
      %1529 = vmatprep.subr.bf16.mxu0 0
      %1530 = vmatpush1.bf16.msra.mxu0 0
      %1531 = vmatprep.subr.bf16.mxu0 0
      %1532 = vmatpush1.bf16.msra.mxu0 0
      %1533 = vmatprep.subr.bf16.mxu0 0
      %1534 = vmatpush1.bf16.msra.mxu0 0
      %1535 = vmatprep.subr.bf16.mxu0 0
      %1536 = vmatpush1.bf16.msra.mxu0 0
      %1537 = vmatprep.subr.bf16.mxu0 0
      %1538 = vmatpush1.bf16.msra.mxu0 0
      %1539 = vmatprep.subr.bf16.mxu0 0
      %1540 = vmatpush1.bf16.msra.mxu0 0
      %1541 = vmatprep.subr.bf16.mxu0 0
      %1542 = vmatpush1.bf16.msra.mxu0 0
      %1543 = vmatprep.subr.bf16.mxu0 0
      %1544 = vmatpush1.bf16.msra.mxu0 0
      %1545 = vmatprep.subr.bf16.mxu0 0
      %1546 = vmatpush1.bf16.msra.mxu0 0
      %1547 = vmatprep.subr.bf16.mxu0 0
      %1548 = vmatpush1.bf16.msra.mxu0 0
      %1549 = vmatprep.subr.bf16.mxu0 0
      %1550 = vmatpush1.bf16.msra.mxu0 0
      %1551 = vmatprep.subr.bf16.mxu0 0
      %1552 = vmatpush1.bf16.msra.mxu0 0
      %1553 = vmatprep.mubr.bf16.mxu0 0
      %1554 = vmatmul.mubr.bf16.gmra.mrb[0].mxu0 %v1519
      %v1555 = vpop.f32.mrb[0].mxu0
      %v1556 = vadd.f32 0.0, %v1555
      %v1557 = vpop.f32.mrb[0].mxu0
      %v1558 = vpop.f32.mrb[0].mxu0
      %v1559 = vadd.f32 0.0, %v1558
      %v1560 = vpop.f32.mrb[0].mxu0
      %1561 = vdwg.mxu0
      %v1564 = vunpack.c.l.b16 %v1499
      %v1565 = vunpack.c.l.b16 %v1500
      %v1566 = vpack.c.b16 %v1565, %v1564
      %v1569 = vunpack.c.l.b16 %v1501
      %v1570 = vunpack.c.l.b16 %v1502
      %v1571 = vpack.c.b16 %v1570, %v1569
      %v1574 = vsel %vm313, %v1566, 0
      %1576 = vmatprep.subr.bf16.mxu0 0
      %1577 = vmatpush1.bf16.msra.mxu0 %v1571
      %1578 = vmatprep.subr.bf16.mxu0 0
      %1579 = vmatpush1.bf16.msra.mxu0 0
      %1580 = vmatprep.subr.bf16.mxu0 0
      %1581 = vmatpush1.bf16.msra.mxu0 0
      %1582 = vmatprep.subr.bf16.mxu0 0
      %1583 = vmatpush1.bf16.msra.mxu0 0
      %1584 = vmatprep.subr.bf16.mxu0 0
      %1585 = vmatpush1.bf16.msra.mxu0 0
      %1586 = vmatprep.subr.bf16.mxu0 0
      %1587 = vmatpush1.bf16.msra.mxu0 0
      %1588 = vmatprep.subr.bf16.mxu0 0
      %1589 = vmatpush1.bf16.msra.mxu0 0
      %1590 = vmatprep.subr.bf16.mxu0 0
      %1591 = vmatpush1.bf16.msra.mxu0 0
      %1592 = vmatprep.subr.bf16.mxu0 0
      %1593 = vmatpush1.bf16.msra.mxu0 0
      %1594 = vmatprep.subr.bf16.mxu0 0
      %1595 = vmatpush1.bf16.msra.mxu0 0
      %1596 = vmatprep.subr.bf16.mxu0 0
      %1597 = vmatpush1.bf16.msra.mxu0 0
      %1598 = vmatprep.subr.bf16.mxu0 0
      %1599 = vmatpush1.bf16.msra.mxu0 0
      %1600 = vmatprep.subr.bf16.mxu0 0
      %1601 = vmatpush1.bf16.msra.mxu0 0
      %1602 = vmatprep.subr.bf16.mxu0 0
      %1603 = vmatpush1.bf16.msra.mxu0 0
      %1604 = vmatprep.subr.bf16.mxu0 0
      %1605 = vmatpush1.bf16.msra.mxu0 0
      %1606 = vmatprep.subr.bf16.mxu0 0
      %1607 = vmatpush1.bf16.msra.mxu0 0
      %1608 = vmatprep.mubr.bf16.mxu0 0
      %1609 = vmatmul.mubr.bf16.gmra.mrb[0].mxu0 %v1574
      %v1610 = vpop.f32.mrb[0].mxu0
      %v1611 = vadd.f32 %v1556, %v1610
      %v1612 = vpop.f32.mrb[0].mxu0
      %v1613 = vpop.f32.mrb[0].mxu0
      %v1614 = vadd.f32 %v1559, %v1613
      %v1615 = vpop.f32.mrb[0].mxu0
      %1616 = vdwg.mxu0
      %s1617 = scalar_lea.vmem %s273, 32
      %v1618 = vld [vmem:[%s1617] sm:$0xf]
      %v1619 = vld [vmem:[%s1617 + $0x4] sm:$0x3]
      %v1620 = vld [vmem:[%s416] sm:$0xf]
      %v1621 = vld [vmem:[%s416 + $0x4] sm:$0xf]
      %v1624 = vunpack.c.l.b16 %v1618
      %v1625 = vunpack.c.l.b16 %v1619
      %v1626 = vpack.c.b16 %v1625, %v1624
      %v1629 = vunpack.c.l.b16 %v1620
      %v1630 = vunpack.c.l.b16 %v1621
      %v1631 = vpack.c.b16 %v1630, %v1629
      %v1634 = vsel %vm313, %v1626, 0
      %1636 = vmatprep.subr.bf16.mxu0 0
      %1637 = vmatpush1.bf16.msra.mxu0 %v1631
      %1638 = vmatprep.subr.bf16.mxu0 0
      %1639 = vmatpush1.bf16.msra.mxu0 0
      %1640 = vmatprep.subr.bf16.mxu0 0
      %1641 = vmatpush1.bf16.msra.mxu0 0
      %1642 = vmatprep.subr.bf16.mxu0 0
      %1643 = vmatpush1.bf16.msra.mxu0 0
      %1644 = vmatprep.subr.bf16.mxu0 0
      %1645 = vmatpush1.bf16.msra.mxu0 0
      %1646 = vmatprep.subr.bf16.mxu0 0
      %1647 = vmatpush1.bf16.msra.mxu0 0
      %1648 = vmatprep.subr.bf16.mxu0 0
      %1649 = vmatpush1.bf16.msra.mxu0 0
      %1650 = vmatprep.subr.bf16.mxu0 0
      %1651 = vmatpush1.bf16.msra.mxu0 0
      %1652 = vmatprep.subr.bf16.mxu0 0
      %1653 = vmatpush1.bf16.msra.mxu0 0
      %1654 = vmatprep.subr.bf16.mxu0 0
      %1655 = vmatpush1.bf16.msra.mxu0 0
      %1656 = vmatprep.subr.bf16.mxu0 0
      %1657 = vmatpush1.bf16.msra.mxu0 0
      %1658 = vmatprep.subr.bf16.mxu0 0
      %1659 = vmatpush1.bf16.msra.mxu0 0
      %1660 = vmatprep.subr.bf16.mxu0 0
      %1661 = vmatpush1.bf16.msra.mxu0 0
      %1662 = vmatprep.subr.bf16.mxu0 0
      %1663 = vmatpush1.bf16.msra.mxu0 0
      %1664 = vmatprep.subr.bf16.mxu0 0
      %1665 = vmatpush1.bf16.msra.mxu0 0
      %1666 = vmatprep.subr.bf16.mxu0 0
      %1667 = vmatpush1.bf16.msra.mxu0 0
      %1668 = vmatprep.mubr.bf16.mxu0 0
      %1669 = vmatmul.mubr.bf16.gmra.mrb[0].mxu0 %v1634
      %v1670 = vpop.f32.mrb[0].mxu0
      %v1671 = vadd.f32 0.0, %v1670
      %v1672 = vpop.f32.mrb[0].mxu0
      %v1673 = vpop.f32.mrb[0].mxu0
      %v1674 = vadd.f32 0.0, %v1673
      %v1675 = vpop.f32.mrb[0].mxu0
      %1676 = vdwg.mxu0
      %v1677 = vadd.f32 %v1611, %v1671
      %v1678 = vadd.f32 %v1614, %v1674
      %v1679 = vld [vmem:[%s413 + $0x4] sm:$0x7]
      %v1680 = vld [vmem:[%s477] sm:$0xf]
      %v1681 = vld [vmem:[%s477 + $0x4] sm:$0xf]
      %v1683 = vunpack.c.l.b16 %v1679
      %v1684 = vpack.c.b16 %v1683, %v1564
      %v1686 = vshrl.u32 %v1684, 16
      %v1688 = vshll.u32 %v1684, 16
      %v1690 = vrot.slane %v1688, 1
      %v1691 = vor.u32 %v1686, %v1690
      %v1694 = vunpack.c.l.b16 %v1680
      %v1695 = vunpack.c.l.b16 %v1681
      %v1696 = vpack.c.b16 %v1695, %v1694
      %v1699 = vsel %vm313, %v1691, 0
      %1701 = vmatprep.subr.bf16.mxu0 0
      %1702 = vmatpush1.bf16.msra.mxu0 %v1696
      %1703 = vmatprep.subr.bf16.mxu0 0
      %1704 = vmatpush1.bf16.msra.mxu0 0
      %1705 = vmatprep.subr.bf16.mxu0 0
      %1706 = vmatpush1.bf16.msra.mxu0 0
      %1707 = vmatprep.subr.bf16.mxu0 0
      %1708 = vmatpush1.bf16.msra.mxu0 0
      %1709 = vmatprep.subr.bf16.mxu0 0
      %1710 = vmatpush1.bf16.msra.mxu0 0
      %1711 = vmatprep.subr.bf16.mxu0 0
      %1712 = vmatpush1.bf16.msra.mxu0 0
      %1713 = vmatprep.subr.bf16.mxu0 0
      %1714 = vmatpush1.bf16.msra.mxu0 0
      %1715 = vmatprep.subr.bf16.mxu0 0
      %1716 = vmatpush1.bf16.msra.mxu0 0
      %1717 = vmatprep.subr.bf16.mxu0 0
      %1718 = vmatpush1.bf16.msra.mxu0 0
      %1719 = vmatprep.subr.bf16.mxu0 0
      %1720 = vmatpush1.bf16.msra.mxu0 0
      %1721 = vmatprep.subr.bf16.mxu0 0
      %1722 = vmatpush1.bf16.msra.mxu0 0
      %1723 = vmatprep.subr.bf16.mxu0 0
      %1724 = vmatpush1.bf16.msra.mxu0 0
      %1725 = vmatprep.subr.bf16.mxu0 0
      %1726 = vmatpush1.bf16.msra.mxu0 0
      %1727 = vmatprep.subr.bf16.mxu0 0
      %1728 = vmatpush1.bf16.msra.mxu0 0
      %1729 = vmatprep.subr.bf16.mxu0 0
      %1730 = vmatpush1.bf16.msra.mxu0 0
      %1731 = vmatprep.subr.bf16.mxu0 0
      %1732 = vmatpush1.bf16.msra.mxu0 0
      %1733 = vmatprep.mubr.bf16.mxu0 0
      %1734 = vmatmul.mubr.bf16.gmra.mrb[0].mxu0 %v1699
      %v1735 = vpop.f32.mrb[0].mxu0
      %v1736 = vadd.f32 0.0, %v1735
      %v1737 = vpop.f32.mrb[0].mxu0
      %v1738 = vpop.f32.mrb[0].mxu0
      %v1739 = vadd.f32 0.0, %v1738
      %v1740 = vpop.f32.mrb[0].mxu0
      %1741 = vdwg.mxu0
      %v1742 = vadd.f32 %v1677, %v1736
      %v1743 = vadd.f32 %v1678, %v1739
      %v1744 = vld [vmem:[%s1023 + $0x4] sm:$0x7]
      %v1745 = vld [vmem:[%s543] sm:$0xf]
      %v1746 = vld [vmem:[%s543 + $0x4] sm:$0xf]
      %v1748 = vunpack.c.l.b16 %v1744
      %v1749 = vpack.c.b16 %v1748, %v1509
      %v1751 = vshrl.u32 %v1749, 16
      %v1753 = vshll.u32 %v1749, 16
      %v1755 = vrot.slane %v1753, 1
      %v1756 = vor.u32 %v1751, %v1755
      %v1759 = vunpack.c.l.b16 %v1745
      %v1760 = vunpack.c.l.b16 %v1746
      %v1761 = vpack.c.b16 %v1760, %v1759
      %v1764 = vsel %vm313, %v1756, 0
      %1766 = vmatprep.subr.bf16.mxu0 0
      %1767 = vmatpush1.bf16.msra.mxu0 %v1761
      %1768 = vmatprep.subr.bf16.mxu0 0
      %1769 = vmatpush1.bf16.msra.mxu0 0
      %1770 = vmatprep.subr.bf16.mxu0 0
      %1771 = vmatpush1.bf16.msra.mxu0 0
      %1772 = vmatprep.subr.bf16.mxu0 0
      %1773 = vmatpush1.bf16.msra.mxu0 0
      %1774 = vmatprep.subr.bf16.mxu0 0
      %1775 = vmatpush1.bf16.msra.mxu0 0
      %1776 = vmatprep.subr.bf16.mxu0 0
      %1777 = vmatpush1.bf16.msra.mxu0 0
      %1778 = vmatprep.subr.bf16.mxu0 0
      %1779 = vmatpush1.bf16.msra.mxu0 0
      %1780 = vmatprep.subr.bf16.mxu0 0
      %1781 = vmatpush1.bf16.msra.mxu0 0
      %1782 = vmatprep.subr.bf16.mxu0 0
      %1783 = vmatpush1.bf16.msra.mxu0 0
      %1784 = vmatprep.subr.bf16.mxu0 0
      %1785 = vmatpush1.bf16.msra.mxu0 0
      %1786 = vmatprep.subr.bf16.mxu0 0
      %1787 = vmatpush1.bf16.msra.mxu0 0
      %1788 = vmatprep.subr.bf16.mxu0 0
      %1789 = vmatpush1.bf16.msra.mxu0 0
      %1790 = vmatprep.subr.bf16.mxu0 0
      %1791 = vmatpush1.bf16.msra.mxu0 0
      %1792 = vmatprep.subr.bf16.mxu0 0
      %1793 = vmatpush1.bf16.msra.mxu0 0
      %1794 = vmatprep.subr.bf16.mxu0 0
      %1795 = vmatpush1.bf16.msra.mxu0 0
      %1796 = vmatprep.subr.bf16.mxu0 0
      %1797 = vmatpush1.bf16.msra.mxu0 0
      %1798 = vmatprep.mubr.bf16.mxu0 0
      %1799 = vmatmul.mubr.bf16.gmra.mrb[0].mxu0 %v1764
      %v1800 = vpop.f32.mrb[0].mxu0
      %v1801 = vadd.f32 0.0, %v1800
      %v1802 = vpop.f32.mrb[0].mxu0
      %v1803 = vpop.f32.mrb[0].mxu0
      %v1804 = vadd.f32 0.0, %v1803
      %v1805 = vpop.f32.mrb[0].mxu0
      %1806 = vdwg.mxu0
      %v1807 = vadd.f32 %v1742, %v1801
      %v1808 = vadd.f32 %v1743, %v1804
      %v1809 = vld [vmem:[%s1617 + $0x4] sm:$0x7]
      %v1810 = vld [vmem:[%s609] sm:$0xf]
      %v1811 = vld [vmem:[%s609 + $0x4] sm:$0xf]
      %v1813 = vunpack.c.l.b16 %v1809
      %v1814 = vpack.c.b16 %v1813, %v1624
      %v1816 = vshrl.u32 %v1814, 16
      %v1818 = vshll.u32 %v1814, 16
      %v1820 = vrot.slane %v1818, 1
      %v1821 = vor.u32 %v1816, %v1820
      %v1824 = vunpack.c.l.b16 %v1810
      %v1825 = vunpack.c.l.b16 %v1811
      %v1826 = vpack.c.b16 %v1825, %v1824
      %v1829 = vsel %vm313, %v1821, 0
      %1831 = vmatprep.subr.bf16.mxu0 0
      %1832 = vmatpush1.bf16.msra.mxu0 %v1826
      %1833 = vmatprep.subr.bf16.mxu0 0
      %1834 = vmatpush1.bf16.msra.mxu0 0
      %1835 = vmatprep.subr.bf16.mxu0 0
      %1836 = vmatpush1.bf16.msra.mxu0 0
      %1837 = vmatprep.subr.bf16.mxu0 0
      %1838 = vmatpush1.bf16.msra.mxu0 0
      %1839 = vmatprep.subr.bf16.mxu0 0
      %1840 = vmatpush1.bf16.msra.mxu0 0
      %1841 = vmatprep.subr.bf16.mxu0 0
      %1842 = vmatpush1.bf16.msra.mxu0 0
      %1843 = vmatprep.subr.bf16.mxu0 0
      %1844 = vmatpush1.bf16.msra.mxu0 0
      %1845 = vmatprep.subr.bf16.mxu0 0
      %1846 = vmatpush1.bf16.msra.mxu0 0
      %1847 = vmatprep.subr.bf16.mxu0 0
      %1848 = vmatpush1.bf16.msra.mxu0 0
      %1849 = vmatprep.subr.bf16.mxu0 0
      %1850 = vmatpush1.bf16.msra.mxu0 0
      %1851 = vmatprep.subr.bf16.mxu0 0
      %1852 = vmatpush1.bf16.msra.mxu0 0
      %1853 = vmatprep.subr.bf16.mxu0 0
      %1854 = vmatpush1.bf16.msra.mxu0 0
      %1855 = vmatprep.subr.bf16.mxu0 0
      %1856 = vmatpush1.bf16.msra.mxu0 0
      %1857 = vmatprep.subr.bf16.mxu0 0
      %1858 = vmatpush1.bf16.msra.mxu0 0
      %1859 = vmatprep.subr.bf16.mxu0 0
      %1860 = vmatpush1.bf16.msra.mxu0 0
      %1861 = vmatprep.subr.bf16.mxu0 0
      %1862 = vmatpush1.bf16.msra.mxu0 0
      %1863 = vmatprep.mubr.bf16.mxu0 0
      %1864 = vmatmul.mubr.bf16.gmra.mrb[0].mxu0 %v1829
      %v1865 = vpop.f32.mrb[0].mxu0
      %v1866 = vadd.f32 0.0, %v1865
      %v1867 = vpop.f32.mrb[0].mxu0
      %v1868 = vpop.f32.mrb[0].mxu0
      %v1869 = vadd.f32 0.0, %v1868
      %v1870 = vpop.f32.mrb[0].mxu0
      %1871 = vdwg.mxu0
      %v1872 = vadd.f32 %v1807, %v1866
      %v1873 = vadd.f32 %v1808, %v1869
      %v1874 = vld [vmem:[%s413] sm:$0xe]
      %v1875 = vld [vmem:[%s675] sm:$0xf]
      %v1876 = vld [vmem:[%s675 + $0x4] sm:$0xf]
      %v1878 = vunpack.c.l.b16 %v1874
      %v1879 = vpack.c.b16 %v1683, %v1878
      %v1880 = vrot.slane %v1879, 1
      %v1883 = vunpack.c.l.b16 %v1875
      %v1884 = vunpack.c.l.b16 %v1876
      %v1885 = vpack.c.b16 %v1884, %v1883
      %v1888 = vsel %vm313, %v1880, 0
      %1890 = vmatprep.subr.bf16.mxu0 0
      %1891 = vmatpush1.bf16.msra.mxu0 %v1885
      %1892 = vmatprep.subr.bf16.mxu0 0
      %1893 = vmatpush1.bf16.msra.mxu0 0
      %1894 = vmatprep.subr.bf16.mxu0 0
      %1895 = vmatpush1.bf16.msra.mxu0 0
      %1896 = vmatprep.subr.bf16.mxu0 0
      %1897 = vmatpush1.bf16.msra.mxu0 0
      %1898 = vmatprep.subr.bf16.mxu0 0
      %1899 = vmatpush1.bf16.msra.mxu0 0
      %1900 = vmatprep.subr.bf16.mxu0 0
      %1901 = vmatpush1.bf16.msra.mxu0 0
      %1902 = vmatprep.subr.bf16.mxu0 0
      %1903 = vmatpush1.bf16.msra.mxu0 0
      %1904 = vmatprep.subr.bf16.mxu0 0
      %1905 = vmatpush1.bf16.msra.mxu0 0
      %1906 = vmatprep.subr.bf16.mxu0 0
      %1907 = vmatpush1.bf16.msra.mxu0 0
      %1908 = vmatprep.subr.bf16.mxu0 0
      %1909 = vmatpush1.bf16.msra.mxu0 0
      %1910 = vmatprep.subr.bf16.mxu0 0
      %1911 = vmatpush1.bf16.msra.mxu0 0
      %1912 = vmatprep.subr.bf16.mxu0 0
      %1913 = vmatpush1.bf16.msra.mxu0 0
      %1914 = vmatprep.subr.bf16.mxu0 0
      %1915 = vmatpush1.bf16.msra.mxu0 0
      %1916 = vmatprep.subr.bf16.mxu0 0
      %1917 = vmatpush1.bf16.msra.mxu0 0
      %1918 = vmatprep.subr.bf16.mxu0 0
      %1919 = vmatpush1.bf16.msra.mxu0 0
      %1920 = vmatprep.subr.bf16.mxu0 0
      %1921 = vmatpush1.bf16.msra.mxu0 0
      %1922 = vmatprep.mubr.bf16.mxu0 0
      %1923 = vmatmul.mubr.bf16.gmra.mrb[0].mxu0 %v1888
      %v1924 = vpop.f32.mrb[0].mxu0
      %v1925 = vadd.f32 0.0, %v1924
      %v1926 = vpop.f32.mrb[0].mxu0
      %v1927 = vpop.f32.mrb[0].mxu0
      %v1928 = vadd.f32 0.0, %v1927
      %v1929 = vpop.f32.mrb[0].mxu0
      %1930 = vdwg.mxu0
      %v1931 = vadd.f32 %v1872, %v1925
      %v1932 = vadd.f32 %v1873, %v1928
      %v1933 = vld [vmem:[%s1023] sm:$0xe]
      %v1934 = vld [vmem:[%s735] sm:$0xf]
      %v1935 = vld [vmem:[%s735 + $0x4] sm:$0xf]
      %v1937 = vunpack.c.l.b16 %v1933
      %v1938 = vpack.c.b16 %v1748, %v1937
      %v1939 = vrot.slane %v1938, 1
      %v1942 = vunpack.c.l.b16 %v1934
      %v1943 = vunpack.c.l.b16 %v1935
      %v1944 = vpack.c.b16 %v1943, %v1942
      %v1947 = vsel %vm313, %v1939, 0
      %1949 = vmatprep.subr.bf16.mxu0 0
      %1950 = vmatpush1.bf16.msra.mxu0 %v1944
      %1951 = vmatprep.subr.bf16.mxu0 0
      %1952 = vmatpush1.bf16.msra.mxu0 0
      %1953 = vmatprep.subr.bf16.mxu0 0
      %1954 = vmatpush1.bf16.msra.mxu0 0
      %1955 = vmatprep.subr.bf16.mxu0 0
      %1956 = vmatpush1.bf16.msra.mxu0 0
      %1957 = vmatprep.subr.bf16.mxu0 0
      %1958 = vmatpush1.bf16.msra.mxu0 0
      %1959 = vmatprep.subr.bf16.mxu0 0
      %1960 = vmatpush1.bf16.msra.mxu0 0
      %1961 = vmatprep.subr.bf16.mxu0 0
      %1962 = vmatpush1.bf16.msra.mxu0 0
      %1963 = vmatprep.subr.bf16.mxu0 0
      %1964 = vmatpush1.bf16.msra.mxu0 0
      %1965 = vmatprep.subr.bf16.mxu0 0
      %1966 = vmatpush1.bf16.msra.mxu0 0
      %1967 = vmatprep.subr.bf16.mxu0 0
      %1968 = vmatpush1.bf16.msra.mxu0 0
      %1969 = vmatprep.subr.bf16.mxu0 0
      %1970 = vmatpush1.bf16.msra.mxu0 0
      %1971 = vmatprep.subr.bf16.mxu0 0
      %1972 = vmatpush1.bf16.msra.mxu0 0
      %1973 = vmatprep.subr.bf16.mxu0 0
      %1974 = vmatpush1.bf16.msra.mxu0 0
      %1975 = vmatprep.subr.bf16.mxu0 0
      %1976 = vmatpush1.bf16.msra.mxu0 0
      %1977 = vmatprep.subr.bf16.mxu0 0
      %1978 = vmatpush1.bf16.msra.mxu0 0
      %1979 = vmatprep.subr.bf16.mxu0 0
      %1980 = vmatpush1.bf16.msra.mxu0 0
      %1981 = vmatprep.mubr.bf16.mxu0 0
      %1982 = vmatmul.mubr.bf16.gmra.mrb[0].mxu0 %v1947
      %v1983 = vpop.f32.mrb[0].mxu0
      %v1984 = vadd.f32 0.0, %v1983
      %v1985 = vpop.f32.mrb[0].mxu0
      %v1986 = vpop.f32.mrb[0].mxu0
      %v1987 = vadd.f32 0.0, %v1986
      %v1988 = vpop.f32.mrb[0].mxu0
      %1989 = vdwg.mxu0
      %v1990 = vadd.f32 %v1931, %v1984
      %v1991 = vadd.f32 %v1932, %v1987
      %v1992 = vld [vmem:[%s1617] sm:$0xe]
      %v1993 = vld [vmem:[%s795] sm:$0xf]
      %v1994 = vld [vmem:[%s795 + $0x4] sm:$0xf]
      %v1996 = vunpack.c.l.b16 %v1992
      %v1997 = vpack.c.b16 %v1813, %v1996
      %v1998 = vrot.slane %v1997, 1
      %v2001 = vunpack.c.l.b16 %v1993
      %v2002 = vunpack.c.l.b16 %v1994
      %v2003 = vpack.c.b16 %v2002, %v2001
      %v2006 = vsel %vm313, %v1998, 0
      %2008 = vmatprep.subr.bf16.mxu0 0
      %2009 = vmatpush1.bf16.msra.mxu0 %v2003
      %2010 = vmatprep.subr.bf16.mxu0 0
      %2011 = vmatpush1.bf16.msra.mxu0 0
      %2012 = vmatprep.subr.bf16.mxu0 0
      %2013 = vmatpush1.bf16.msra.mxu0 0
      %2014 = vmatprep.subr.bf16.mxu0 0
      %2015 = vmatpush1.bf16.msra.mxu0 0
      %2016 = vmatprep.subr.bf16.mxu0 0
      %2017 = vmatpush1.bf16.msra.mxu0 0
      %2018 = vmatprep.subr.bf16.mxu0 0
      %2019 = vmatpush1.bf16.msra.mxu0 0
      %2020 = vmatprep.subr.bf16.mxu0 0
      %2021 = vmatpush1.bf16.msra.mxu0 0
      %2022 = vmatprep.subr.bf16.mxu0 0
      %2023 = vmatpush1.bf16.msra.mxu0 0
      %2024 = vmatprep.subr.bf16.mxu0 0
      %2025 = vmatpush1.bf16.msra.mxu0 0
      %2026 = vmatprep.subr.bf16.mxu0 0
      %2027 = vmatpush1.bf16.msra.mxu0 0
      %2028 = vmatprep.subr.bf16.mxu0 0
      %2029 = vmatpush1.bf16.msra.mxu0 0
      %2030 = vmatprep.subr.bf16.mxu0 0
      %2031 = vmatpush1.bf16.msra.mxu0 0
      %2032 = vmatprep.subr.bf16.mxu0 0
      %2033 = vmatpush1.bf16.msra.mxu0 0
      %2034 = vmatprep.subr.bf16.mxu0 0
      %2035 = vmatpush1.bf16.msra.mxu0 0
      %2036 = vmatprep.subr.bf16.mxu0 0
      %2037 = vmatpush1.bf16.msra.mxu0 0
      %2038 = vmatprep.subr.bf16.mxu0 0
      %2039 = vmatpush1.bf16.msra.mxu0 0
      %2040 = vmatprep.mubr.bf16.mxu0 0
      %2041 = vmatmul.mubr.bf16.gmra.mrb[0].mxu0 %v2006
      %v2042 = vpop.f32.mrb[0].mxu0
      %v2043 = vadd.f32 0.0, %v2042
      %v2044 = vpop.f32.mrb[0].mxu0
      %v2045 = vpop.f32.mrb[0].mxu0
      %v2046 = vadd.f32 0.0, %v2045
      %v2047 = vpop.f32.mrb[0].mxu0
      %2048 = vdwg.mxu0
      %v2049 = vadd.f32 %v1990, %v2043
      %v2050 = vadd.f32 %v1991, %v2046
      %v2051 = vld [vmem:[%s2] sm:$0x1]
      %v2053 = vlaneseq
      %v2054 = vshrl.u32 %v2053, 7
      %v2055 = vsub.s32 0, %v2054
      %v2056 = vrot.slane %v2051, %v2055
      %v2058 = vadd.f32 %v2049, %v2056
      %v2059 = vadd.f32 %v2050, %v2056
      %v2060 = vmax.f32 %v2058, 0.0
      %v2061 = vmax.f32 %v2059, 0.0
      %v2062 = vpack.c.bf16 %v2061, %v2060
      %v2064 = vunpack.c.l.b16 %v2062
      %v2065 = vunpack.c.h.b16 %v2062
      %v2066 = vpack.c.b16 %v2064, %v2064
      %v2067 = vpack.c.b16 %v2065, %v2065
      %v2069 = vshrl.u32 %v2066, 16
      %v2071 = vrot.slane %v2069, 7
      %v2072 = vshll.u32 %v2066, 16
      %v2074 = vor.u32 %v2071, %v2072
      %v2075 = vrot.slane %v2071, 4
      %v2077 = vshrl.u32 %v2067, 16
      %v2079 = vrot.slane %v2077, 7
      %v2080 = vshll.u32 %v2067, 16
      %v2082 = vor.u32 %v2079, %v2080
      %v2083 = vsel %vm873, %v2075, %v2082
      %s2086 = scalar_lea.vmem [#allocation2], 24
      %v2087 = vld [vmem:[%s2086] sm:$0xf]
      %v2088 = vsel %vm895, %v2074, %v2087
      %2089 = vst [vmem:[%s2086] sm:$0xf] %v2088
      %v2090 = vld [vmem:[%s2086 + $0x4] sm:$0x7]
      %v2091 = vsel %vm901, %v2083, %v2090
      %2092 = vst [vmem:[%s2086 + $0x4] sm:$0x7] %v2091
      %v2093 = vld [vmem:[#allocation2] sm:$0xf]
      %v2094 = vld [vmem:[#allocation2 + $0x4] sm:$0x3]
      %v2095 = vld [vmem:[%s3] sm:$0xf]
      %v2096 = vld [vmem:[%s3 + $0x4] sm:$0xf]
      %v2097 = vld [vmem:[%s892] sm:$0xf]
      %v2098 = vld [vmem:[%s892 + $0x4] sm:$0x3]
      %s2099 = scalar_lea.vmem %s3, 8
      %v2100 = vld [vmem:[%s2099] sm:$0xf]
      %v2101 = vld [vmem:[%s2099 + $0x4] sm:$0xf]
      %v2104 = vunpack.c.l.b16 %v2097
      %v2105 = vunpack.c.l.b16 %v2098
      %v2106 = vpack.c.b16 %v2105, %v2104
      %v2109 = vunpack.c.l.b16 %v2100
      %v2110 = vunpack.c.l.b16 %v2101
      %v2111 = vpack.c.b16 %v2110, %v2109
      %v2114 = vsel %vm313, %v2106, 0
      %2116 = vmatprep.subr.bf16.mxu0 0
      %2117 = vmatpush1.bf16.msra.mxu0 %v2111
      %2118 = vmatprep.subr.bf16.mxu0 0
      %2119 = vmatpush1.bf16.msra.mxu0 0
      %2120 = vmatprep.subr.bf16.mxu0 0
      %2121 = vmatpush1.bf16.msra.mxu0 0
      %2122 = vmatprep.subr.bf16.mxu0 0
      %2123 = vmatpush1.bf16.msra.mxu0 0
      %2124 = vmatprep.subr.bf16.mxu0 0
      %2125 = vmatpush1.bf16.msra.mxu0 0
      %2126 = vmatprep.subr.bf16.mxu0 0
      %2127 = vmatpush1.bf16.msra.mxu0 0
      %2128 = vmatprep.subr.bf16.mxu0 0
      %2129 = vmatpush1.bf16.msra.mxu0 0
      %2130 = vmatprep.subr.bf16.mxu0 0
      %2131 = vmatpush1.bf16.msra.mxu0 0
      %2132 = vmatprep.subr.bf16.mxu0 0
      %2133 = vmatpush1.bf16.msra.mxu0 0
      %2134 = vmatprep.subr.bf16.mxu0 0
      %2135 = vmatpush1.bf16.msra.mxu0 0
      %2136 = vmatprep.subr.bf16.mxu0 0
      %2137 = vmatpush1.bf16.msra.mxu0 0
      %2138 = vmatprep.subr.bf16.mxu0 0
      %2139 = vmatpush1.bf16.msra.mxu0 0
      %2140 = vmatprep.subr.bf16.mxu0 0
      %2141 = vmatpush1.bf16.msra.mxu0 0
      %2142 = vmatprep.subr.bf16.mxu0 0
      %2143 = vmatpush1.bf16.msra.mxu0 0
      %2144 = vmatprep.subr.bf16.mxu0 0
      %2145 = vmatpush1.bf16.msra.mxu0 0
      %2146 = vmatprep.subr.bf16.mxu0 0
      %2147 = vmatpush1.bf16.msra.mxu0 0
      %2148 = vmatprep.mubr.bf16.mxu0 0
      %2149 = vmatmul.mubr.bf16.gmra.mrb[0].mxu0 %v2114
      %v2150 = vpop.f32.mrb[0].mxu0
      %v2151 = vadd.f32 0.0, %v2150
      %v2152 = vpop.f32.mrb[0].mxu0
      %v2153 = vpop.f32.mrb[0].mxu0
      %v2154 = vadd.f32 0.0, %v2153
      %v2155 = vpop.f32.mrb[0].mxu0
      %2156 = vdwg.mxu0
      %v2159 = vunpack.c.l.b16 %v2093
      %v2160 = vunpack.c.l.b16 %v2094
      %v2161 = vpack.c.b16 %v2160, %v2159
      %v2164 = vunpack.c.l.b16 %v2095
      %v2165 = vunpack.c.l.b16 %v2096
      %v2166 = vpack.c.b16 %v2165, %v2164
      %v2169 = vsel %vm313, %v2161, 0
      %2171 = vmatprep.subr.bf16.mxu0 0
      %2172 = vmatpush1.bf16.msra.mxu0 %v2166
      %2173 = vmatprep.subr.bf16.mxu0 0
      %2174 = vmatpush1.bf16.msra.mxu0 0
      %2175 = vmatprep.subr.bf16.mxu0 0
      %2176 = vmatpush1.bf16.msra.mxu0 0
      %2177 = vmatprep.subr.bf16.mxu0 0
      %2178 = vmatpush1.bf16.msra.mxu0 0
      %2179 = vmatprep.subr.bf16.mxu0 0
      %2180 = vmatpush1.bf16.msra.mxu0 0
      %2181 = vmatprep.subr.bf16.mxu0 0
      %2182 = vmatpush1.bf16.msra.mxu0 0
      %2183 = vmatprep.subr.bf16.mxu0 0
      %2184 = vmatpush1.bf16.msra.mxu0 0
      %2185 = vmatprep.subr.bf16.mxu0 0
      %2186 = vmatpush1.bf16.msra.mxu0 0
      %2187 = vmatprep.subr.bf16.mxu0 0
      %2188 = vmatpush1.bf16.msra.mxu0 0
      %2189 = vmatprep.subr.bf16.mxu0 0
      %2190 = vmatpush1.bf16.msra.mxu0 0
      %2191 = vmatprep.subr.bf16.mxu0 0
      %2192 = vmatpush1.bf16.msra.mxu0 0
      %2193 = vmatprep.subr.bf16.mxu0 0
      %2194 = vmatpush1.bf16.msra.mxu0 0
      %2195 = vmatprep.subr.bf16.mxu0 0
      %2196 = vmatpush1.bf16.msra.mxu0 0
      %2197 = vmatprep.subr.bf16.mxu0 0
      %2198 = vmatpush1.bf16.msra.mxu0 0
      %2199 = vmatprep.subr.bf16.mxu0 0
      %2200 = vmatpush1.bf16.msra.mxu0 0
      %2201 = vmatprep.subr.bf16.mxu0 0
      %2202 = vmatpush1.bf16.msra.mxu0 0
      %2203 = vmatprep.mubr.bf16.mxu0 0
      %2204 = vmatmul.mubr.bf16.gmra.mrb[0].mxu0 %v2169
      %v2205 = vpop.f32.mrb[0].mxu0
      %v2206 = vadd.f32 %v2151, %v2205
      %v2207 = vpop.f32.mrb[0].mxu0
      %v2208 = vpop.f32.mrb[0].mxu0
      %v2209 = vadd.f32 %v2154, %v2208
      %v2210 = vpop.f32.mrb[0].mxu0
      %2211 = vdwg.mxu0
      %v2212 = vld [vmem:[%s1492] sm:$0xf]
      %v2213 = vld [vmem:[%s1492 + $0x4] sm:$0x3]
      %s2214 = scalar_lea.vmem %s3, 16
      %v2215 = vld [vmem:[%s2214] sm:$0xf]
      %v2216 = vld [vmem:[%s2214 + $0x4] sm:$0xf]
      %v2219 = vunpack.c.l.b16 %v2212
      %v2220 = vunpack.c.l.b16 %v2213
      %v2221 = vpack.c.b16 %v2220, %v2219
      %v2224 = vunpack.c.l.b16 %v2215
      %v2225 = vunpack.c.l.b16 %v2216
      %v2226 = vpack.c.b16 %v2225, %v2224
      %v2229 = vsel %vm313, %v2221, 0
      %2231 = vmatprep.subr.bf16.mxu0 0
      %2232 = vmatpush1.bf16.msra.mxu0 %v2226
      %2233 = vmatprep.subr.bf16.mxu0 0
      %2234 = vmatpush1.bf16.msra.mxu0 0
      %2235 = vmatprep.subr.bf16.mxu0 0
      %2236 = vmatpush1.bf16.msra.mxu0 0
      %2237 = vmatprep.subr.bf16.mxu0 0
      %2238 = vmatpush1.bf16.msra.mxu0 0
      %2239 = vmatprep.subr.bf16.mxu0 0
      %2240 = vmatpush1.bf16.msra.mxu0 0
      %2241 = vmatprep.subr.bf16.mxu0 0
      %2242 = vmatpush1.bf16.msra.mxu0 0
      %2243 = vmatprep.subr.bf16.mxu0 0
      %2244 = vmatpush1.bf16.msra.mxu0 0
      %2245 = vmatprep.subr.bf16.mxu0 0
      %2246 = vmatpush1.bf16.msra.mxu0 0
      %2247 = vmatprep.subr.bf16.mxu0 0
      %2248 = vmatpush1.bf16.msra.mxu0 0
      %2249 = vmatprep.subr.bf16.mxu0 0
      %2250 = vmatpush1.bf16.msra.mxu0 0
      %2251 = vmatprep.subr.bf16.mxu0 0
      %2252 = vmatpush1.bf16.msra.mxu0 0
      %2253 = vmatprep.subr.bf16.mxu0 0
      %2254 = vmatpush1.bf16.msra.mxu0 0
      %2255 = vmatprep.subr.bf16.mxu0 0
      %2256 = vmatpush1.bf16.msra.mxu0 0
      %2257 = vmatprep.subr.bf16.mxu0 0
      %2258 = vmatpush1.bf16.msra.mxu0 0
      %2259 = vmatprep.subr.bf16.mxu0 0
      %2260 = vmatpush1.bf16.msra.mxu0 0
      %2261 = vmatprep.subr.bf16.mxu0 0
      %2262 = vmatpush1.bf16.msra.mxu0 0
      %2263 = vmatprep.mubr.bf16.mxu0 0
      %2264 = vmatmul.mubr.bf16.gmra.mrb[0].mxu0 %v2229
      %v2265 = vpop.f32.mrb[0].mxu0
      %v2266 = vadd.f32 0.0, %v2265
      %v2267 = vpop.f32.mrb[0].mxu0
      %v2268 = vpop.f32.mrb[0].mxu0
      %v2269 = vadd.f32 0.0, %v2268
      %v2270 = vpop.f32.mrb[0].mxu0
      %2271 = vdwg.mxu0
      %v2272 = vadd.f32 %v2206, %v2266
      %v2273 = vadd.f32 %v2209, %v2269
      %v2274 = vld [vmem:[#allocation2 + $0x4] sm:$0x7]
      %s2275 = scalar_lea.vmem %s3, 24
      %v2276 = vld [vmem:[%s2275] sm:$0xf]
      %v2277 = vld [vmem:[%s2275 + $0x4] sm:$0xf]
      %v2279 = vunpack.c.l.b16 %v2274
      %v2280 = vpack.c.b16 %v2279, %v2159
      %v2282 = vshrl.u32 %v2280, 16
      %v2284 = vshll.u32 %v2280, 16
      %v2286 = vrot.slane %v2284, 1
      %v2287 = vor.u32 %v2282, %v2286
      %v2290 = vunpack.c.l.b16 %v2276
      %v2291 = vunpack.c.l.b16 %v2277
      %v2292 = vpack.c.b16 %v2291, %v2290
      %v2295 = vsel %vm313, %v2287, 0
      %2297 = vmatprep.subr.bf16.mxu0 0
      %2298 = vmatpush1.bf16.msra.mxu0 %v2292
      %2299 = vmatprep.subr.bf16.mxu0 0
      %2300 = vmatpush1.bf16.msra.mxu0 0
      %2301 = vmatprep.subr.bf16.mxu0 0
      %2302 = vmatpush1.bf16.msra.mxu0 0
      %2303 = vmatprep.subr.bf16.mxu0 0
      %2304 = vmatpush1.bf16.msra.mxu0 0
      %2305 = vmatprep.subr.bf16.mxu0 0
      %2306 = vmatpush1.bf16.msra.mxu0 0
      %2307 = vmatprep.subr.bf16.mxu0 0
      %2308 = vmatpush1.bf16.msra.mxu0 0
      %2309 = vmatprep.subr.bf16.mxu0 0
      %2310 = vmatpush1.bf16.msra.mxu0 0
      %2311 = vmatprep.subr.bf16.mxu0 0
      %2312 = vmatpush1.bf16.msra.mxu0 0
      %2313 = vmatprep.subr.bf16.mxu0 0
      %2314 = vmatpush1.bf16.msra.mxu0 0
      %2315 = vmatprep.subr.bf16.mxu0 0
      %2316 = vmatpush1.bf16.msra.mxu0 0
      %2317 = vmatprep.subr.bf16.mxu0 0
      %2318 = vmatpush1.bf16.msra.mxu0 0
      %2319 = vmatprep.subr.bf16.mxu0 0
      %2320 = vmatpush1.bf16.msra.mxu0 0
      %2321 = vmatprep.subr.bf16.mxu0 0
      %2322 = vmatpush1.bf16.msra.mxu0 0
      %2323 = vmatprep.subr.bf16.mxu0 0
      %2324 = vmatpush1.bf16.msra.mxu0 0
      %2325 = vmatprep.subr.bf16.mxu0 0
      %2326 = vmatpush1.bf16.msra.mxu0 0
      %2327 = vmatprep.subr.bf16.mxu0 0
      %2328 = vmatpush1.bf16.msra.mxu0 0
      %2329 = vmatprep.mubr.bf16.mxu0 0
      %2330 = vmatmul.mubr.bf16.gmra.mrb[0].mxu0 %v2295
      %v2331 = vpop.f32.mrb[0].mxu0
      %v2332 = vadd.f32 0.0, %v2331
      %v2333 = vpop.f32.mrb[0].mxu0
      %v2334 = vpop.f32.mrb[0].mxu0
      %v2335 = vadd.f32 0.0, %v2334
      %v2336 = vpop.f32.mrb[0].mxu0
      %2337 = vdwg.mxu0
      %v2338 = vadd.f32 %v2272, %v2332
      %v2339 = vadd.f32 %v2273, %v2335
      %v2340 = vld [vmem:[%s892 + $0x4] sm:$0x7]
      %s2341 = scalar_lea.vmem %s3, 32
      %v2342 = vld [vmem:[%s2341] sm:$0xf]
      %v2343 = vld [vmem:[%s2341 + $0x4] sm:$0xf]
      %v2345 = vunpack.c.l.b16 %v2340
      %v2346 = vpack.c.b16 %v2345, %v2104
      %v2348 = vshrl.u32 %v2346, 16
      %v2350 = vshll.u32 %v2346, 16
      %v2352 = vrot.slane %v2350, 1
      %v2353 = vor.u32 %v2348, %v2352
      %v2356 = vunpack.c.l.b16 %v2342
      %v2357 = vunpack.c.l.b16 %v2343
      %v2358 = vpack.c.b16 %v2357, %v2356
      %v2361 = vsel %vm313, %v2353, 0
      %2363 = vmatprep.subr.bf16.mxu0 0
      %2364 = vmatpush1.bf16.msra.mxu0 %v2358
      %2365 = vmatprep.subr.bf16.mxu0 0
      %2366 = vmatpush1.bf16.msra.mxu0 0
      %2367 = vmatprep.subr.bf16.mxu0 0
      %2368 = vmatpush1.bf16.msra.mxu0 0
      %2369 = vmatprep.subr.bf16.mxu0 0
      %2370 = vmatpush1.bf16.msra.mxu0 0
      %2371 = vmatprep.subr.bf16.mxu0 0
      %2372 = vmatpush1.bf16.msra.mxu0 0
      %2373 = vmatprep.subr.bf16.mxu0 0
      %2374 = vmatpush1.bf16.msra.mxu0 0
      %2375 = vmatprep.subr.bf16.mxu0 0
      %2376 = vmatpush1.bf16.msra.mxu0 0
      %2377 = vmatprep.subr.bf16.mxu0 0
      %2378 = vmatpush1.bf16.msra.mxu0 0
      %2379 = vmatprep.subr.bf16.mxu0 0
      %2380 = vmatpush1.bf16.msra.mxu0 0
      %2381 = vmatprep.subr.bf16.mxu0 0
      %2382 = vmatpush1.bf16.msra.mxu0 0
      %2383 = vmatprep.subr.bf16.mxu0 0
      %2384 = vmatpush1.bf16.msra.mxu0 0
      %2385 = vmatprep.subr.bf16.mxu0 0
      %2386 = vmatpush1.bf16.msra.mxu0 0
      %2387 = vmatprep.subr.bf16.mxu0 0
      %2388 = vmatpush1.bf16.msra.mxu0 0
      %2389 = vmatprep.subr.bf16.mxu0 0
      %2390 = vmatpush1.bf16.msra.mxu0 0
      %2391 = vmatprep.subr.bf16.mxu0 0
      %2392 = vmatpush1.bf16.msra.mxu0 0
      %2393 = vmatprep.subr.bf16.mxu0 0
      %2394 = vmatpush1.bf16.msra.mxu0 0
      %2395 = vmatprep.mubr.bf16.mxu0 0
      %2396 = vmatmul.mubr.bf16.gmra.mrb[0].mxu0 %v2361
      %v2397 = vpop.f32.mrb[0].mxu0
      %v2398 = vadd.f32 0.0, %v2397
      %v2399 = vpop.f32.mrb[0].mxu0
      %v2400 = vpop.f32.mrb[0].mxu0
      %v2401 = vadd.f32 0.0, %v2400
      %v2402 = vpop.f32.mrb[0].mxu0
      %2403 = vdwg.mxu0
      %v2404 = vadd.f32 %v2338, %v2398
      %v2405 = vadd.f32 %v2339, %v2401
      %v2406 = vld [vmem:[%s1492 + $0x4] sm:$0x7]
      %s2407 = scalar_lea.vmem %s3, 40
      %v2408 = vld [vmem:[%s2407] sm:$0xf]
      %v2409 = vld [vmem:[%s2407 + $0x4] sm:$0xf]
      %v2411 = vunpack.c.l.b16 %v2406
      %v2412 = vpack.c.b16 %v2411, %v2219
      %v2414 = vshrl.u32 %v2412, 16
      %v2416 = vshll.u32 %v2412, 16
      %v2418 = vrot.slane %v2416, 1
      %v2419 = vor.u32 %v2414, %v2418
      %v2422 = vunpack.c.l.b16 %v2408
      %v2423 = vunpack.c.l.b16 %v2409
      %v2424 = vpack.c.b16 %v2423, %v2422
      %v2427 = vsel %vm313, %v2419, 0
      %2429 = vmatprep.subr.bf16.mxu0 0
      %2430 = vmatpush1.bf16.msra.mxu0 %v2424
      %2431 = vmatprep.subr.bf16.mxu0 0
      %2432 = vmatpush1.bf16.msra.mxu0 0
      %2433 = vmatprep.subr.bf16.mxu0 0
      %2434 = vmatpush1.bf16.msra.mxu0 0
      %2435 = vmatprep.subr.bf16.mxu0 0
      %2436 = vmatpush1.bf16.msra.mxu0 0
      %2437 = vmatprep.subr.bf16.mxu0 0
      %2438 = vmatpush1.bf16.msra.mxu0 0
      %2439 = vmatprep.subr.bf16.mxu0 0
      %2440 = vmatpush1.bf16.msra.mxu0 0
      %2441 = vmatprep.subr.bf16.mxu0 0
      %2442 = vmatpush1.bf16.msra.mxu0 0
      %2443 = vmatprep.subr.bf16.mxu0 0
      %2444 = vmatpush1.bf16.msra.mxu0 0
      %2445 = vmatprep.subr.bf16.mxu0 0
      %2446 = vmatpush1.bf16.msra.mxu0 0
      %2447 = vmatprep.subr.bf16.mxu0 0
      %2448 = vmatpush1.bf16.msra.mxu0 0
      %2449 = vmatprep.subr.bf16.mxu0 0
      %2450 = vmatpush1.bf16.msra.mxu0 0
      %2451 = vmatprep.subr.bf16.mxu0 0
      %2452 = vmatpush1.bf16.msra.mxu0 0
      %2453 = vmatprep.subr.bf16.mxu0 0
      %2454 = vmatpush1.bf16.msra.mxu0 0
      %2455 = vmatprep.subr.bf16.mxu0 0
      %2456 = vmatpush1.bf16.msra.mxu0 0
      %2457 = vmatprep.subr.bf16.mxu0 0
      %2458 = vmatpush1.bf16.msra.mxu0 0
      %2459 = vmatprep.subr.bf16.mxu0 0
      %2460 = vmatpush1.bf16.msra.mxu0 0
      %2461 = vmatprep.mubr.bf16.mxu0 0
      %2462 = vmatmul.mubr.bf16.gmra.mrb[0].mxu0 %v2427
      %v2463 = vpop.f32.mrb[0].mxu0
      %v2464 = vadd.f32 0.0, %v2463
      %v2465 = vpop.f32.mrb[0].mxu0
      %v2466 = vpop.f32.mrb[0].mxu0
      %v2467 = vadd.f32 0.0, %v2466
      %v2468 = vpop.f32.mrb[0].mxu0
      %2469 = vdwg.mxu0
      %v2470 = vadd.f32 %v2404, %v2464
      %v2471 = vadd.f32 %v2405, %v2467
      %v2472 = vld [vmem:[#allocation2] sm:$0xe]
      %s2473 = scalar_lea.vmem %s3, 48
      %v2474 = vld [vmem:[%s2473] sm:$0xf]
      %v2475 = vld [vmem:[%s2473 + $0x4] sm:$0xf]
      %v2477 = vunpack.c.l.b16 %v2472
      %v2478 = vpack.c.b16 %v2279, %v2477
      %v2479 = vrot.slane %v2478, 1
      %v2482 = vunpack.c.l.b16 %v2474
      %v2483 = vunpack.c.l.b16 %v2475
      %v2484 = vpack.c.b16 %v2483, %v2482
      %v2487 = vsel %vm313, %v2479, 0
      %2489 = vmatprep.subr.bf16.mxu0 0
      %2490 = vmatpush1.bf16.msra.mxu0 %v2484
      %2491 = vmatprep.subr.bf16.mxu0 0
      %2492 = vmatpush1.bf16.msra.mxu0 0
      %2493 = vmatprep.subr.bf16.mxu0 0
      %2494 = vmatpush1.bf16.msra.mxu0 0
      %2495 = vmatprep.subr.bf16.mxu0 0
      %2496 = vmatpush1.bf16.msra.mxu0 0
      %2497 = vmatprep.subr.bf16.mxu0 0
      %2498 = vmatpush1.bf16.msra.mxu0 0
      %2499 = vmatprep.subr.bf16.mxu0 0
      %2500 = vmatpush1.bf16.msra.mxu0 0
      %2501 = vmatprep.subr.bf16.mxu0 0
      %2502 = vmatpush1.bf16.msra.mxu0 0
      %2503 = vmatprep.subr.bf16.mxu0 0
      %2504 = vmatpush1.bf16.msra.mxu0 0
      %2505 = vmatprep.subr.bf16.mxu0 0
      %2506 = vmatpush1.bf16.msra.mxu0 0
      %2507 = vmatprep.subr.bf16.mxu0 0
      %2508 = vmatpush1.bf16.msra.mxu0 0
      %2509 = vmatprep.subr.bf16.mxu0 0
      %2510 = vmatpush1.bf16.msra.mxu0 0
      %2511 = vmatprep.subr.bf16.mxu0 0
      %2512 = vmatpush1.bf16.msra.mxu0 0
      %2513 = vmatprep.subr.bf16.mxu0 0
      %2514 = vmatpush1.bf16.msra.mxu0 0
      %2515 = vmatprep.subr.bf16.mxu0 0
      %2516 = vmatpush1.bf16.msra.mxu0 0
      %2517 = vmatprep.subr.bf16.mxu0 0
      %2518 = vmatpush1.bf16.msra.mxu0 0
      %2519 = vmatprep.subr.bf16.mxu0 0
      %2520 = vmatpush1.bf16.msra.mxu0 0
      %2521 = vmatprep.mubr.bf16.mxu0 0
      %2522 = vmatmul.mubr.bf16.gmra.mrb[0].mxu0 %v2487
      %v2523 = vpop.f32.mrb[0].mxu0
      %v2524 = vadd.f32 0.0, %v2523
      %v2525 = vpop.f32.mrb[0].mxu0
      %v2526 = vpop.f32.mrb[0].mxu0
      %v2527 = vadd.f32 0.0, %v2526
      %v2528 = vpop.f32.mrb[0].mxu0
      %2529 = vdwg.mxu0
      %v2530 = vadd.f32 %v2470, %v2524
      %v2531 = vadd.f32 %v2471, %v2527
      %v2532 = vld [vmem:[%s892] sm:$0xe]
      %s2533 = scalar_lea.vmem %s3, 56
      %v2534 = vld [vmem:[%s2533] sm:$0xf]
      %v2535 = vld [vmem:[%s2533 + $0x4] sm:$0xf]
      %v2537 = vunpack.c.l.b16 %v2532
      %v2538 = vpack.c.b16 %v2345, %v2537
      %v2539 = vrot.slane %v2538, 1
      %v2542 = vunpack.c.l.b16 %v2534
      %v2543 = vunpack.c.l.b16 %v2535
      %v2544 = vpack.c.b16 %v2543, %v2542
      %v2547 = vsel %vm313, %v2539, 0
      %2549 = vmatprep.subr.bf16.mxu0 0
      %2550 = vmatpush1.bf16.msra.mxu0 %v2544
      %2551 = vmatprep.subr.bf16.mxu0 0
      %2552 = vmatpush1.bf16.msra.mxu0 0
      %2553 = vmatprep.subr.bf16.mxu0 0
      %2554 = vmatpush1.bf16.msra.mxu0 0
      %2555 = vmatprep.subr.bf16.mxu0 0
      %2556 = vmatpush1.bf16.msra.mxu0 0
      %2557 = vmatprep.subr.bf16.mxu0 0
      %2558 = vmatpush1.bf16.msra.mxu0 0
      %2559 = vmatprep.subr.bf16.mxu0 0
      %2560 = vmatpush1.bf16.msra.mxu0 0
      %2561 = vmatprep.subr.bf16.mxu0 0
      %2562 = vmatpush1.bf16.msra.mxu0 0
      %2563 = vmatprep.subr.bf16.mxu0 0
      %2564 = vmatpush1.bf16.msra.mxu0 0
      %2565 = vmatprep.subr.bf16.mxu0 0
      %2566 = vmatpush1.bf16.msra.mxu0 0
      %2567 = vmatprep.subr.bf16.mxu0 0
      %2568 = vmatpush1.bf16.msra.mxu0 0
      %2569 = vmatprep.subr.bf16.mxu0 0
      %2570 = vmatpush1.bf16.msra.mxu0 0
      %2571 = vmatprep.subr.bf16.mxu0 0
      %2572 = vmatpush1.bf16.msra.mxu0 0
      %2573 = vmatprep.subr.bf16.mxu0 0
      %2574 = vmatpush1.bf16.msra.mxu0 0
      %2575 = vmatprep.subr.bf16.mxu0 0
      %2576 = vmatpush1.bf16.msra.mxu0 0
      %2577 = vmatprep.subr.bf16.mxu0 0
      %2578 = vmatpush1.bf16.msra.mxu0 0
      %2579 = vmatprep.subr.bf16.mxu0 0
      %2580 = vmatpush1.bf16.msra.mxu0 0
      %2581 = vmatprep.mubr.bf16.mxu0 0
      %2582 = vmatmul.mubr.bf16.gmra.mrb[0].mxu0 %v2547
      %v2583 = vpop.f32.mrb[0].mxu0
      %v2584 = vadd.f32 0.0, %v2583
      %v2585 = vpop.f32.mrb[0].mxu0
      %v2586 = vpop.f32.mrb[0].mxu0
      %v2587 = vadd.f32 0.0, %v2586
      %v2588 = vpop.f32.mrb[0].mxu0
      %2589 = vdwg.mxu0
      %v2590 = vadd.f32 %v2530, %v2584
      %v2591 = vadd.f32 %v2531, %v2587
      %v2592 = vld [vmem:[%s1492] sm:$0xe]
      %s2593 = scalar_lea.vmem %s3, 64
      %v2594 = vld [vmem:[%s2593] sm:$0xf]
      %v2595 = vld [vmem:[%s2593 + $0x4] sm:$0xf]
      %v2597 = vunpack.c.l.b16 %v2592
      %v2598 = vpack.c.b16 %v2411, %v2597
      %v2599 = vrot.slane %v2598, 1
      %v2602 = vunpack.c.l.b16 %v2594
      %v2603 = vunpack.c.l.b16 %v2595
      %v2604 = vpack.c.b16 %v2603, %v2602
      %v2607 = vsel %vm313, %v2599, 0
      %2609 = vmatprep.subr.bf16.mxu0 0
      %2610 = vmatpush1.bf16.msra.mxu0 %v2604
      %2611 = vmatprep.subr.bf16.mxu0 0
      %2612 = vmatpush1.bf16.msra.mxu0 0
      %2613 = vmatprep.subr.bf16.mxu0 0
      %2614 = vmatpush1.bf16.msra.mxu0 0
      %2615 = vmatprep.subr.bf16.mxu0 0
      %2616 = vmatpush1.bf16.msra.mxu0 0
      %2617 = vmatprep.subr.bf16.mxu0 0
      %2618 = vmatpush1.bf16.msra.mxu0 0
      %2619 = vmatprep.subr.bf16.mxu0 0
      %2620 = vmatpush1.bf16.msra.mxu0 0
      %2621 = vmatprep.subr.bf16.mxu0 0
      %2622 = vmatpush1.bf16.msra.mxu0 0
      %2623 = vmatprep.subr.bf16.mxu0 0
      %2624 = vmatpush1.bf16.msra.mxu0 0
      %2625 = vmatprep.subr.bf16.mxu0 0
      %2626 = vmatpush1.bf16.msra.mxu0 0
      %2627 = vmatprep.subr.bf16.mxu0 0
      %2628 = vmatpush1.bf16.msra.mxu0 0
      %2629 = vmatprep.subr.bf16.mxu0 0
      %2630 = vmatpush1.bf16.msra.mxu0 0
      %2631 = vmatprep.subr.bf16.mxu0 0
      %2632 = vmatpush1.bf16.msra.mxu0 0
      %2633 = vmatprep.subr.bf16.mxu0 0
      %2634 = vmatpush1.bf16.msra.mxu0 0
      %2635 = vmatprep.subr.bf16.mxu0 0
      %2636 = vmatpush1.bf16.msra.mxu0 0
      %2637 = vmatprep.subr.bf16.mxu0 0
      %2638 = vmatpush1.bf16.msra.mxu0 0
      %2639 = vmatprep.subr.bf16.mxu0 0
      %2640 = vmatpush1.bf16.msra.mxu0 0
      %2641 = vmatprep.mubr.bf16.mxu0 0
      %2642 = vmatmul.mubr.bf16.gmra.mrb[0].mxu0 %v2607
      %v2643 = vpop.f32.mrb[0].mxu0
      %v2644 = vadd.f32 0.0, %v2643
      %v2645 = vpop.f32.mrb[0].mxu0
      %v2646 = vpop.f32.mrb[0].mxu0
      %v2647 = vadd.f32 0.0, %v2646
      %v2648 = vpop.f32.mrb[0].mxu0
      %2649 = vdwg.mxu0
      %v2650 = vadd.f32 %v2590, %v2644
      %v2651 = vadd.f32 %v2591, %v2647
      %v2652 = vld [vmem:[%s296] sm:$0xf]
      %v2653 = vld [vmem:[%s296 + $0x4] sm:$0x7]
      %v2654 = vunpack.c.l.bf16 %v2652
      %v2655 = vunpack.c.l.bf16 %v2653
      %v2656 = vld [vmem:[%s4] sm:$0x1]
      %v2658 = vlaneseq
      %v2659 = vshrl.u32 %v2658, 7
      %v2660 = vsub.s32 0, %v2659
      %v2661 = vrot.slane %v2656, %v2660
      %v2663 = vadd.f32 %v2650, %v2661
      %v2664 = vadd.f32 %v2651, %v2661
      %vm2667 = vcmask 1046528
      %v2668 = vrot.slane %v2654, 1
      %v2669 = vrot.slane %v2655, 1
      %v2670 = vsel %vm2667, %v2668, %v2669
      %v2673 = vadd.f32 %v2663, %v2670
      %v2674 = vadd.f32 %v2664, %v2669
      %v2675 = vmax.f32 %v2673, 0.0
      %v2676 = vmax.f32 %v2674, 0.0
      %v2677 = vpack.c.bf16 %v2676, %v2675
      %v2678 = vld [vmem:[%s5] sm:$0xf]
      %v2679 = vld [vmem:[%s5 + $0x4] sm:$0xf]
      %v2680 = vld [vmem:[%s6] sm:$0x1]
      %v2682 = vlaneseq
      %v2683 = vshrl.u32 %v2682, 7
      %v2684 = vsub.s32 0, %v2683
      %v2685 = vrot.slane %v2680, %v2684
      %v2689 = vunpack.c.l.b16 %v2678
      %v2690 = vunpack.c.l.b16 %v2679
      %v2691 = vpack.c.b16 %v2690, %v2689
      %v2694 = vsel %vm313, %v2677, 0
      %2696 = vmatprep.subr.bf16.mxu0 0
      %2697 = vmatpush1.bf16.msra.mxu0 %v2691
      %2698 = vmatprep.subr.bf16.mxu0 0
      %2699 = vmatpush1.bf16.msra.mxu0 0
      %2700 = vmatprep.subr.bf16.mxu0 0
      %2701 = vmatpush1.bf16.msra.mxu0 0
      %2702 = vmatprep.subr.bf16.mxu0 0
      %2703 = vmatpush1.bf16.msra.mxu0 0
      %2704 = vmatprep.subr.bf16.mxu0 0
      %2705 = vmatpush1.bf16.msra.mxu0 0
      %2706 = vmatprep.subr.bf16.mxu0 0
      %2707 = vmatpush1.bf16.msra.mxu0 0
      %2708 = vmatprep.subr.bf16.mxu0 0
      %2709 = vmatpush1.bf16.msra.mxu0 0
      %2710 = vmatprep.subr.bf16.mxu0 0
      %2711 = vmatpush1.bf16.msra.mxu0 0
      %2712 = vmatprep.subr.bf16.mxu0 0
      %2713 = vmatpush1.bf16.msra.mxu0 0
      %2714 = vmatprep.subr.bf16.mxu0 0
      %2715 = vmatpush1.bf16.msra.mxu0 0
      %2716 = vmatprep.subr.bf16.mxu0 0
      %2717 = vmatpush1.bf16.msra.mxu0 0
      %2718 = vmatprep.subr.bf16.mxu0 0
      %2719 = vmatpush1.bf16.msra.mxu0 0
      %2720 = vmatprep.subr.bf16.mxu0 0
      %2721 = vmatpush1.bf16.msra.mxu0 0
      %2722 = vmatprep.subr.bf16.mxu0 0
      %2723 = vmatpush1.bf16.msra.mxu0 0
      %2724 = vmatprep.subr.bf16.mxu0 0
      %2725 = vmatpush1.bf16.msra.mxu0 0
      %2726 = vmatprep.subr.bf16.mxu0 0
      %2727 = vmatpush1.bf16.msra.mxu0 0
      %2728 = vmatprep.mubr.bf16.mxu0 0
      %2729 = vmatmul.mubr.bf16.gmra.mrb[0].mxu0 %v2694
      %v2730 = vpop.f32.mrb[0].mxu0
      %v2731 = vadd.f32 %v2685, %v2730
      %v2732 = vpop.f32.mrb[0].mxu0
      %v2733 = vpop.f32.mrb[0].mxu0
      %v2734 = vadd.f32 %v2685, %v2733
      %v2735 = vpop.f32.mrb[0].mxu0
      %2736 = vdwg.mxu0
      %v2737 = vmax.f32 %v2731, 0.0
      %v2738 = vmax.f32 %v2734, 0.0
      %2739 = vst.msk [vmem:[%s278] sm:$0xff] %vm313, %v2737
      %2740 = vst.msk [vmem:[%s278 + $0x8] sm:$0xf] %vm280, %v2738
      %v2741 = vld [vmem:[%s892] sm:$0xf]
      %v2742 = vld [vmem:[%s892 + $0x4] sm:$0x3]
      %v2743 = vld [vmem:[%s3] sm:$0xf]
      %v2744 = vld [vmem:[%s3 + $0x4] sm:$0xf]
      %v2745 = vld [vmem:[%s1492] sm:$0xf]
      %v2746 = vld [vmem:[%s1492 + $0x4] sm:$0x3]
      %v2747 = vld [vmem:[%s2099] sm:$0xf]
      %v2748 = vld [vmem:[%s2099 + $0x4] sm:$0xf]
      %v2751 = vunpack.c.l.b16 %v2745
      %v2752 = vunpack.c.l.b16 %v2746
      %v2753 = vpack.c.b16 %v2752, %v2751
      %v2756 = vunpack.c.l.b16 %v2747
      %v2757 = vunpack.c.l.b16 %v2748
      %v2758 = vpack.c.b16 %v2757, %v2756
      %v2761 = vsel %vm313, %v2753, 0
      %2763 = vmatprep.subr.bf16.mxu0 0
      %2764 = vmatpush1.bf16.msra.mxu0 %v2758
      %2765 = vmatprep.subr.bf16.mxu0 0
      %2766 = vmatpush1.bf16.msra.mxu0 0
      %2767 = vmatprep.subr.bf16.mxu0 0
      %2768 = vmatpush1.bf16.msra.mxu0 0
      %2769 = vmatprep.subr.bf16.mxu0 0
      %2770 = vmatpush1.bf16.msra.mxu0 0
      %2771 = vmatprep.subr.bf16.mxu0 0
      %2772 = vmatpush1.bf16.msra.mxu0 0
      %2773 = vmatprep.subr.bf16.mxu0 0
      %2774 = vmatpush1.bf16.msra.mxu0 0
      %2775 = vmatprep.subr.bf16.mxu0 0
      %2776 = vmatpush1.bf16.msra.mxu0 0
      %2777 = vmatprep.subr.bf16.mxu0 0
      %2778 = vmatpush1.bf16.msra.mxu0 0
      %2779 = vmatprep.subr.bf16.mxu0 0
      %2780 = vmatpush1.bf16.msra.mxu0 0
      %2781 = vmatprep.subr.bf16.mxu0 0
      %2782 = vmatpush1.bf16.msra.mxu0 0
      %2783 = vmatprep.subr.bf16.mxu0 0
      %2784 = vmatpush1.bf16.msra.mxu0 0
      %2785 = vmatprep.subr.bf16.mxu0 0
      %2786 = vmatpush1.bf16.msra.mxu0 0
      %2787 = vmatprep.subr.bf16.mxu0 0
      %2788 = vmatpush1.bf16.msra.mxu0 0
      %2789 = vmatprep.subr.bf16.mxu0 0
      %2790 = vmatpush1.bf16.msra.mxu0 0
      %2791 = vmatprep.subr.bf16.mxu0 0
      %2792 = vmatpush1.bf16.msra.mxu0 0
      %2793 = vmatprep.subr.bf16.mxu0 0
      %2794 = vmatpush1.bf16.msra.mxu0 0
      %2795 = vmatprep.mubr.bf16.mxu0 0
      %2796 = vmatmul.mubr.bf16.gmra.mrb[0].mxu0 %v2761
      %v2797 = vpop.f32.mrb[0].mxu0
      %v2798 = vadd.f32 0.0, %v2797
      %v2799 = vpop.f32.mrb[0].mxu0
      %v2800 = vpop.f32.mrb[0].mxu0
      %v2801 = vadd.f32 0.0, %v2800
      %v2802 = vpop.f32.mrb[0].mxu0
      %2803 = vdwg.mxu0
      %v2806 = vunpack.c.l.b16 %v2741
      %v2807 = vunpack.c.l.b16 %v2742
      %v2808 = vpack.c.b16 %v2807, %v2806
      %v2811 = vunpack.c.l.b16 %v2743
      %v2812 = vunpack.c.l.b16 %v2744
      %v2813 = vpack.c.b16 %v2812, %v2811
      %v2816 = vsel %vm313, %v2808, 0
      %2818 = vmatprep.subr.bf16.mxu0 0
      %2819 = vmatpush1.bf16.msra.mxu0 %v2813
      %2820 = vmatprep.subr.bf16.mxu0 0
      %2821 = vmatpush1.bf16.msra.mxu0 0
      %2822 = vmatprep.subr.bf16.mxu0 0
      %2823 = vmatpush1.bf16.msra.mxu0 0
      %2824 = vmatprep.subr.bf16.mxu0 0
      %2825 = vmatpush1.bf16.msra.mxu0 0
      %2826 = vmatprep.subr.bf16.mxu0 0
      %2827 = vmatpush1.bf16.msra.mxu0 0
      %2828 = vmatprep.subr.bf16.mxu0 0
      %2829 = vmatpush1.bf16.msra.mxu0 0
      %2830 = vmatprep.subr.bf16.mxu0 0
      %2831 = vmatpush1.bf16.msra.mxu0 0
      %2832 = vmatprep.subr.bf16.mxu0 0
      %2833 = vmatpush1.bf16.msra.mxu0 0
      %2834 = vmatprep.subr.bf16.mxu0 0
      %2835 = vmatpush1.bf16.msra.mxu0 0
      %2836 = vmatprep.subr.bf16.mxu0 0
      %2837 = vmatpush1.bf16.msra.mxu0 0
      %2838 = vmatprep.subr.bf16.mxu0 0
      %2839 = vmatpush1.bf16.msra.mxu0 0
      %2840 = vmatprep.subr.bf16.mxu0 0
      %2841 = vmatpush1.bf16.msra.mxu0 0
      %2842 = vmatprep.subr.bf16.mxu0 0
      %2843 = vmatpush1.bf16.msra.mxu0 0
      %2844 = vmatprep.subr.bf16.mxu0 0
      %2845 = vmatpush1.bf16.msra.mxu0 0
      %2846 = vmatprep.subr.bf16.mxu0 0
      %2847 = vmatpush1.bf16.msra.mxu0 0
      %2848 = vmatprep.subr.bf16.mxu0 0
      %2849 = vmatpush1.bf16.msra.mxu0 0
      %2850 = vmatprep.mubr.bf16.mxu0 0
      %2851 = vmatmul.mubr.bf16.gmra.mrb[0].mxu0 %v2816
      %v2852 = vpop.f32.mrb[0].mxu0
      %v2853 = vadd.f32 %v2798, %v2852
      %v2854 = vpop.f32.mrb[0].mxu0
      %v2855 = vpop.f32.mrb[0].mxu0
      %v2856 = vadd.f32 %v2801, %v2855
      %v2857 = vpop.f32.mrb[0].mxu0
      %2858 = vdwg.mxu0
      %v2859 = vld [vmem:[%s2086] sm:$0xf]
      %v2860 = vld [vmem:[%s2086 + $0x4] sm:$0x3]
      %v2861 = vld [vmem:[%s2214] sm:$0xf]
      %v2862 = vld [vmem:[%s2214 + $0x4] sm:$0xf]
      %v2865 = vunpack.c.l.b16 %v2859
      %v2866 = vunpack.c.l.b16 %v2860
      %v2867 = vpack.c.b16 %v2866, %v2865
      %v2870 = vunpack.c.l.b16 %v2861
      %v2871 = vunpack.c.l.b16 %v2862
      %v2872 = vpack.c.b16 %v2871, %v2870
      %v2875 = vsel %vm313, %v2867, 0
      %2877 = vmatprep.subr.bf16.mxu0 0
      %2878 = vmatpush1.bf16.msra.mxu0 %v2872
      %2879 = vmatprep.subr.bf16.mxu0 0
      %2880 = vmatpush1.bf16.msra.mxu0 0
      %2881 = vmatprep.subr.bf16.mxu0 0
      %2882 = vmatpush1.bf16.msra.mxu0 0
      %2883 = vmatprep.subr.bf16.mxu0 0
      %2884 = vmatpush1.bf16.msra.mxu0 0
      %2885 = vmatprep.subr.bf16.mxu0 0
      %2886 = vmatpush1.bf16.msra.mxu0 0
      %2887 = vmatprep.subr.bf16.mxu0 0
      %2888 = vmatpush1.bf16.msra.mxu0 0
      %2889 = vmatprep.subr.bf16.mxu0 0
      %2890 = vmatpush1.bf16.msra.mxu0 0
      %2891 = vmatprep.subr.bf16.mxu0 0
      %2892 = vmatpush1.bf16.msra.mxu0 0
      %2893 = vmatprep.subr.bf16.mxu0 0
      %2894 = vmatpush1.bf16.msra.mxu0 0
      %2895 = vmatprep.subr.bf16.mxu0 0
      %2896 = vmatpush1.bf16.msra.mxu0 0
      %2897 = vmatprep.subr.bf16.mxu0 0
      %2898 = vmatpush1.bf16.msra.mxu0 0
      %2899 = vmatprep.subr.bf16.mxu0 0
      %2900 = vmatpush1.bf16.msra.mxu0 0
      %2901 = vmatprep.subr.bf16.mxu0 0
      %2902 = vmatpush1.bf16.msra.mxu0 0
      %2903 = vmatprep.subr.bf16.mxu0 0
      %2904 = vmatpush1.bf16.msra.mxu0 0
      %2905 = vmatprep.subr.bf16.mxu0 0
      %2906 = vmatpush1.bf16.msra.mxu0 0
      %2907 = vmatprep.subr.bf16.mxu0 0
      %2908 = vmatpush1.bf16.msra.mxu0 0
      %2909 = vmatprep.mubr.bf16.mxu0 0
      %2910 = vmatmul.mubr.bf16.gmra.mrb[0].mxu0 %v2875
      %v2911 = vpop.f32.mrb[0].mxu0
      %v2912 = vadd.f32 0.0, %v2911
      %v2913 = vpop.f32.mrb[0].mxu0
      %v2914 = vpop.f32.mrb[0].mxu0
      %v2915 = vadd.f32 0.0, %v2914
      %v2916 = vpop.f32.mrb[0].mxu0
      %2917 = vdwg.mxu0
      %v2918 = vadd.f32 %v2853, %v2912
      %v2919 = vadd.f32 %v2856, %v2915
      %v2920 = vld [vmem:[%s892 + $0x4] sm:$0x7]
      %v2921 = vld [vmem:[%s2275] sm:$0xf]
      %v2922 = vld [vmem:[%s2275 + $0x4] sm:$0xf]
      %v2924 = vunpack.c.l.b16 %v2920
      %v2925 = vpack.c.b16 %v2924, %v2806
      %v2927 = vshrl.u32 %v2925, 16
      %v2929 = vshll.u32 %v2925, 16
      %v2931 = vrot.slane %v2929, 1
      %v2932 = vor.u32 %v2927, %v2931
      %v2935 = vunpack.c.l.b16 %v2921
      %v2936 = vunpack.c.l.b16 %v2922
      %v2937 = vpack.c.b16 %v2936, %v2935
      %v2940 = vsel %vm313, %v2932, 0
      %2942 = vmatprep.subr.bf16.mxu0 0
      %2943 = vmatpush1.bf16.msra.mxu0 %v2937
      %2944 = vmatprep.subr.bf16.mxu0 0
      %2945 = vmatpush1.bf16.msra.mxu0 0
      %2946 = vmatprep.subr.bf16.mxu0 0
      %2947 = vmatpush1.bf16.msra.mxu0 0
      %2948 = vmatprep.subr.bf16.mxu0 0
      %2949 = vmatpush1.bf16.msra.mxu0 0
      %2950 = vmatprep.subr.bf16.mxu0 0
      %2951 = vmatpush1.bf16.msra.mxu0 0
      %2952 = vmatprep.subr.bf16.mxu0 0
      %2953 = vmatpush1.bf16.msra.mxu0 0
      %2954 = vmatprep.subr.bf16.mxu0 0
      %2955 = vmatpush1.bf16.msra.mxu0 0
      %2956 = vmatprep.subr.bf16.mxu0 0
      %2957 = vmatpush1.bf16.msra.mxu0 0
      %2958 = vmatprep.subr.bf16.mxu0 0
      %2959 = vmatpush1.bf16.msra.mxu0 0
      %2960 = vmatprep.subr.bf16.mxu0 0
      %2961 = vmatpush1.bf16.msra.mxu0 0
      %2962 = vmatprep.subr.bf16.mxu0 0
      %2963 = vmatpush1.bf16.msra.mxu0 0
      %2964 = vmatprep.subr.bf16.mxu0 0
      %2965 = vmatpush1.bf16.msra.mxu0 0
      %2966 = vmatprep.subr.bf16.mxu0 0
      %2967 = vmatpush1.bf16.msra.mxu0 0
      %2968 = vmatprep.subr.bf16.mxu0 0
      %2969 = vmatpush1.bf16.msra.mxu0 0
      %2970 = vmatprep.subr.bf16.mxu0 0
      %2971 = vmatpush1.bf16.msra.mxu0 0
      %2972 = vmatprep.subr.bf16.mxu0 0
      %2973 = vmatpush1.bf16.msra.mxu0 0
      %2974 = vmatprep.mubr.bf16.mxu0 0
      %2975 = vmatmul.mubr.bf16.gmra.mrb[0].mxu0 %v2940
      %v2976 = vpop.f32.mrb[0].mxu0
      %v2977 = vadd.f32 0.0, %v2976
      %v2978 = vpop.f32.mrb[0].mxu0
      %v2979 = vpop.f32.mrb[0].mxu0
      %v2980 = vadd.f32 0.0, %v2979
      %v2981 = vpop.f32.mrb[0].mxu0
      %2982 = vdwg.mxu0
      %v2983 = vadd.f32 %v2918, %v2977
      %v2984 = vadd.f32 %v2919, %v2980
      %v2985 = vld [vmem:[%s1492 + $0x4] sm:$0x7]
      %v2986 = vld [vmem:[%s2341] sm:$0xf]
      %v2987 = vld [vmem:[%s2341 + $0x4] sm:$0xf]
      %v2989 = vunpack.c.l.b16 %v2985
      %v2990 = vpack.c.b16 %v2989, %v2751
      %v2992 = vshrl.u32 %v2990, 16
      %v2994 = vshll.u32 %v2990, 16
      %v2996 = vrot.slane %v2994, 1
      %v2997 = vor.u32 %v2992, %v2996
      %v3000 = vunpack.c.l.b16 %v2986
      %v3001 = vunpack.c.l.b16 %v2987
      %v3002 = vpack.c.b16 %v3001, %v3000
      %v3005 = vsel %vm313, %v2997, 0
      %3007 = vmatprep.subr.bf16.mxu0 0
      %3008 = vmatpush1.bf16.msra.mxu0 %v3002
      %3009 = vmatprep.subr.bf16.mxu0 0
      %3010 = vmatpush1.bf16.msra.mxu0 0
      %3011 = vmatprep.subr.bf16.mxu0 0
      %3012 = vmatpush1.bf16.msra.mxu0 0
      %3013 = vmatprep.subr.bf16.mxu0 0
      %3014 = vmatpush1.bf16.msra.mxu0 0
      %3015 = vmatprep.subr.bf16.mxu0 0
      %3016 = vmatpush1.bf16.msra.mxu0 0
      %3017 = vmatprep.subr.bf16.mxu0 0
      %3018 = vmatpush1.bf16.msra.mxu0 0
      %3019 = vmatprep.subr.bf16.mxu0 0
      %3020 = vmatpush1.bf16.msra.mxu0 0
      %3021 = vmatprep.subr.bf16.mxu0 0
      %3022 = vmatpush1.bf16.msra.mxu0 0
      %3023 = vmatprep.subr.bf16.mxu0 0
      %3024 = vmatpush1.bf16.msra.mxu0 0
      %3025 = vmatprep.subr.bf16.mxu0 0
      %3026 = vmatpush1.bf16.msra.mxu0 0
      %3027 = vmatprep.subr.bf16.mxu0 0
      %3028 = vmatpush1.bf16.msra.mxu0 0
      %3029 = vmatprep.subr.bf16.mxu0 0
      %3030 = vmatpush1.bf16.msra.mxu0 0
      %3031 = vmatprep.subr.bf16.mxu0 0
      %3032 = vmatpush1.bf16.msra.mxu0 0
      %3033 = vmatprep.subr.bf16.mxu0 0
      %3034 = vmatpush1.bf16.msra.mxu0 0
      %3035 = vmatprep.subr.bf16.mxu0 0
      %3036 = vmatpush1.bf16.msra.mxu0 0
      %3037 = vmatprep.subr.bf16.mxu0 0
      %3038 = vmatpush1.bf16.msra.mxu0 0
      %3039 = vmatprep.mubr.bf16.mxu0 0
      %3040 = vmatmul.mubr.bf16.gmra.mrb[0].mxu0 %v3005
      %v3041 = vpop.f32.mrb[0].mxu0
      %v3042 = vadd.f32 0.0, %v3041
      %v3043 = vpop.f32.mrb[0].mxu0
      %v3044 = vpop.f32.mrb[0].mxu0
      %v3045 = vadd.f32 0.0, %v3044
      %v3046 = vpop.f32.mrb[0].mxu0
      %3047 = vdwg.mxu0
      %v3048 = vadd.f32 %v2983, %v3042
      %v3049 = vadd.f32 %v2984, %v3045
      %v3050 = vld [vmem:[%s2086 + $0x4] sm:$0x7]
      %v3051 = vld [vmem:[%s2407] sm:$0xf]
      %v3052 = vld [vmem:[%s2407 + $0x4] sm:$0xf]
      %v3054 = vunpack.c.l.b16 %v3050
      %v3055 = vpack.c.b16 %v3054, %v2865
      %v3057 = vshrl.u32 %v3055, 16
      %v3059 = vshll.u32 %v3055, 16
      %v3061 = vrot.slane %v3059, 1
      %v3062 = vor.u32 %v3057, %v3061
      %v3065 = vunpack.c.l.b16 %v3051
      %v3066 = vunpack.c.l.b16 %v3052
      %v3067 = vpack.c.b16 %v3066, %v3065
      %v3070 = vsel %vm313, %v3062, 0
      %3072 = vmatprep.subr.bf16.mxu0 0
      %3073 = vmatpush1.bf16.msra.mxu0 %v3067
      %3074 = vmatprep.subr.bf16.mxu0 0
      %3075 = vmatpush1.bf16.msra.mxu0 0
      %3076 = vmatprep.subr.bf16.mxu0 0
      %3077 = vmatpush1.bf16.msra.mxu0 0
      %3078 = vmatprep.subr.bf16.mxu0 0
      %3079 = vmatpush1.bf16.msra.mxu0 0
      %3080 = vmatprep.subr.bf16.mxu0 0
      %3081 = vmatpush1.bf16.msra.mxu0 0
      %3082 = vmatprep.subr.bf16.mxu0 0
      %3083 = vmatpush1.bf16.msra.mxu0 0
      %3084 = vmatprep.subr.bf16.mxu0 0
      %3085 = vmatpush1.bf16.msra.mxu0 0
      %3086 = vmatprep.subr.bf16.mxu0 0
      %3087 = vmatpush1.bf16.msra.mxu0 0
      %3088 = vmatprep.subr.bf16.mxu0 0
      %3089 = vmatpush1.bf16.msra.mxu0 0
      %3090 = vmatprep.subr.bf16.mxu0 0
      %3091 = vmatpush1.bf16.msra.mxu0 0
      %3092 = vmatprep.subr.bf16.mxu0 0
      %3093 = vmatpush1.bf16.msra.mxu0 0
      %3094 = vmatprep.subr.bf16.mxu0 0
      %3095 = vmatpush1.bf16.msra.mxu0 0
      %3096 = vmatprep.subr.bf16.mxu0 0
      %3097 = vmatpush1.bf16.msra.mxu0 0
      %3098 = vmatprep.subr.bf16.mxu0 0
      %3099 = vmatpush1.bf16.msra.mxu0 0
      %3100 = vmatprep.subr.bf16.mxu0 0
      %3101 = vmatpush1.bf16.msra.mxu0 0
      %3102 = vmatprep.subr.bf16.mxu0 0
      %3103 = vmatpush1.bf16.msra.mxu0 0
      %3104 = vmatprep.mubr.bf16.mxu0 0
      %3105 = vmatmul.mubr.bf16.gmra.mrb[0].mxu0 %v3070
      %v3106 = vpop.f32.mrb[0].mxu0
      %v3107 = vadd.f32 0.0, %v3106
      %v3108 = vpop.f32.mrb[0].mxu0
      %v3109 = vpop.f32.mrb[0].mxu0
      %v3110 = vadd.f32 0.0, %v3109
      %v3111 = vpop.f32.mrb[0].mxu0
      %3112 = vdwg.mxu0
      %v3113 = vadd.f32 %v3048, %v3107
      %v3114 = vadd.f32 %v3049, %v3110
      %v3115 = vld [vmem:[%s892] sm:$0xe]
      %v3116 = vld [vmem:[%s2473] sm:$0xf]
      %v3117 = vld [vmem:[%s2473 + $0x4] sm:$0xf]
      %v3119 = vunpack.c.l.b16 %v3115
      %v3120 = vpack.c.b16 %v2924, %v3119
      %v3121 = vrot.slane %v3120, 1
      %v3124 = vunpack.c.l.b16 %v3116
      %v3125 = vunpack.c.l.b16 %v3117
      %v3126 = vpack.c.b16 %v3125, %v3124
      %v3129 = vsel %vm313, %v3121, 0
      %3131 = vmatprep.subr.bf16.mxu0 0
      %3132 = vmatpush1.bf16.msra.mxu0 %v3126
      %3133 = vmatprep.subr.bf16.mxu0 0
      %3134 = vmatpush1.bf16.msra.mxu0 0
      %3135 = vmatprep.subr.bf16.mxu0 0
      %3136 = vmatpush1.bf16.msra.mxu0 0
      %3137 = vmatprep.subr.bf16.mxu0 0
      %3138 = vmatpush1.bf16.msra.mxu0 0
      %3139 = vmatprep.subr.bf16.mxu0 0
      %3140 = vmatpush1.bf16.msra.mxu0 0
      %3141 = vmatprep.subr.bf16.mxu0 0
      %3142 = vmatpush1.bf16.msra.mxu0 0
      %3143 = vmatprep.subr.bf16.mxu0 0
      %3144 = vmatpush1.bf16.msra.mxu0 0
      %3145 = vmatprep.subr.bf16.mxu0 0
      %3146 = vmatpush1.bf16.msra.mxu0 0
      %3147 = vmatprep.subr.bf16.mxu0 0
      %3148 = vmatpush1.bf16.msra.mxu0 0
      %3149 = vmatprep.subr.bf16.mxu0 0
      %3150 = vmatpush1.bf16.msra.mxu0 0
      %3151 = vmatprep.subr.bf16.mxu0 0
      %3152 = vmatpush1.bf16.msra.mxu0 0
      %3153 = vmatprep.subr.bf16.mxu0 0
      %3154 = vmatpush1.bf16.msra.mxu0 0
      %3155 = vmatprep.subr.bf16.mxu0 0
      %3156 = vmatpush1.bf16.msra.mxu0 0
      %3157 = vmatprep.subr.bf16.mxu0 0
      %3158 = vmatpush1.bf16.msra.mxu0 0
      %3159 = vmatprep.subr.bf16.mxu0 0
      %3160 = vmatpush1.bf16.msra.mxu0 0
      %3161 = vmatprep.subr.bf16.mxu0 0
      %3162 = vmatpush1.bf16.msra.mxu0 0
      %3163 = vmatprep.mubr.bf16.mxu0 0
      %3164 = vmatmul.mubr.bf16.gmra.mrb[0].mxu0 %v3129
      %v3165 = vpop.f32.mrb[0].mxu0
      %v3166 = vadd.f32 0.0, %v3165
      %v3167 = vpop.f32.mrb[0].mxu0
      %v3168 = vpop.f32.mrb[0].mxu0
      %v3169 = vadd.f32 0.0, %v3168
      %v3170 = vpop.f32.mrb[0].mxu0
      %3171 = vdwg.mxu0
      %v3172 = vadd.f32 %v3113, %v3166
      %v3173 = vadd.f32 %v3114, %v3169
      %v3174 = vld [vmem:[%s1492] sm:$0xe]
      %v3175 = vld [vmem:[%s2533] sm:$0xf]
      %v3176 = vld [vmem:[%s2533 + $0x4] sm:$0xf]
      %v3178 = vunpack.c.l.b16 %v3174
      %v3179 = vpack.c.b16 %v2989, %v3178
      %v3180 = vrot.slane %v3179, 1
      %v3183 = vunpack.c.l.b16 %v3175
      %v3184 = vunpack.c.l.b16 %v3176
      %v3185 = vpack.c.b16 %v3184, %v3183
      %v3188 = vsel %vm313, %v3180, 0
      %3190 = vmatprep.subr.bf16.mxu0 0
      %3191 = vmatpush1.bf16.msra.mxu0 %v3185
      %3192 = vmatprep.subr.bf16.mxu0 0
      %3193 = vmatpush1.bf16.msra.mxu0 0
      %3194 = vmatprep.subr.bf16.mxu0 0
      %3195 = vmatpush1.bf16.msra.mxu0 0
      %3196 = vmatprep.subr.bf16.mxu0 0
      %3197 = vmatpush1.bf16.msra.mxu0 0
      %3198 = vmatprep.subr.bf16.mxu0 0
      %3199 = vmatpush1.bf16.msra.mxu0 0
      %3200 = vmatprep.subr.bf16.mxu0 0
      %3201 = vmatpush1.bf16.msra.mxu0 0
      %3202 = vmatprep.subr.bf16.mxu0 0
      %3203 = vmatpush1.bf16.msra.mxu0 0
      %3204 = vmatprep.subr.bf16.mxu0 0
      %3205 = vmatpush1.bf16.msra.mxu0 0
      %3206 = vmatprep.subr.bf16.mxu0 0
      %3207 = vmatpush1.bf16.msra.mxu0 0
      %3208 = vmatprep.subr.bf16.mxu0 0
      %3209 = vmatpush1.bf16.msra.mxu0 0
      %3210 = vmatprep.subr.bf16.mxu0 0
      %3211 = vmatpush1.bf16.msra.mxu0 0
      %3212 = vmatprep.subr.bf16.mxu0 0
      %3213 = vmatpush1.bf16.msra.mxu0 0
      %3214 = vmatprep.subr.bf16.mxu0 0
      %3215 = vmatpush1.bf16.msra.mxu0 0
      %3216 = vmatprep.subr.bf16.mxu0 0
      %3217 = vmatpush1.bf16.msra.mxu0 0
      %3218 = vmatprep.subr.bf16.mxu0 0
      %3219 = vmatpush1.bf16.msra.mxu0 0
      %3220 = vmatprep.subr.bf16.mxu0 0
      %3221 = vmatpush1.bf16.msra.mxu0 0
      %3222 = vmatprep.mubr.bf16.mxu0 0
      %3223 = vmatmul.mubr.bf16.gmra.mrb[0].mxu0 %v3188
      %v3224 = vpop.f32.mrb[0].mxu0
      %v3225 = vadd.f32 0.0, %v3224
      %v3226 = vpop.f32.mrb[0].mxu0
      %v3227 = vpop.f32.mrb[0].mxu0
      %v3228 = vadd.f32 0.0, %v3227
      %v3229 = vpop.f32.mrb[0].mxu0
      %3230 = vdwg.mxu0
      %v3231 = vadd.f32 %v3172, %v3225
      %v3232 = vadd.f32 %v3173, %v3228
      %v3233 = vld [vmem:[%s2086] sm:$0xe]
      %v3234 = vld [vmem:[%s2593] sm:$0xf]
      %v3235 = vld [vmem:[%s2593 + $0x4] sm:$0xf]
      %v3237 = vunpack.c.l.b16 %v3233
      %v3238 = vpack.c.b16 %v3054, %v3237
      %v3239 = vrot.slane %v3238, 1
      %v3242 = vunpack.c.l.b16 %v3234
      %v3243 = vunpack.c.l.b16 %v3235
      %v3244 = vpack.c.b16 %v3243, %v3242
      %v3247 = vsel %vm313, %v3239, 0
      %3249 = vmatprep.subr.bf16.mxu0 0
      %3250 = vmatpush1.bf16.msra.mxu0 %v3244
      %3251 = vmatprep.subr.bf16.mxu0 0
      %3252 = vmatpush1.bf16.msra.mxu0 0
      %3253 = vmatprep.subr.bf16.mxu0 0
      %3254 = vmatpush1.bf16.msra.mxu0 0
      %3255 = vmatprep.subr.bf16.mxu0 0
      %3256 = vmatpush1.bf16.msra.mxu0 0
      %3257 = vmatprep.subr.bf16.mxu0 0
      %3258 = vmatpush1.bf16.msra.mxu0 0
      %3259 = vmatprep.subr.bf16.mxu0 0
      %3260 = vmatpush1.bf16.msra.mxu0 0
      %3261 = vmatprep.subr.bf16.mxu0 0
      %3262 = vmatpush1.bf16.msra.mxu0 0
      %3263 = vmatprep.subr.bf16.mxu0 0
      %3264 = vmatpush1.bf16.msra.mxu0 0
      %3265 = vmatprep.subr.bf16.mxu0 0
      %3266 = vmatpush1.bf16.msra.mxu0 0
      %3267 = vmatprep.subr.bf16.mxu0 0
      %3268 = vmatpush1.bf16.msra.mxu0 0
      %3269 = vmatprep.subr.bf16.mxu0 0
      %3270 = vmatpush1.bf16.msra.mxu0 0
      %3271 = vmatprep.subr.bf16.mxu0 0
      %3272 = vmatpush1.bf16.msra.mxu0 0
      %3273 = vmatprep.subr.bf16.mxu0 0
      %3274 = vmatpush1.bf16.msra.mxu0 0
      %3275 = vmatprep.subr.bf16.mxu0 0
      %3276 = vmatpush1.bf16.msra.mxu0 0
      %3277 = vmatprep.subr.bf16.mxu0 0
      %3278 = vmatpush1.bf16.msra.mxu0 0
      %3279 = vmatprep.subr.bf16.mxu0 0
      %3280 = vmatpush1.bf16.msra.mxu0 0
      %3281 = vmatprep.mubr.bf16.mxu0 0
      %3282 = vmatmul.mubr.bf16.gmra.mrb[0].mxu0 %v3247
      %v3283 = vpop.f32.mrb[0].mxu0
      %v3284 = vadd.f32 0.0, %v3283
      %v3285 = vpop.f32.mrb[0].mxu0
      %v3286 = vpop.f32.mrb[0].mxu0
      %v3287 = vadd.f32 0.0, %v3286
      %v3288 = vpop.f32.mrb[0].mxu0
      %3289 = vdwg.mxu0
      %v3290 = vadd.f32 %v3231, %v3284
      %v3291 = vadd.f32 %v3232, %v3287
      %v3292 = vld [vmem:[%s413] sm:$0xf]
      %v3293 = vld [vmem:[%s413 + $0x4] sm:$0x7]
      %v3294 = vunpack.c.l.bf16 %v3292
      %v3295 = vunpack.c.l.bf16 %v3293
      %v3296 = vld [vmem:[%s4] sm:$0x1]
      %v3298 = vlaneseq
      %v3299 = vshrl.u32 %v3298, 7
      %v3300 = vsub.s32 0, %v3299
      %v3301 = vrot.slane %v3296, %v3300
      %v3303 = vadd.f32 %v3290, %v3301
      %v3304 = vadd.f32 %v3291, %v3301
      %v3307 = vrot.slane %v3294, 1
      %v3308 = vrot.slane %v3295, 1
      %v3309 = vsel %vm2667, %v3307, %v3308
      %v3312 = vadd.f32 %v3303, %v3309
      %v3313 = vadd.f32 %v3304, %v3308
      %v3314 = vmax.f32 %v3312, 0.0
      %v3315 = vmax.f32 %v3313, 0.0
      %v3316 = vpack.c.bf16 %v3315, %v3314
      %v3317 = vld [vmem:[%s5] sm:$0xf]
      %v3318 = vld [vmem:[%s5 + $0x4] sm:$0xf]
      %v3319 = vld [vmem:[%s6] sm:$0x1]
      %v3321 = vlaneseq
      %v3322 = vshrl.u32 %v3321, 7
      %v3323 = vsub.s32 0, %v3322
      %v3324 = vrot.slane %v3319, %v3323
      %v3328 = vunpack.c.l.b16 %v3317
      %v3329 = vunpack.c.l.b16 %v3318
      %v3330 = vpack.c.b16 %v3329, %v3328
      %v3333 = vsel %vm313, %v3316, 0
      %3335 = vmatprep.subr.bf16.mxu0 0
      %3336 = vmatpush1.bf16.msra.mxu0 %v3330
      %3337 = vmatprep.subr.bf16.mxu0 0
      %3338 = vmatpush1.bf16.msra.mxu0 0
      %3339 = vmatprep.subr.bf16.mxu0 0
      %3340 = vmatpush1.bf16.msra.mxu0 0
      %3341 = vmatprep.subr.bf16.mxu0 0
      %3342 = vmatpush1.bf16.msra.mxu0 0
      %3343 = vmatprep.subr.bf16.mxu0 0
      %3344 = vmatpush1.bf16.msra.mxu0 0
      %3345 = vmatprep.subr.bf16.mxu0 0
      %3346 = vmatpush1.bf16.msra.mxu0 0
      %3347 = vmatprep.subr.bf16.mxu0 0
      %3348 = vmatpush1.bf16.msra.mxu0 0
      %3349 = vmatprep.subr.bf16.mxu0 0
      %3350 = vmatpush1.bf16.msra.mxu0 0
      %3351 = vmatprep.subr.bf16.mxu0 0
      %3352 = vmatpush1.bf16.msra.mxu0 0
      %3353 = vmatprep.subr.bf16.mxu0 0
      %3354 = vmatpush1.bf16.msra.mxu0 0
      %3355 = vmatprep.subr.bf16.mxu0 0
      %3356 = vmatpush1.bf16.msra.mxu0 0
      %3357 = vmatprep.subr.bf16.mxu0 0
      %3358 = vmatpush1.bf16.msra.mxu0 0
      %3359 = vmatprep.subr.bf16.mxu0 0
      %3360 = vmatpush1.bf16.msra.mxu0 0
      %3361 = vmatprep.subr.bf16.mxu0 0
      %3362 = vmatpush1.bf16.msra.mxu0 0
      %3363 = vmatprep.subr.bf16.mxu0 0
      %3364 = vmatpush1.bf16.msra.mxu0 0
      %3365 = vmatprep.subr.bf16.mxu0 0
      %3366 = vmatpush1.bf16.msra.mxu0 0
      %3367 = vmatprep.mubr.bf16.mxu0 0
      %3368 = vmatmul.mubr.bf16.gmra.mrb[0].mxu0 %v3333
      %v3369 = vpop.f32.mrb[0].mxu0
      %v3370 = vadd.f32 %v3324, %v3369
      %v3371 = vpop.f32.mrb[0].mxu0
      %v3372 = vpop.f32.mrb[0].mxu0
      %v3373 = vadd.f32 %v3324, %v3372
      %v3374 = vpop.f32.mrb[0].mxu0
      %3375 = vdwg.mxu0
      %v3376 = vmax.f32 %v3370, 0.0
      %v3377 = vmax.f32 %v3373, 0.0
      %s3378 = scalar_lea.vmem %s278, 16
      %3379 = vst.msk [vmem:[%s3378] sm:$0xff] %vm313, %v3376
      %3380 = vst.msk [vmem:[%s3378 + $0x8] sm:$0xf] %vm280, %v3377
      %v3381 = vld [vmem:[%s1492] sm:$0xf]
      %v3382 = vld [vmem:[%s1492 + $0x4] sm:$0x3]
      %v3383 = vld [vmem:[%s3] sm:$0xf]
      %v3384 = vld [vmem:[%s3 + $0x4] sm:$0xf]
      %v3385 = vld [vmem:[%s2086] sm:$0xf]
      %v3386 = vld [vmem:[%s2086 + $0x4] sm:$0x3]
      %v3387 = vld [vmem:[%s2099] sm:$0xf]
      %v3388 = vld [vmem:[%s2099 + $0x4] sm:$0xf]
      %v3391 = vunpack.c.l.b16 %v3385
      %v3392 = vunpack.c.l.b16 %v3386
      %v3393 = vpack.c.b16 %v3392, %v3391
      %v3396 = vunpack.c.l.b16 %v3387
      %v3397 = vunpack.c.l.b16 %v3388
      %v3398 = vpack.c.b16 %v3397, %v3396
      %v3401 = vsel %vm313, %v3393, 0
      %3403 = vmatprep.subr.bf16.mxu0 0
      %3404 = vmatpush1.bf16.msra.mxu0 %v3398
      %3405 = vmatprep.subr.bf16.mxu0 0
      %3406 = vmatpush1.bf16.msra.mxu0 0
      %3407 = vmatprep.subr.bf16.mxu0 0
      %3408 = vmatpush1.bf16.msra.mxu0 0
      %3409 = vmatprep.subr.bf16.mxu0 0
      %3410 = vmatpush1.bf16.msra.mxu0 0
      %3411 = vmatprep.subr.bf16.mxu0 0
      %3412 = vmatpush1.bf16.msra.mxu0 0
      %3413 = vmatprep.subr.bf16.mxu0 0
      %3414 = vmatpush1.bf16.msra.mxu0 0
      %3415 = vmatprep.subr.bf16.mxu0 0
      %3416 = vmatpush1.bf16.msra.mxu0 0
      %3417 = vmatprep.subr.bf16.mxu0 0
      %3418 = vmatpush1.bf16.msra.mxu0 0
      %3419 = vmatprep.subr.bf16.mxu0 0
      %3420 = vmatpush1.bf16.msra.mxu0 0
      %3421 = vmatprep.subr.bf16.mxu0 0
      %3422 = vmatpush1.bf16.msra.mxu0 0
      %3423 = vmatprep.subr.bf16.mxu0 0
      %3424 = vmatpush1.bf16.msra.mxu0 0
      %3425 = vmatprep.subr.bf16.mxu0 0
      %3426 = vmatpush1.bf16.msra.mxu0 0
      %3427 = vmatprep.subr.bf16.mxu0 0
      %3428 = vmatpush1.bf16.msra.mxu0 0
      %3429 = vmatprep.subr.bf16.mxu0 0
      %3430 = vmatpush1.bf16.msra.mxu0 0
      %3431 = vmatprep.subr.bf16.mxu0 0
      %3432 = vmatpush1.bf16.msra.mxu0 0
      %3433 = vmatprep.subr.bf16.mxu0 0
      %3434 = vmatpush1.bf16.msra.mxu0 0
      %3435 = vmatprep.mubr.bf16.mxu0 0
      %3436 = vmatmul.mubr.bf16.gmra.mrb[0].mxu0 %v3401
      %v3437 = vpop.f32.mrb[0].mxu0
      %v3438 = vadd.f32 0.0, %v3437
      %v3439 = vpop.f32.mrb[0].mxu0
      %v3440 = vpop.f32.mrb[0].mxu0
      %v3441 = vadd.f32 0.0, %v3440
      %v3442 = vpop.f32.mrb[0].mxu0
      %3443 = vdwg.mxu0
      %v3446 = vunpack.c.l.b16 %v3381
      %v3447 = vunpack.c.l.b16 %v3382
      %v3448 = vpack.c.b16 %v3447, %v3446
      %v3451 = vunpack.c.l.b16 %v3383
      %v3452 = vunpack.c.l.b16 %v3384
      %v3453 = vpack.c.b16 %v3452, %v3451
      %v3456 = vsel %vm313, %v3448, 0
      %3458 = vmatprep.subr.bf16.mxu0 0
      %3459 = vmatpush1.bf16.msra.mxu0 %v3453
      %3460 = vmatprep.subr.bf16.mxu0 0
      %3461 = vmatpush1.bf16.msra.mxu0 0
      %3462 = vmatprep.subr.bf16.mxu0 0
      %3463 = vmatpush1.bf16.msra.mxu0 0
      %3464 = vmatprep.subr.bf16.mxu0 0
      %3465 = vmatpush1.bf16.msra.mxu0 0
      %3466 = vmatprep.subr.bf16.mxu0 0
      %3467 = vmatpush1.bf16.msra.mxu0 0
      %3468 = vmatprep.subr.bf16.mxu0 0
      %3469 = vmatpush1.bf16.msra.mxu0 0
      %3470 = vmatprep.subr.bf16.mxu0 0
      %3471 = vmatpush1.bf16.msra.mxu0 0
      %3472 = vmatprep.subr.bf16.mxu0 0
      %3473 = vmatpush1.bf16.msra.mxu0 0
      %3474 = vmatprep.subr.bf16.mxu0 0
      %3475 = vmatpush1.bf16.msra.mxu0 0
      %3476 = vmatprep.subr.bf16.mxu0 0
      %3477 = vmatpush1.bf16.msra.mxu0 0
      %3478 = vmatprep.subr.bf16.mxu0 0
      %3479 = vmatpush1.bf16.msra.mxu0 0
      %3480 = vmatprep.subr.bf16.mxu0 0
      %3481 = vmatpush1.bf16.msra.mxu0 0
      %3482 = vmatprep.subr.bf16.mxu0 0
      %3483 = vmatpush1.bf16.msra.mxu0 0
      %3484 = vmatprep.subr.bf16.mxu0 0
      %3485 = vmatpush1.bf16.msra.mxu0 0
      %3486 = vmatprep.subr.bf16.mxu0 0
      %3487 = vmatpush1.bf16.msra.mxu0 0
      %3488 = vmatprep.subr.bf16.mxu0 0
      %3489 = vmatpush1.bf16.msra.mxu0 0
      %3490 = vmatprep.mubr.bf16.mxu0 0
      %3491 = vmatmul.mubr.bf16.gmra.mrb[0].mxu0 %v3456
      %v3492 = vpop.f32.mrb[0].mxu0
      %v3493 = vadd.f32 %v3438, %v3492
      %v3494 = vpop.f32.mrb[0].mxu0
      %v3495 = vpop.f32.mrb[0].mxu0
      %v3496 = vadd.f32 %v3441, %v3495
      %v3497 = vpop.f32.mrb[0].mxu0
      %3498 = vdwg.mxu0
      %s3499 = scalar_lea.vmem [#allocation2], 32
      %v3500 = vld [vmem:[%s3499] sm:$0xf]
      %v3501 = vld [vmem:[%s3499 + $0x4] sm:$0x3]
      %v3502 = vld [vmem:[%s2214] sm:$0xf]
      %v3503 = vld [vmem:[%s2214 + $0x4] sm:$0xf]
      %v3506 = vunpack.c.l.b16 %v3500
      %v3507 = vunpack.c.l.b16 %v3501
      %v3508 = vpack.c.b16 %v3507, %v3506
      %v3511 = vunpack.c.l.b16 %v3502
      %v3512 = vunpack.c.l.b16 %v3503
      %v3513 = vpack.c.b16 %v3512, %v3511
      %v3516 = vsel %vm313, %v3508, 0
      %3518 = vmatprep.subr.bf16.mxu0 0
      %3519 = vmatpush1.bf16.msra.mxu0 %v3513
      %3520 = vmatprep.subr.bf16.mxu0 0
      %3521 = vmatpush1.bf16.msra.mxu0 0
      %3522 = vmatprep.subr.bf16.mxu0 0
      %3523 = vmatpush1.bf16.msra.mxu0 0
      %3524 = vmatprep.subr.bf16.mxu0 0
      %3525 = vmatpush1.bf16.msra.mxu0 0
      %3526 = vmatprep.subr.bf16.mxu0 0
      %3527 = vmatpush1.bf16.msra.mxu0 0
      %3528 = vmatprep.subr.bf16.mxu0 0
      %3529 = vmatpush1.bf16.msra.mxu0 0
      %3530 = vmatprep.subr.bf16.mxu0 0
      %3531 = vmatpush1.bf16.msra.mxu0 0
      %3532 = vmatprep.subr.bf16.mxu0 0
      %3533 = vmatpush1.bf16.msra.mxu0 0
      %3534 = vmatprep.subr.bf16.mxu0 0
      %3535 = vmatpush1.bf16.msra.mxu0 0
      %3536 = vmatprep.subr.bf16.mxu0 0
      %3537 = vmatpush1.bf16.msra.mxu0 0
      %3538 = vmatprep.subr.bf16.mxu0 0
      %3539 = vmatpush1.bf16.msra.mxu0 0
      %3540 = vmatprep.subr.bf16.mxu0 0
      %3541 = vmatpush1.bf16.msra.mxu0 0
      %3542 = vmatprep.subr.bf16.mxu0 0
      %3543 = vmatpush1.bf16.msra.mxu0 0
      %3544 = vmatprep.subr.bf16.mxu0 0
      %3545 = vmatpush1.bf16.msra.mxu0 0
      %3546 = vmatprep.subr.bf16.mxu0 0
      %3547 = vmatpush1.bf16.msra.mxu0 0
      %3548 = vmatprep.subr.bf16.mxu0 0
      %3549 = vmatpush1.bf16.msra.mxu0 0
      %3550 = vmatprep.mubr.bf16.mxu0 0
      %3551 = vmatmul.mubr.bf16.gmra.mrb[0].mxu0 %v3516
      %v3552 = vpop.f32.mrb[0].mxu0
      %v3553 = vadd.f32 0.0, %v3552
      %v3554 = vpop.f32.mrb[0].mxu0
      %v3555 = vpop.f32.mrb[0].mxu0
      %v3556 = vadd.f32 0.0, %v3555
      %v3557 = vpop.f32.mrb[0].mxu0
      %3558 = vdwg.mxu0
      %v3559 = vadd.f32 %v3493, %v3553
      %v3560 = vadd.f32 %v3496, %v3556
      %v3561 = vld [vmem:[%s1492 + $0x4] sm:$0x7]
      %v3562 = vld [vmem:[%s2275] sm:$0xf]
      %v3563 = vld [vmem:[%s2275 + $0x4] sm:$0xf]
      %v3565 = vunpack.c.l.b16 %v3561
      %v3566 = vpack.c.b16 %v3565, %v3446
      %v3568 = vshrl.u32 %v3566, 16
      %v3570 = vshll.u32 %v3566, 16
      %v3572 = vrot.slane %v3570, 1
      %v3573 = vor.u32 %v3568, %v3572
      %v3576 = vunpack.c.l.b16 %v3562
      %v3577 = vunpack.c.l.b16 %v3563
      %v3578 = vpack.c.b16 %v3577, %v3576
      %v3581 = vsel %vm313, %v3573, 0
      %3583 = vmatprep.subr.bf16.mxu0 0
      %3584 = vmatpush1.bf16.msra.mxu0 %v3578
      %3585 = vmatprep.subr.bf16.mxu0 0
      %3586 = vmatpush1.bf16.msra.mxu0 0
      %3587 = vmatprep.subr.bf16.mxu0 0
      %3588 = vmatpush1.bf16.msra.mxu0 0
      %3589 = vmatprep.subr.bf16.mxu0 0
      %3590 = vmatpush1.bf16.msra.mxu0 0
      %3591 = vmatprep.subr.bf16.mxu0 0
      %3592 = vmatpush1.bf16.msra.mxu0 0
      %3593 = vmatprep.subr.bf16.mxu0 0
      %3594 = vmatpush1.bf16.msra.mxu0 0
      %3595 = vmatprep.subr.bf16.mxu0 0
      %3596 = vmatpush1.bf16.msra.mxu0 0
      %3597 = vmatprep.subr.bf16.mxu0 0
      %3598 = vmatpush1.bf16.msra.mxu0 0
      %3599 = vmatprep.subr.bf16.mxu0 0
      %3600 = vmatpush1.bf16.msra.mxu0 0
      %3601 = vmatprep.subr.bf16.mxu0 0
      %3602 = vmatpush1.bf16.msra.mxu0 0
      %3603 = vmatprep.subr.bf16.mxu0 0
      %3604 = vmatpush1.bf16.msra.mxu0 0
      %3605 = vmatprep.subr.bf16.mxu0 0
      %3606 = vmatpush1.bf16.msra.mxu0 0
      %3607 = vmatprep.subr.bf16.mxu0 0
      %3608 = vmatpush1.bf16.msra.mxu0 0
      %3609 = vmatprep.subr.bf16.mxu0 0
      %3610 = vmatpush1.bf16.msra.mxu0 0
      %3611 = vmatprep.subr.bf16.mxu0 0
      %3612 = vmatpush1.bf16.msra.mxu0 0
      %3613 = vmatprep.subr.bf16.mxu0 0
      %3614 = vmatpush1.bf16.msra.mxu0 0
      %3615 = vmatprep.mubr.bf16.mxu0 0
      %3616 = vmatmul.mubr.bf16.gmra.mrb[0].mxu0 %v3581
      %v3617 = vpop.f32.mrb[0].mxu0
      %v3618 = vadd.f32 0.0, %v3617
      %v3619 = vpop.f32.mrb[0].mxu0
      %v3620 = vpop.f32.mrb[0].mxu0
      %v3621 = vadd.f32 0.0, %v3620
      %v3622 = vpop.f32.mrb[0].mxu0
      %3623 = vdwg.mxu0
      %v3624 = vadd.f32 %v3559, %v3618
      %v3625 = vadd.f32 %v3560, %v3621
      %v3626 = vld [vmem:[%s2086 + $0x4] sm:$0x7]
      %v3627 = vld [vmem:[%s2341] sm:$0xf]
      %v3628 = vld [vmem:[%s2341 + $0x4] sm:$0xf]
      %v3630 = vunpack.c.l.b16 %v3626
      %v3631 = vpack.c.b16 %v3630, %v3391
      %v3633 = vshrl.u32 %v3631, 16
      %v3635 = vshll.u32 %v3631, 16
      %v3637 = vrot.slane %v3635, 1
      %v3638 = vor.u32 %v3633, %v3637
      %v3641 = vunpack.c.l.b16 %v3627
      %v3642 = vunpack.c.l.b16 %v3628
      %v3643 = vpack.c.b16 %v3642, %v3641
      %v3646 = vsel %vm313, %v3638, 0
      %3648 = vmatprep.subr.bf16.mxu0 0
      %3649 = vmatpush1.bf16.msra.mxu0 %v3643
      %3650 = vmatprep.subr.bf16.mxu0 0
      %3651 = vmatpush1.bf16.msra.mxu0 0
      %3652 = vmatprep.subr.bf16.mxu0 0
      %3653 = vmatpush1.bf16.msra.mxu0 0
      %3654 = vmatprep.subr.bf16.mxu0 0
      %3655 = vmatpush1.bf16.msra.mxu0 0
      %3656 = vmatprep.subr.bf16.mxu0 0
      %3657 = vmatpush1.bf16.msra.mxu0 0
      %3658 = vmatprep.subr.bf16.mxu0 0
      %3659 = vmatpush1.bf16.msra.mxu0 0
      %3660 = vmatprep.subr.bf16.mxu0 0
      %3661 = vmatpush1.bf16.msra.mxu0 0
      %3662 = vmatprep.subr.bf16.mxu0 0
      %3663 = vmatpush1.bf16.msra.mxu0 0
      %3664 = vmatprep.subr.bf16.mxu0 0
      %3665 = vmatpush1.bf16.msra.mxu0 0
      %3666 = vmatprep.subr.bf16.mxu0 0
      %3667 = vmatpush1.bf16.msra.mxu0 0
      %3668 = vmatprep.subr.bf16.mxu0 0
      %3669 = vmatpush1.bf16.msra.mxu0 0
      %3670 = vmatprep.subr.bf16.mxu0 0
      %3671 = vmatpush1.bf16.msra.mxu0 0
      %3672 = vmatprep.subr.bf16.mxu0 0
      %3673 = vmatpush1.bf16.msra.mxu0 0
      %3674 = vmatprep.subr.bf16.mxu0 0
      %3675 = vmatpush1.bf16.msra.mxu0 0
      %3676 = vmatprep.subr.bf16.mxu0 0
      %3677 = vmatpush1.bf16.msra.mxu0 0
      %3678 = vmatprep.subr.bf16.mxu0 0
      %3679 = vmatpush1.bf16.msra.mxu0 0
      %3680 = vmatprep.mubr.bf16.mxu0 0
      %3681 = vmatmul.mubr.bf16.gmra.mrb[0].mxu0 %v3646
      %v3682 = vpop.f32.mrb[0].mxu0
      %v3683 = vadd.f32 0.0, %v3682
      %v3684 = vpop.f32.mrb[0].mxu0
      %v3685 = vpop.f32.mrb[0].mxu0
      %v3686 = vadd.f32 0.0, %v3685
      %v3687 = vpop.f32.mrb[0].mxu0
      %3688 = vdwg.mxu0
      %v3689 = vadd.f32 %v3624, %v3683
      %v3690 = vadd.f32 %v3625, %v3686
      %v3691 = vld [vmem:[%s3499 + $0x4] sm:$0x7]
      %v3692 = vld [vmem:[%s2407] sm:$0xf]
      %v3693 = vld [vmem:[%s2407 + $0x4] sm:$0xf]
      %v3695 = vunpack.c.l.b16 %v3691
      %v3696 = vpack.c.b16 %v3695, %v3506
      %v3698 = vshrl.u32 %v3696, 16
      %v3700 = vshll.u32 %v3696, 16
      %v3702 = vrot.slane %v3700, 1
      %v3703 = vor.u32 %v3698, %v3702
      %v3706 = vunpack.c.l.b16 %v3692
      %v3707 = vunpack.c.l.b16 %v3693
      %v3708 = vpack.c.b16 %v3707, %v3706
      %v3711 = vsel %vm313, %v3703, 0
      %3713 = vmatprep.subr.bf16.mxu0 0
      %3714 = vmatpush1.bf16.msra.mxu0 %v3708
      %3715 = vmatprep.subr.bf16.mxu0 0
      %3716 = vmatpush1.bf16.msra.mxu0 0
      %3717 = vmatprep.subr.bf16.mxu0 0
      %3718 = vmatpush1.bf16.msra.mxu0 0
      %3719 = vmatprep.subr.bf16.mxu0 0
      %3720 = vmatpush1.bf16.msra.mxu0 0
      %3721 = vmatprep.subr.bf16.mxu0 0
      %3722 = vmatpush1.bf16.msra.mxu0 0
      %3723 = vmatprep.subr.bf16.mxu0 0
      %3724 = vmatpush1.bf16.msra.mxu0 0
      %3725 = vmatprep.subr.bf16.mxu0 0
      %3726 = vmatpush1.bf16.msra.mxu0 0
      %3727 = vmatprep.subr.bf16.mxu0 0
      %3728 = vmatpush1.bf16.msra.mxu0 0
      %3729 = vmatprep.subr.bf16.mxu0 0
      %3730 = vmatpush1.bf16.msra.mxu0 0
      %3731 = vmatprep.subr.bf16.mxu0 0
      %3732 = vmatpush1.bf16.msra.mxu0 0
      %3733 = vmatprep.subr.bf16.mxu0 0
      %3734 = vmatpush1.bf16.msra.mxu0 0
      %3735 = vmatprep.subr.bf16.mxu0 0
      %3736 = vmatpush1.bf16.msra.mxu0 0
      %3737 = vmatprep.subr.bf16.mxu0 0
      %3738 = vmatpush1.bf16.msra.mxu0 0
      %3739 = vmatprep.subr.bf16.mxu0 0
      %3740 = vmatpush1.bf16.msra.mxu0 0
      %3741 = vmatprep.subr.bf16.mxu0 0
      %3742 = vmatpush1.bf16.msra.mxu0 0
      %3743 = vmatprep.subr.bf16.mxu0 0
      %3744 = vmatpush1.bf16.msra.mxu0 0
      %3745 = vmatprep.mubr.bf16.mxu0 0
      %3746 = vmatmul.mubr.bf16.gmra.mrb[0].mxu0 %v3711
      %v3747 = vpop.f32.mrb[0].mxu0
      %v3748 = vadd.f32 0.0, %v3747
      %v3749 = vpop.f32.mrb[0].mxu0
      %v3750 = vpop.f32.mrb[0].mxu0
      %v3751 = vadd.f32 0.0, %v3750
      %v3752 = vpop.f32.mrb[0].mxu0
      %3753 = vdwg.mxu0
      %v3754 = vadd.f32 %v3689, %v3748
      %v3755 = vadd.f32 %v3690, %v3751
      %v3756 = vld [vmem:[%s1492] sm:$0xe]
      %v3757 = vld [vmem:[%s2473] sm:$0xf]
      %v3758 = vld [vmem:[%s2473 + $0x4] sm:$0xf]
      %v3760 = vunpack.c.l.b16 %v3756
      %v3761 = vpack.c.b16 %v3565, %v3760
      %v3762 = vrot.slane %v3761, 1
      %v3765 = vunpack.c.l.b16 %v3757
      %v3766 = vunpack.c.l.b16 %v3758
      %v3767 = vpack.c.b16 %v3766, %v3765
      %v3770 = vsel %vm313, %v3762, 0
      %3772 = vmatprep.subr.bf16.mxu0 0
      %3773 = vmatpush1.bf16.msra.mxu0 %v3767
      %3774 = vmatprep.subr.bf16.mxu0 0
      %3775 = vmatpush1.bf16.msra.mxu0 0
      %3776 = vmatprep.subr.bf16.mxu0 0
      %3777 = vmatpush1.bf16.msra.mxu0 0
      %3778 = vmatprep.subr.bf16.mxu0 0
      %3779 = vmatpush1.bf16.msra.mxu0 0
      %3780 = vmatprep.subr.bf16.mxu0 0
      %3781 = vmatpush1.bf16.msra.mxu0 0
      %3782 = vmatprep.subr.bf16.mxu0 0
      %3783 = vmatpush1.bf16.msra.mxu0 0
      %3784 = vmatprep.subr.bf16.mxu0 0
      %3785 = vmatpush1.bf16.msra.mxu0 0
      %3786 = vmatprep.subr.bf16.mxu0 0
      %3787 = vmatpush1.bf16.msra.mxu0 0
      %3788 = vmatprep.subr.bf16.mxu0 0
      %3789 = vmatpush1.bf16.msra.mxu0 0
      %3790 = vmatprep.subr.bf16.mxu0 0
      %3791 = vmatpush1.bf16.msra.mxu0 0
      %3792 = vmatprep.subr.bf16.mxu0 0
      %3793 = vmatpush1.bf16.msra.mxu0 0
      %3794 = vmatprep.subr.bf16.mxu0 0
      %3795 = vmatpush1.bf16.msra.mxu0 0
      %3796 = vmatprep.subr.bf16.mxu0 0
      %3797 = vmatpush1.bf16.msra.mxu0 0
      %3798 = vmatprep.subr.bf16.mxu0 0
      %3799 = vmatpush1.bf16.msra.mxu0 0
      %3800 = vmatprep.subr.bf16.mxu0 0
      %3801 = vmatpush1.bf16.msra.mxu0 0
      %3802 = vmatprep.subr.bf16.mxu0 0
      %3803 = vmatpush1.bf16.msra.mxu0 0
      %3804 = vmatprep.mubr.bf16.mxu0 0
      %3805 = vmatmul.mubr.bf16.gmra.mrb[0].mxu0 %v3770
      %v3806 = vpop.f32.mrb[0].mxu0
      %v3807 = vadd.f32 0.0, %v3806
      %v3808 = vpop.f32.mrb[0].mxu0
      %v3809 = vpop.f32.mrb[0].mxu0
      %v3810 = vadd.f32 0.0, %v3809
      %v3811 = vpop.f32.mrb[0].mxu0
      %3812 = vdwg.mxu0
      %v3813 = vadd.f32 %v3754, %v3807
      %v3814 = vadd.f32 %v3755, %v3810
      %v3815 = vld [vmem:[%s2086] sm:$0xe]
      %v3816 = vld [vmem:[%s2533] sm:$0xf]
      %v3817 = vld [vmem:[%s2533 + $0x4] sm:$0xf]
      %v3819 = vunpack.c.l.b16 %v3815
      %v3820 = vpack.c.b16 %v3630, %v3819
      %v3821 = vrot.slane %v3820, 1
      %v3824 = vunpack.c.l.b16 %v3816
      %v3825 = vunpack.c.l.b16 %v3817
      %v3826 = vpack.c.b16 %v3825, %v3824
      %v3829 = vsel %vm313, %v3821, 0
      %3831 = vmatprep.subr.bf16.mxu0 0
      %3832 = vmatpush1.bf16.msra.mxu0 %v3826
      %3833 = vmatprep.subr.bf16.mxu0 0
      %3834 = vmatpush1.bf16.msra.mxu0 0
      %3835 = vmatprep.subr.bf16.mxu0 0
      %3836 = vmatpush1.bf16.msra.mxu0 0
      %3837 = vmatprep.subr.bf16.mxu0 0
      %3838 = vmatpush1.bf16.msra.mxu0 0
      %3839 = vmatprep.subr.bf16.mxu0 0
      %3840 = vmatpush1.bf16.msra.mxu0 0
      %3841 = vmatprep.subr.bf16.mxu0 0
      %3842 = vmatpush1.bf16.msra.mxu0 0
      %3843 = vmatprep.subr.bf16.mxu0 0
      %3844 = vmatpush1.bf16.msra.mxu0 0
      %3845 = vmatprep.subr.bf16.mxu0 0
      %3846 = vmatpush1.bf16.msra.mxu0 0
      %3847 = vmatprep.subr.bf16.mxu0 0
      %3848 = vmatpush1.bf16.msra.mxu0 0
      %3849 = vmatprep.subr.bf16.mxu0 0
      %3850 = vmatpush1.bf16.msra.mxu0 0
      %3851 = vmatprep.subr.bf16.mxu0 0
      %3852 = vmatpush1.bf16.msra.mxu0 0
      %3853 = vmatprep.subr.bf16.mxu0 0
      %3854 = vmatpush1.bf16.msra.mxu0 0
      %3855 = vmatprep.subr.bf16.mxu0 0
      %3856 = vmatpush1.bf16.msra.mxu0 0
      %3857 = vmatprep.subr.bf16.mxu0 0
      %3858 = vmatpush1.bf16.msra.mxu0 0
      %3859 = vmatprep.subr.bf16.mxu0 0
      %3860 = vmatpush1.bf16.msra.mxu0 0
      %3861 = vmatprep.subr.bf16.mxu0 0
      %3862 = vmatpush1.bf16.msra.mxu0 0
      %3863 = vmatprep.mubr.bf16.mxu0 0
      %3864 = vmatmul.mubr.bf16.gmra.mrb[0].mxu0 %v3829
      %v3865 = vpop.f32.mrb[0].mxu0
      %v3866 = vadd.f32 0.0, %v3865
      %v3867 = vpop.f32.mrb[0].mxu0
      %v3868 = vpop.f32.mrb[0].mxu0
      %v3869 = vadd.f32 0.0, %v3868
      %v3870 = vpop.f32.mrb[0].mxu0
      %3871 = vdwg.mxu0
      %v3872 = vadd.f32 %v3813, %v3866
      %v3873 = vadd.f32 %v3814, %v3869
      %v3874 = vld [vmem:[%s3499] sm:$0xe]
      %v3875 = vld [vmem:[%s2593] sm:$0xf]
      %v3876 = vld [vmem:[%s2593 + $0x4] sm:$0xf]
      %v3878 = vunpack.c.l.b16 %v3874
      %v3879 = vpack.c.b16 %v3695, %v3878
      %v3880 = vrot.slane %v3879, 1
      %v3883 = vunpack.c.l.b16 %v3875
      %v3884 = vunpack.c.l.b16 %v3876
      %v3885 = vpack.c.b16 %v3884, %v3883
      %v3888 = vsel %vm313, %v3880, 0
      %3890 = vmatprep.subr.bf16.mxu0 0
      %3891 = vmatpush1.bf16.msra.mxu0 %v3885
      %3892 = vmatprep.subr.bf16.mxu0 0
      %3893 = vmatpush1.bf16.msra.mxu0 0
      %3894 = vmatprep.subr.bf16.mxu0 0
      %3895 = vmatpush1.bf16.msra.mxu0 0
      %3896 = vmatprep.subr.bf16.mxu0 0
      %3897 = vmatpush1.bf16.msra.mxu0 0
      %3898 = vmatprep.subr.bf16.mxu0 0
      %3899 = vmatpush1.bf16.msra.mxu0 0
      %3900 = vmatprep.subr.bf16.mxu0 0
      %3901 = vmatpush1.bf16.msra.mxu0 0
      %3902 = vmatprep.subr.bf16.mxu0 0
      %3903 = vmatpush1.bf16.msra.mxu0 0
      %3904 = vmatprep.subr.bf16.mxu0 0
      %3905 = vmatpush1.bf16.msra.mxu0 0
      %3906 = vmatprep.subr.bf16.mxu0 0
      %3907 = vmatpush1.bf16.msra.mxu0 0
      %3908 = vmatprep.subr.bf16.mxu0 0
      %3909 = vmatpush1.bf16.msra.mxu0 0
      %3910 = vmatprep.subr.bf16.mxu0 0
      %3911 = vmatpush1.bf16.msra.mxu0 0
      %3912 = vmatprep.subr.bf16.mxu0 0
      %3913 = vmatpush1.bf16.msra.mxu0 0
      %3914 = vmatprep.subr.bf16.mxu0 0
      %3915 = vmatpush1.bf16.msra.mxu0 0
      %3916 = vmatprep.subr.bf16.mxu0 0
      %3917 = vmatpush1.bf16.msra.mxu0 0
      %3918 = vmatprep.subr.bf16.mxu0 0
      %3919 = vmatpush1.bf16.msra.mxu0 0
      %3920 = vmatprep.subr.bf16.mxu0 0
      %3921 = vmatpush1.bf16.msra.mxu0 0
      %3922 = vmatprep.mubr.bf16.mxu0 0
      %3923 = vmatmul.mubr.bf16.gmra.mrb[0].mxu0 %v3888
      %v3924 = vpop.f32.mrb[0].mxu0
      %v3925 = vadd.f32 0.0, %v3924
      %v3926 = vpop.f32.mrb[0].mxu0
      %v3927 = vpop.f32.mrb[0].mxu0
      %v3928 = vadd.f32 0.0, %v3927
      %v3929 = vpop.f32.mrb[0].mxu0
      %3930 = vdwg.mxu0
      %v3931 = vadd.f32 %v3872, %v3925
      %v3932 = vadd.f32 %v3873, %v3928
      %v3933 = vld [vmem:[%s1023] sm:$0xf]
      %v3934 = vld [vmem:[%s1023 + $0x4] sm:$0x7]
      %v3935 = vunpack.c.l.bf16 %v3933
      %v3936 = vunpack.c.l.bf16 %v3934
      %v3937 = vld [vmem:[%s4] sm:$0x1]
      %v3939 = vlaneseq
      %v3940 = vshrl.u32 %v3939, 7
      %v3941 = vsub.s32 0, %v3940
      %v3942 = vrot.slane %v3937, %v3941
      %v3944 = vadd.f32 %v3931, %v3942
      %v3945 = vadd.f32 %v3932, %v3942
      %v3948 = vrot.slane %v3935, 1
      %v3949 = vrot.slane %v3936, 1
      %v3950 = vsel %vm2667, %v3948, %v3949
      %v3953 = vadd.f32 %v3944, %v3950
      %v3954 = vadd.f32 %v3945, %v3949
      %v3955 = vmax.f32 %v3953, 0.0
      %v3956 = vmax.f32 %v3954, 0.0
      %v3957 = vpack.c.bf16 %v3956, %v3955
      %v3958 = vld [vmem:[%s5] sm:$0xf]
      %v3959 = vld [vmem:[%s5 + $0x4] sm:$0xf]
      %v3960 = vld [vmem:[%s6] sm:$0x1]
      %v3962 = vlaneseq
      %v3963 = vshrl.u32 %v3962, 7
      %v3964 = vsub.s32 0, %v3963
      %v3965 = vrot.slane %v3960, %v3964
      %v3969 = vunpack.c.l.b16 %v3958
      %v3970 = vunpack.c.l.b16 %v3959
      %v3971 = vpack.c.b16 %v3970, %v3969
      %v3974 = vsel %vm313, %v3957, 0
      %3976 = vmatprep.subr.bf16.mxu0 0
      %3977 = vmatpush1.bf16.msra.mxu0 %v3971
      %3978 = vmatprep.subr.bf16.mxu0 0
      %3979 = vmatpush1.bf16.msra.mxu0 0
      %3980 = vmatprep.subr.bf16.mxu0 0
      %3981 = vmatpush1.bf16.msra.mxu0 0
      %3982 = vmatprep.subr.bf16.mxu0 0
      %3983 = vmatpush1.bf16.msra.mxu0 0
      %3984 = vmatprep.subr.bf16.mxu0 0
      %3985 = vmatpush1.bf16.msra.mxu0 0
      %3986 = vmatprep.subr.bf16.mxu0 0
      %3987 = vmatpush1.bf16.msra.mxu0 0
      %3988 = vmatprep.subr.bf16.mxu0 0
      %3989 = vmatpush1.bf16.msra.mxu0 0
      %3990 = vmatprep.subr.bf16.mxu0 0
      %3991 = vmatpush1.bf16.msra.mxu0 0
      %3992 = vmatprep.subr.bf16.mxu0 0
      %3993 = vmatpush1.bf16.msra.mxu0 0
      %3994 = vmatprep.subr.bf16.mxu0 0
      %3995 = vmatpush1.bf16.msra.mxu0 0
      %3996 = vmatprep.subr.bf16.mxu0 0
      %3997 = vmatpush1.bf16.msra.mxu0 0
      %3998 = vmatprep.subr.bf16.mxu0 0
      %3999 = vmatpush1.bf16.msra.mxu0 0
      %4000 = vmatprep.subr.bf16.mxu0 0
      %4001 = vmatpush1.bf16.msra.mxu0 0
      %4002 = vmatprep.subr.bf16.mxu0 0
      %4003 = vmatpush1.bf16.msra.mxu0 0
      %4004 = vmatprep.subr.bf16.mxu0 0
      %4005 = vmatpush1.bf16.msra.mxu0 0
      %4006 = vmatprep.subr.bf16.mxu0 0
      %4007 = vmatpush1.bf16.msra.mxu0 0
      %4008 = vmatprep.mubr.bf16.mxu0 0
      %4009 = vmatmul.mubr.bf16.gmra.mrb[0].mxu0 %v3974
      %v4010 = vpop.f32.mrb[0].mxu0
      %v4011 = vadd.f32 %v3965, %v4010
      %v4012 = vpop.f32.mrb[0].mxu0
      %v4013 = vpop.f32.mrb[0].mxu0
      %v4014 = vadd.f32 %v3965, %v4013
      %v4015 = vpop.f32.mrb[0].mxu0
      %4016 = vdwg.mxu0
      %v4017 = vmax.f32 %v4011, 0.0
      %v4018 = vmax.f32 %v4014, 0.0
      %s4019 = scalar_lea.vmem %s278, 32
      %4020 = vst.msk [vmem:[%s4019] sm:$0xff] %vm313, %v4017
      %4021 = vst.msk [vmem:[%s4019 + $0x8] sm:$0xf] %vm280, %v4018
      %p4022 = scmp.lt.s32.totalorder %s18, 1
      %s4023 = scalar_select %p4022, %s18, 1
      %s4024 = smul.addr %s4023, 6
      %s4025 = smul.addr %s4024, 8
      %s4026 = scalar_lea.vmem %s7, %s4025
      // Predicated region
      $region49: #{doa_resnet_trunk_forward.7} parent=47 // pred_check
        %p4027 = pneg %p188
      $region50: #{doa_resnet_trunk_forward.7} parent=47 // pred_check_branch
        %4029 = sbr.rel (%p4027) target = $region52
      $region51: #{doa_resnet_trunk_forward.7} parent=47 // pred_region
        _
      $region52: #{doa_resnet_trunk_forward.7} parent=47 // pred_fallthru
        _
    $region48: #{doa_resnet_trunk_forward.7} parent=5 // pred_fallthru
      _
    %p4030 = scmp.le.s32.totalorder 2, %s13
    // Predicated region
    $region53: #{doa_resnet_trunk_forward.7} parent=5 // pred_check
      %p4031 = pneg %p4030
    $region54: #{doa_resnet_trunk_forward.7} parent=5 // pred_check_branch
      %4033 = sbr.rel (%p4031) target = $region56
    $region55: #{doa_resnet_trunk_forward.7} parent=5 // pred_region
      %s4034 = ssub.s32 %s13, 2
      // Predicated region
      $region57: #{doa_resnet_trunk_forward.7} parent=55 // pred_check
        %p4035 = pneg %p194
      $region58: #{doa_resnet_trunk_forward.7} parent=55 // pred_check_branch
        %4037 = sbr.rel (%p4035) target = $region60
      $region59: #{doa_resnet_trunk_forward.7} parent=55 // pred_region
        %p4038 = scmp.lt.s32.totalorder %s19, 1
        %s4039 = scalar_select %p4038, %s19, 1
        %s4040 = smul.addr %s4039, 6
        %s4041 = smul.addr %s4040, 8
        %s4042 = scalar_lea.vmem %s7, %s4041
      $region60: #{doa_resnet_trunk_forward.7} parent=55 // pred_fallthru
        _
    $region56: #{doa_resnet_trunk_forward.7} parent=5 // pred_fallthru
      _
  $region6: #{doa_resnet_trunk_forward.7} parent=0 // loop_footer
    %s17 = sadd.s32 1, %s13
  $region7: #{doa_resnet_trunk_forward.7} parent=0 // loop_footer_branch
    %12 = sbr.rel target = $region3
  $region8: #{doa_resnet_trunk_forward.7} parent=0 // loop_exit
    _

</llo_original>
